<compile_context>
chip_gen: v5e
topology: v5e:2x2
jax: 0.10.0
libtpu: 0.0.40
codegen_flags: <defaults>
</compile_context>

<pallas_src>
import functools

import numpy as np
import jax
import jax.numpy as jnp
from jax.experimental import pallas as pl
from jax.experimental.pallas import tpu as pltpu

# ---------------- synthetic "t5-small-like" config (tiny, deterministic) ---------------
VOCAB = 64
D_MODEL = 32          # hidden_size used by cls_layer
D_KV = 8
N_HEADS = 4
D_FF = 64
N_LAYERS = 2
NUM_BUCKETS = 32
MAX_DISTANCE = 128
EPS = 1e-6
NEG_INF = -1e9


# ---------------- in-kernel helpers -----------------------------------------------------
def _rms(x, w):
    # T5LayerNorm: rms-norm, no mean subtraction
    var = jnp.mean(x * x, axis=-1, keepdims=True)
    return x * jax.lax.rsqrt(var + EPS) * w


def _mha(xq2, xkv2, batch, wq, wk, wv, wo, head_bias, mask):
    """Multi-head attention, head-major weights, static per-head loop.

    xq2:  (batch*Sq, D) normalized query source
    xkv2: (batch*Sk, D) normalized key/value source
    wq/wk/wv: (H, D, Dh);  wo: (H, Dh, D)
    head_bias: (H, Sq, Sk) additive bias (rel-pos [+ causal]) or None
    mask: (batch, 1, Sk) additive padding bias or None
    returns (batch*Sq, D_MODEL).  T5 applies no 1/sqrt(d) scaling.
    """
    nq, d = xq2.shape
    nk = xkv2.shape[0]
    sq = nq // batch
    sk = nk // batch
    out = jnp.zeros((nq, D_MODEL), jnp.float32)
    for h in range(N_HEADS):
        q = jnp.dot(xq2, wq[h], preferred_element_type=jnp.float32).reshape(batch, sq, D_KV)
        k = jnp.dot(xkv2, wk[h], preferred_element_type=jnp.float32).reshape(batch, sk, D_KV)
        v = jnp.dot(xkv2, wv[h], preferred_element_type=jnp.float32).reshape(batch, sk, D_KV)
        s = jnp.einsum('bqd,bkd->bqk', q, k, preferred_element_type=jnp.float32)
        if head_bias is not None:
            s = s + head_bias[h]          # (Sq, Sk) broadcast over batch
        if mask is not None:
            s = s + mask                  # (batch, 1, Sk) broadcast over queries
        m = jnp.max(s, axis=-1, keepdims=True)
        p = jnp.exp(s - m)
        p = p * pl.reciprocal(jnp.sum(p, axis=-1, keepdims=True), approx=True)
        ctx = jnp.einsum('bqk,bkd->bqd', p, v, preferred_element_type=jnp.float32)
        out = out + jnp.dot(ctx.reshape(nq, D_KV), wo[h], preferred_element_type=jnp.float32)
    return out


# ---------------- fused encoder kernel: grid=(L,), batch folded into the block ----------
def _encoder_kernel(emb_ref, pos_bias_ref, mask_ref, clsw_ref, clsb_ref, ylab_ref,
                    ln_ref, wq_ref, wk_ref, wv_ref, wo_ref, wi_ref, wff_ref,
                    final_ln_ref, h_ref, clf_loss_ref, *, b_gen):
    l = pl.program_id(0)

    @pl.when(l == 0)
    def _():
        h_ref[...] = emb_ref[...]

    h = h_ref[...]                                   # (BB, S, D)  resident across layers
    bb, s_len, d = h.shape
    ln = ln_ref[...]                                 # (2, D)

    # ---- self attention ----
    x2 = _rms(h, ln[0]).reshape(bb * s_len, d)
    attn = _mha(x2, x2, bb,
                wq_ref[...], wk_ref[...], wv_ref[...], wo_ref[...],
                pos_bias_ref[...], mask_ref[...])
    h = h + attn.reshape(bb, s_len, d)

    # ---- FFN (DenseReluDense) ----
    x2 = _rms(h, ln[1]).reshape(bb * s_len, d)
    g = jnp.maximum(jnp.dot(x2, wi_ref[...], preferred_element_type=jnp.float32), 0.0)
    h = h + jnp.dot(g, wff_ref[...], preferred_element_type=jnp.float32).reshape(bb, s_len, d)

    h_ref[...] = h

    @pl.when(l == pl.num_programs(0) - 1)
    def _():
        hn = _rms(h, final_ln_ref[...][0])
        h_ref[...] = hn
        # ---- fused classification head on the clf half of the batch (rows b_gen:) ----
        # torch.mean(last_hidden_state, dim=1) -> Linear(D,1) -> BCEWithLogitsLoss
        sent = jnp.mean(hn[b_gen:], axis=1)                                   # (Bclf, D)
        logit = jnp.dot(sent, clsw_ref[...],
                        preferred_element_type=jnp.float32) + clsb_ref[...]   # (Bclf, 1)
        y = ylab_ref[...]                                                     # (Bclf, 1)
        per = jnp.maximum(logit, 0.0) - logit * y + jnp.log(1.0 + jnp.exp(-jnp.abs(logit)))
        clf_loss_ref[...] = jnp.mean(per, axis=0, keepdims=True)              # (1, 1)


# ---------------- fused decoder kernel: grid=(L,), lm_head+CE fused in last step --------
def _decoder_kernel(emb_ref, self_bias_ref, enc_ref, cmask_ref, lmhead_ref, labels_ref,
                    ln_ref, swq_ref, swk_ref, swv_ref, swo_ref,
                    cwq_ref, cwk_ref, cwv_ref, cwo_ref,
                    wi_ref, wff_ref, final_ln_ref, h_ref, loss_ref):
    l = pl.program_id(0)

    @pl.when(l == 0)
    def _():
        h_ref[...] = emb_ref[...]

    h = h_ref[...]                                   # (B, Sd, D)
    b, sd, d = h.shape
    enc = enc_ref[...]                               # (B, Se, D)
    se = enc.shape[1]
    ln = ln_ref[...]                                 # (3, D)

    # ---- causal self attention (rel-pos + causal bias precombined in self_bias) ----
    x2 = _rms(h, ln[0]).reshape(b * sd, d)
    attn = _mha(x2, x2, b,
                swq_ref[...], swk_ref[...], swv_ref[...], swo_ref[...],
                self_bias_ref[...], None)
    h = h + attn.reshape(b, sd, d)

    # ---- cross attention (K/V from encoder hidden, padding-mask bias only) ----
    x2 = _rms(h, ln[1]).reshape(b * sd, d)
    enc2 = enc.reshape(b * se, d)
    attn = _mha(x2, enc2, b,
                cwq_ref[...], cwk_ref[...], cwv_ref[...], cwo_ref[...],
                None, cmask_ref[...])
    h = h + attn.reshape(b, sd, d)

    # ---- FFN ----
    x2 = _rms(h, ln[2]).reshape(b * sd, d)
    g = jnp.maximum(jnp.dot(x2, wi_ref[...], preferred_element_type=jnp.float32), 0.0)
    h = h + jnp.dot(g, wff_ref[...], preferred_element_type=jnp.float32).reshape(b, sd, d)

    h_ref[...] = h

    @pl.when(l == pl.num_programs(0) - 1)
    def _():
        hn = _rms(h, final_ln_ref[...][0])
        h_ref[...] = hn
        # ---- fused lm_head (tied embedding, * d_model**-0.5) + cross-entropy ----
        seq = hn.reshape(b * sd, d) * (D_MODEL ** -0.5)
        logits = jnp.dot(seq, lmhead_ref[...], preferred_element_type=jnp.float32)  # (N, V)
        labels = labels_ref[...]                                                    # (N, 1)
        m = jnp.max(logits, axis=-1, keepdims=True)
        lse = jnp.log(jnp.sum(jnp.exp(logits - m), axis=-1, keepdims=True)) + m
        col = jax.lax.broadcasted_iota(jnp.int32, logits.shape, 1)
        picked = jnp.sum(jnp.where(col == labels, logits, 0.0), axis=-1, keepdims=True)
        valid = (labels >= 0).astype(jnp.float32)            # ignore_index = -100
        nll = (lse - picked) * valid
        tot = jnp.sum(nll, axis=0, keepdims=True)            # (1, 1)
        cnt = jnp.sum(valid, axis=0, keepdims=True)          # (1, 1)
        loss_ref[...] = tot / jnp.maximum(cnt, 1.0)


# ---------------- BlockSpec plumbing ------------------------------------------------------
def _fixed_spec(shape):
    nd = len(shape)
    return pl.BlockSpec(tuple(shape), lambda l, _nd=nd: (0,) * _nd)


def _layer_spec(shape):
    # stacked per-layer weight: squeeze the layer dim, index it by the grid step
    nd = len(shape)
    return pl.BlockSpec((None,) + tuple(shape[1:]),
                        lambda l, _nd=nd: (l,) + (0,) * (_nd - 1))


# ---------------- encoder wrapper (merged gen+clf batch, clf loss fused) ------------------
def t5_encoder_with_clf(params, input_ids, attention_mask, clf_labels, n_gen):
    bb, s = input_ids.shape
    emb = jnp.take(params['shared'], input_ids, axis=0).astype(jnp.float32)
    pos_bias = compute_position_bias(params['enc_rel_bias'], s, s, bidirectional=True)  # (H,S,S)
    mask_bias = ((1.0 - attention_mask.astype(jnp.float32)) * NEG_INF)[:, None, :]      # (BB,1,S)
    ylab = clf_labels.reshape(-1, 1).astype(jnp.float32)                                # (Bclf,1)
    num_layers = params['enc_ln'].shape[0]

    hidden, clf_loss = pl.pallas_call(
        functools.partial(_encoder_kernel, b_gen=n_gen),
        grid=(num_layers,),
        in_specs=[
            _fixed_spec(emb.shape),                      # embeddings (BB,S,D)
            _fixed_spec(pos_bias.shape),                 # rel-pos bias (H,S,S)
            _fixed_spec(mask_bias.shape),                # padding-mask bias (BB,1,S)
            _fixed_spec(params['cls_w'].shape),          # cls weight (D,1)
            _fixed_spec(params['cls_b'].shape),          # cls bias (1,1)
            _fixed_spec(ylab.shape),                     # clf labels (Bclf,1)
            _layer_spec(params['enc_ln'].shape),         # ln1/ln2 (2,D)
            _layer_spec(params['enc_wq'].shape),         # (H,D,Dh)
            _layer_spec(params['enc_wk'].shape),
            _layer_spec(params['enc_wv'].shape),
            _layer_spec(params['enc_wo'].shape),         # (H,Dh,D)
            _layer_spec(params['enc_wi'].shape),         # (D,FF)
            _layer_spec(params['enc_wff'].shape),        # (FF,D)
            _fixed_spec(params['enc_final_ln'].shape),   # (1,D)
        ],
        out_specs=[
            _fixed_spec((bb, s, D_MODEL)),
            _fixed_spec((1, 1)),
        ],
        out_shape=[
            jax.ShapeDtypeStruct((bb, s, D_MODEL), jnp.float32),
            jax.ShapeDtypeStruct((1, 1), jnp.float32),
        ],
        compiler_params=pltpu.CompilerParams(dimension_semantics=("arbitrary",)),
    )(emb, pos_bias, mask_bias, params['cls_w'], params['cls_b'], ylab,
      params['enc_ln'], params['enc_wq'], params['enc_wk'], params['enc_wv'],
      params['enc_wo'], params['enc_wi'], params['enc_wff'], params['enc_final_ln'])
    return hidden, clf_loss[0, 0]


# ---------------- decoder wrapper (lm_head + CE fused) -------------------------------------
def t5_decoder_with_lm_loss(params, decoder_input_ids, enc_hidden, enc_mask, gen_labels):
    b, sd = decoder_input_ids.shape
    emb = jnp.take(params['shared'], decoder_input_ids, axis=0).astype(jnp.float32)
    causal = (jnp.arange(sd)[None, :] > jnp.arange(sd)[:, None]).astype(jnp.float32) * NEG_INF
    self_bias = compute_position_bias(params['dec_rel_bias'], sd, sd,
                                      bidirectional=False) + causal[None]                # (H,Sd,Sd)
    cross_mask = ((1.0 - enc_mask.astype(jnp.float32)) * NEG_INF)[:, None, :]            # (B,1,Se)
    labels2d = gen_labels.reshape(-1, 1).astype(jnp.int32)                               # (B*Sd,1)
    num_layers = params['dec_ln'].shape[0]

    _, gen_loss = pl.pallas_call(
        _decoder_kernel,
        grid=(num_layers,),
        in_specs=[
            _fixed_spec(emb.shape),
            _fixed_spec(self_bias.shape),
            _fixed_spec(enc_hidden.shape),
            _fixed_spec(cross_mask.shape),
            _fixed_spec(params['lm_head'].shape),        # (D,V), tied embedding
            _fixed_spec(labels2d.shape),
            _layer_spec(params['dec_ln'].shape),         # (3,D)
            _layer_spec(params['dec_swq'].shape),
            _layer_spec(params['dec_swk'].shape),
            _layer_spec(params['dec_swv'].shape),
            _layer_spec(params['dec_swo'].shape),
            _layer_spec(params['dec_cwq'].shape),
            _layer_spec(params['dec_cwk'].shape),
            _layer_spec(params['dec_cwv'].shape),
            _layer_spec(params['dec_cwo'].shape),
            _layer_spec(params['dec_wi'].shape),
            _layer_spec(params['dec_wff'].shape),
            _fixed_spec(params['dec_final_ln'].shape),
        ],
        out_specs=[
            _fixed_spec((b, sd, D_MODEL)),
            _fixed_spec((1, 1)),
        ],
        out_shape=[
            jax.ShapeDtypeStruct((b, sd, D_MODEL), jnp.float32),
            jax.ShapeDtypeStruct((1, 1), jnp.float32),
        ],
        compiler_params=pltpu.CompilerParams(dimension_semantics=("arbitrary",)),
    )(emb, self_bias, enc_hidden, cross_mask, params['lm_head'], labels2d,
      params['dec_ln'], params['dec_swq'], params['dec_swk'], params['dec_swv'],
      params['dec_swo'], params['dec_cwq'], params['dec_cwk'], params['dec_cwv'],
      params['dec_cwo'], params['dec_wi'], params['dec_wff'], params['dec_final_ln'])
    return gen_loss[0, 0]


# ---------------- T5 glue (plain JAX, wrapper side) ----------------------------------------
def _relative_position_bucket(relative_position, bidirectional, num_buckets, max_distance):
    relative_buckets = jnp.zeros_like(relative_position)
    if bidirectional:
        num_buckets //= 2
        relative_buckets = relative_buckets + (relative_position > 0).astype(jnp.int32) * num_buckets
        relative_position = jnp.abs(relative_position)
    else:
        relative_position = -jnp.minimum(relative_position, jnp.zeros_like(relative_position))
    max_exact = num_buckets // 2
    is_small = relative_position < max_exact
    rp = jnp.maximum(relative_position.astype(jnp.float32), 1.0)
    rel_if_large = max_exact + (jnp.log(rp / max_exact)
                                / np.log(max_distance / max_exact)
                                * (num_buckets - max_exact)).astype(jnp.int32)
    rel_if_large = jnp.minimum(rel_if_large, num_buckets - 1)
    return relative_buckets + jnp.where(is_small, relative_position, rel_if_large)


def compute_position_bias(rel_emb, q_len, k_len, bidirectional):
    ctx = jnp.arange(q_len, dtype=jnp.int32)[:, None]
    mem = jnp.arange(k_len, dtype=jnp.int32)[None, :]
    buckets = _relative_position_bucket(mem - ctx, bidirectional, NUM_BUCKETS, MAX_DISTANCE)
    values = rel_emb[buckets]                      # (q, k, H)
    return jnp.transpose(values, (2, 0, 1))        # (H, q, k)


def shift_right(labels):
    # decoder_start_token_id = 0, pad_token_id = 0
    start = jnp.zeros((labels.shape[0], 1), dtype=labels.dtype)
    shifted = jnp.concatenate([start, labels[:, :-1]], axis=1)
    return jnp.where(shifted == -100, 0, shifted)


def t5_multitask_relation_forward(params, input_ids_gen, input_ids_clf, gen_labels,
                                  clf_labels, gen_attention_mask, clf_attention_mask):
    # Merged encoder: gen rows first, clf rows second (both branches share weights and,
    # in practice, the same padded sequence length).  The clf BCE loss is computed in
    # the same kernel on the final layer step.
    b_gen = input_ids_gen.shape[0]
    ids = jnp.concatenate([input_ids_gen, input_ids_clf], axis=0)
    mask = jnp.concatenate([gen_attention_mask, clf_attention_mask], axis=0)
    enc_all, clf_loss = t5_encoder_with_clf(params, ids, mask, clf_labels, b_gen)
    enc_gen = enc_all[:b_gen]

    # Generation branch: shift labels right, run decoder, fused lm_head + CE loss.
    dec_in = shift_right(gen_labels)
    gen_loss = t5_decoder_with_lm_loss(params, dec_in, enc_gen, gen_attention_mask, gen_labels)

    return gen_loss + clf_loss


# ---------------- deterministic parameter init (stacked, head-major per-layer weights) -----
def init_params(key):
    keys = iter(jax.random.split(key, 64))

    def nrm(shape, scale=0.02):
        return scale * jax.random.normal(next(keys), shape, dtype=jnp.float32)

    shared = nrm((VOCAB, D_MODEL), 1.0)
    L = N_LAYERS
    return {
        'shared': shared,
        'lm_head': shared.T,                                   # tied, stored as (D, V)
        'enc_rel_bias': nrm((NUM_BUCKETS, N_HEADS)),
        'dec_rel_bias': nrm((NUM_BUCKETS, N_HEADS)),
        # encoder stacks (head-major projections -> no lane slicing inside the kernel)
        'enc_ln': jnp.ones((L, 2, D_MODEL), jnp.float32),
        'enc_wq': nrm((L, N_HEADS, D_MODEL, D_KV)),
        'enc_wk': nrm((L, N_HEADS, D_MODEL, D_KV)),
        'enc_wv': nrm((L, N_HEADS, D_MODEL, D_KV)),
        'enc_wo': nrm((L, N_HEADS, D_KV, D_MODEL)),
        'enc_wi': nrm((L, D_MODEL, D_FF)),
        'enc_wff': nrm((L, D_FF, D_MODEL)),
        'enc_final_ln': jnp.ones((1, D_MODEL), jnp.float32),
        # decoder stacks
        'dec_ln': jnp.ones((L, 3, D_MODEL), jnp.float32),
        'dec_swq': nrm((L, N_HEADS, D_MODEL, D_KV)),
        'dec_swk': nrm((L, N_HEADS, D_MODEL, D_KV)),
        'dec_swv': nrm((L, N_HEADS, D_MODEL, D_KV)),
        'dec_swo': nrm((L, N_HEADS, D_KV, D_MODEL)),
        'dec_cwq': nrm((L, N_HEADS, D_MODEL, D_KV)),
        'dec_cwk': nrm((L, N_HEADS, D_MODEL, D_KV)),
        'dec_cwv': nrm((L, N_HEADS, D_MODEL, D_KV)),
        'dec_cwo': nrm((L, N_HEADS, D_KV, D_MODEL)),
        'dec_wi': nrm((L, D_MODEL, D_FF)),
        'dec_wff': nrm((L, D_FF, D_MODEL)),
        'dec_final_ln': jnp.ones((1, D_MODEL), jnp.float32),
        # classification head: nn.Linear(hidden_size, 1)
        'cls_w': nrm((D_MODEL, 1)),
        'cls_b': jnp.zeros((1, 1), jnp.float32),
    }


# ---------------- driver ----------------------------------------------------------------
if __name__ == "__main__":
    key = jax.random.PRNGKey(0)
    pkey, k1, k2, k3 = jax.random.split(key, 4)
    params = init_params(pkey)

    B, S_ENC, S_DEC = 2, 8, 8
    input_ids_gen = jax.random.randint(k1, (B, S_ENC), 0, VOCAB, dtype=jnp.int32)
    input_ids_clf = jax.random.randint(k2, (B, S_ENC), 0, VOCAB, dtype=jnp.int32)
    gen_labels = jax.random.randint(k3, (B, S_DEC), 0, VOCAB, dtype=jnp.int32)
    gen_labels = gen_labels.at[1, -1].set(-100)          # exercise ignore_index
    clf_labels = jnp.array([0.0, 1.0], dtype=jnp.float32)
    gen_attention_mask = jnp.ones((B, S_ENC), jnp.int32).at[1, -2:].set(0)
    clf_attention_mask = jnp.ones((B, S_ENC), jnp.int32).at[0, -1:].set(0)

    loss = jax.jit(t5_multitask_relation_forward)(
        params, input_ids_gen, input_ids_clf, gen_labels,
        clf_labels, gen_attention_mask, clf_attention_mask)
    jax.block_until_ready(loss)
    assert jnp.isfinite(loss), loss
    print("KERNEL_OK")
</pallas_src>

<mosaic_0001>
module attributes {stable_mosaic.version = 11 : i64} {
  func.func @_encoder_kernel(%arg0: i32, %arg1: memref<4x8x32xf32, #tpu.memory_space<vmem>>, %arg2: memref<4x8x8xf32, #tpu.memory_space<vmem>>, %arg3: memref<4x1x8xf32, #tpu.memory_space<vmem>>, %arg4: memref<32x1xf32, #tpu.memory_space<vmem>>, %arg5: memref<1x1xf32, #tpu.memory_space<vmem>>, %arg6: memref<2x1xf32, #tpu.memory_space<vmem>>, %arg7: memref<1x2x32xf32, #tpu.memory_space<vmem>>, %arg8: memref<1x4x32x8xf32, #tpu.memory_space<vmem>>, %arg9: memref<1x4x32x8xf32, #tpu.memory_space<vmem>>, %arg10: memref<1x4x32x8xf32, #tpu.memory_space<vmem>>, %arg11: memref<1x4x8x32xf32, #tpu.memory_space<vmem>>, %arg12: memref<1x32x64xf32, #tpu.memory_space<vmem>>, %arg13: memref<1x64x32xf32, #tpu.memory_space<vmem>>, %arg14: memref<1x32xf32, #tpu.memory_space<vmem>>, %arg15: memref<4x8x32xf32, #tpu.memory_space<vmem>>, %arg16: memref<1x1xf32, #tpu.memory_space<vmem>>) attributes {dimension_semantics = [#tpu.dimension_semantics<arbitrary>], iteration_bounds = array<i64: 2>, scalar_prefetch = 0 : i64, scratch_operands = 0 : i64, tpu.core_type = #tpu.core_type<tc>, window_params = [{pipeline_mode = #tpu.pipeline_mode<synchronous>, transform_indices = @transform_0, window_bounds = array<i64: 4, 8, 32>}, {pipeline_mode = #tpu.pipeline_mode<synchronous>, transform_indices = @transform_1, window_bounds = array<i64: 4, 8, 8>}, {pipeline_mode = #tpu.pipeline_mode<synchronous>, transform_indices = @transform_2, window_bounds = array<i64: 4, 1, 8>}, {pipeline_mode = #tpu.pipeline_mode<synchronous>, transform_indices = @transform_3, window_bounds = array<i64: 32, 1>}, {pipeline_mode = #tpu.pipeline_mode<synchronous>, transform_indices = @transform_4, window_bounds = array<i64: 1, 1>}, {pipeline_mode = #tpu.pipeline_mode<synchronous>, transform_indices = @transform_5, window_bounds = array<i64: 2, 1>}, {transform_indices = @transform_6, window_bounds = array<i64: 1, 2, 32>}, {transform_indices = @transform_7, window_bounds = array<i64: 1, 4, 32, 8>}, {transform_indices = @transform_8, window_bounds = array<i64: 1, 4, 32, 8>}, {transform_indices = @transform_9, window_bounds = array<i64: 1, 4, 32, 8>}, {transform_indices = @transform_10, window_bounds = array<i64: 1, 4, 8, 32>}, {transform_indices = @transform_11, window_bounds = array<i64: 1, 32, 64>}, {transform_indices = @transform_12, window_bounds = array<i64: 1, 64, 32>}, {pipeline_mode = #tpu.pipeline_mode<synchronous>, transform_indices = @transform_13, window_bounds = array<i64: 1, 32>}, {pipeline_mode = #tpu.pipeline_mode<synchronous>, transform_indices = @transform_14, window_bounds = array<i64: 4, 8, 32>}, {pipeline_mode = #tpu.pipeline_mode<synchronous>, transform_indices = @transform_15, window_bounds = array<i64: 1, 1>}]} {
    %c0_i32 = arith.constant 0 : i32
    %0 = arith.cmpi eq, %arg0, %c0_i32 : i32
    %1 = arith.extui %0 : i1 to i32
    %c0_i32_0 = arith.constant 0 : i32
    %2 = arith.cmpi ne, %1, %c0_i32_0 : i32
    scf.if %2 {
      %c0_79 = arith.constant 0 : index
      %c0_80 = arith.constant 0 : index
      %c0_81 = arith.constant 0 : index
      %209 = vector.load %arg1[%c0_79, %c0_80, %c0_81] : memref<4x8x32xf32, #tpu.memory_space<vmem>>, vector<4x8x32xf32>
      %c0_82 = arith.constant 0 : index
      %c0_83 = arith.constant 0 : index
      %c0_84 = arith.constant 0 : index
      %210 = vector.load %arg15[%c0_82, %c0_83, %c0_84] : memref<4x8x32xf32, #tpu.memory_space<vmem>>, vector<4x8x32xf32>
      tpu.vector_store %arg15[%c0_82, %c0_83, %c0_84], %209 {strides = array<i32>} : memref<4x8x32xf32, #tpu.memory_space<vmem>>, vector<4x8x32xf32>,
    } else {
    }
    %c0 = arith.constant 0 : index
    %c0_1 = arith.constant 0 : index
    %c0_2 = arith.constant 0 : index
    %3 = vector.load %arg15[%c0, %c0_1, %c0_2] : memref<4x8x32xf32, #tpu.memory_space<vmem>>, vector<4x8x32xf32>
    %c0_3 = arith.constant 0 : index
    %c0_4 = arith.constant 0 : index
    %c0_5 = arith.constant 0 : index
    %4 = vector.load %arg7[%c0_3, %c0_4, %c0_5] : memref<1x2x32xf32, #tpu.memory_space<vmem>>, vector<1x2x32xf32>
    %5 = vector.shape_cast %4 : vector<1x2x32xf32> to vector<2x32xf32>
    %6 = vector.extract_strided_slice %5 {offsets = [0, 0], sizes = [1, 32], strides = [1, 1]} : vector<2x32xf32> to vector<1x32xf32>
    %7 = vector.shape_cast %6 : vector<1x32xf32> to vector<32xf32>
    %8 = arith.mulf %3, %3 : vector<4x8x32xf32>
    %cst = arith.constant dense<0.000000e+00> : vector<4x8xf32>
    %9 = vector.multi_reduction <add>, %8, %cst [2] : vector<4x8x32xf32> to vector<4x8xf32>
    %10 = vector.shape_cast %9 : vector<4x8xf32> to vector<4x8x1xf32>
    %cst_6 = arith.constant 3.200000e+01 : f32
    %11 = vector.broadcast %cst_6 : f32 to vector<4x8x1xf32>
    %12 = arith.divf %10, %11 : vector<4x8x1xf32>
    %cst_7 = arith.constant 9.99999997E-7 : f32
    %13 = vector.broadcast %cst_7 : f32 to vector<4x8x1xf32>
    %14 = arith.addf %12, %13 : vector<4x8x1xf32>
    %15 = math.rsqrt %14 : vector<4x8x1xf32>
    %16 = vector.broadcast %15 : vector<4x8x1xf32> to vector<4x8x32xf32>
    %17 = arith.mulf %3, %16 : vector<4x8x32xf32>
    %18 = vector.shape_cast %7 : vector<32xf32> to vector<1x1x32xf32>
    %19 = vector.broadcast %18 : vector<1x1x32xf32> to vector<4x8x32xf32>
    %20 = arith.mulf %17, %19 : vector<4x8x32xf32>
    %21 = vector.shape_cast %20 : vector<4x8x32xf32> to vector<32x32xf32>
    %c0_8 = arith.constant 0 : index
    %c0_9 = arith.constant 0 : index
    %c0_10 = arith.constant 0 : index
    %c0_11 = arith.constant 0 : index
    %22 = vector.load %arg8[%c0_8, %c0_9, %c0_10, %c0_11] : memref<1x4x32x8xf32, #tpu.memory_space<vmem>>, vector<1x4x32x8xf32>
    %23 = vector.shape_cast %22 : vector<1x4x32x8xf32> to vector<4x32x8xf32>
    %c0_12 = arith.constant 0 : index
    %c0_13 = arith.constant 0 : index
    %c0_14 = arith.constant 0 : index
    %c0_15 = arith.constant 0 : index
    %24 = vector.load %arg9[%c0_12, %c0_13, %c0_14, %c0_15] : memref<1x4x32x8xf32, #tpu.memory_space<vmem>>, vector<1x4x32x8xf32>
    %25 = vector.shape_cast %24 : vector<1x4x32x8xf32> to vector<4x32x8xf32>
    %c0_16 = arith.constant 0 : index
    %c0_17 = arith.constant 0 : index
    %c0_18 = arith.constant 0 : index
    %c0_19 = arith.constant 0 : index
    %26 = vector.load %arg10[%c0_16, %c0_17, %c0_18, %c0_19] : memref<1x4x32x8xf32, #tpu.memory_space<vmem>>, vector<1x4x32x8xf32>
    %27 = vector.shape_cast %26 : vector<1x4x32x8xf32> to vector<4x32x8xf32>
    %c0_20 = arith.constant 0 : index
    %c0_21 = arith.constant 0 : index
    %c0_22 = arith.constant 0 : index
    %c0_23 = arith.constant 0 : index
    %28 = vector.load %arg11[%c0_20, %c0_21, %c0_22, %c0_23] : memref<1x4x8x32xf32, #tpu.memory_space<vmem>>, vector<1x4x8x32xf32>
    %29 = vector.shape_cast %28 : vector<1x4x8x32xf32> to vector<4x8x32xf32>
    %c0_24 = arith.constant 0 : index
    %c0_25 = arith.constant 0 : index
    %c0_26 = arith.constant 0 : index
    %30 = vector.load %arg2[%c0_24, %c0_25, %c0_26] : memref<4x8x8xf32, #tpu.memory_space<vmem>>, vector<4x8x8xf32>
    %c0_27 = arith.constant 0 : index
    %c0_28 = arith.constant 0 : index
    %c0_29 = arith.constant 0 : index
    %31 = vector.load %arg3[%c0_27, %c0_28, %c0_29] : memref<4x1x8xf32, #tpu.memory_space<vmem>>, vector<4x1x8xf32>
    %cst_30 = arith.constant 0.000000e+00 : f32
    %32 = vector.broadcast %cst_30 : f32 to vector<32x32xf32>
    %33 = vector.extract_strided_slice %23 {offsets = [0, 0, 0], sizes = [1, 32, 8], strides = [1, 1, 1]} : vector<4x32x8xf32> to vector<1x32x8xf32>
    %34 = vector.shape_cast %33 : vector<1x32x8xf32> to vector<32x8xf32>
    %cst_31 = arith.constant dense<0.000000e+00> : vector<32x8xf32>
    %35 = tpu.matmul %21, %34, %cst_31 {dimension_numbers = #tpu.dot_dimension_numbers<[1], [0], [0], [1], [0, 0, 1, 1], [], []>} : vector<32x32xf32>, vector<32x8xf32>, vector<32x8xf32> -> vector<32x8xf32>
    %36 = vector.shape_cast %35 : vector<32x8xf32> to vector<4x8x8xf32>
    %37 = vector.extract_strided_slice %25 {offsets = [0, 0, 0], sizes = [1, 32, 8], strides = [1, 1, 1]} : vector<4x32x8xf32> to vector<1x32x8xf32>
    %38 = vector.shape_cast %37 : vector<1x32x8xf32> to vector<32x8xf32>
    %cst_32 = arith.constant dense<0.000000e+00> : vector<32x8xf32>
    %39 = tpu.matmul %21, %38, %cst_32 {dimension_numbers = #tpu.dot_dimension_numbers<[1], [0], [0], [1], [0, 0, 1, 1], [], []>} : vector<32x32xf32>, vector<32x8xf32>, vector<32x8xf32> -> vector<32x8xf32>
    %40 = vector.shape_cast %39 : vector<32x8xf32> to vector<4x8x8xf32>
    %41 = vector.extract_strided_slice %27 {offsets = [0, 0, 0], sizes = [1, 32, 8], strides = [1, 1, 1]} : vector<4x32x8xf32> to vector<1x32x8xf32>
    %42 = vector.shape_cast %41 : vector<1x32x8xf32> to vector<32x8xf32>
    %cst_33 = arith.constant dense<0.000000e+00> : vector<32x8xf32>
    %43 = tpu.matmul %21, %42, %cst_33 {dimension_numbers = #tpu.dot_dimension_numbers<[1], [0], [0], [1], [0, 0, 1, 1], [], []>} : vector<32x32xf32>, vector<32x8xf32>, vector<32x8xf32> -> vector<32x8xf32>
    %44 = vector.shape_cast %43 : vector<32x8xf32> to vector<4x8x8xf32>
    "tpu.trace_start"() <{level = 10 : i32, message = "bqd,bkd->bqk"}> : () -> ()
    %cst_34 = arith.constant dense<0.000000e+00> : vector<4x8x8xf32>
    %45 = tpu.matmul %36, %40, %cst_34 {dimension_numbers = #tpu.dot_dimension_numbers<[2], [2], [1], [1], [0, 0, 0, 1, 1, 1], [0], [0]>} : vector<4x8x8xf32>, vector<4x8x8xf32>, vector<4x8x8xf32> -> vector<4x8x8xf32>
    "tpu.trace_stop"() : () -> ()
    %46 = vector.extract_strided_slice %30 {offsets = [0, 0, 0], sizes = [1, 8, 8], strides = [1, 1, 1]} : vector<4x8x8xf32> to vector<1x8x8xf32>
    %47 = vector.shape_cast %46 : vector<1x8x8xf32> to vector<8x8xf32>
    %48 = vector.shape_cast %47 : vector<8x8xf32> to vector<1x8x8xf32>
    %49 = vector.broadcast %48 : vector<1x8x8xf32> to vector<4x8x8xf32>
    %50 = arith.addf %45, %49 : vector<4x8x8xf32>
    %51 = vector.broadcast %31 : vector<4x1x8xf32> to vector<4x8x8xf32>
    %52 = arith.addf %50, %51 : vector<4x8x8xf32>
    %cst_35 = arith.constant dense<0xFF800000> : vector<4x8xf32>
    %53 = vector.multi_reduction <maximumf>, %52, %cst_35 [2] : vector<4x8x8xf32> to vector<4x8xf32>
    %54 = vector.shape_cast %53 : vector<4x8xf32> to vector<4x8x1xf32>
    %55 = vector.broadcast %54 : vector<4x8x1xf32> to vector<4x8x8xf32>
    %56 = arith.subf %52, %55 : vector<4x8x8xf32>
    %57 = math.exp %56 : vector<4x8x8xf32>
    %cst_36 = arith.constant dense<0.000000e+00> : vector<4x8xf32>
    %58 = vector.multi_reduction <add>, %57, %cst_36 [2] : vector<4x8x8xf32> to vector<4x8xf32>
    %59 = vector.shape_cast %58 : vector<4x8xf32> to vector<4x8x1xf32>
    %60 = tpu.reciprocal %59 {approx = true} : vector<4x8x1xf32> -> vector<4x8x1xf32>
    %61 = vector.broadcast %60 : vector<4x8x1xf32> to vector<4x8x8xf32>
    %62 = arith.mulf %57, %61 : vector<4x8x8xf32>
    "tpu.trace_start"() <{level = 10 : i32, message = "bqk,bkd->bqd"}> : () -> ()
    %cst_37 = arith.constant dense<0.000000e+00> : vector<4x8x8xf32>
    %63 = tpu.matmul %62, %44, %cst_37 {dimension_numbers = #tpu.dot_dimension_numbers<[2], [1], [1], [2], [0, 0, 0, 1, 1, 2], [0], [0]>} : vector<4x8x8xf32>, vector<4x8x8xf32>, vector<4x8x8xf32> -> vector<4x8x8xf32>
    "tpu.trace_stop"() : () -> ()
    %64 = vector.shape_cast %63 : vector<4x8x8xf32> to vector<32x8xf32>
    %65 = vector.extract_strided_slice %29 {offsets = [0, 0, 0], sizes = [1, 8, 32], strides = [1, 1, 1]} : vector<4x8x32xf32> to vector<1x8x32xf32>
    %66 = vector.shape_cast %65 : vector<1x8x32xf32> to vector<8x32xf32>
    %cst_38 = arith.constant dense<0.000000e+00> : vector<32x32xf32>
    %67 = tpu.matmul %64, %66, %cst_38 {dimension_numbers = #tpu.dot_dimension_numbers<[1], [0], [0], [1], [0, 0, 1, 1], [], []>} : vector<32x8xf32>, vector<8x32xf32>, vector<32x32xf32> -> vector<32x32xf32>
    %68 = arith.addf %32, %67 : vector<32x32xf32>
    %69 = vector.extract_strided_slice %23 {offsets = [1, 0, 0], sizes = [1, 32, 8], strides = [1, 1, 1]} : vector<4x32x8xf32> to vector<1x32x8xf32>
    %70 = vector.shape_cast %69 : vector<1x32x8xf32> to vector<32x8xf32>
    %cst_39 = arith.constant dense<0.000000e+00> : vector<32x8xf32>
    %71 = tpu.matmul %21, %70, %cst_39 {dimension_numbers = #tpu.dot_dimension_numbers<[1], [0], [0], [1], [0, 0, 1, 1], [], []>} : vector<32x32xf32>, vector<32x8xf32>, vector<32x8xf32> -> vector<32x8xf32>
    %72 = vector.shape_cast %71 : vector<32x8xf32> to vector<4x8x8xf32>
    %73 = vector.extract_strided_slice %25 {offsets = [1, 0, 0], sizes = [1, 32, 8], strides = [1, 1, 1]} : vector<4x32x8xf32> to vector<1x32x8xf32>
    %74 = vector.shape_cast %73 : vector<1x32x8xf32> to vector<32x8xf32>
    %cst_40 = arith.constant dense<0.000000e+00> : vector<32x8xf32>
    %75 = tpu.matmul %21, %74, %cst_40 {dimension_numbers = #tpu.dot_dimension_numbers<[1], [0], [0], [1], [0, 0, 1, 1], [], []>} : vector<32x32xf32>, vector<32x8xf32>, vector<32x8xf32> -> vector<32x8xf32>
    %76 = vector.shape_cast %75 : vector<32x8xf32> to vector<4x8x8xf32>
    %77 = vector.extract_strided_slice %27 {offsets = [1, 0, 0], sizes = [1, 32, 8], strides = [1, 1, 1]} : vector<4x32x8xf32> to vector<1x32x8xf32>
    %78 = vector.shape_cast %77 : vector<1x32x8xf32> to vector<32x8xf32>
    %cst_41 = arith.constant dense<0.000000e+00> : vector<32x8xf32>
    %79 = tpu.matmul %21, %78, %cst_41 {dimension_numbers = #tpu.dot_dimension_numbers<[1], [0], [0], [1], [0, 0, 1, 1], [], []>} : vector<32x32xf32>, vector<32x8xf32>, vector<32x8xf32> -> vector<32x8xf32>
    %80 = vector.shape_cast %79 : vector<32x8xf32> to vector<4x8x8xf32>
    "tpu.trace_start"() <{level = 10 : i32, message = "bqd,bkd->bqk"}> : () -> ()
    %cst_42 = arith.constant dense<0.000000e+00> : vector<4x8x8xf32>
    %81 = tpu.matmul %72, %76, %cst_42 {dimension_numbers = #tpu.dot_dimension_numbers<[2], [2], [1], [1], [0, 0, 0, 1, 1, 1], [0], [0]>} : vector<4x8x8xf32>, vector<4x8x8xf32>, vector<4x8x8xf32> -> vector<4x8x8xf32>
    "tpu.trace_stop"() : () -> ()
    %82 = vector.extract_strided_slice %30 {offsets = [1, 0, 0], sizes = [1, 8, 8], strides = [1, 1, 1]} : vector<4x8x8xf32> to vector<1x8x8xf32>
    %83 = vector.shape_cast %82 : vector<1x8x8xf32> to vector<8x8xf32>
    %84 = vector.shape_cast %83 : vector<8x8xf32> to vector<1x8x8xf32>
    %85 = vector.broadcast %84 : vector<1x8x8xf32> to vector<4x8x8xf32>
    %86 = arith.addf %81, %85 : vector<4x8x8xf32>
    %87 = vector.broadcast %31 : vector<4x1x8xf32> to vector<4x8x8xf32>
    %88 = arith.addf %86, %87 : vector<4x8x8xf32>
    %cst_43 = arith.constant dense<0xFF800000> : vector<4x8xf32>
    %89 = vector.multi_reduction <maximumf>, %88, %cst_43 [2] : vector<4x8x8xf32> to vector<4x8xf32>
    %90 = vector.shape_cast %89 : vector<4x8xf32> to vector<4x8x1xf32>
    %91 = vector.broadcast %90 : vector<4x8x1xf32> to vector<4x8x8xf32>
    %92 = arith.subf %88, %91 : vector<4x8x8xf32>
    %93 = math.exp %92 : vector<4x8x8xf32>
    %cst_44 = arith.constant dense<0.000000e+00> : vector<4x8xf32>
    %94 = vector.multi_reduction <add>, %93, %cst_44 [2] : vector<4x8x8xf32> to vector<4x8xf32>
    %95 = vector.shape_cast %94 : vector<4x8xf32> to vector<4x8x1xf32>
    %96 = tpu.reciprocal %95 {approx = true} : vector<4x8x1xf32> -> vector<4x8x1xf32>
    %97 = vector.broadcast %96 : vector<4x8x1xf32> to vector<4x8x8xf32>
    %98 = arith.mulf %93, %97 : vector<4x8x8xf32>
    "tpu.trace_start"() <{level = 10 : i32, message = "bqk,bkd->bqd"}> : () -> ()
    %cst_45 = arith.constant dense<0.000000e+00> : vector<4x8x8xf32>
    %99 = tpu.matmul %98, %80, %cst_45 {dimension_numbers = #tpu.dot_dimension_numbers<[2], [1], [1], [2], [0, 0, 0, 1, 1, 2], [0], [0]>} : vector<4x8x8xf32>, vector<4x8x8xf32>, vector<4x8x8xf32> -> vector<4x8x8xf32>
    "tpu.trace_stop"() : () -> ()
    %100 = vector.shape_cast %99 : vector<4x8x8xf32> to vector<32x8xf32>
    %101 = vector.extract_strided_slice %29 {offsets = [1, 0, 0], sizes = [1, 8, 32], strides = [1, 1, 1]} : vector<4x8x32xf32> to vector<1x8x32xf32>
    %102 = vector.shape_cast %101 : vector<1x8x32xf32> to vector<8x32xf32>
    %cst_46 = arith.constant dense<0.000000e+00> : vector<32x32xf32>
    %103 = tpu.matmul %100, %102, %cst_46 {dimension_numbers = #tpu.dot_dimension_numbers<[1], [0], [0], [1], [0, 0, 1, 1], [], []>} : vector<32x8xf32>, vector<8x32xf32>, vector<32x32xf32> -> vector<32x32xf32>
    %104 = arith.addf %68, %103 : vector<32x32xf32>
    %105 = vector.extract_strided_slice %23 {offsets = [2, 0, 0], sizes = [1, 32, 8], strides = [1, 1, 1]} : vector<4x32x8xf32> to vector<1x32x8xf32>
    %106 = vector.shape_cast %105 : vector<1x32x8xf32> to vector<32x8xf32>
    %cst_47 = arith.constant dense<0.000000e+00> : vector<32x8xf32>
    %107 = tpu.matmul %21, %106, %cst_47 {dimension_numbers = #tpu.dot_dimension_numbers<[1], [0], [0], [1], [0, 0, 1, 1], [], []>} : vector<32x32xf32>, vector<32x8xf32>, vector<32x8xf32> -> vector<32x8xf32>
    %108 = vector.shape_cast %107 : vector<32x8xf32> to vector<4x8x8xf32>
    %109 = vector.extract_strided_slice %25 {offsets = [2, 0, 0], sizes = [1, 32, 8], strides = [1, 1, 1]} : vector<4x32x8xf32> to vector<1x32x8xf32>
    %110 = vector.shape_cast %109 : vector<1x32x8xf32> to vector<32x8xf32>
    %cst_48 = arith.constant dense<0.000000e+00> : vector<32x8xf32>
    %111 = tpu.matmul %21, %110, %cst_48 {dimension_numbers = #tpu.dot_dimension_numbers<[1], [0], [0], [1], [0, 0, 1, 1], [], []>} : vector<32x32xf32>, vector<32x8xf32>, vector<32x8xf32> -> vector<32x8xf32>
    %112 = vector.shape_cast %111 : vector<32x8xf32> to vector<4x8x8xf32>
    %113 = vector.extract_strided_slice %27 {offsets = [2, 0, 0], sizes = [1, 32, 8], strides = [1, 1, 1]} : vector<4x32x8xf32> to vector<1x32x8xf32>
    %114 = vector.shape_cast %113 : vector<1x32x8xf32> to vector<32x8xf32>
    %cst_49 = arith.constant dense<0.000000e+00> : vector<32x8xf32>
    %115 = tpu.matmul %21, %114, %cst_49 {dimension_numbers = #tpu.dot_dimension_numbers<[1], [0], [0], [1], [0, 0, 1, 1], [], []>} : vector<32x32xf32>, vector<32x8xf32>, vector<32x8xf32> -> vector<32x8xf32>
    %116 = vector.shape_cast %115 : vector<32x8xf32> to vector<4x8x8xf32>
    "tpu.trace_start"() <{level = 10 : i32, message = "bqd,bkd->bqk"}> : () -> ()
    %cst_50 = arith.constant dense<0.000000e+00> : vector<4x8x8xf32>
    %117 = tpu.matmul %108, %112, %cst_50 {dimension_numbers = #tpu.dot_dimension_numbers<[2], [2], [1], [1], [0, 0, 0, 1, 1, 1], [0], [0]>} : vector<4x8x8xf32>, vector<4x8x8xf32>, vector<4x8x8xf32> -> vector<4x8x8xf32>
    "tpu.trace_stop"() : () -> ()
    %118 = vector.extract_strided_slice %30 {offsets = [2, 0, 0], sizes = [1, 8, 8], strides = [1, 1, 1]} : vector<4x8x8xf32> to vector<1x8x8xf32>
    %119 = vector.shape_cast %118 : vector<1x8x8xf32> to vector<8x8xf32>
    %120 = vector.shape_cast %119 : vector<8x8xf32> to vector<1x8x8xf32>
    %121 = vector.broadcast %120 : vector<1x8x8xf32> to vector<4x8x8xf32>
    %122 = arith.addf %117, %121 : vector<4x8x8xf32>
    %123 = vector.broadcast %31 : vector<4x1x8xf32> to vector<4x8x8xf32>
    %124 = arith.addf %122, %123 : vector<4x8x8xf32>
    %cst_51 = arith.constant dense<0xFF800000> : vector<4x8xf32>
    %125 = vector.multi_reduction <maximumf>, %124, %cst_51 [2] : vector<4x8x8xf32> to vector<4x8xf32>
    %126 = vector.shape_cast %125 : vector<4x8xf32> to vector<4x8x1xf32>
    %127 = vector.broadcast %126 : vector<4x8x1xf32> to vector<4x8x8xf32>
    %128 = arith.subf %124, %127 : vector<4x8x8xf32>
    %129 = math.exp %128 : vector<4x8x8xf32>
    %cst_52 = arith.constant dense<0.000000e+00> : vector<4x8xf32>
    %130 = vector.multi_reduction <add>, %129, %cst_52 [2] : vector<4x8x8xf32> to vector<4x8xf32>
    %131 = vector.shape_cast %130 : vector<4x8xf32> to vector<4x8x1xf32>
    %132 = tpu.reciprocal %131 {approx = true} : vector<4x8x1xf32> -> vector<4x8x1xf32>
    %133 = vector.broadcast %132 : vector<4x8x1xf32> to vector<4x8x8xf32>
    %134 = arith.mulf %129, %133 : vector<4x8x8xf32>
    "tpu.trace_start"() <{level = 10 : i32, message = "bqk,bkd->bqd"}> : () -> ()
    %cst_53 = arith.constant dense<0.000000e+00> : vector<4x8x8xf32>
    %135 = tpu.matmul %134, %116, %cst_53 {dimension_numbers = #tpu.dot_dimension_numbers<[2], [1], [1], [2], [0, 0, 0, 1, 1, 2], [0], [0]>} : vector<4x8x8xf32>, vector<4x8x8xf32>, vector<4x8x8xf32> -> vector<4x8x8xf32>
    "tpu.trace_stop"() : () -> ()
    %136 = vector.shape_cast %135 : vector<4x8x8xf32> to vector<32x8xf32>
    %137 = vector.extract_strided_slice %29 {offsets = [2, 0, 0], sizes = [1, 8, 32], strides = [1, 1, 1]} : vector<4x8x32xf32> to vector<1x8x32xf32>
    %138 = vector.shape_cast %137 : vector<1x8x32xf32> to vector<8x32xf32>
    %cst_54 = arith.constant dense<0.000000e+00> : vector<32x32xf32>
    %139 = tpu.matmul %136, %138, %cst_54 {dimension_numbers = #tpu.dot_dimension_numbers<[1], [0], [0], [1], [0, 0, 1, 1], [], []>} : vector<32x8xf32>, vector<8x32xf32>, vector<32x32xf32> -> vector<32x32xf32>
    %140 = arith.addf %104, %139 : vector<32x32xf32>
    %141 = vector.extract_strided_slice %23 {offsets = [3, 0, 0], sizes = [1, 32, 8], strides = [1, 1, 1]} : vector<4x32x8xf32> to vector<1x32x8xf32>
    %142 = vector.shape_cast %141 : vector<1x32x8xf32> to vector<32x8xf32>
    %cst_55 = arith.constant dense<0.000000e+00> : vector<32x8xf32>
    %143 = tpu.matmul %21, %142, %cst_55 {dimension_numbers = #tpu.dot_dimension_numbers<[1], [0], [0], [1], [0, 0, 1, 1], [], []>} : vector<32x32xf32>, vector<32x8xf32>, vector<32x8xf32> -> vector<32x8xf32>
    %144 = vector.shape_cast %143 : vector<32x8xf32> to vector<4x8x8xf32>
    %145 = vector.extract_strided_slice %25 {offsets = [3, 0, 0], sizes = [1, 32, 8], strides = [1, 1, 1]} : vector<4x32x8xf32> to vector<1x32x8xf32>
    %146 = vector.shape_cast %145 : vector<1x32x8xf32> to vector<32x8xf32>
    %cst_56 = arith.constant dense<0.000000e+00> : vector<32x8xf32>
    %147 = tpu.matmul %21, %146, %cst_56 {dimension_numbers = #tpu.dot_dimension_numbers<[1], [0], [0], [1], [0, 0, 1, 1], [], []>} : vector<32x32xf32>, vector<32x8xf32>, vector<32x8xf32> -> vector<32x8xf32>
    %148 = vector.shape_cast %147 : vector<32x8xf32> to vector<4x8x8xf32>
    %149 = vector.extract_strided_slice %27 {offsets = [3, 0, 0], sizes = [1, 32, 8], strides = [1, 1, 1]} : vector<4x32x8xf32> to vector<1x32x8xf32>
    %150 = vector.shape_cast %149 : vector<1x32x8xf32> to vector<32x8xf32>
    %cst_57 = arith.constant dense<0.000000e+00> : vector<32x8xf32>
    %151 = tpu.matmul %21, %150, %cst_57 {dimension_numbers = #tpu.dot_dimension_numbers<[1], [0], [0], [1], [0, 0, 1, 1], [], []>} : vector<32x32xf32>, vector<32x8xf32>, vector<32x8xf32> -> vector<32x8xf32>
    %152 = vector.shape_cast %151 : vector<32x8xf32> to vector<4x8x8xf32>
    "tpu.trace_start"() <{level = 10 : i32, message = "bqd,bkd->bqk"}> : () -> ()
    %cst_58 = arith.constant dense<0.000000e+00> : vector<4x8x8xf32>
    %153 = tpu.matmul %144, %148, %cst_58 {dimension_numbers = #tpu.dot_dimension_numbers<[2], [2], [1], [1], [0, 0, 0, 1, 1, 1], [0], [0]>} : vector<4x8x8xf32>, vector<4x8x8xf32>, vector<4x8x8xf32> -> vector<4x8x8xf32>
    "tpu.trace_stop"() : () -> ()
    %154 = vector.extract_strided_slice %30 {offsets = [3, 0, 0], sizes = [1, 8, 8], strides = [1, 1, 1]} : vector<4x8x8xf32> to vector<1x8x8xf32>
    %155 = vector.shape_cast %154 : vector<1x8x8xf32> to vector<8x8xf32>
    %156 = vector.shape_cast %155 : vector<8x8xf32> to vector<1x8x8xf32>
    %157 = vector.broadcast %156 : vector<1x8x8xf32> to vector<4x8x8xf32>
    %158 = arith.addf %153, %157 : vector<4x8x8xf32>
    %159 = vector.broadcast %31 : vector<4x1x8xf32> to vector<4x8x8xf32>
    %160 = arith.addf %158, %159 : vector<4x8x8xf32>
    %cst_59 = arith.constant dense<0xFF800000> : vector<4x8xf32>
    %161 = vector.multi_reduction <maximumf>, %160, %cst_59 [2] : vector<4x8x8xf32> to vector<4x8xf32>
    %162 = vector.shape_cast %161 : vector<4x8xf32> to vector<4x8x1xf32>
    %163 = vector.broadcast %162 : vector<4x8x1xf32> to vector<4x8x8xf32>
    %164 = arith.subf %160, %163 : vector<4x8x8xf32>
    %165 = math.exp %164 : vector<4x8x8xf32>
    %cst_60 = arith.constant dense<0.000000e+00> : vector<4x8xf32>
    %166 = vector.multi_reduction <add>, %165, %cst_60 [2] : vector<4x8x8xf32> to vector<4x8xf32>
    %167 = vector.shape_cast %166 : vector<4x8xf32> to vector<4x8x1xf32>
    %168 = tpu.reciprocal %167 {approx = true} : vector<4x8x1xf32> -> vector<4x8x1xf32>
    %169 = vector.broadcast %168 : vector<4x8x1xf32> to vector<4x8x8xf32>
    %170 = arith.mulf %165, %169 : vector<4x8x8xf32>
    "tpu.trace_start"() <{level = 10 : i32, message = "bqk,bkd->bqd"}> : () -> ()
    %cst_61 = arith.constant dense<0.000000e+00> : vector<4x8x8xf32>
    %171 = tpu.matmul %170, %152, %cst_61 {dimension_numbers = #tpu.dot_dimension_numbers<[2], [1], [1], [2], [0, 0, 0, 1, 1, 2], [0], [0]>} : vector<4x8x8xf32>, vector<4x8x8xf32>, vector<4x8x8xf32> -> vector<4x8x8xf32>
    "tpu.trace_stop"() : () -> ()
    %172 = vector.shape_cast %171 : vector<4x8x8xf32> to vector<32x8xf32>
    %173 = vector.extract_strided_slice %29 {offsets = [3, 0, 0], sizes = [1, 8, 32], strides = [1, 1, 1]} : vector<4x8x32xf32> to vector<1x8x32xf32>
    %174 = vector.shape_cast %173 : vector<1x8x32xf32> to vector<8x32xf32>
    %cst_62 = arith.constant dense<0.000000e+00> : vector<32x32xf32>
    %175 = tpu.matmul %172, %174, %cst_62 {dimension_numbers = #tpu.dot_dimension_numbers<[1], [0], [0], [1], [0, 0, 1, 1], [], []>} : vector<32x8xf32>, vector<8x32xf32>, vector<32x32xf32> -> vector<32x32xf32>
    %176 = arith.addf %140, %175 : vector<32x32xf32>
    %177 = vector.shape_cast %176 : vector<32x32xf32> to vector<4x8x32xf32>
    %178 = arith.addf %3, %177 : vector<4x8x32xf32>
    %179 = vector.extract_strided_slice %5 {offsets = [1, 0], sizes = [1, 32], strides = [1, 1]} : vector<2x32xf32> to vector<1x32xf32>
    %180 = vector.shape_cast %179 : vector<1x32xf32> to vector<32xf32>
    %181 = arith.mulf %178, %178 : vector<4x8x32xf32>
    %cst_63 = arith.constant dense<0.000000e+00> : vector<4x8xf32>
    %182 = vector.multi_reduction <add>, %181, %cst_63 [2] : vector<4x8x32xf32> to vector<4x8xf32>
    %183 = vector.shape_cast %182 : vector<4x8xf32> to vector<4x8x1xf32>
    %cst_64 = arith.constant 3.200000e+01 : f32
    %184 = vector.broadcast %cst_64 : f32 to vector<4x8x1xf32>
    %185 = arith.divf %183, %184 : vector<4x8x1xf32>
    %cst_65 = arith.constant 9.99999997E-7 : f32
    %186 = vector.broadcast %cst_65 : f32 to vector<4x8x1xf32>
    %187 = arith.addf %185, %186 : vector<4x8x1xf32>
    %188 = math.rsqrt %187 : vector<4x8x1xf32>
    %189 = vector.broadcast %188 : vector<4x8x1xf32> to vector<4x8x32xf32>
    %190 = arith.mulf %178, %189 : vector<4x8x32xf32>
    %191 = vector.shape_cast %180 : vector<32xf32> to vector<1x1x32xf32>
    %192 = vector.broadcast %191 : vector<1x1x32xf32> to vector<4x8x32xf32>
    %193 = arith.mulf %190, %192 : vector<4x8x32xf32>
    %194 = vector.shape_cast %193 : vector<4x8x32xf32> to vector<32x32xf32>
    %c0_66 = arith.constant 0 : index
    %c0_67 = arith.constant 0 : index
    %c0_68 = arith.constant 0 : index
    %195 = vector.load %arg12[%c0_66, %c0_67, %c0_68] : memref<1x32x64xf32, #tpu.memory_space<vmem>>, vector<1x32x64xf32>
    %196 = vector.shape_cast %195 : vector<1x32x64xf32> to vector<32x64xf32>
    %cst_69 = arith.constant dense<0.000000e+00> : vector<32x64xf32>
    %197 = tpu.matmul %194, %196, %cst_69 {dimension_numbers = #tpu.dot_dimension_numbers<[1], [0], [0], [1], [0, 0, 1, 1], [], []>} : vector<32x32xf32>, vector<32x64xf32>, vector<32x64xf32> -> vector<32x64xf32>
    %cst_70 = arith.constant 0.000000e+00 : f32
    %198 = vector.broadcast %cst_70 : f32 to vector<32x64xf32>
    %199 = arith.maximumf %197, %198 : vector<32x64xf32>
    %c0_71 = arith.constant 0 : index
    %c0_72 = arith.constant 0 : index
    %c0_73 = arith.constant 0 : index
    %200 = vector.load %arg13[%c0_71, %c0_72, %c0_73] : memref<1x64x32xf32, #tpu.memory_space<vmem>>, vector<1x64x32xf32>
    %201 = vector.shape_cast %200 : vector<1x64x32xf32> to vector<64x32xf32>
    %cst_74 = arith.constant dense<0.000000e+00> : vector<32x32xf32>
    %202 = tpu.matmul %199, %201, %cst_74 {dimension_numbers = #tpu.dot_dimension_numbers<[1], [0], [0], [1], [0, 0, 1, 1], [], []>} : vector<32x64xf32>, vector<64x32xf32>, vector<32x32xf32> -> vector<32x32xf32>
    %203 = vector.shape_cast %202 : vector<32x32xf32> to vector<4x8x32xf32>
    %204 = arith.addf %178, %203 : vector<4x8x32xf32>
    %c0_75 = arith.constant 0 : index
    %c0_76 = arith.constant 0 : index
    %c0_77 = arith.constant 0 : index
    %205 = vector.load %arg15[%c0_75, %c0_76, %c0_77] : memref<4x8x32xf32, #tpu.memory_space<vmem>>, vector<4x8x32xf32>
    tpu.vector_store %arg15[%c0_75, %c0_76, %c0_77], %204 {strides = array<i32>} : memref<4x8x32xf32, #tpu.memory_space<vmem>>, vector<4x8x32xf32>,
    %c1_i32 = arith.constant 1 : i32
    %206 = arith.cmpi eq, %arg0, %c1_i32 : i32
    %207 = arith.extui %206 : i1 to i32
    %c0_i32_78 = arith.constant 0 : i32
    %208 = arith.cmpi ne, %207, %c0_i32_78 : i32
    scf.if %208 {
      %c0_79 = arith.constant 0 : index
      %c0_80 = arith.constant 0 : index
      %209 = vector.load %arg14[%c0_79, %c0_80] : memref<1x32xf32, #tpu.memory_space<vmem>>, vector<1x32xf32>
      %210 = vector.shape_cast %209 : vector<1x32xf32> to vector<32xf32>
      %211 = arith.mulf %204, %204 : vector<4x8x32xf32>
      %cst_81 = arith.constant dense<0.000000e+00> : vector<4x8xf32>
      %212 = vector.multi_reduction <add>, %211, %cst_81 [2] : vector<4x8x32xf32> to vector<4x8xf32>
      %213 = vector.shape_cast %212 : vector<4x8xf32> to vector<4x8x1xf32>
      %cst_82 = arith.constant 3.200000e+01 : f32
      %214 = vector.broadcast %cst_82 : f32 to vector<4x8x1xf32>
      %215 = arith.divf %213, %214 : vector<4x8x1xf32>
      %cst_83 = arith.constant 9.99999997E-7 : f32
      %216 = vector.broadcast %cst_83 : f32 to vector<4x8x1xf32>
      %217 = arith.addf %215, %216 : vector<4x8x1xf32>
      %218 = math.rsqrt %217 : vector<4x8x1xf32>
      %219 = vector.broadcast %218 : vector<4x8x1xf32> to vector<4x8x32xf32>
      %220 = arith.mulf %204, %219 : vector<4x8x32xf32>
      %221 = vector.shape_cast %210 : vector<32xf32> to vector<1x1x32xf32>
      %222 = vector.broadcast %221 : vector<1x1x32xf32> to vector<4x8x32xf32>
      %223 = arith.mulf %220, %222 : vector<4x8x32xf32>
      %c0_84 = arith.constant 0 : index
      %c0_85 = arith.constant 0 : index
      %c0_86 = arith.constant 0 : index
      %224 = vector.load %arg15[%c0_84, %c0_85, %c0_86] : memref<4x8x32xf32, #tpu.memory_space<vmem>>, vector<4x8x32xf32>
      tpu.vector_store %arg15[%c0_84, %c0_85, %c0_86], %223 {strides = array<i32>} : memref<4x8x32xf32, #tpu.memory_space<vmem>>, vector<4x8x32xf32>,
      %225 = vector.extract_strided_slice %223 {offsets = [2, 0, 0], sizes = [2, 8, 32], strides = [1, 1, 1]} : vector<4x8x32xf32> to vector<2x8x32xf32>
      %cst_87 = arith.constant dense<0.000000e+00> : vector<2x32xf32>
      %226 = vector.multi_reduction <add>, %225, %cst_87 [1] : vector<2x8x32xf32> to vector<2x32xf32>
      %cst_88 = arith.constant 8.000000e+00 : f32
      %227 = vector.broadcast %cst_88 : f32 to vector<2x32xf32>
      %228 = arith.divf %226, %227 : vector<2x32xf32>
      %c0_89 = arith.constant 0 : index
      %c0_90 = arith.constant 0 : index
      %229 = vector.load %arg4[%c0_89, %c0_90] : memref<32x1xf32, #tpu.memory_space<vmem>>, vector<32x1xf32>
      %cst_91 = arith.constant dense<0.000000e+00> : vector<2x1xf32>
      %230 = tpu.matmul %228, %229, %cst_91 {dimension_numbers = #tpu.dot_dimension_numbers<[1], [0], [0], [1], [0, 0, 1, 1], [], []>} : vector<2x32xf32>, vector<32x1xf32>, vector<2x1xf32> -> vector<2x1xf32>
      %c0_92 = arith.constant 0 : index
      %c0_93 = arith.constant 0 : index
      %231 = vector.load %arg5[%c0_92, %c0_93] : memref<1x1xf32, #tpu.memory_space<vmem>>, vector<1x1xf32>
      %232 = vector.broadcast %231 : vector<1x1xf32> to vector<2x1xf32>
      %233 = arith.addf %230, %232 : vector<2x1xf32>
      %c0_94 = arith.constant 0 : index
      %c0_95 = arith.constant 0 : index
      %234 = vector.load %arg6[%c0_94, %c0_95] : memref<2x1xf32, #tpu.memory_space<vmem>>, vector<2x1xf32>
      %cst_96 = arith.constant 0.000000e+00 : f32
      %235 = vector.broadcast %cst_96 : f32 to vector<2x1xf32>
      %236 = arith.maximumf %233, %235 : vector<2x1xf32>
      %237 = arith.mulf %233, %234 : vector<2x1xf32>
      %238 = arith.subf %236, %237 : vector<2x1xf32>
      %239 = math.absf %233 : vector<2x1xf32>
      %cst_97 = arith.constant 0.000000e+00 : f32
      %240 = vector.broadcast %cst_97 : f32 to vector<2x1xf32>
      %241 = arith.subf %240, %239 : vector<2x1xf32>
      %242 = math.exp %241 : vector<2x1xf32>
      %cst_98 = arith.constant 1.000000e+00 : f32
      %243 = vector.broadcast %cst_98 : f32 to vector<2x1xf32>
      %244 = arith.addf %243, %242 : vector<2x1xf32>
      %245 = math.log %244 : vector<2x1xf32>
      %246 = arith.addf %238, %245 : vector<2x1xf32>
      %cst_99 = arith.constant dense<0.000000e+00> : vector<1xf32>
      %247 = vector.multi_reduction <add>, %246, %cst_99 [0] : vector<2x1xf32> to vector<1xf32>
      %248 = vector.shape_cast %247 : vector<1xf32> to vector<1x1xf32>
      %cst_100 = arith.constant 2.000000e+00 : f32
      %249 = vector.broadcast %cst_100 : f32 to vector<1x1xf32>
      %250 = arith.divf %248, %249 : vector<1x1xf32>
      %c0_101 = arith.constant 0 : index
      %c0_102 = arith.constant 0 : index
      %251 = vector.load %arg16[%c0_101, %c0_102] : memref<1x1xf32, #tpu.memory_space<vmem>>, vector<1x1xf32>
      tpu.vector_store %arg16[%c0_101, %c0_102], %250 {strides = array<i32>} : memref<1x1xf32, #tpu.memory_space<vmem>>, vector<1x1xf32>,
    } else {
    }
    return
  }
  func.func @transform_0(%arg0: i32) -> (i32, i32, i32) {
    %c0_i32 = arith.constant 0 : i32
    %c0_i32_0 = arith.constant 0 : i32
    %c0_i32_1 = arith.constant 0 : i32
    %c0_i32_2 = arith.constant 0 : i32
    return %c0_i32, %c0_i32_0, %c0_i32_1 : i32, i32, i32
  }
  func.func @transform_1(%arg0: i32) -> (i32, i32, i32) {
    %c0_i32 = arith.constant 0 : i32
    %c0_i32_0 = arith.constant 0 : i32
    %c0_i32_1 = arith.constant 0 : i32
    %c0_i32_2 = arith.constant 0 : i32
    return %c0_i32, %c0_i32_0, %c0_i32_1 : i32, i32, i32
  }
  func.func @transform_2(%arg0: i32) -> (i32, i32, i32) {
    %c0_i32 = arith.constant 0 : i32
    %c0_i32_0 = arith.constant 0 : i32
    %c0_i32_1 = arith.constant 0 : i32
    %c0_i32_2 = arith.constant 0 : i32
    return %c0_i32, %c0_i32_0, %c0_i32_1 : i32, i32, i32
  }
  func.func @transform_3(%arg0: i32) -> (i32, i32) {
    %c0_i32 = arith.constant 0 : i32
    %c0_i32_0 = arith.constant 0 : i32
    %c0_i32_1 = arith.constant 0 : i32
    return %c0_i32, %c0_i32_0 : i32, i32
  }
  func.func @transform_4(%arg0: i32) -> (i32, i32) {
    %c0_i32 = arith.constant 0 : i32
    %c0_i32_0 = arith.constant 0 : i32
    %c0_i32_1 = arith.constant 0 : i32
    return %c0_i32, %c0_i32_0 : i32, i32
  }
  func.func @transform_5(%arg0: i32) -> (i32, i32) {
    %c0_i32 = arith.constant 0 : i32
    %c0_i32_0 = arith.constant 0 : i32
    %c0_i32_1 = arith.constant 0 : i32
    return %c0_i32, %c0_i32_0 : i32, i32
  }
  func.func @transform_6(%arg0: i32) -> (i32, i32, i32) {
    %c0_i32 = arith.constant 0 : i32
    %c0_i32_0 = arith.constant 0 : i32
    %c0_i32_1 = arith.constant 0 : i32
    return %arg0, %c0_i32, %c0_i32_0 : i32, i32, i32
  }
  func.func @transform_7(%arg0: i32) -> (i32, i32, i32, i32) {
    %c0_i32 = arith.constant 0 : i32
    %c0_i32_0 = arith.constant 0 : i32
    %c0_i32_1 = arith.constant 0 : i32
    %c0_i32_2 = arith.constant 0 : i32
    return %arg0, %c0_i32, %c0_i32_0, %c0_i32_1 : i32, i32, i32, i32
  }
  func.func @transform_8(%arg0: i32) -> (i32, i32, i32, i32) {
    %c0_i32 = arith.constant 0 : i32
    %c0_i32_0 = arith.constant 0 : i32
    %c0_i32_1 = arith.constant 0 : i32
    %c0_i32_2 = arith.constant 0 : i32
    return %arg0, %c0_i32, %c0_i32_0, %c0_i32_1 : i32, i32, i32, i32
  }
  func.func @transform_9(%arg0: i32) -> (i32, i32, i32, i32) {
    %c0_i32 = arith.constant 0 : i32
    %c0_i32_0 = arith.constant 0 : i32
    %c0_i32_1 = arith.constant 0 : i32
    %c0_i32_2 = arith.constant 0 : i32
    return %arg0, %c0_i32, %c0_i32_0, %c0_i32_1 : i32, i32, i32, i32
  }
  func.func @transform_10(%arg0: i32) -> (i32, i32, i32, i32) {
    %c0_i32 = arith.constant 0 : i32
    %c0_i32_0 = arith.constant 0 : i32
    %c0_i32_1 = arith.constant 0 : i32
    %c0_i32_2 = arith.constant 0 : i32
    return %arg0, %c0_i32, %c0_i32_0, %c0_i32_1 : i32, i32, i32, i32
  }
  func.func @transform_11(%arg0: i32) -> (i32, i32, i32) {
    %c0_i32 = arith.constant 0 : i32
    %c0_i32_0 = arith.constant 0 : i32
    %c0_i32_1 = arith.constant 0 : i32
    return %arg0, %c0_i32, %c0_i32_0 : i32, i32, i32
  }
  func.func @transform_12(%arg0: i32) -> (i32, i32, i32) {
    %c0_i32 = arith.constant 0 : i32
    %c0_i32_0 = arith.constant 0 : i32
    %c0_i32_1 = arith.constant 0 : i32
    return %arg0, %c0_i32, %c0_i32_0 : i32, i32, i32
  }
  func.func @transform_13(%arg0: i32) -> (i32, i32) {
    %c0_i32 = arith.constant 0 : i32
    %c0_i32_0 = arith.constant 0 : i32
    %c0_i32_1 = arith.constant 0 : i32
    return %c0_i32, %c0_i32_0 : i32, i32
  }
  func.func @transform_14(%arg0: i32) -> (i32, i32, i32) {
    %c0_i32 = arith.constant 0 : i32
    %c0_i32_0 = arith.constant 0 : i32
    %c0_i32_1 = arith.constant 0 : i32
    %c0_i32_2 = arith.constant 0 : i32
    return %c0_i32, %c0_i32_0, %c0_i32_1 : i32, i32, i32
  }
  func.func @transform_15(%arg0: i32) -> (i32, i32) {
    %c0_i32 = arith.constant 0 : i32
    %c0_i32_0 = arith.constant 0 : i32
    %c0_i32_1 = arith.constant 0 : i32
    return %c0_i32, %c0_i32_0 : i32, i32
  }
}

module attributes {stable_mosaic.version = 11 : i64} {
  func.func @_decoder_kernel(%arg0: i32, %arg1: memref<2x8x32xf32, #tpu.memory_space<vmem>>, %arg2: memref<4x8x8xf32, #tpu.memory_space<vmem>>, %arg3: memref<2x8x32xf32, #tpu.memory_space<vmem>>, %arg4: memref<2x1x8xf32, #tpu.memory_space<vmem>>, %arg5: memref<32x64xf32, #tpu.memory_space<vmem>>, %arg6: memref<16x1xi32, #tpu.memory_space<vmem>>, %arg7: memref<1x3x32xf32, #tpu.memory_space<vmem>>, %arg8: memref<1x4x32x8xf32, #tpu.memory_space<vmem>>, %arg9: memref<1x4x32x8xf32, #tpu.memory_space<vmem>>, %arg10: memref<1x4x32x8xf32, #tpu.memory_space<vmem>>, %arg11: memref<1x4x8x32xf32, #tpu.memory_space<vmem>>, %arg12: memref<1x4x32x8xf32, #tpu.memory_space<vmem>>, %arg13: memref<1x4x32x8xf32, #tpu.memory_space<vmem>>, %arg14: memref<1x4x32x8xf32, #tpu.memory_space<vmem>>, %arg15: memref<1x4x8x32xf32, #tpu.memory_space<vmem>>, %arg16: memref<1x32x64xf32, #tpu.memory_space<vmem>>, %arg17: memref<1x64x32xf32, #tpu.memory_space<vmem>>, %arg18: memref<1x32xf32, #tpu.memory_space<vmem>>, %arg19: memref<2x8x32xf32, #tpu.memory_space<vmem>>, %arg20: memref<1x1xf32, #tpu.memory_space<vmem>>) attributes {dimension_semantics = [#tpu.dimension_semantics<arbitrary>], iteration_bounds = array<i64: 2>, scalar_prefetch = 0 : i64, scratch_operands = 0 : i64, tpu.core_type = #tpu.core_type<tc>, window_params = [{pipeline_mode = #tpu.pipeline_mode<synchronous>, transform_indices = @transform_0, window_bounds = array<i64: 2, 8, 32>}, {pipeline_mode = #tpu.pipeline_mode<synchronous>, transform_indices = @transform_1, window_bounds = array<i64: 4, 8, 8>}, {pipeline_mode = #tpu.pipeline_mode<synchronous>, transform_indices = @transform_2, window_bounds = array<i64: 2, 8, 32>}, {pipeline_mode = #tpu.pipeline_mode<synchronous>, transform_indices = @transform_3, window_bounds = array<i64: 2, 1, 8>}, {pipeline_mode = #tpu.pipeline_mode<synchronous>, transform_indices = @transform_4, window_bounds = array<i64: 32, 64>}, {pipeline_mode = #tpu.pipeline_mode<synchronous>, transform_indices = @transform_5, window_bounds = array<i64: 16, 1>}, {transform_indices = @transform_6, window_bounds = array<i64: 1, 3, 32>}, {transform_indices = @transform_7, window_bounds = array<i64: 1, 4, 32, 8>}, {transform_indices = @transform_8, window_bounds = array<i64: 1, 4, 32, 8>}, {transform_indices = @transform_9, window_bounds = array<i64: 1, 4, 32, 8>}, {transform_indices = @transform_10, window_bounds = array<i64: 1, 4, 8, 32>}, {transform_indices = @transform_11, window_bounds = array<i64: 1, 4, 32, 8>}, {transform_indices = @transform_12, window_bounds = array<i64: 1, 4, 32, 8>}, {transform_indices = @transform_13, window_bounds = array<i64: 1, 4, 32, 8>}, {transform_indices = @transform_14, window_bounds = array<i64: 1, 4, 8, 32>}, {transform_indices = @transform_15, window_bounds = array<i64: 1, 32, 64>}, {transform_indices = @transform_16, window_bounds = array<i64: 1, 64, 32>}, {pipeline_mode = #tpu.pipeline_mode<synchronous>, transform_indices = @transform_17, window_bounds = array<i64: 1, 32>}, {pipeline_mode = #tpu.pipeline_mode<synchronous>, transform_indices = @transform_18, window_bounds = array<i64: 2, 8, 32>}, {pipeline_mode = #tpu.pipeline_mode<synchronous>, transform_indices = @transform_19, window_bounds = array<i64: 1, 1>}]} {
    %c0_i32 = arith.constant 0 : i32
    %0 = arith.cmpi eq, %arg0, %c0_i32 : i32
    %1 = arith.extui %0 : i1 to i32
    %c0_i32_0 = arith.constant 0 : i32
    %2 = arith.cmpi ne, %1, %c0_i32_0 : i32
    scf.if %2 {
      %c0_134 = arith.constant 0 : index
      %c0_135 = arith.constant 0 : index
      %c0_136 = arith.constant 0 : index
      %354 = vector.load %arg1[%c0_134, %c0_135, %c0_136] : memref<2x8x32xf32, #tpu.memory_space<vmem>>, vector<2x8x32xf32>
      %c0_137 = arith.constant 0 : index
      %c0_138 = arith.constant 0 : index
      %c0_139 = arith.constant 0 : index
      %355 = vector.load %arg19[%c0_137, %c0_138, %c0_139] : memref<2x8x32xf32, #tpu.memory_space<vmem>>, vector<2x8x32xf32>
      tpu.vector_store %arg19[%c0_137, %c0_138, %c0_139], %354 {strides = array<i32>} : memref<2x8x32xf32, #tpu.memory_space<vmem>>, vector<2x8x32xf32>,
    } else {
    }
    %c0 = arith.constant 0 : index
    %c0_1 = arith.constant 0 : index
    %c0_2 = arith.constant 0 : index
    %3 = vector.load %arg19[%c0, %c0_1, %c0_2] : memref<2x8x32xf32, #tpu.memory_space<vmem>>, vector<2x8x32xf32>
    %c0_3 = arith.constant 0 : index
    %c0_4 = arith.constant 0 : index
    %c0_5 = arith.constant 0 : index
    %4 = vector.load %arg3[%c0_3, %c0_4, %c0_5] : memref<2x8x32xf32, #tpu.memory_space<vmem>>, vector<2x8x32xf32>
    %c0_6 = arith.constant 0 : index
    %c0_7 = arith.constant 0 : index
    %c0_8 = arith.constant 0 : index
    %5 = vector.load %arg7[%c0_6, %c0_7, %c0_8] : memref<1x3x32xf32, #tpu.memory_space<vmem>>, vector<1x3x32xf32>
    %6 = vector.shape_cast %5 : vector<1x3x32xf32> to vector<3x32xf32>
    %7 = vector.extract_strided_slice %6 {offsets = [0, 0], sizes = [1, 32], strides = [1, 1]} : vector<3x32xf32> to vector<1x32xf32>
    %8 = vector.shape_cast %7 : vector<1x32xf32> to vector<32xf32>
    %9 = arith.mulf %3, %3 : vector<2x8x32xf32>
    %cst = arith.constant dense<0.000000e+00> : vector<2x8xf32>
    %10 = vector.multi_reduction <add>, %9, %cst [2] : vector<2x8x32xf32> to vector<2x8xf32>
    %11 = vector.shape_cast %10 : vector<2x8xf32> to vector<2x8x1xf32>
    %cst_9 = arith.constant 3.200000e+01 : f32
    %12 = vector.broadcast %cst_9 : f32 to vector<2x8x1xf32>
    %13 = arith.divf %11, %12 : vector<2x8x1xf32>
    %cst_10 = arith.constant 9.99999997E-7 : f32
    %14 = vector.broadcast %cst_10 : f32 to vector<2x8x1xf32>
    %15 = arith.addf %13, %14 : vector<2x8x1xf32>
    %16 = math.rsqrt %15 : vector<2x8x1xf32>
    %17 = vector.broadcast %16 : vector<2x8x1xf32> to vector<2x8x32xf32>
    %18 = arith.mulf %3, %17 : vector<2x8x32xf32>
    %19 = vector.shape_cast %8 : vector<32xf32> to vector<1x1x32xf32>
    %20 = vector.broadcast %19 : vector<1x1x32xf32> to vector<2x8x32xf32>
    %21 = arith.mulf %18, %20 : vector<2x8x32xf32>
    %22 = vector.shape_cast %21 : vector<2x8x32xf32> to vector<16x32xf32>
    %c0_11 = arith.constant 0 : index
    %c0_12 = arith.constant 0 : index
    %c0_13 = arith.constant 0 : index
    %c0_14 = arith.constant 0 : index
    %23 = vector.load %arg8[%c0_11, %c0_12, %c0_13, %c0_14] : memref<1x4x32x8xf32, #tpu.memory_space<vmem>>, vector<1x4x32x8xf32>
    %24 = vector.shape_cast %23 : vector<1x4x32x8xf32> to vector<4x32x8xf32>
    %c0_15 = arith.constant 0 : index
    %c0_16 = arith.constant 0 : index
    %c0_17 = arith.constant 0 : index
    %c0_18 = arith.constant 0 : index
    %25 = vector.load %arg9[%c0_15, %c0_16, %c0_17, %c0_18] : memref<1x4x32x8xf32, #tpu.memory_space<vmem>>, vector<1x4x32x8xf32>
    %26 = vector.shape_cast %25 : vector<1x4x32x8xf32> to vector<4x32x8xf32>
    %c0_19 = arith.constant 0 : index
    %c0_20 = arith.constant 0 : index
    %c0_21 = arith.constant 0 : index
    %c0_22 = arith.constant 0 : index
    %27 = vector.load %arg10[%c0_19, %c0_20, %c0_21, %c0_22] : memref<1x4x32x8xf32, #tpu.memory_space<vmem>>, vector<1x4x32x8xf32>
    %28 = vector.shape_cast %27 : vector<1x4x32x8xf32> to vector<4x32x8xf32>
    %c0_23 = arith.constant 0 : index
    %c0_24 = arith.constant 0 : index
    %c0_25 = arith.constant 0 : index
    %c0_26 = arith.constant 0 : index
    %29 = vector.load %arg11[%c0_23, %c0_24, %c0_25, %c0_26] : memref<1x4x8x32xf32, #tpu.memory_space<vmem>>, vector<1x4x8x32xf32>
    %30 = vector.shape_cast %29 : vector<1x4x8x32xf32> to vector<4x8x32xf32>
    %c0_27 = arith.constant 0 : index
    %c0_28 = arith.constant 0 : index
    %c0_29 = arith.constant 0 : index
    %31 = vector.load %arg2[%c0_27, %c0_28, %c0_29] : memref<4x8x8xf32, #tpu.memory_space<vmem>>, vector<4x8x8xf32>
    %cst_30 = arith.constant 0.000000e+00 : f32
    %32 = vector.broadcast %cst_30 : f32 to vector<16x32xf32>
    %33 = vector.extract_strided_slice %24 {offsets = [0, 0, 0], sizes = [1, 32, 8], strides = [1, 1, 1]} : vector<4x32x8xf32> to vector<1x32x8xf32>
    %34 = vector.shape_cast %33 : vector<1x32x8xf32> to vector<32x8xf32>
    %cst_31 = arith.constant dense<0.000000e+00> : vector<16x8xf32>
    %35 = tpu.matmul %22, %34, %cst_31 {dimension_numbers = #tpu.dot_dimension_numbers<[1], [0], [0], [1], [0, 0, 1, 1], [], []>} : vector<16x32xf32>, vector<32x8xf32>, vector<16x8xf32> -> vector<16x8xf32>
    %36 = vector.shape_cast %35 : vector<16x8xf32> to vector<2x8x8xf32>
    %37 = vector.extract_strided_slice %26 {offsets = [0, 0, 0], sizes = [1, 32, 8], strides = [1, 1, 1]} : vector<4x32x8xf32> to vector<1x32x8xf32>
    %38 = vector.shape_cast %37 : vector<1x32x8xf32> to vector<32x8xf32>
    %cst_32 = arith.constant dense<0.000000e+00> : vector<16x8xf32>
    %39 = tpu.matmul %22, %38, %cst_32 {dimension_numbers = #tpu.dot_dimension_numbers<[1], [0], [0], [1], [0, 0, 1, 1], [], []>} : vector<16x32xf32>, vector<32x8xf32>, vector<16x8xf32> -> vector<16x8xf32>
    %40 = vector.shape_cast %39 : vector<16x8xf32> to vector<2x8x8xf32>
    %41 = vector.extract_strided_slice %28 {offsets = [0, 0, 0], sizes = [1, 32, 8], strides = [1, 1, 1]} : vector<4x32x8xf32> to vector<1x32x8xf32>
    %42 = vector.shape_cast %41 : vector<1x32x8xf32> to vector<32x8xf32>
    %cst_33 = arith.constant dense<0.000000e+00> : vector<16x8xf32>
    %43 = tpu.matmul %22, %42, %cst_33 {dimension_numbers = #tpu.dot_dimension_numbers<[1], [0], [0], [1], [0, 0, 1, 1], [], []>} : vector<16x32xf32>, vector<32x8xf32>, vector<16x8xf32> -> vector<16x8xf32>
    %44 = vector.shape_cast %43 : vector<16x8xf32> to vector<2x8x8xf32>
    "tpu.trace_start"() <{level = 10 : i32, message = "bqd,bkd->bqk"}> : () -> ()
    %cst_34 = arith.constant dense<0.000000e+00> : vector<2x8x8xf32>
    %45 = tpu.matmul %36, %40, %cst_34 {dimension_numbers = #tpu.dot_dimension_numbers<[2], [2], [1], [1], [0, 0, 0, 1, 1, 1], [0], [0]>} : vector<2x8x8xf32>, vector<2x8x8xf32>, vector<2x8x8xf32> -> vector<2x8x8xf32>
    "tpu.trace_stop"() : () -> ()
    %46 = vector.extract_strided_slice %31 {offsets = [0, 0, 0], sizes = [1, 8, 8], strides = [1, 1, 1]} : vector<4x8x8xf32> to vector<1x8x8xf32>
    %47 = vector.shape_cast %46 : vector<1x8x8xf32> to vector<8x8xf32>
    %48 = vector.shape_cast %47 : vector<8x8xf32> to vector<1x8x8xf32>
    %49 = vector.broadcast %48 : vector<1x8x8xf32> to vector<2x8x8xf32>
    %50 = arith.addf %45, %49 : vector<2x8x8xf32>
    %cst_35 = arith.constant dense<0xFF800000> : vector<2x8xf32>
    %51 = vector.multi_reduction <maximumf>, %50, %cst_35 [2] : vector<2x8x8xf32> to vector<2x8xf32>
    %52 = vector.shape_cast %51 : vector<2x8xf32> to vector<2x8x1xf32>
    %53 = vector.broadcast %52 : vector<2x8x1xf32> to vector<2x8x8xf32>
    %54 = arith.subf %50, %53 : vector<2x8x8xf32>
    %55 = math.exp %54 : vector<2x8x8xf32>
    %cst_36 = arith.constant dense<0.000000e+00> : vector<2x8xf32>
    %56 = vector.multi_reduction <add>, %55, %cst_36 [2] : vector<2x8x8xf32> to vector<2x8xf32>
    %57 = vector.shape_cast %56 : vector<2x8xf32> to vector<2x8x1xf32>
    %58 = tpu.reciprocal %57 {approx = true} : vector<2x8x1xf32> -> vector<2x8x1xf32>
    %59 = vector.broadcast %58 : vector<2x8x1xf32> to vector<2x8x8xf32>
    %60 = arith.mulf %55, %59 : vector<2x8x8xf32>
    "tpu.trace_start"() <{level = 10 : i32, message = "bqk,bkd->bqd"}> : () -> ()
    %cst_37 = arith.constant dense<0.000000e+00> : vector<2x8x8xf32>
    %61 = tpu.matmul %60, %44, %cst_37 {dimension_numbers = #tpu.dot_dimension_numbers<[2], [1], [1], [2], [0, 0, 0, 1, 1, 2], [0], [0]>} : vector<2x8x8xf32>, vector<2x8x8xf32>, vector<2x8x8xf32> -> vector<2x8x8xf32>
    "tpu.trace_stop"() : () -> ()
    %62 = vector.shape_cast %61 : vector<2x8x8xf32> to vector<16x8xf32>
    %63 = vector.extract_strided_slice %30 {offsets = [0, 0, 0], sizes = [1, 8, 32], strides = [1, 1, 1]} : vector<4x8x32xf32> to vector<1x8x32xf32>
    %64 = vector.shape_cast %63 : vector<1x8x32xf32> to vector<8x32xf32>
    %cst_38 = arith.constant dense<0.000000e+00> : vector<16x32xf32>
    %65 = tpu.matmul %62, %64, %cst_38 {dimension_numbers = #tpu.dot_dimension_numbers<[1], [0], [0], [1], [0, 0, 1, 1], [], []>} : vector<16x8xf32>, vector<8x32xf32>, vector<16x32xf32> -> vector<16x32xf32>
    %66 = arith.addf %32, %65 : vector<16x32xf32>
    %67 = vector.extract_strided_slice %24 {offsets = [1, 0, 0], sizes = [1, 32, 8], strides = [1, 1, 1]} : vector<4x32x8xf32> to vector<1x32x8xf32>
    %68 = vector.shape_cast %67 : vector<1x32x8xf32> to vector<32x8xf32>
    %cst_39 = arith.constant dense<0.000000e+00> : vector<16x8xf32>
    %69 = tpu.matmul %22, %68, %cst_39 {dimension_numbers = #tpu.dot_dimension_numbers<[1], [0], [0], [1], [0, 0, 1, 1], [], []>} : vector<16x32xf32>, vector<32x8xf32>, vector<16x8xf32> -> vector<16x8xf32>
    %70 = vector.shape_cast %69 : vector<16x8xf32> to vector<2x8x8xf32>
    %71 = vector.extract_strided_slice %26 {offsets = [1, 0, 0], sizes = [1, 32, 8], strides = [1, 1, 1]} : vector<4x32x8xf32> to vector<1x32x8xf32>
    %72 = vector.shape_cast %71 : vector<1x32x8xf32> to vector<32x8xf32>
    %cst_40 = arith.constant dense<0.000000e+00> : vector<16x8xf32>
    %73 = tpu.matmul %22, %72, %cst_40 {dimension_numbers = #tpu.dot_dimension_numbers<[1], [0], [0], [1], [0, 0, 1, 1], [], []>} : vector<16x32xf32>, vector<32x8xf32>, vector<16x8xf32> -> vector<16x8xf32>
    %74 = vector.shape_cast %73 : vector<16x8xf32> to vector<2x8x8xf32>
    %75 = vector.extract_strided_slice %28 {offsets = [1, 0, 0], sizes = [1, 32, 8], strides = [1, 1, 1]} : vector<4x32x8xf32> to vector<1x32x8xf32>
    %76 = vector.shape_cast %75 : vector<1x32x8xf32> to vector<32x8xf32>
    %cst_41 = arith.constant dense<0.000000e+00> : vector<16x8xf32>
    %77 = tpu.matmul %22, %76, %cst_41 {dimension_numbers = #tpu.dot_dimension_numbers<[1], [0], [0], [1], [0, 0, 1, 1], [], []>} : vector<16x32xf32>, vector<32x8xf32>, vector<16x8xf32> -> vector<16x8xf32>
    %78 = vector.shape_cast %77 : vector<16x8xf32> to vector<2x8x8xf32>
    "tpu.trace_start"() <{level = 10 : i32, message = "bqd,bkd->bqk"}> : () -> ()
    %cst_42 = arith.constant dense<0.000000e+00> : vector<2x8x8xf32>
    %79 = tpu.matmul %70, %74, %cst_42 {dimension_numbers = #tpu.dot_dimension_numbers<[2], [2], [1], [1], [0, 0, 0, 1, 1, 1], [0], [0]>} : vector<2x8x8xf32>, vector<2x8x8xf32>, vector<2x8x8xf32> -> vector<2x8x8xf32>
    "tpu.trace_stop"() : () -> ()
    %80 = vector.extract_strided_slice %31 {offsets = [1, 0, 0], sizes = [1, 8, 8], strides = [1, 1, 1]} : vector<4x8x8xf32> to vector<1x8x8xf32>
    %81 = vector.shape_cast %80 : vector<1x8x8xf32> to vector<8x8xf32>
    %82 = vector.shape_cast %81 : vector<8x8xf32> to vector<1x8x8xf32>
    %83 = vector.broadcast %82 : vector<1x8x8xf32> to vector<2x8x8xf32>
    %84 = arith.addf %79, %83 : vector<2x8x8xf32>
    %cst_43 = arith.constant dense<0xFF800000> : vector<2x8xf32>
    %85 = vector.multi_reduction <maximumf>, %84, %cst_43 [2] : vector<2x8x8xf32> to vector<2x8xf32>
    %86 = vector.shape_cast %85 : vector<2x8xf32> to vector<2x8x1xf32>
    %87 = vector.broadcast %86 : vector<2x8x1xf32> to vector<2x8x8xf32>
    %88 = arith.subf %84, %87 : vector<2x8x8xf32>
    %89 = math.exp %88 : vector<2x8x8xf32>
    %cst_44 = arith.constant dense<0.000000e+00> : vector<2x8xf32>
    %90 = vector.multi_reduction <add>, %89, %cst_44 [2] : vector<2x8x8xf32> to vector<2x8xf32>
    %91 = vector.shape_cast %90 : vector<2x8xf32> to vector<2x8x1xf32>
    %92 = tpu.reciprocal %91 {approx = true} : vector<2x8x1xf32> -> vector<2x8x1xf32>
    %93 = vector.broadcast %92 : vector<2x8x1xf32> to vector<2x8x8xf32>
    %94 = arith.mulf %89, %93 : vector<2x8x8xf32>
    "tpu.trace_start"() <{level = 10 : i32, message = "bqk,bkd->bqd"}> : () -> ()
    %cst_45 = arith.constant dense<0.000000e+00> : vector<2x8x8xf32>
    %95 = tpu.matmul %94, %78, %cst_45 {dimension_numbers = #tpu.dot_dimension_numbers<[2], [1], [1], [2], [0, 0, 0, 1, 1, 2], [0], [0]>} : vector<2x8x8xf32>, vector<2x8x8xf32>, vector<2x8x8xf32> -> vector<2x8x8xf32>
    "tpu.trace_stop"() : () -> ()
    %96 = vector.shape_cast %95 : vector<2x8x8xf32> to vector<16x8xf32>
    %97 = vector.extract_strided_slice %30 {offsets = [1, 0, 0], sizes = [1, 8, 32], strides = [1, 1, 1]} : vector<4x8x32xf32> to vector<1x8x32xf32>
    %98 = vector.shape_cast %97 : vector<1x8x32xf32> to vector<8x32xf32>
    %cst_46 = arith.constant dense<0.000000e+00> : vector<16x32xf32>
    %99 = tpu.matmul %96, %98, %cst_46 {dimension_numbers = #tpu.dot_dimension_numbers<[1], [0], [0], [1], [0, 0, 1, 1], [], []>} : vector<16x8xf32>, vector<8x32xf32>, vector<16x32xf32> -> vector<16x32xf32>
    %100 = arith.addf %66, %99 : vector<16x32xf32>
    %101 = vector.extract_strided_slice %24 {offsets = [2, 0, 0], sizes = [1, 32, 8], strides = [1, 1, 1]} : vector<4x32x8xf32> to vector<1x32x8xf32>
    %102 = vector.shape_cast %101 : vector<1x32x8xf32> to vector<32x8xf32>
    %cst_47 = arith.constant dense<0.000000e+00> : vector<16x8xf32>
    %103 = tpu.matmul %22, %102, %cst_47 {dimension_numbers = #tpu.dot_dimension_numbers<[1], [0], [0], [1], [0, 0, 1, 1], [], []>} : vector<16x32xf32>, vector<32x8xf32>, vector<16x8xf32> -> vector<16x8xf32>
    %104 = vector.shape_cast %103 : vector<16x8xf32> to vector<2x8x8xf32>
    %105 = vector.extract_strided_slice %26 {offsets = [2, 0, 0], sizes = [1, 32, 8], strides = [1, 1, 1]} : vector<4x32x8xf32> to vector<1x32x8xf32>
    %106 = vector.shape_cast %105 : vector<1x32x8xf32> to vector<32x8xf32>
    %cst_48 = arith.constant dense<0.000000e+00> : vector<16x8xf32>
    %107 = tpu.matmul %22, %106, %cst_48 {dimension_numbers = #tpu.dot_dimension_numbers<[1], [0], [0], [1], [0, 0, 1, 1], [], []>} : vector<16x32xf32>, vector<32x8xf32>, vector<16x8xf32> -> vector<16x8xf32>
    %108 = vector.shape_cast %107 : vector<16x8xf32> to vector<2x8x8xf32>
    %109 = vector.extract_strided_slice %28 {offsets = [2, 0, 0], sizes = [1, 32, 8], strides = [1, 1, 1]} : vector<4x32x8xf32> to vector<1x32x8xf32>
    %110 = vector.shape_cast %109 : vector<1x32x8xf32> to vector<32x8xf32>
    %cst_49 = arith.constant dense<0.000000e+00> : vector<16x8xf32>
    %111 = tpu.matmul %22, %110, %cst_49 {dimension_numbers = #tpu.dot_dimension_numbers<[1], [0], [0], [1], [0, 0, 1, 1], [], []>} : vector<16x32xf32>, vector<32x8xf32>, vector<16x8xf32> -> vector<16x8xf32>
    %112 = vector.shape_cast %111 : vector<16x8xf32> to vector<2x8x8xf32>
    "tpu.trace_start"() <{level = 10 : i32, message = "bqd,bkd->bqk"}> : () -> ()
    %cst_50 = arith.constant dense<0.000000e+00> : vector<2x8x8xf32>
    %113 = tpu.matmul %104, %108, %cst_50 {dimension_numbers = #tpu.dot_dimension_numbers<[2], [2], [1], [1], [0, 0, 0, 1, 1, 1], [0], [0]>} : vector<2x8x8xf32>, vector<2x8x8xf32>, vector<2x8x8xf32> -> vector<2x8x8xf32>
    "tpu.trace_stop"() : () -> ()
    %114 = vector.extract_strided_slice %31 {offsets = [2, 0, 0], sizes = [1, 8, 8], strides = [1, 1, 1]} : vector<4x8x8xf32> to vector<1x8x8xf32>
    %115 = vector.shape_cast %114 : vector<1x8x8xf32> to vector<8x8xf32>
    %116 = vector.shape_cast %115 : vector<8x8xf32> to vector<1x8x8xf32>
    %117 = vector.broadcast %116 : vector<1x8x8xf32> to vector<2x8x8xf32>
    %118 = arith.addf %113, %117 : vector<2x8x8xf32>
    %cst_51 = arith.constant dense<0xFF800000> : vector<2x8xf32>
    %119 = vector.multi_reduction <maximumf>, %118, %cst_51 [2] : vector<2x8x8xf32> to vector<2x8xf32>
    %120 = vector.shape_cast %119 : vector<2x8xf32> to vector<2x8x1xf32>
    %121 = vector.broadcast %120 : vector<2x8x1xf32> to vector<2x8x8xf32>
    %122 = arith.subf %118, %121 : vector<2x8x8xf32>
    %123 = math.exp %122 : vector<2x8x8xf32>
    %cst_52 = arith.constant dense<0.000000e+00> : vector<2x8xf32>
    %124 = vector.multi_reduction <add>, %123, %cst_52 [2] : vector<2x8x8xf32> to vector<2x8xf32>
    %125 = vector.shape_cast %124 : vector<2x8xf32> to vector<2x8x1xf32>
    %126 = tpu.reciprocal %125 {approx = true} : vector<2x8x1xf32> -> vector<2x8x1xf32>
    %127 = vector.broadcast %126 : vector<2x8x1xf32> to vector<2x8x8xf32>
    %128 = arith.mulf %123, %127 : vector<2x8x8xf32>
    "tpu.trace_start"() <{level = 10 : i32, message = "bqk,bkd->bqd"}> : () -> ()
    %cst_53 = arith.constant dense<0.000000e+00> : vector<2x8x8xf32>
    %129 = tpu.matmul %128, %112, %cst_53 {dimension_numbers = #tpu.dot_dimension_numbers<[2], [1], [1], [2], [0, 0, 0, 1, 1, 2], [0], [0]>} : vector<2x8x8xf32>, vector<2x8x8xf32>, vector<2x8x8xf32> -> vector<2x8x8xf32>
    "tpu.trace_stop"() : () -> ()
    %130 = vector.shape_cast %129 : vector<2x8x8xf32> to vector<16x8xf32>
    %131 = vector.extract_strided_slice %30 {offsets = [2, 0, 0], sizes = [1, 8, 32], strides = [1, 1, 1]} : vector<4x8x32xf32> to vector<1x8x32xf32>
    %132 = vector.shape_cast %131 : vector<1x8x32xf32> to vector<8x32xf32>
    %cst_54 = arith.constant dense<0.000000e+00> : vector<16x32xf32>
    %133 = tpu.matmul %130, %132, %cst_54 {dimension_numbers = #tpu.dot_dimension_numbers<[1], [0], [0], [1], [0, 0, 1, 1], [], []>} : vector<16x8xf32>, vector<8x32xf32>, vector<16x32xf32> -> vector<16x32xf32>
    %134 = arith.addf %100, %133 : vector<16x32xf32>
    %135 = vector.extract_strided_slice %24 {offsets = [3, 0, 0], sizes = [1, 32, 8], strides = [1, 1, 1]} : vector<4x32x8xf32> to vector<1x32x8xf32>
    %136 = vector.shape_cast %135 : vector<1x32x8xf32> to vector<32x8xf32>
    %cst_55 = arith.constant dense<0.000000e+00> : vector<16x8xf32>
    %137 = tpu.matmul %22, %136, %cst_55 {dimension_numbers = #tpu.dot_dimension_numbers<[1], [0], [0], [1], [0, 0, 1, 1], [], []>} : vector<16x32xf32>, vector<32x8xf32>, vector<16x8xf32> -> vector<16x8xf32>
    %138 = vector.shape_cast %137 : vector<16x8xf32> to vector<2x8x8xf32>
    %139 = vector.extract_strided_slice %26 {offsets = [3, 0, 0], sizes = [1, 32, 8], strides = [1, 1, 1]} : vector<4x32x8xf32> to vector<1x32x8xf32>
    %140 = vector.shape_cast %139 : vector<1x32x8xf32> to vector<32x8xf32>
    %cst_56 = arith.constant dense<0.000000e+00> : vector<16x8xf32>
    %141 = tpu.matmul %22, %140, %cst_56 {dimension_numbers = #tpu.dot_dimension_numbers<[1], [0], [0], [1], [0, 0, 1, 1], [], []>} : vector<16x32xf32>, vector<32x8xf32>, vector<16x8xf32> -> vector<16x8xf32>
    %142 = vector.shape_cast %141 : vector<16x8xf32> to vector<2x8x8xf32>
    %143 = vector.extract_strided_slice %28 {offsets = [3, 0, 0], sizes = [1, 32, 8], strides = [1, 1, 1]} : vector<4x32x8xf32> to vector<1x32x8xf32>
    %144 = vector.shape_cast %143 : vector<1x32x8xf32> to vector<32x8xf32>
    %cst_57 = arith.constant dense<0.000000e+00> : vector<16x8xf32>
    %145 = tpu.matmul %22, %144, %cst_57 {dimension_numbers = #tpu.dot_dimension_numbers<[1], [0], [0], [1], [0, 0, 1, 1], [], []>} : vector<16x32xf32>, vector<32x8xf32>, vector<16x8xf32> -> vector<16x8xf32>
    %146 = vector.shape_cast %145 : vector<16x8xf32> to vector<2x8x8xf32>
    "tpu.trace_start"() <{level = 10 : i32, message = "bqd,bkd->bqk"}> : () -> ()
    %cst_58 = arith.constant dense<0.000000e+00> : vector<2x8x8xf32>
    %147 = tpu.matmul %138, %142, %cst_58 {dimension_numbers = #tpu.dot_dimension_numbers<[2], [2], [1], [1], [0, 0, 0, 1, 1, 1], [0], [0]>} : vector<2x8x8xf32>, vector<2x8x8xf32>, vector<2x8x8xf32> -> vector<2x8x8xf32>
    "tpu.trace_stop"() : () -> ()
    %148 = vector.extract_strided_slice %31 {offsets = [3, 0, 0], sizes = [1, 8, 8], strides = [1, 1, 1]} : vector<4x8x8xf32> to vector<1x8x8xf32>
    %149 = vector.shape_cast %148 : vector<1x8x8xf32> to vector<8x8xf32>
    %150 = vector.shape_cast %149 : vector<8x8xf32> to vector<1x8x8xf32>
    %151 = vector.broadcast %150 : vector<1x8x8xf32> to vector<2x8x8xf32>
    %152 = arith.addf %147, %151 : vector<2x8x8xf32>
    %cst_59 = arith.constant dense<0xFF800000> : vector<2x8xf32>
    %153 = vector.multi_reduction <maximumf>, %152, %cst_59 [2] : vector<2x8x8xf32> to vector<2x8xf32>
    %154 = vector.shape_cast %153 : vector<2x8xf32> to vector<2x8x1xf32>
    %155 = vector.broadcast %154 : vector<2x8x1xf32> to vector<2x8x8xf32>
    %156 = arith.subf %152, %155 : vector<2x8x8xf32>
    %157 = math.exp %156 : vector<2x8x8xf32>
    %cst_60 = arith.constant dense<0.000000e+00> : vector<2x8xf32>
    %158 = vector.multi_reduction <add>, %157, %cst_60 [2] : vector<2x8x8xf32> to vector<2x8xf32>
    %159 = vector.shape_cast %158 : vector<2x8xf32> to vector<2x8x1xf32>
    %160 = tpu.reciprocal %159 {approx = true} : vector<2x8x1xf32> -> vector<2x8x1xf32>
    %161 = vector.broadcast %160 : vector<2x8x1xf32> to vector<2x8x8xf32>
    %162 = arith.mulf %157, %161 : vector<2x8x8xf32>
    "tpu.trace_start"() <{level = 10 : i32, message = "bqk,bkd->bqd"}> : () -> ()
    %cst_61 = arith.constant dense<0.000000e+00> : vector<2x8x8xf32>
    %163 = tpu.matmul %162, %146, %cst_61 {dimension_numbers = #tpu.dot_dimension_numbers<[2], [1], [1], [2], [0, 0, 0, 1, 1, 2], [0], [0]>} : vector<2x8x8xf32>, vector<2x8x8xf32>, vector<2x8x8xf32> -> vector<2x8x8xf32>
    "tpu.trace_stop"() : () -> ()
    %164 = vector.shape_cast %163 : vector<2x8x8xf32> to vector<16x8xf32>
    %165 = vector.extract_strided_slice %30 {offsets = [3, 0, 0], sizes = [1, 8, 32], strides = [1, 1, 1]} : vector<4x8x32xf32> to vector<1x8x32xf32>
    %166 = vector.shape_cast %165 : vector<1x8x32xf32> to vector<8x32xf32>
    %cst_62 = arith.constant dense<0.000000e+00> : vector<16x32xf32>
    %167 = tpu.matmul %164, %166, %cst_62 {dimension_numbers = #tpu.dot_dimension_numbers<[1], [0], [0], [1], [0, 0, 1, 1], [], []>} : vector<16x8xf32>, vector<8x32xf32>, vector<16x32xf32> -> vector<16x32xf32>
    %168 = arith.addf %134, %167 : vector<16x32xf32>
    %169 = vector.shape_cast %168 : vector<16x32xf32> to vector<2x8x32xf32>
    %170 = arith.addf %3, %169 : vector<2x8x32xf32>
    %171 = vector.extract_strided_slice %6 {offsets = [1, 0], sizes = [1, 32], strides = [1, 1]} : vector<3x32xf32> to vector<1x32xf32>
    %172 = vector.shape_cast %171 : vector<1x32xf32> to vector<32xf32>
    %173 = arith.mulf %170, %170 : vector<2x8x32xf32>
    %cst_63 = arith.constant dense<0.000000e+00> : vector<2x8xf32>
    %174 = vector.multi_reduction <add>, %173, %cst_63 [2] : vector<2x8x32xf32> to vector<2x8xf32>
    %175 = vector.shape_cast %174 : vector<2x8xf32> to vector<2x8x1xf32>
    %cst_64 = arith.constant 3.200000e+01 : f32
    %176 = vector.broadcast %cst_64 : f32 to vector<2x8x1xf32>
    %177 = arith.divf %175, %176 : vector<2x8x1xf32>
    %cst_65 = arith.constant 9.99999997E-7 : f32
    %178 = vector.broadcast %cst_65 : f32 to vector<2x8x1xf32>
    %179 = arith.addf %177, %178 : vector<2x8x1xf32>
    %180 = math.rsqrt %179 : vector<2x8x1xf32>
    %181 = vector.broadcast %180 : vector<2x8x1xf32> to vector<2x8x32xf32>
    %182 = arith.mulf %170, %181 : vector<2x8x32xf32>
    %183 = vector.shape_cast %172 : vector<32xf32> to vector<1x1x32xf32>
    %184 = vector.broadcast %183 : vector<1x1x32xf32> to vector<2x8x32xf32>
    %185 = arith.mulf %182, %184 : vector<2x8x32xf32>
    %186 = vector.shape_cast %185 : vector<2x8x32xf32> to vector<16x32xf32>
    %187 = vector.shape_cast %4 : vector<2x8x32xf32> to vector<16x32xf32>
    %c0_66 = arith.constant 0 : index
    %c0_67 = arith.constant 0 : index
    %c0_68 = arith.constant 0 : index
    %c0_69 = arith.constant 0 : index
    %188 = vector.load %arg12[%c0_66, %c0_67, %c0_68, %c0_69] : memref<1x4x32x8xf32, #tpu.memory_space<vmem>>, vector<1x4x32x8xf32>
    %189 = vector.shape_cast %188 : vector<1x4x32x8xf32> to vector<4x32x8xf32>
    %c0_70 = arith.constant 0 : index
    %c0_71 = arith.constant 0 : index
    %c0_72 = arith.constant 0 : index
    %c0_73 = arith.constant 0 : index
    %190 = vector.load %arg13[%c0_70, %c0_71, %c0_72, %c0_73] : memref<1x4x32x8xf32, #tpu.memory_space<vmem>>, vector<1x4x32x8xf32>
    %191 = vector.shape_cast %190 : vector<1x4x32x8xf32> to vector<4x32x8xf32>
    %c0_74 = arith.constant 0 : index
    %c0_75 = arith.constant 0 : index
    %c0_76 = arith.constant 0 : index
    %c0_77 = arith.constant 0 : index
    %192 = vector.load %arg14[%c0_74, %c0_75, %c0_76, %c0_77] : memref<1x4x32x8xf32, #tpu.memory_space<vmem>>, vector<1x4x32x8xf32>
    %193 = vector.shape_cast %192 : vector<1x4x32x8xf32> to vector<4x32x8xf32>
    %c0_78 = arith.constant 0 : index
    %c0_79 = arith.constant 0 : index
    %c0_80 = arith.constant 0 : index
    %c0_81 = arith.constant 0 : index
    %194 = vector.load %arg15[%c0_78, %c0_79, %c0_80, %c0_81] : memref<1x4x8x32xf32, #tpu.memory_space<vmem>>, vector<1x4x8x32xf32>
    %195 = vector.shape_cast %194 : vector<1x4x8x32xf32> to vector<4x8x32xf32>
    %c0_82 = arith.constant 0 : index
    %c0_83 = arith.constant 0 : index
    %c0_84 = arith.constant 0 : index
    %196 = vector.load %arg4[%c0_82, %c0_83, %c0_84] : memref<2x1x8xf32, #tpu.memory_space<vmem>>, vector<2x1x8xf32>
    %cst_85 = arith.constant 0.000000e+00 : f32
    %197 = vector.broadcast %cst_85 : f32 to vector<16x32xf32>
    %198 = vector.extract_strided_slice %189 {offsets = [0, 0, 0], sizes = [1, 32, 8], strides = [1, 1, 1]} : vector<4x32x8xf32> to vector<1x32x8xf32>
    %199 = vector.shape_cast %198 : vector<1x32x8xf32> to vector<32x8xf32>
    %cst_86 = arith.constant dense<0.000000e+00> : vector<16x8xf32>
    %200 = tpu.matmul %186, %199, %cst_86 {dimension_numbers = #tpu.dot_dimension_numbers<[1], [0], [0], [1], [0, 0, 1, 1], [], []>} : vector<16x32xf32>, vector<32x8xf32>, vector<16x8xf32> -> vector<16x8xf32>
    %201 = vector.shape_cast %200 : vector<16x8xf32> to vector<2x8x8xf32>
    %202 = vector.extract_strided_slice %191 {offsets = [0, 0, 0], sizes = [1, 32, 8], strides = [1, 1, 1]} : vector<4x32x8xf32> to vector<1x32x8xf32>
    %203 = vector.shape_cast %202 : vector<1x32x8xf32> to vector<32x8xf32>
    %cst_87 = arith.constant dense<0.000000e+00> : vector<16x8xf32>
    %204 = tpu.matmul %187, %203, %cst_87 {dimension_numbers = #tpu.dot_dimension_numbers<[1], [0], [0], [1], [0, 0, 1, 1], [], []>} : vector<16x32xf32>, vector<32x8xf32>, vector<16x8xf32> -> vector<16x8xf32>
    %205 = vector.shape_cast %204 : vector<16x8xf32> to vector<2x8x8xf32>
    %206 = vector.extract_strided_slice %193 {offsets = [0, 0, 0], sizes = [1, 32, 8], strides = [1, 1, 1]} : vector<4x32x8xf32> to vector<1x32x8xf32>
    %207 = vector.shape_cast %206 : vector<1x32x8xf32> to vector<32x8xf32>
    %cst_88 = arith.constant dense<0.000000e+00> : vector<16x8xf32>
    %208 = tpu.matmul %187, %207, %cst_88 {dimension_numbers = #tpu.dot_dimension_numbers<[1], [0], [0], [1], [0, 0, 1, 1], [], []>} : vector<16x32xf32>, vector<32x8xf32>, vector<16x8xf32> -> vector<16x8xf32>
    %209 = vector.shape_cast %208 : vector<16x8xf32> to vector<2x8x8xf32>
    "tpu.trace_start"() <{level = 10 : i32, message = "bqd,bkd->bqk"}> : () -> ()
    %cst_89 = arith.constant dense<0.000000e+00> : vector<2x8x8xf32>
    %210 = tpu.matmul %201, %205, %cst_89 {dimension_numbers = #tpu.dot_dimension_numbers<[2], [2], [1], [1], [0, 0, 0, 1, 1, 1], [0], [0]>} : vector<2x8x8xf32>, vector<2x8x8xf32>, vector<2x8x8xf32> -> vector<2x8x8xf32>
    "tpu.trace_stop"() : () -> ()
    %211 = vector.broadcast %196 : vector<2x1x8xf32> to vector<2x8x8xf32>
    %212 = arith.addf %210, %211 : vector<2x8x8xf32>
    %cst_90 = arith.constant dense<0xFF800000> : vector<2x8xf32>
    %213 = vector.multi_reduction <maximumf>, %212, %cst_90 [2] : vector<2x8x8xf32> to vector<2x8xf32>
    %214 = vector.shape_cast %213 : vector<2x8xf32> to vector<2x8x1xf32>
    %215 = vector.broadcast %214 : vector<2x8x1xf32> to vector<2x8x8xf32>
    %216 = arith.subf %212, %215 : vector<2x8x8xf32>
    %217 = math.exp %216 : vector<2x8x8xf32>
    %cst_91 = arith.constant dense<0.000000e+00> : vector<2x8xf32>
    %218 = vector.multi_reduction <add>, %217, %cst_91 [2] : vector<2x8x8xf32> to vector<2x8xf32>
    %219 = vector.shape_cast %218 : vector<2x8xf32> to vector<2x8x1xf32>
    %220 = tpu.reciprocal %219 {approx = true} : vector<2x8x1xf32> -> vector<2x8x1xf32>
    %221 = vector.broadcast %220 : vector<2x8x1xf32> to vector<2x8x8xf32>
    %222 = arith.mulf %217, %221 : vector<2x8x8xf32>
    "tpu.trace_start"() <{level = 10 : i32, message = "bqk,bkd->bqd"}> : () -> ()
    %cst_92 = arith.constant dense<0.000000e+00> : vector<2x8x8xf32>
    %223 = tpu.matmul %222, %209, %cst_92 {dimension_numbers = #tpu.dot_dimension_numbers<[2], [1], [1], [2], [0, 0, 0, 1, 1, 2], [0], [0]>} : vector<2x8x8xf32>, vector<2x8x8xf32>, vector<2x8x8xf32> -> vector<2x8x8xf32>
    "tpu.trace_stop"() : () -> ()
    %224 = vector.shape_cast %223 : vector<2x8x8xf32> to vector<16x8xf32>
    %225 = vector.extract_strided_slice %195 {offsets = [0, 0, 0], sizes = [1, 8, 32], strides = [1, 1, 1]} : vector<4x8x32xf32> to vector<1x8x32xf32>
    %226 = vector.shape_cast %225 : vector<1x8x32xf32> to vector<8x32xf32>
    %cst_93 = arith.constant dense<0.000000e+00> : vector<16x32xf32>
    %227 = tpu.matmul %224, %226, %cst_93 {dimension_numbers = #tpu.dot_dimension_numbers<[1], [0], [0], [1], [0, 0, 1, 1], [], []>} : vector<16x8xf32>, vector<8x32xf32>, vector<16x32xf32> -> vector<16x32xf32>
    %228 = arith.addf %197, %227 : vector<16x32xf32>
    %229 = vector.extract_strided_slice %189 {offsets = [1, 0, 0], sizes = [1, 32, 8], strides = [1, 1, 1]} : vector<4x32x8xf32> to vector<1x32x8xf32>
    %230 = vector.shape_cast %229 : vector<1x32x8xf32> to vector<32x8xf32>
    %cst_94 = arith.constant dense<0.000000e+00> : vector<16x8xf32>
    %231 = tpu.matmul %186, %230, %cst_94 {dimension_numbers = #tpu.dot_dimension_numbers<[1], [0], [0], [1], [0, 0, 1, 1], [], []>} : vector<16x32xf32>, vector<32x8xf32>, vector<16x8xf32> -> vector<16x8xf32>
    %232 = vector.shape_cast %231 : vector<16x8xf32> to vector<2x8x8xf32>
    %233 = vector.extract_strided_slice %191 {offsets = [1, 0, 0], sizes = [1, 32, 8], strides = [1, 1, 1]} : vector<4x32x8xf32> to vector<1x32x8xf32>
    %234 = vector.shape_cast %233 : vector<1x32x8xf32> to vector<32x8xf32>
    %cst_95 = arith.constant dense<0.000000e+00> : vector<16x8xf32>
    %235 = tpu.matmul %187, %234, %cst_95 {dimension_numbers = #tpu.dot_dimension_numbers<[1], [0], [0], [1], [0, 0, 1, 1], [], []>} : vector<16x32xf32>, vector<32x8xf32>, vector<16x8xf32> -> vector<16x8xf32>
    %236 = vector.shape_cast %235 : vector<16x8xf32> to vector<2x8x8xf32>
    %237 = vector.extract_strided_slice %193 {offsets = [1, 0, 0], sizes = [1, 32, 8], strides = [1, 1, 1]} : vector<4x32x8xf32> to vector<1x32x8xf32>
    %238 = vector.shape_cast %237 : vector<1x32x8xf32> to vector<32x8xf32>
    %cst_96 = arith.constant dense<0.000000e+00> : vector<16x8xf32>
    %239 = tpu.matmul %187, %238, %cst_96 {dimension_numbers = #tpu.dot_dimension_numbers<[1], [0], [0], [1], [0, 0, 1, 1], [], []>} : vector<16x32xf32>, vector<32x8xf32>, vector<16x8xf32> -> vector<16x8xf32>
    %240 = vector.shape_cast %239 : vector<16x8xf32> to vector<2x8x8xf32>
    "tpu.trace_start"() <{level = 10 : i32, message = "bqd,bkd->bqk"}> : () -> ()
    %cst_97 = arith.constant dense<0.000000e+00> : vector<2x8x8xf32>
    %241 = tpu.matmul %232, %236, %cst_97 {dimension_numbers = #tpu.dot_dimension_numbers<[2], [2], [1], [1], [0, 0, 0, 1, 1, 1], [0], [0]>} : vector<2x8x8xf32>, vector<2x8x8xf32>, vector<2x8x8xf32> -> vector<2x8x8xf32>
    "tpu.trace_stop"() : () -> ()
    %242 = vector.broadcast %196 : vector<2x1x8xf32> to vector<2x8x8xf32>
    %243 = arith.addf %241, %242 : vector<2x8x8xf32>
    %cst_98 = arith.constant dense<0xFF800000> : vector<2x8xf32>
    %244 = vector.multi_reduction <maximumf>, %243, %cst_98 [2] : vector<2x8x8xf32> to vector<2x8xf32>
    %245 = vector.shape_cast %244 : vector<2x8xf32> to vector<2x8x1xf32>
    %246 = vector.broadcast %245 : vector<2x8x1xf32> to vector<2x8x8xf32>
    %247 = arith.subf %243, %246 : vector<2x8x8xf32>
    %248 = math.exp %247 : vector<2x8x8xf32>
    %cst_99 = arith.constant dense<0.000000e+00> : vector<2x8xf32>
    %249 = vector.multi_reduction <add>, %248, %cst_99 [2] : vector<2x8x8xf32> to vector<2x8xf32>
    %250 = vector.shape_cast %249 : vector<2x8xf32> to vector<2x8x1xf32>
    %251 = tpu.reciprocal %250 {approx = true} : vector<2x8x1xf32> -> vector<2x8x1xf32>
    %252 = vector.broadcast %251 : vector<2x8x1xf32> to vector<2x8x8xf32>
    %253 = arith.mulf %248, %252 : vector<2x8x8xf32>
    "tpu.trace_start"() <{level = 10 : i32, message = "bqk,bkd->bqd"}> : () -> ()
    %cst_100 = arith.constant dense<0.000000e+00> : vector<2x8x8xf32>
    %254 = tpu.matmul %253, %240, %cst_100 {dimension_numbers = #tpu.dot_dimension_numbers<[2], [1], [1], [2], [0, 0, 0, 1, 1, 2], [0], [0]>} : vector<2x8x8xf32>, vector<2x8x8xf32>, vector<2x8x8xf32> -> vector<2x8x8xf32>
    "tpu.trace_stop"() : () -> ()
    %255 = vector.shape_cast %254 : vector<2x8x8xf32> to vector<16x8xf32>
    %256 = vector.extract_strided_slice %195 {offsets = [1, 0, 0], sizes = [1, 8, 32], strides = [1, 1, 1]} : vector<4x8x32xf32> to vector<1x8x32xf32>
    %257 = vector.shape_cast %256 : vector<1x8x32xf32> to vector<8x32xf32>
    %cst_101 = arith.constant dense<0.000000e+00> : vector<16x32xf32>
    %258 = tpu.matmul %255, %257, %cst_101 {dimension_numbers = #tpu.dot_dimension_numbers<[1], [0], [0], [1], [0, 0, 1, 1], [], []>} : vector<16x8xf32>, vector<8x32xf32>, vector<16x32xf32> -> vector<16x32xf32>
    %259 = arith.addf %228, %258 : vector<16x32xf32>
    %260 = vector.extract_strided_slice %189 {offsets = [2, 0, 0], sizes = [1, 32, 8], strides = [1, 1, 1]} : vector<4x32x8xf32> to vector<1x32x8xf32>
    %261 = vector.shape_cast %260 : vector<1x32x8xf32> to vector<32x8xf32>
    %cst_102 = arith.constant dense<0.000000e+00> : vector<16x8xf32>
    %262 = tpu.matmul %186, %261, %cst_102 {dimension_numbers = #tpu.dot_dimension_numbers<[1], [0], [0], [1], [0, 0, 1, 1], [], []>} : vector<16x32xf32>, vector<32x8xf32>, vector<16x8xf32> -> vector<16x8xf32>
    %263 = vector.shape_cast %262 : vector<16x8xf32> to vector<2x8x8xf32>
    %264 = vector.extract_strided_slice %191 {offsets = [2, 0, 0], sizes = [1, 32, 8], strides = [1, 1, 1]} : vector<4x32x8xf32> to vector<1x32x8xf32>
    %265 = vector.shape_cast %264 : vector<1x32x8xf32> to vector<32x8xf32>
    %cst_103 = arith.constant dense<0.000000e+00> : vector<16x8xf32>
    %266 = tpu.matmul %187, %265, %cst_103 {dimension_numbers = #tpu.dot_dimension_numbers<[1], [0], [0], [1], [0, 0, 1, 1], [], []>} : vector<16x32xf32>, vector<32x8xf32>, vector<16x8xf32> -> vector<16x8xf32>
    %267 = vector.shape_cast %266 : vector<16x8xf32> to vector<2x8x8xf32>
    %268 = vector.extract_strided_slice %193 {offsets = [2, 0, 0], sizes = [1, 32, 8], strides = [1, 1, 1]} : vector<4x32x8xf32> to vector<1x32x8xf32>
    %269 = vector.shape_cast %268 : vector<1x32x8xf32> to vector<32x8xf32>
    %cst_104 = arith.constant dense<0.000000e+00> : vector<16x8xf32>
    %270 = tpu.matmul %187, %269, %cst_104 {dimension_numbers = #tpu.dot_dimension_numbers<[1], [0], [0], [1], [0, 0, 1, 1], [], []>} : vector<16x32xf32>, vector<32x8xf32>, vector<16x8xf32> -> vector<16x8xf32>
    %271 = vector.shape_cast %270 : vector<16x8xf32> to vector<2x8x8xf32>
    "tpu.trace_start"() <{level = 10 : i32, message = "bqd,bkd->bqk"}> : () -> ()
    %cst_105 = arith.constant dense<0.000000e+00> : vector<2x8x8xf32>
    %272 = tpu.matmul %263, %267, %cst_105 {dimension_numbers = #tpu.dot_dimension_numbers<[2], [2], [1], [1], [0, 0, 0, 1, 1, 1], [0], [0]>} : vector<2x8x8xf32>, vector<2x8x8xf32>, vector<2x8x8xf32> -> vector<2x8x8xf32>
    "tpu.trace_stop"() : () -> ()
    %273 = vector.broadcast %196 : vector<2x1x8xf32> to vector<2x8x8xf32>
    %274 = arith.addf %272, %273 : vector<2x8x8xf32>
    %cst_106 = arith.constant dense<0xFF800000> : vector<2x8xf32>
    %275 = vector.multi_reduction <maximumf>, %274, %cst_106 [2] : vector<2x8x8xf32> to vector<2x8xf32>
    %276 = vector.shape_cast %275 : vector<2x8xf32> to vector<2x8x1xf32>
    %277 = vector.broadcast %276 : vector<2x8x1xf32> to vector<2x8x8xf32>
    %278 = arith.subf %274, %277 : vector<2x8x8xf32>
    %279 = math.exp %278 : vector<2x8x8xf32>
    %cst_107 = arith.constant dense<0.000000e+00> : vector<2x8xf32>
    %280 = vector.multi_reduction <add>, %279, %cst_107 [2] : vector<2x8x8xf32> to vector<2x8xf32>
    %281 = vector.shape_cast %280 : vector<2x8xf32> to vector<2x8x1xf32>
    %282 = tpu.reciprocal %281 {approx = true} : vector<2x8x1xf32> -> vector<2x8x1xf32>
    %283 = vector.broadcast %282 : vector<2x8x1xf32> to vector<2x8x8xf32>
    %284 = arith.mulf %279, %283 : vector<2x8x8xf32>
    "tpu.trace_start"() <{level = 10 : i32, message = "bqk,bkd->bqd"}> : () -> ()
    %cst_108 = arith.constant dense<0.000000e+00> : vector<2x8x8xf32>
    %285 = tpu.matmul %284, %271, %cst_108 {dimension_numbers = #tpu.dot_dimension_numbers<[2], [1], [1], [2], [0, 0, 0, 1, 1, 2], [0], [0]>} : vector<2x8x8xf32>, vector<2x8x8xf32>, vector<2x8x8xf32> -> vector<2x8x8xf32>
    "tpu.trace_stop"() : () -> ()
    %286 = vector.shape_cast %285 : vector<2x8x8xf32> to vector<16x8xf32>
    %287 = vector.extract_strided_slice %195 {offsets = [2, 0, 0], sizes = [1, 8, 32], strides = [1, 1, 1]} : vector<4x8x32xf32> to vector<1x8x32xf32>
    %288 = vector.shape_cast %287 : vector<1x8x32xf32> to vector<8x32xf32>
    %cst_109 = arith.constant dense<0.000000e+00> : vector<16x32xf32>
    %289 = tpu.matmul %286, %288, %cst_109 {dimension_numbers = #tpu.dot_dimension_numbers<[1], [0], [0], [1], [0, 0, 1, 1], [], []>} : vector<16x8xf32>, vector<8x32xf32>, vector<16x32xf32> -> vector<16x32xf32>
    %290 = arith.addf %259, %289 : vector<16x32xf32>
    %291 = vector.extract_strided_slice %189 {offsets = [3, 0, 0], sizes = [1, 32, 8], strides = [1, 1, 1]} : vector<4x32x8xf32> to vector<1x32x8xf32>
    %292 = vector.shape_cast %291 : vector<1x32x8xf32> to vector<32x8xf32>
    %cst_110 = arith.constant dense<0.000000e+00> : vector<16x8xf32>
    %293 = tpu.matmul %186, %292, %cst_110 {dimension_numbers = #tpu.dot_dimension_numbers<[1], [0], [0], [1], [0, 0, 1, 1], [], []>} : vector<16x32xf32>, vector<32x8xf32>, vector<16x8xf32> -> vector<16x8xf32>
    %294 = vector.shape_cast %293 : vector<16x8xf32> to vector<2x8x8xf32>
    %295 = vector.extract_strided_slice %191 {offsets = [3, 0, 0], sizes = [1, 32, 8], strides = [1, 1, 1]} : vector<4x32x8xf32> to vector<1x32x8xf32>
    %296 = vector.shape_cast %295 : vector<1x32x8xf32> to vector<32x8xf32>
    %cst_111 = arith.constant dense<0.000000e+00> : vector<16x8xf32>
    %297 = tpu.matmul %187, %296, %cst_111 {dimension_numbers = #tpu.dot_dimension_numbers<[1], [0], [0], [1], [0, 0, 1, 1], [], []>} : vector<16x32xf32>, vector<32x8xf32>, vector<16x8xf32> -> vector<16x8xf32>
    %298 = vector.shape_cast %297 : vector<16x8xf32> to vector<2x8x8xf32>
    %299 = vector.extract_strided_slice %193 {offsets = [3, 0, 0], sizes = [1, 32, 8], strides = [1, 1, 1]} : vector<4x32x8xf32> to vector<1x32x8xf32>
    %300 = vector.shape_cast %299 : vector<1x32x8xf32> to vector<32x8xf32>
    %cst_112 = arith.constant dense<0.000000e+00> : vector<16x8xf32>
    %301 = tpu.matmul %187, %300, %cst_112 {dimension_numbers = #tpu.dot_dimension_numbers<[1], [0], [0], [1], [0, 0, 1, 1], [], []>} : vector<16x32xf32>, vector<32x8xf32>, vector<16x8xf32> -> vector<16x8xf32>
    %302 = vector.shape_cast %301 : vector<16x8xf32> to vector<2x8x8xf32>
    "tpu.trace_start"() <{level = 10 : i32, message = "bqd,bkd->bqk"}> : () -> ()
    %cst_113 = arith.constant dense<0.000000e+00> : vector<2x8x8xf32>
    %303 = tpu.matmul %294, %298, %cst_113 {dimension_numbers = #tpu.dot_dimension_numbers<[2], [2], [1], [1], [0, 0, 0, 1, 1, 1], [0], [0]>} : vector<2x8x8xf32>, vector<2x8x8xf32>, vector<2x8x8xf32> -> vector<2x8x8xf32>
    "tpu.trace_stop"() : () -> ()
    %304 = vector.broadcast %196 : vector<2x1x8xf32> to vector<2x8x8xf32>
    %305 = arith.addf %303, %304 : vector<2x8x8xf32>
    %cst_114 = arith.constant dense<0xFF800000> : vector<2x8xf32>
    %306 = vector.multi_reduction <maximumf>, %305, %cst_114 [2] : vector<2x8x8xf32> to vector<2x8xf32>
    %307 = vector.shape_cast %306 : vector<2x8xf32> to vector<2x8x1xf32>
    %308 = vector.broadcast %307 : vector<2x8x1xf32> to vector<2x8x8xf32>
    %309 = arith.subf %305, %308 : vector<2x8x8xf32>
    %310 = math.exp %309 : vector<2x8x8xf32>
    %cst_115 = arith.constant dense<0.000000e+00> : vector<2x8xf32>
    %311 = vector.multi_reduction <add>, %310, %cst_115 [2] : vector<2x8x8xf32> to vector<2x8xf32>
    %312 = vector.shape_cast %311 : vector<2x8xf32> to vector<2x8x1xf32>
    %313 = tpu.reciprocal %312 {approx = true} : vector<2x8x1xf32> -> vector<2x8x1xf32>
    %314 = vector.broadcast %313 : vector<2x8x1xf32> to vector<2x8x8xf32>
    %315 = arith.mulf %310, %314 : vector<2x8x8xf32>
    "tpu.trace_start"() <{level = 10 : i32, message = "bqk,bkd->bqd"}> : () -> ()
    %cst_116 = arith.constant dense<0.000000e+00> : vector<2x8x8xf32>
    %316 = tpu.matmul %315, %302, %cst_116 {dimension_numbers = #tpu.dot_dimension_numbers<[2], [1], [1], [2], [0, 0, 0, 1, 1, 2], [0], [0]>} : vector<2x8x8xf32>, vector<2x8x8xf32>, vector<2x8x8xf32> -> vector<2x8x8xf32>
    "tpu.trace_stop"() : () -> ()
    %317 = vector.shape_cast %316 : vector<2x8x8xf32> to vector<16x8xf32>
    %318 = vector.extract_strided_slice %195 {offsets = [3, 0, 0], sizes = [1, 8, 32], strides = [1, 1, 1]} : vector<4x8x32xf32> to vector<1x8x32xf32>
    %319 = vector.shape_cast %318 : vector<1x8x32xf32> to vector<8x32xf32>
    %cst_117 = arith.constant dense<0.000000e+00> : vector<16x32xf32>
    %320 = tpu.matmul %317, %319, %cst_117 {dimension_numbers = #tpu.dot_dimension_numbers<[1], [0], [0], [1], [0, 0, 1, 1], [], []>} : vector<16x8xf32>, vector<8x32xf32>, vector<16x32xf32> -> vector<16x32xf32>
    %321 = arith.addf %290, %320 : vector<16x32xf32>
    %322 = vector.shape_cast %321 : vector<16x32xf32> to vector<2x8x32xf32>
    %323 = arith.addf %170, %322 : vector<2x8x32xf32>
    %324 = vector.extract_strided_slice %6 {offsets = [2, 0], sizes = [1, 32], strides = [1, 1]} : vector<3x32xf32> to vector<1x32xf32>
    %325 = vector.shape_cast %324 : vector<1x32xf32> to vector<32xf32>
    %326 = arith.mulf %323, %323 : vector<2x8x32xf32>
    %cst_118 = arith.constant dense<0.000000e+00> : vector<2x8xf32>
    %327 = vector.multi_reduction <add>, %326, %cst_118 [2] : vector<2x8x32xf32> to vector<2x8xf32>
    %328 = vector.shape_cast %327 : vector<2x8xf32> to vector<2x8x1xf32>
    %cst_119 = arith.constant 3.200000e+01 : f32
    %329 = vector.broadcast %cst_119 : f32 to vector<2x8x1xf32>
    %330 = arith.divf %328, %329 : vector<2x8x1xf32>
    %cst_120 = arith.constant 9.99999997E-7 : f32
    %331 = vector.broadcast %cst_120 : f32 to vector<2x8x1xf32>
    %332 = arith.addf %330, %331 : vector<2x8x1xf32>
    %333 = math.rsqrt %332 : vector<2x8x1xf32>
    %334 = vector.broadcast %333 : vector<2x8x1xf32> to vector<2x8x32xf32>
    %335 = arith.mulf %323, %334 : vector<2x8x32xf32>
    %336 = vector.shape_cast %325 : vector<32xf32> to vector<1x1x32xf32>
    %337 = vector.broadcast %336 : vector<1x1x32xf32> to vector<2x8x32xf32>
    %338 = arith.mulf %335, %337 : vector<2x8x32xf32>
    %339 = vector.shape_cast %338 : vector<2x8x32xf32> to vector<16x32xf32>
    %c0_121 = arith.constant 0 : index
    %c0_122 = arith.constant 0 : index
    %c0_123 = arith.constant 0 : index
    %340 = vector.load %arg16[%c0_121, %c0_122, %c0_123] : memref<1x32x64xf32, #tpu.memory_space<vmem>>, vector<1x32x64xf32>
    %341 = vector.shape_cast %340 : vector<1x32x64xf32> to vector<32x64xf32>
    %cst_124 = arith.constant dense<0.000000e+00> : vector<16x64xf32>
    %342 = tpu.matmul %339, %341, %cst_124 {dimension_numbers = #tpu.dot_dimension_numbers<[1], [0], [0], [1], [0, 0, 1, 1], [], []>} : vector<16x32xf32>, vector<32x64xf32>, vector<16x64xf32> -> vector<16x64xf32>
    %cst_125 = arith.constant 0.000000e+00 : f32
    %343 = vector.broadcast %cst_125 : f32 to vector<16x64xf32>
    %344 = arith.maximumf %342, %343 : vector<16x64xf32>
    %c0_126 = arith.constant 0 : index
    %c0_127 = arith.constant 0 : index
    %c0_128 = arith.constant 0 : index
    %345 = vector.load %arg17[%c0_126, %c0_127, %c0_128] : memref<1x64x32xf32, #tpu.memory_space<vmem>>, vector<1x64x32xf32>
    %346 = vector.shape_cast %345 : vector<1x64x32xf32> to vector<64x32xf32>
    %cst_129 = arith.constant dense<0.000000e+00> : vector<16x32xf32>
    %347 = tpu.matmul %344, %346, %cst_129 {dimension_numbers = #tpu.dot_dimension_numbers<[1], [0], [0], [1], [0, 0, 1, 1], [], []>} : vector<16x64xf32>, vector<64x32xf32>, vector<16x32xf32> -> vector<16x32xf32>
    %348 = vector.shape_cast %347 : vector<16x32xf32> to vector<2x8x32xf32>
    %349 = arith.addf %323, %348 : vector<2x8x32xf32>
    %c0_130 = arith.constant 0 : index
    %c0_131 = arith.constant 0 : index
    %c0_132 = arith.constant 0 : index
    %350 = vector.load %arg19[%c0_130, %c0_131, %c0_132] : memref<2x8x32xf32, #tpu.memory_space<vmem>>, vector<2x8x32xf32>
    tpu.vector_store %arg19[%c0_130, %c0_131, %c0_132], %349 {strides = array<i32>} : memref<2x8x32xf32, #tpu.memory_space<vmem>>, vector<2x8x32xf32>,
    %c1_i32 = arith.constant 1 : i32
    %351 = arith.cmpi eq, %arg0, %c1_i32 : i32
    %352 = arith.extui %351 : i1 to i32
    %c0_i32_133 = arith.constant 0 : i32
    %353 = arith.cmpi ne, %352, %c0_i32_133 : i32
    scf.if %353 {
      %c0_134 = arith.constant 0 : index
      %c0_135 = arith.constant 0 : index
      %354 = vector.load %arg18[%c0_134, %c0_135] : memref<1x32xf32, #tpu.memory_space<vmem>>, vector<1x32xf32>
      %355 = vector.shape_cast %354 : vector<1x32xf32> to vector<32xf32>
      %356 = arith.mulf %349, %349 : vector<2x8x32xf32>
      %cst_136 = arith.constant dense<0.000000e+00> : vector<2x8xf32>
      %357 = vector.multi_reduction <add>, %356, %cst_136 [2] : vector<2x8x32xf32> to vector<2x8xf32>
      %358 = vector.shape_cast %357 : vector<2x8xf32> to vector<2x8x1xf32>
      %cst_137 = arith.constant 3.200000e+01 : f32
      %359 = vector.broadcast %cst_137 : f32 to vector<2x8x1xf32>
      %360 = arith.divf %358, %359 : vector<2x8x1xf32>
      %cst_138 = arith.constant 9.99999997E-7 : f32
      %361 = vector.broadcast %cst_138 : f32 to vector<2x8x1xf32>
      %362 = arith.addf %360, %361 : vector<2x8x1xf32>
      %363 = math.rsqrt %362 : vector<2x8x1xf32>
      %364 = vector.broadcast %363 : vector<2x8x1xf32> to vector<2x8x32xf32>
      %365 = arith.mulf %349, %364 : vector<2x8x32xf32>
      %366 = vector.shape_cast %355 : vector<32xf32> to vector<1x1x32xf32>
      %367 = vector.broadcast %366 : vector<1x1x32xf32> to vector<2x8x32xf32>
      %368 = arith.mulf %365, %367 : vector<2x8x32xf32>
      %c0_139 = arith.constant 0 : index
      %c0_140 = arith.constant 0 : index
      %c0_141 = arith.constant 0 : index
      %369 = vector.load %arg19[%c0_139, %c0_140, %c0_141] : memref<2x8x32xf32, #tpu.memory_space<vmem>>, vector<2x8x32xf32>
      tpu.vector_store %arg19[%c0_139, %c0_140, %c0_141], %368 {strides = array<i32>} : memref<2x8x32xf32, #tpu.memory_space<vmem>>, vector<2x8x32xf32>,
      %370 = vector.shape_cast %368 : vector<2x8x32xf32> to vector<16x32xf32>
      %cst_142 = arith.constant 0.176776692 : f32
      %371 = vector.broadcast %cst_142 : f32 to vector<16x32xf32>
      %372 = arith.mulf %370, %371 : vector<16x32xf32>
      %c0_143 = arith.constant 0 : index
      %c0_144 = arith.constant 0 : index
      %373 = vector.load %arg5[%c0_143, %c0_144] : memref<32x64xf32, #tpu.memory_space<vmem>>, vector<32x64xf32>
      %cst_145 = arith.constant dense<0.000000e+00> : vector<16x64xf32>
      %374 = tpu.matmul %372, %373, %cst_145 {dimension_numbers = #tpu.dot_dimension_numbers<[1], [0], [0], [1], [0, 0, 1, 1], [], []>} : vector<16x32xf32>, vector<32x64xf32>, vector<16x64xf32> -> vector<16x64xf32>
      %c0_146 = arith.constant 0 : index
      %c0_147 = arith.constant 0 : index
      %375 = vector.load %arg6[%c0_146, %c0_147] : memref<16x1xi32, #tpu.memory_space<vmem>>, vector<16x1xi32>
      %cst_148 = arith.constant dense<0xFF800000> : vector<16xf32>
      %376 = vector.multi_reduction <maximumf>, %374, %cst_148 [1] : vector<16x64xf32> to vector<16xf32>
      %377 = vector.shape_cast %376 : vector<16xf32> to vector<16x1xf32>
      %378 = vector.broadcast %377 : vector<16x1xf32> to vector<16x64xf32>
      %379 = arith.subf %374, %378 : vector<16x64xf32>
      %380 = math.exp %379 : vector<16x64xf32>
      %cst_149 = arith.constant dense<0.000000e+00> : vector<16xf32>
      %381 = vector.multi_reduction <add>, %380, %cst_149 [1] : vector<16x64xf32> to vector<16xf32>
      %382 = vector.shape_cast %381 : vector<16xf32> to vector<16x1xf32>
      %383 = math.log %382 : vector<16x1xf32>
      %384 = arith.addf %383, %377 : vector<16x1xf32>
      %385 = tpu.iota {dimensions = array<i32: 1>} : vector<16x64xi32>
      %386 = vector.broadcast %375 : vector<16x1xi32> to vector<16x64xi32>
      %387 = arith.cmpi eq, %385, %386 : vector<16x64xi32>
      %cst_150 = arith.constant 0.000000e+00 : f32
      %388 = vector.broadcast %cst_150 : f32 to vector<16x64xf32>
      %389 = arith.select %387, %374, %388 : vector<16x64xi1>, vector<16x64xf32>
      %cst_151 = arith.constant dense<0.000000e+00> : vector<16xf32>
      %390 = vector.multi_reduction <add>, %389, %cst_151 [1] : vector<16x64xf32> to vector<16xf32>
      %391 = vector.shape_cast %390 : vector<16xf32> to vector<16x1xf32>
      %c0_i32_152 = arith.constant 0 : i32
      %392 = vector.broadcast %c0_i32_152 : i32 to vector<16x1xi32>
      %393 = arith.cmpi sge, %375, %392 : vector<16x1xi32>
      %394 = arith.extui %393 : vector<16x1xi1> to vector<16x1xi32>
      %395 = arith.sitofp %394 : vector<16x1xi32> to vector<16x1xf32>
      %396 = arith.subf %384, %391 : vector<16x1xf32>
      %397 = arith.mulf %396, %395 : vector<16x1xf32>
      %cst_153 = arith.constant dense<0.000000e+00> : vector<1xf32>
      %398 = vector.multi_reduction <add>, %397, %cst_153 [0] : vector<16x1xf32> to vector<1xf32>
      %399 = vector.shape_cast %398 : vector<1xf32> to vector<1x1xf32>
      %cst_154 = arith.constant dense<0.000000e+00> : vector<1xf32>
      %400 = vector.multi_reduction <add>, %395, %cst_154 [0] : vector<16x1xf32> to vector<1xf32>
      %401 = vector.shape_cast %400 : vector<1xf32> to vector<1x1xf32>
      %cst_155 = arith.constant 1.000000e+00 : f32
      %402 = vector.broadcast %cst_155 : f32 to vector<1x1xf32>
      %403 = arith.maximumf %401, %402 : vector<1x1xf32>
      %404 = arith.divf %399, %403 : vector<1x1xf32>
      %c0_156 = arith.constant 0 : index
      %c0_157 = arith.constant 0 : index
      %405 = vector.load %arg20[%c0_156, %c0_157] : memref<1x1xf32, #tpu.memory_space<vmem>>, vector<1x1xf32>
      tpu.vector_store %arg20[%c0_156, %c0_157], %404 {strides = array<i32>} : memref<1x1xf32, #tpu.memory_space<vmem>>, vector<1x1xf32>,
    } else {
    }
    return
  }
  func.func @transform_0(%arg0: i32) -> (i32, i32, i32) {
    %c0_i32 = arith.constant 0 : i32
    %c0_i32_0 = arith.constant 0 : i32
    %c0_i32_1 = arith.constant 0 : i32
    %c0_i32_2 = arith.constant 0 : i32
    return %c0_i32, %c0_i32_0, %c0_i32_1 : i32, i32, i32
  }
  func.func @transform_1(%arg0: i32) -> (i32, i32, i32) {
    %c0_i32 = arith.constant 0 : i32
    %c0_i32_0 = arith.constant 0 : i32
    %c0_i32_1 = arith.constant 0 : i32
    %c0_i32_2 = arith.constant 0 : i32
    return %c0_i32, %c0_i32_0, %c0_i32_1 : i32, i32, i32
  }
  func.func @transform_2(%arg0: i32) -> (i32, i32, i32) {
    %c0_i32 = arith.constant 0 : i32
    %c0_i32_0 = arith.constant 0 : i32
    %c0_i32_1 = arith.constant 0 : i32
    %c0_i32_2 = arith.constant 0 : i32
    return %c0_i32, %c0_i32_0, %c0_i32_1 : i32, i32, i32
  }
  func.func @transform_3(%arg0: i32) -> (i32, i32, i32) {
    %c0_i32 = arith.constant 0 : i32
    %c0_i32_0 = arith.constant 0 : i32
    %c0_i32_1 = arith.constant 0 : i32
    %c0_i32_2 = arith.constant 0 : i32
    return %c0_i32, %c0_i32_0, %c0_i32_1 : i32, i32, i32
  }
  func.func @transform_4(%arg0: i32) -> (i32, i32) {
    %c0_i32 = arith.constant 0 : i32
    %c0_i32_0 = arith.constant 0 : i32
    %c0_i32_1 = arith.constant 0 : i32
    return %c0_i32, %c0_i32_0 : i32, i32
  }
  func.func @transform_5(%arg0: i32) -> (i32, i32) {
    %c0_i32 = arith.constant 0 : i32
    %c0_i32_0 = arith.constant 0 : i32
    %c0_i32_1 = arith.constant 0 : i32
    return %c0_i32, %c0_i32_0 : i32, i32
  }
  func.func @transform_6(%arg0: i32) -> (i32, i32, i32) {
    %c0_i32 = arith.constant 0 : i32
    %c0_i32_0 = arith.constant 0 : i32
    %c0_i32_1 = arith.constant 0 : i32
    return %arg0, %c0_i32, %c0_i32_0 : i32, i32, i32
  }
  func.func @transform_7(%arg0: i32) -> (i32, i32, i32, i32) {
    %c0_i32 = arith.constant 0 : i32
    %c0_i32_0 = arith.constant 0 : i32
    %c0_i32_1 = arith.constant 0 : i32
    %c0_i32_2 = arith.constant 0 : i32
    return %arg0, %c0_i32, %c0_i32_0, %c0_i32_1 : i32, i32, i32, i32
  }
  func.func @transform_8(%arg0: i32) -> (i32, i32, i32, i32) {
    %c0_i32 = arith.constant 0 : i32
    %c0_i32_0 = arith.constant 0 : i32
    %c0_i32_1 = arith.constant 0 : i32
    %c0_i32_2 = arith.constant 0 : i32
    return %arg0, %c0_i32, %c0_i32_0, %c0_i32_1 : i32, i32, i32, i32
  }
  func.func @transform_9(%arg0: i32) -> (i32, i32, i32, i32) {
    %c0_i32 = arith.constant 0 : i32
    %c0_i32_0 = arith.constant 0 : i32
    %c0_i32_1 = arith.constant 0 : i32
    %c0_i32_2 = arith.constant 0 : i32
    return %arg0, %c0_i32, %c0_i32_0, %c0_i32_1 : i32, i32, i32, i32
  }
  func.func @transform_10(%arg0: i32) -> (i32, i32, i32, i32) {
    %c0_i32 = arith.constant 0 : i32
    %c0_i32_0 = arith.constant 0 : i32
    %c0_i32_1 = arith.constant 0 : i32
    %c0_i32_2 = arith.constant 0 : i32
    return %arg0, %c0_i32, %c0_i32_0, %c0_i32_1 : i32, i32, i32, i32
  }
  func.func @transform_11(%arg0: i32) -> (i32, i32, i32, i32) {
    %c0_i32 = arith.constant 0 : i32
    %c0_i32_0 = arith.constant 0 : i32
    %c0_i32_1 = arith.constant 0 : i32
    %c0_i32_2 = arith.constant 0 : i32
    return %arg0, %c0_i32, %c0_i32_0, %c0_i32_1 : i32, i32, i32, i32
  }
  func.func @transform_12(%arg0: i32) -> (i32, i32, i32, i32) {
    %c0_i32 = arith.constant 0 : i32
    %c0_i32_0 = arith.constant 0 : i32
    %c0_i32_1 = arith.constant 0 : i32
    %c0_i32_2 = arith.constant 0 : i32
    return %arg0, %c0_i32, %c0_i32_0, %c0_i32_1 : i32, i32, i32, i32
  }
  func.func @transform_13(%arg0: i32) -> (i32, i32, i32, i32) {
    %c0_i32 = arith.constant 0 : i32
    %c0_i32_0 = arith.constant 0 : i32
    %c0_i32_1 = arith.constant 0 : i32
    %c0_i32_2 = arith.constant 0 : i32
    return %arg0, %c0_i32, %c0_i32_0, %c0_i32_1 : i32, i32, i32, i32
  }
  func.func @transform_14(%arg0: i32) -> (i32, i32, i32, i32) {
    %c0_i32 = arith.constant 0 : i32
    %c0_i32_0 = arith.constant 0 : i32
    %c0_i32_1 = arith.constant 0 : i32
    %c0_i32_2 = arith.constant 0 : i32
    return %arg0, %c0_i32, %c0_i32_0, %c0_i32_1 : i32, i32, i32, i32
  }
  func.func @transform_15(%arg0: i32) -> (i32, i32, i32) {
    %c0_i32 = arith.constant 0 : i32
    %c0_i32_0 = arith.constant 0 : i32
    %c0_i32_1 = arith.constant 0 : i32
    return %arg0, %c0_i32, %c0_i32_0 : i32, i32, i32
  }
  func.func @transform_16(%arg0: i32) -> (i32, i32, i32) {
    %c0_i32 = arith.constant 0 : i32
    %c0_i32_0 = arith.constant 0 : i32
    %c0_i32_1 = arith.constant 0 : i32
    return %arg0, %c0_i32, %c0_i32_0 : i32, i32, i32
  }
  func.func @transform_17(%arg0: i32) -> (i32, i32) {
    %c0_i32 = arith.constant 0 : i32
    %c0_i32_0 = arith.constant 0 : i32
    %c0_i32_1 = arith.constant 0 : i32
    return %c0_i32, %c0_i32_0 : i32, i32
  }
  func.func @transform_18(%arg0: i32) -> (i32, i32, i32) {
    %c0_i32 = arith.constant 0 : i32
    %c0_i32_0 = arith.constant 0 : i32
    %c0_i32_1 = arith.constant 0 : i32
    %c0_i32_2 = arith.constant 0 : i32
    return %c0_i32, %c0_i32_0, %c0_i32_1 : i32, i32, i32
  }
  func.func @transform_19(%arg0: i32) -> (i32, i32) {
    %c0_i32 = arith.constant 0 : i32
    %c0_i32_0 = arith.constant 0 : i32
    %c0_i32_1 = arith.constant 0 : i32
    return %c0_i32, %c0_i32_0 : i32, i32
  }
}

</mosaic_0001>

<llo_original>
// kernel: t5_multitask_relation_forward.2
$region0: #{t5_multitask_relation_forward.2}
  #allocation0 [shape = 'u32[]', space=smem, size = 0x4, offset = 0x4, fixed_abs, tag = 'smem constant byte address 0x4 - core index']
  #allocation1 [shape = 'u32[72,128]{1,0:T(1,128)}', space=vmem, size = 0x9000, scoped, tag = 'internal scratch']
  #allocation2 [shape = 'f32[1,1]{1,0:T(1,128)S(1)}', space=vmem, size = 0x200, scoped, tag = 'scoped memory for t5_multitask_relation_forward.2']
  %s0 = inlined_call_operand.vmem [shape: f32[4,8,32], index: 0, kind: input, shape index: {}]
  %s1 = inlined_call_operand.vmem [shape: f32[4,8,8], index: 1, kind: input, shape index: {}]
  %s2 = inlined_call_operand.vmem [shape: f32[4,1,8], index: 2, kind: input, shape index: {}]
  %s3 = inlined_call_operand.vmem [shape: f32[32,1], index: 3, kind: input, shape index: {}]
  %s4 = inlined_call_operand.<no memory space> [shape: f32[1,1], index: 4, kind: input, shape index: {}]
  %s5 = inlined_call_operand.vmem [shape: f32[2,1], index: 5, kind: input, shape index: {}]
  %s6 = inlined_call_operand.vmem [shape: f32[2,2,32], index: 6, kind: input, shape index: {}]
  %s7 = inlined_call_operand.vmem [shape: f32[2,4,32,8], index: 7, kind: input, shape index: {}]
  %s8 = inlined_call_operand.vmem [shape: f32[2,4,32,8], index: 8, kind: input, shape index: {}]
  %s9 = inlined_call_operand.vmem [shape: f32[2,4,32,8], index: 9, kind: input, shape index: {}]
  %s10 = inlined_call_operand.vmem [shape: f32[2,4,8,32], index: 10, kind: input, shape index: {}]
  %s11 = inlined_call_operand.vmem [shape: f32[2,32,64], index: 11, kind: input, shape index: {}]
  %s12 = inlined_call_operand.vmem [shape: f32[2,64,32], index: 12, kind: input, shape index: {}]
  %s13 = inlined_call_operand.vmem [shape: f32[1,32], index: 13, kind: input, shape index: {}]
  %s14 = inlined_call_operand.vmem [shape: f32[4,8,32], index: 14, kind: output, shape index: {0}]
  %s15 = inlined_call_operand.hbm [shape: f32[1,1], index: 15, kind: output, shape index: {1}]
  %16 = xla_tuple %s14, %s15
  %s17 = sld [smem:[#allocation0]]
  $region105: #{t5_multitask_relation_forward.2} parent=0
    _
  %s19 = ssub.s32 1, %s17
  %s20 = scalar_select 0, %s19, %s17
  %v21 = vstv %s4
  %22 = vst [vmem:[#allocation2] sm:$0x1] %v21
  $region1: #{t5_multitask_relation_forward.2} parent=0
    #allocation3 [shape = 'u8[512]{0}', space=vmem, size = 0x400, scoped, tag = 'output window, operand 1, single buffered']
    #allocation4 [shape = 's32[2]{0}', space=sflag, size = 0x8, scoped, tag = 'scoped memory for t5_multitask_relation_forward.2']
    %23 = vsyncpa [#allocation4], 0
    loop: start=0, step=1, limit=4
    $region2: #{t5_multitask_relation_forward.2} parent=1 // loop_pre_header
      _
    $region3: #{t5_multitask_relation_forward.2} parent=1 // loop_header
      %s25 = sphi 0, %s29
      %p26 = scmp.ge.s32.totalorder %s25, 4
      %s33 = sphi 0, %s33
      %s35 = sphi 0, %s33
      %s36 = sphi 0, %s35
      %s50 = sphi 0, %s36
      %s54 = sphi 0, %s54
      %s56 = sphi 0, %s54
      %s57 = sphi 0, %s56
      %s71 = sphi 0, %s57
      %s75 = sphi 0, %s75
      %s77 = sphi 0, %s75
      %s78 = sphi 0, %s77
      %s92 = sphi 0, %s78
      %s96 = sphi 0, %s96
      %s98 = sphi 0, %s96
      %s99 = sphi 0, %s98
      %s113 = sphi 0, %s99
      %s117 = sphi 0, %s117
      %s119 = sphi 0, %s117
      %s120 = sphi 0, %s119
      %s134 = sphi 0, %s120
      %s138 = sphi 0, %s138
      %s140 = sphi 0, %s138
      %s141 = sphi 0, %s140
      %s155 = sphi 0, %s141
      %s161 = sphi 0, %s163
      %s164 = sphi 0, %s161
      %s165 = sphi 0, %s164
      %s181 = sphi 0, %s165
      %s187 = sphi 0, %s189
      %s190 = sphi 0, %s187
      %s191 = sphi 0, %s190
      %s207 = sphi 0, %s191
      %s213 = sphi 0, %s215
      %s216 = sphi 0, %s213
      %s217 = sphi 0, %s216
      %s233 = sphi 0, %s217
      %s239 = sphi 0, %s241
      %s242 = sphi 0, %s239
      %s243 = sphi 0, %s242
      %s259 = sphi 0, %s243
      %s265 = sphi 0, %s267
      %s268 = sphi 0, %s265
      %s269 = sphi 0, %s268
      %s285 = sphi 0, %s269
      %s291 = sphi 0, %s293
      %s294 = sphi 0, %s291
      %s295 = sphi 0, %s294
      %s311 = sphi 0, %s295
      %s317 = sphi 0, %s319
      %s320 = sphi 0, %s317
      %s321 = sphi 0, %s320
      %s337 = sphi 0, %s321
      %s341 = sphi 0, %s341
      %s343 = sphi 0, %s341
      %s344 = sphi 0, %s343
      %s358 = sphi 0, %s344
      %s362 = sphi 0, %s362
      %s364 = sphi 0, %s362
      %s365 = sphi 0, %s364
      %s379 = sphi 0, %s365
      %s383 = sphi 0, %s383
      %s385 = sphi 0, %s383
      %s386 = sphi 0, %s385
      %s400 = sphi 0, %s386
    $region4: #{t5_multitask_relation_forward.2} parent=1 // loop_header_branch
      %28 = sbr.rel (%p26) target = $region8
    $region5: #{t5_multitask_relation_forward.2} parent=1 // loop_body
      %s30 = ssub.s32 %s25, 1
      %s31 = ssub.s32 %s25, 2
      %s32 = sadd.s32 %s25, 1
      %s34 = sadd.s32 %s33, 1
      %p37 = scmp.eq.s32.totalorder %s25, 1
      %p38 = scmp.ne.s32.totalorder %s33, %s35
      %p39 = scmp.eq.s32.totalorder %s25, 0
      %p40 = por %p38, %p39
      %p41 = scmp.ne.s32.totalorder %s33, %s35
      %p42 = scmp.eq.s32.totalorder %s30, 1
      %p43 = por %p41, %p42
      %p44 = scmp.ne.s32.totalorder %s35, %s36
      %p45 = scmp.eq.s32.totalorder %s30, 0
      %p46 = por %p44, %p45
      %p47 = scmp.ne.s32.totalorder %s35, %s36
      %p48 = scmp.eq.s32.totalorder %s31, 1
      %p49 = por %p47, %p48
      %p51 = scmp.ne.s32.totalorder %s36, %s50
      %p52 = scmp.eq.s32.totalorder %s31, 0
      %p53 = por %p51, %p52
      %s55 = sadd.s32 %s54, 1
      %p58 = scmp.eq.s32.totalorder %s25, 1
      %p59 = scmp.ne.s32.totalorder %s54, %s56
      %p60 = scmp.eq.s32.totalorder %s25, 0
      %p61 = por %p59, %p60
      %p62 = scmp.ne.s32.totalorder %s54, %s56
      %p63 = scmp.eq.s32.totalorder %s30, 1
      %p64 = por %p62, %p63
      %p65 = scmp.ne.s32.totalorder %s56, %s57
      %p66 = scmp.eq.s32.totalorder %s30, 0
      %p67 = por %p65, %p66
      %p68 = scmp.ne.s32.totalorder %s56, %s57
      %p69 = scmp.eq.s32.totalorder %s31, 1
      %p70 = por %p68, %p69
      %p72 = scmp.ne.s32.totalorder %s57, %s71
      %p73 = scmp.eq.s32.totalorder %s31, 0
      %p74 = por %p72, %p73
      %s76 = sadd.s32 %s75, 1
      %p79 = scmp.eq.s32.totalorder %s25, 1
      %p80 = scmp.ne.s32.totalorder %s75, %s77
      %p81 = scmp.eq.s32.totalorder %s25, 0
      %p82 = por %p80, %p81
      %p83 = scmp.ne.s32.totalorder %s75, %s77
      %p84 = scmp.eq.s32.totalorder %s30, 1
      %p85 = por %p83, %p84
      %p86 = scmp.ne.s32.totalorder %s77, %s78
      %p87 = scmp.eq.s32.totalorder %s30, 0
      %p88 = por %p86, %p87
      %p89 = scmp.ne.s32.totalorder %s77, %s78
      %p90 = scmp.eq.s32.totalorder %s31, 1
      %p91 = por %p89, %p90
      %p93 = scmp.ne.s32.totalorder %s78, %s92
      %p94 = scmp.eq.s32.totalorder %s31, 0
      %p95 = por %p93, %p94
      %s97 = sadd.s32 %s96, 1
      %p100 = scmp.eq.s32.totalorder %s25, 1
      %p101 = scmp.ne.s32.totalorder %s96, %s98
      %p102 = scmp.eq.s32.totalorder %s25, 0
      %p103 = por %p101, %p102
      %p104 = scmp.ne.s32.totalorder %s96, %s98
      %p105 = scmp.eq.s32.totalorder %s30, 1
      %p106 = por %p104, %p105
      %p107 = scmp.ne.s32.totalorder %s98, %s99
      %p108 = scmp.eq.s32.totalorder %s30, 0
      %p109 = por %p107, %p108
      %p110 = scmp.ne.s32.totalorder %s98, %s99
      %p111 = scmp.eq.s32.totalorder %s31, 1
      %p112 = por %p110, %p111
      %p114 = scmp.ne.s32.totalorder %s99, %s113
      %p115 = scmp.eq.s32.totalorder %s31, 0
      %p116 = por %p114, %p115
      %s118 = sadd.s32 %s117, 1
      %p121 = scmp.eq.s32.totalorder %s25, 1
      %p122 = scmp.ne.s32.totalorder %s117, %s119
      %p123 = scmp.eq.s32.totalorder %s25, 0
      %p124 = por %p122, %p123
      %p125 = scmp.ne.s32.totalorder %s117, %s119
      %p126 = scmp.eq.s32.totalorder %s30, 1
      %p127 = por %p125, %p126
      %p128 = scmp.ne.s32.totalorder %s119, %s120
      %p129 = scmp.eq.s32.totalorder %s30, 0
      %p130 = por %p128, %p129
      %p131 = scmp.ne.s32.totalorder %s119, %s120
      %p132 = scmp.eq.s32.totalorder %s31, 1
      %p133 = por %p131, %p132
      %p135 = scmp.ne.s32.totalorder %s120, %s134
      %p136 = scmp.eq.s32.totalorder %s31, 0
      %p137 = por %p135, %p136
      %s139 = sadd.s32 %s138, 1
      %p142 = scmp.eq.s32.totalorder %s25, 1
      %p143 = scmp.ne.s32.totalorder %s138, %s140
      %p144 = scmp.eq.s32.totalorder %s25, 0
      %p145 = por %p143, %p144
      %p146 = scmp.ne.s32.totalorder %s138, %s140
      %p147 = scmp.eq.s32.totalorder %s30, 1
      %p148 = por %p146, %p147
      %p149 = scmp.ne.s32.totalorder %s140, %s141
      %p150 = scmp.eq.s32.totalorder %s30, 0
      %p151 = por %p149, %p150
      %p152 = scmp.ne.s32.totalorder %s140, %s141
      %p153 = scmp.eq.s32.totalorder %s31, 1
      %p154 = por %p152, %p153
      %p156 = scmp.ne.s32.totalorder %s141, %s155
      %p157 = scmp.eq.s32.totalorder %s31, 0
      %p158 = por %p156, %p157
      %s159 = ssub.s32 %s25, %s32
      %p160 = scmp.eq.s32.totalorder %s159, 0
      %s162 = sadd.s32 %s161, 1
      %s163 = scalar_select %p160, %s161, %s162
      %p166 = pneg %p160
      %p167 = scmp.eq.s32.totalorder %s25, 1
      %p168 = por %p166, %p167
      %p169 = scmp.ne.s32.totalorder %s161, %s164
      %p170 = scmp.eq.s32.totalorder %s25, 0
      %p171 = por %p169, %p170
      %p172 = scmp.ne.s32.totalorder %s161, %s164
      %p173 = scmp.eq.s32.totalorder %s30, 1
      %p174 = por %p172, %p173
      %p175 = scmp.ne.s32.totalorder %s164, %s165
      %p176 = scmp.eq.s32.totalorder %s30, 0
      %p177 = por %p175, %p176
      %p178 = scmp.ne.s32.totalorder %s164, %s165
      %p179 = scmp.eq.s32.totalorder %s31, 1
      %p180 = por %p178, %p179
      %p182 = scmp.ne.s32.totalorder %s165, %s181
      %p183 = scmp.eq.s32.totalorder %s31, 0
      %p184 = por %p182, %p183
      %s185 = ssub.s32 %s25, %s32
      %p186 = scmp.eq.s32.totalorder %s185, 0
      %s188 = sadd.s32 %s187, 1
      %s189 = scalar_select %p186, %s187, %s188
      %p192 = pneg %p186
      %p193 = scmp.eq.s32.totalorder %s25, 1
      %p194 = por %p192, %p193
      %p195 = scmp.ne.s32.totalorder %s187, %s190
      %p196 = scmp.eq.s32.totalorder %s25, 0
      %p197 = por %p195, %p196
      %p198 = scmp.ne.s32.totalorder %s187, %s190
      %p199 = scmp.eq.s32.totalorder %s30, 1
      %p200 = por %p198, %p199
      %p201 = scmp.ne.s32.totalorder %s190, %s191
      %p202 = scmp.eq.s32.totalorder %s30, 0
      %p203 = por %p201, %p202
      %p204 = scmp.ne.s32.totalorder %s190, %s191
      %p205 = scmp.eq.s32.totalorder %s31, 1
      %p206 = por %p204, %p205
      %p208 = scmp.ne.s32.totalorder %s191, %s207
      %p209 = scmp.eq.s32.totalorder %s31, 0
      %p210 = por %p208, %p209
      %s211 = ssub.s32 %s25, %s32
      %p212 = scmp.eq.s32.totalorder %s211, 0
      %s214 = sadd.s32 %s213, 1
      %s215 = scalar_select %p212, %s213, %s214
      %p218 = pneg %p212
      %p219 = scmp.eq.s32.totalorder %s25, 1
      %p220 = por %p218, %p219
      %p221 = scmp.ne.s32.totalorder %s213, %s216
      %p222 = scmp.eq.s32.totalorder %s25, 0
      %p223 = por %p221, %p222
      %p224 = scmp.ne.s32.totalorder %s213, %s216
      %p225 = scmp.eq.s32.totalorder %s30, 1
      %p226 = por %p224, %p225
      %p227 = scmp.ne.s32.totalorder %s216, %s217
      %p228 = scmp.eq.s32.totalorder %s30, 0
      %p229 = por %p227, %p228
      %p230 = scmp.ne.s32.totalorder %s216, %s217
      %p231 = scmp.eq.s32.totalorder %s31, 1
      %p232 = por %p230, %p231
      %p234 = scmp.ne.s32.totalorder %s217, %s233
      %p235 = scmp.eq.s32.totalorder %s31, 0
      %p236 = por %p234, %p235
      %s237 = ssub.s32 %s25, %s32
      %p238 = scmp.eq.s32.totalorder %s237, 0
      %s240 = sadd.s32 %s239, 1
      %s241 = scalar_select %p238, %s239, %s240
      %p244 = pneg %p238
      %p245 = scmp.eq.s32.totalorder %s25, 1
      %p246 = por %p244, %p245
      %p247 = scmp.ne.s32.totalorder %s239, %s242
      %p248 = scmp.eq.s32.totalorder %s25, 0
      %p249 = por %p247, %p248
      %p250 = scmp.ne.s32.totalorder %s239, %s242
      %p251 = scmp.eq.s32.totalorder %s30, 1
      %p252 = por %p250, %p251
      %p253 = scmp.ne.s32.totalorder %s242, %s243
      %p254 = scmp.eq.s32.totalorder %s30, 0
      %p255 = por %p253, %p254
      %p256 = scmp.ne.s32.totalorder %s242, %s243
      %p257 = scmp.eq.s32.totalorder %s31, 1
      %p258 = por %p256, %p257
      %p260 = scmp.ne.s32.totalorder %s243, %s259
      %p261 = scmp.eq.s32.totalorder %s31, 0
      %p262 = por %p260, %p261
      %s263 = ssub.s32 %s25, %s32
      %p264 = scmp.eq.s32.totalorder %s263, 0
      %s266 = sadd.s32 %s265, 1
      %s267 = scalar_select %p264, %s265, %s266
      %p270 = pneg %p264
      %p271 = scmp.eq.s32.totalorder %s25, 1
      %p272 = por %p270, %p271
      %p273 = scmp.ne.s32.totalorder %s265, %s268
      %p274 = scmp.eq.s32.totalorder %s25, 0
      %p275 = por %p273, %p274
      %p276 = scmp.ne.s32.totalorder %s265, %s268
      %p277 = scmp.eq.s32.totalorder %s30, 1
      %p278 = por %p276, %p277
      %p279 = scmp.ne.s32.totalorder %s268, %s269
      %p280 = scmp.eq.s32.totalorder %s30, 0
      %p281 = por %p279, %p280
      %p282 = scmp.ne.s32.totalorder %s268, %s269
      %p283 = scmp.eq.s32.totalorder %s31, 1
      %p284 = por %p282, %p283
      %p286 = scmp.ne.s32.totalorder %s269, %s285
      %p287 = scmp.eq.s32.totalorder %s31, 0
      %p288 = por %p286, %p287
      %s289 = ssub.s32 %s25, %s32
      %p290 = scmp.eq.s32.totalorder %s289, 0
      %s292 = sadd.s32 %s291, 1
      %s293 = scalar_select %p290, %s291, %s292
      %p296 = pneg %p290
      %p297 = scmp.eq.s32.totalorder %s25, 1
      %p298 = por %p296, %p297
      %p299 = scmp.ne.s32.totalorder %s291, %s294
      %p300 = scmp.eq.s32.totalorder %s25, 0
      %p301 = por %p299, %p300
      %p302 = scmp.ne.s32.totalorder %s291, %s294
      %p303 = scmp.eq.s32.totalorder %s30, 1
      %p304 = por %p302, %p303
      %p305 = scmp.ne.s32.totalorder %s294, %s295
      %p306 = scmp.eq.s32.totalorder %s30, 0
      %p307 = por %p305, %p306
      %p308 = scmp.ne.s32.totalorder %s294, %s295
      %p309 = scmp.eq.s32.totalorder %s31, 1
      %p310 = por %p308, %p309
      %p312 = scmp.ne.s32.totalorder %s295, %s311
      %p313 = scmp.eq.s32.totalorder %s31, 0
      %p314 = por %p312, %p313
      %s315 = ssub.s32 %s25, %s32
      %p316 = scmp.eq.s32.totalorder %s315, 0
      %s318 = sadd.s32 %s317, 1
      %s319 = scalar_select %p316, %s317, %s318
      %p322 = pneg %p316
      %p323 = scmp.eq.s32.totalorder %s25, 1
      %p324 = por %p322, %p323
      %p325 = scmp.ne.s32.totalorder %s317, %s320
      %p326 = scmp.eq.s32.totalorder %s25, 0
      %p327 = por %p325, %p326
      %p328 = scmp.ne.s32.totalorder %s317, %s320
      %p329 = scmp.eq.s32.totalorder %s30, 1
      %p330 = por %p328, %p329
      %p331 = scmp.ne.s32.totalorder %s320, %s321
      %p332 = scmp.eq.s32.totalorder %s30, 0
      %p333 = por %p331, %p332
      %p334 = scmp.ne.s32.totalorder %s320, %s321
      %p335 = scmp.eq.s32.totalorder %s31, 1
      %p336 = por %p334, %p335
      %p338 = scmp.ne.s32.totalorder %s321, %s337
      %p339 = scmp.eq.s32.totalorder %s31, 0
      %p340 = por %p338, %p339
      %s342 = sadd.s32 %s341, 1
      %p345 = scmp.eq.s32.totalorder %s25, 1
      %p346 = scmp.ne.s32.totalorder %s341, %s343
      %p347 = scmp.eq.s32.totalorder %s25, 0
      %p348 = por %p346, %p347
      %p349 = scmp.ne.s32.totalorder %s341, %s343
      %p350 = scmp.eq.s32.totalorder %s30, 1
      %p351 = por %p349, %p350
      %p352 = scmp.ne.s32.totalorder %s343, %s344
      %p353 = scmp.eq.s32.totalorder %s30, 0
      %p354 = por %p352, %p353
      %p355 = scmp.ne.s32.totalorder %s343, %s344
      %p356 = scmp.eq.s32.totalorder %s31, 1
      %p357 = por %p355, %p356
      %p359 = scmp.ne.s32.totalorder %s344, %s358
      %p360 = scmp.eq.s32.totalorder %s31, 0
      %p361 = por %p359, %p360
      %s363 = sadd.s32 %s362, 1
      %p366 = scmp.eq.s32.totalorder %s25, 1
      %p367 = scmp.ne.s32.totalorder %s362, %s364
      %p368 = scmp.eq.s32.totalorder %s25, 0
      %p369 = por %p367, %p368
      %p370 = scmp.ne.s32.totalorder %s362, %s364
      %p371 = scmp.eq.s32.totalorder %s30, 1
      %p372 = por %p370, %p371
      %p373 = scmp.ne.s32.totalorder %s364, %s365
      %p374 = scmp.eq.s32.totalorder %s30, 0
      %p375 = por %p373, %p374
      %p376 = scmp.ne.s32.totalorder %s364, %s365
      %p377 = scmp.eq.s32.totalorder %s31, 1
      %p378 = por %p376, %p377
      %p380 = scmp.ne.s32.totalorder %s365, %s379
      %p381 = scmp.eq.s32.totalorder %s31, 0
      %p382 = por %p380, %p381
      %s384 = sadd.s32 %s383, 1
      %p387 = scmp.eq.s32.totalorder %s25, 1
      %p388 = scmp.ne.s32.totalorder %s383, %s385
      %p389 = scmp.eq.s32.totalorder %s25, 0
      %p390 = por %p388, %p389
      %p391 = scmp.ne.s32.totalorder %s383, %s385
      %p392 = scmp.eq.s32.totalorder %s30, 1
      %p393 = por %p391, %p392
      %p394 = scmp.ne.s32.totalorder %s385, %s386
      %p395 = scmp.eq.s32.totalorder %s30, 0
      %p396 = por %p394, %p395
      %p397 = scmp.ne.s32.totalorder %s385, %s386
      %p398 = scmp.eq.s32.totalorder %s31, 1
      %p399 = por %p397, %p398
      %p401 = scmp.ne.s32.totalorder %s386, %s400
      %p402 = scmp.eq.s32.totalorder %s31, 0
      %p403 = por %p401, %p402
      %p404 = scmp.le.s32.totalorder 1, %s25
      %p405 = scmp.lt.s32.totalorder %s25, 3
      %p406 = pnand %p404, %p405
      %p407 = pneg %p406
      // Predicated region
      $region9: #{t5_multitask_relation_forward.2} parent=5 // pred_check
        _
      $region10: #{t5_multitask_relation_forward.2} parent=5 // pred_check_branch
        %409 = sbr.rel (%p406) target = $region12
      $region11: #{t5_multitask_relation_forward.2} parent=5 // pred_region
        %s410 = ssub.s32 %s25, 1
        // Predicated region
        $region13: #{t5_multitask_relation_forward.2} parent=11 // pred_check
          %p411 = pneg %p46
        $region14: #{t5_multitask_relation_forward.2} parent=11 // pred_check_branch
          %413 = sbr.rel (%p411) target = $region16
        $region15: #{t5_multitask_relation_forward.2} parent=11 // pred_region
          _
        $region16: #{t5_multitask_relation_forward.2} parent=11 // pred_fallthru
          _
        // Predicated region
        $region17: #{t5_multitask_relation_forward.2} parent=11 // pred_check
          %p414 = pneg %p67
        $region18: #{t5_multitask_relation_forward.2} parent=11 // pred_check_branch
          %416 = sbr.rel (%p414) target = $region20
        $region19: #{t5_multitask_relation_forward.2} parent=11 // pred_region
          _
        $region20: #{t5_multitask_relation_forward.2} parent=11 // pred_fallthru
          _
        // Predicated region
        $region21: #{t5_multitask_relation_forward.2} parent=11 // pred_check
          %p417 = pneg %p88
        $region22: #{t5_multitask_relation_forward.2} parent=11 // pred_check_branch
          %419 = sbr.rel (%p417) target = $region24
        $region23: #{t5_multitask_relation_forward.2} parent=11 // pred_region
          _
        $region24: #{t5_multitask_relation_forward.2} parent=11 // pred_fallthru
          _
        // Predicated region
        $region25: #{t5_multitask_relation_forward.2} parent=11 // pred_check
          %p420 = pneg %p109
        $region26: #{t5_multitask_relation_forward.2} parent=11 // pred_check_branch
          %422 = sbr.rel (%p420) target = $region28
        $region27: #{t5_multitask_relation_forward.2} parent=11 // pred_region
          _
        $region28: #{t5_multitask_relation_forward.2} parent=11 // pred_fallthru
          _
        // Predicated region
        $region29: #{t5_multitask_relation_forward.2} parent=11 // pred_check
          %p423 = pneg %p130
        $region30: #{t5_multitask_relation_forward.2} parent=11 // pred_check_branch
          %425 = sbr.rel (%p423) target = $region32
        $region31: #{t5_multitask_relation_forward.2} parent=11 // pred_region
          _
        $region32: #{t5_multitask_relation_forward.2} parent=11 // pred_fallthru
          _
        // Predicated region
        $region33: #{t5_multitask_relation_forward.2} parent=11 // pred_check
          %p426 = pneg %p151
        $region34: #{t5_multitask_relation_forward.2} parent=11 // pred_check_branch
          %428 = sbr.rel (%p426) target = $region36
        $region35: #{t5_multitask_relation_forward.2} parent=11 // pred_region
          _
        $region36: #{t5_multitask_relation_forward.2} parent=11 // pred_fallthru
          _
        // Predicated region
        $region37: #{t5_multitask_relation_forward.2} parent=11 // pred_check
          %p429 = pneg %p354
        $region38: #{t5_multitask_relation_forward.2} parent=11 // pred_check_branch
          %431 = sbr.rel (%p429) target = $region40
        $region39: #{t5_multitask_relation_forward.2} parent=11 // pred_region
          _
        $region40: #{t5_multitask_relation_forward.2} parent=11 // pred_fallthru
          _
      $region12: #{t5_multitask_relation_forward.2} parent=5 // pred_fallthru
        _
      %p432 = scmp.lt.s32.totalorder %s25, 2
      // Predicated region
      $region41: #{t5_multitask_relation_forward.2} parent=5 // pred_check
        %p433 = pneg %p432
      $region42: #{t5_multitask_relation_forward.2} parent=5 // pred_check_branch
        %435 = sbr.rel (%p433) target = $region44
      $region43: #{t5_multitask_relation_forward.2} parent=5 // pred_region
        // Predicated region
        $region45: #{t5_multitask_relation_forward.2} parent=43 // pred_check
          %p436 = pneg %p171
        $region46: #{t5_multitask_relation_forward.2} parent=43 // pred_check_branch
          %438 = sbr.rel (%p436) target = $region48
        $region47: #{t5_multitask_relation_forward.2} parent=43 // pred_region
          %p439 = scmp.lt.s32.totalorder %s25, 1
          %s440 = scalar_select %p439, %s25, 1
          %s441 = smul.addr %s440, 2
          %s442 = scalar_lea.vmem %s6, %s441
        $region48: #{t5_multitask_relation_forward.2} parent=43 // pred_fallthru
          _
        // Predicated region
        $region49: #{t5_multitask_relation_forward.2} parent=43 // pred_check
          %p443 = pneg %p197
        $region50: #{t5_multitask_relation_forward.2} parent=43 // pred_check_branch
          %445 = sbr.rel (%p443) target = $region52
        $region51: #{t5_multitask_relation_forward.2} parent=43 // pred_region
          %p446 = scmp.lt.s32.totalorder %s25, 1
          %s447 = scalar_select %p446, %s25, 1
          %s448 = smul.addr %s447, 16
          %s449 = smul.addr %s448, 8
          %s450 = scalar_lea.vmem %s7, %s449
        $region52: #{t5_multitask_relation_forward.2} parent=43 // pred_fallthru
          _
        // Predicated region
        $region53: #{t5_multitask_relation_forward.2} parent=43 // pred_check
          %p451 = pneg %p223
        $region54: #{t5_multitask_relation_forward.2} parent=43 // pred_check_branch
          %453 = sbr.rel (%p451) target = $region56
        $region55: #{t5_multitask_relation_forward.2} parent=43 // pred_region
          %p454 = scmp.lt.s32.totalorder %s25, 1
          %s455 = scalar_select %p454, %s25, 1
          %s456 = smul.addr %s455, 16
          %s457 = smul.addr %s456, 8
          %s458 = scalar_lea.vmem %s8, %s457
        $region56: #{t5_multitask_relation_forward.2} parent=43 // pred_fallthru
          _
        // Predicated region
        $region57: #{t5_multitask_relation_forward.2} parent=43 // pred_check
          %p459 = pneg %p249
        $region58: #{t5_multitask_relation_forward.2} parent=43 // pred_check_branch
          %461 = sbr.rel (%p459) target = $region60
        $region59: #{t5_multitask_relation_forward.2} parent=43 // pred_region
          %p462 = scmp.lt.s32.totalorder %s25, 1
          %s463 = scalar_select %p462, %s25, 1
          %s464 = smul.addr %s463, 16
          %s465 = smul.addr %s464, 8
          %s466 = scalar_lea.vmem %s9, %s465
        $region60: #{t5_multitask_relation_forward.2} parent=43 // pred_fallthru
          _
        // Predicated region
        $region61: #{t5_multitask_relation_forward.2} parent=43 // pred_check
          %p467 = pneg %p275
        $region62: #{t5_multitask_relation_forward.2} parent=43 // pred_check_branch
          %469 = sbr.rel (%p467) target = $region64
        $region63: #{t5_multitask_relation_forward.2} parent=43 // pred_region
          %p470 = scmp.lt.s32.totalorder %s25, 1
          %s471 = scalar_select %p470, %s25, 1
          %s472 = smul.addr %s471, 4
          %s473 = smul.addr %s472, 8
          %s474 = scalar_lea.vmem %s10, %s473
        $region64: #{t5_multitask_relation_forward.2} parent=43 // pred_fallthru
          _
        // Predicated region
        $region65: #{t5_multitask_relation_forward.2} parent=43 // pred_check
          %p475 = pneg %p301
        $region66: #{t5_multitask_relation_forward.2} parent=43 // pred_check_branch
          %477 = sbr.rel (%p475) target = $region68
        $region67: #{t5_multitask_relation_forward.2} parent=43 // pred_region
          %p478 = scmp.lt.s32.totalorder %s25, 1
          %s479 = scalar_select %p478, %s25, 1
          %s480 = smul.addr %s479, 4
          %s481 = smul.addr %s480, 8
          %s482 = scalar_lea.vmem %s11, %s481
        $region68: #{t5_multitask_relation_forward.2} parent=43 // pred_fallthru
          _
        // Predicated region
        $region69: #{t5_multitask_relation_forward.2} parent=43 // pred_check
          %p483 = pneg %p327
        $region70: #{t5_multitask_relation_forward.2} parent=43 // pred_check_branch
          %485 = sbr.rel (%p483) target = $region72
        $region71: #{t5_multitask_relation_forward.2} parent=43 // pred_region
          %p486 = scmp.lt.s32.totalorder %s25, 1
          %s487 = scalar_select %p486, %s25, 1
          %s488 = smul.addr %s487, 8
          %s489 = smul.addr %s488, 8
          %s490 = scalar_lea.vmem %s12, %s489
        $region72: #{t5_multitask_relation_forward.2} parent=43 // pred_fallthru
          _
      $region44: #{t5_multitask_relation_forward.2} parent=5 // pred_fallthru
        _
      %p491 = scmp.le.s32.totalorder 1, %s25
      %p492 = scmp.lt.s32.totalorder %s25, 3
      %p493 = pnand %p491, %p492
      %p494 = pneg %p493
      // Predicated region
      $region73: #{t5_multitask_relation_forward.2} parent=5 // pred_check
        _
      $region74: #{t5_multitask_relation_forward.2} parent=5 // pred_check_branch
        %496 = sbr.rel (%p493) target = $region76
      $region75: #{t5_multitask_relation_forward.2} parent=5 // pred_region
        %s497 = ssub.s32 %s25, 1
        %p498 = pneg %p46
        %p499 = pneg %p43
        %p500 = pneg %p67
        %p501 = pneg %p64
        %p502 = pneg %p88
        %p503 = pneg %p85
        %p504 = pneg %p109
        %p505 = pneg %p106
        %p506 = pneg %p130
        %p507 = pneg %p127
        %p508 = pneg %p151
        %p509 = pneg %p148
        %p510 = scmp.lt.s32.totalorder %s30, 1
        %s511 = scalar_select %p510, %s30, 1
        %s512 = smul.addr %s511, 2
        %s513 = scalar_lea.vmem %s6, %s512
        %p514 = pneg %p177
        %p515 = pneg %p174
        %p516 = scmp.lt.s32.totalorder %s30, 1
        %s517 = scalar_select %p516, %s30, 1
        %s518 = smul.addr %s517, 16
        %s519 = smul.addr %s518, 8
        %s520 = scalar_lea.vmem %s7, %s519
        %p521 = pneg %p203
        %p522 = pneg %p200
        %p523 = scmp.lt.s32.totalorder %s30, 1
        %s524 = scalar_select %p523, %s30, 1
        %s525 = smul.addr %s524, 16
        %s526 = smul.addr %s525, 8
        %s527 = scalar_lea.vmem %s8, %s526
        %p528 = pneg %p229
        %p529 = pneg %p226
        %p530 = scmp.lt.s32.totalorder %s30, 1
        %s531 = scalar_select %p530, %s30, 1
        %s532 = smul.addr %s531, 16
        %s533 = smul.addr %s532, 8
        %s534 = scalar_lea.vmem %s9, %s533
        %p535 = pneg %p255
        %p536 = pneg %p252
        %p537 = scmp.lt.s32.totalorder %s30, 1
        %s538 = scalar_select %p537, %s30, 1
        %s539 = smul.addr %s538, 4
        %s540 = smul.addr %s539, 8
        %s541 = scalar_lea.vmem %s10, %s540
        %p542 = pneg %p281
        %p543 = pneg %p278
        %p544 = scmp.lt.s32.totalorder %s30, 1
        %s545 = scalar_select %p544, %s30, 1
        %s546 = smul.addr %s545, 4
        %s547 = smul.addr %s546, 8
        %s548 = scalar_lea.vmem %s11, %s547
        %p549 = pneg %p307
        %p550 = pneg %p304
        %p551 = scmp.lt.s32.totalorder %s30, 1
        %s552 = scalar_select %p551, %s30, 1
        %s553 = smul.addr %s552, 8
        %s554 = smul.addr %s553, 8
        %s555 = scalar_lea.vmem %s12, %s554
        %p556 = pneg %p333
        %p557 = pneg %p330
        %p558 = pneg %p354
        %p559 = pneg %p351
        %p560 = pneg %p375
        %p561 = pneg %p372
        %p562 = pneg %p396
        %p563 = pneg %p393
        %p564 = scmp.lt.s32.totalorder %s30, 1
        %s565 = scalar_select %p564, %s30, 1
        %s566 = smul.addr %s565, 2
        %s567 = scalar_lea.vmem %s6, %s566
        %p568 = scmp.lt.s32.totalorder %s30, 1
        %s569 = scalar_select %p568, %s30, 1
        %s570 = smul.addr %s569, 16
        %s571 = smul.addr %s570, 8
        %s572 = scalar_lea.vmem %s7, %s571
        %p573 = scmp.lt.s32.totalorder %s30, 1
        %s574 = scalar_select %p573, %s30, 1
        %s575 = smul.addr %s574, 16
        %s576 = smul.addr %s575, 8
        %s577 = scalar_lea.vmem %s8, %s576
        %p578 = scmp.lt.s32.totalorder %s30, 1
        %s579 = scalar_select %p578, %s30, 1
        %s580 = smul.addr %s579, 16
        %s581 = smul.addr %s580, 8
        %s582 = scalar_lea.vmem %s9, %s581
        %p583 = scmp.lt.s32.totalorder %s30, 1
        %s584 = scalar_select %p583, %s30, 1
        %s585 = smul.addr %s584, 4
        %s586 = smul.addr %s585, 8
        %s587 = scalar_lea.vmem %s10, %s586
        %p588 = scmp.lt.s32.totalorder %s30, 1
        %s589 = scalar_select %p588, %s30, 1
        %s590 = smul.addr %s589, 4
        %s591 = smul.addr %s590, 8
        %s592 = scalar_lea.vmem %s11, %s591
        %p593 = scmp.lt.s32.totalorder %s30, 1
        %s594 = scalar_select %p593, %s30, 1
        %s595 = smul.addr %s594, 8
        %s596 = smul.addr %s595, 8
        %s597 = scalar_lea.vmem %s12, %s596
        %p598 = scmp.eq.s32.totalorder %s30, 0
        // Predicated region
        $region77: #{t5_multitask_relation_forward.2} parent=75 // pred_check
          %p599 = pneg %p598
        $region78: #{t5_multitask_relation_forward.2} parent=75 // pred_check_branch
          %601 = sbr.rel (%p599) target = $region80
        $region79: #{t5_multitask_relation_forward.2} parent=75 // pred_region
          %v602 = vld [vmem:[%s0] sm:$0xff]
          %v603 = vld [vmem:[%s0 + $0x8] sm:$0xff]
          %v604 = vld [vmem:[%s0 + $0x10] sm:$0xff]
          %v605 = vld [vmem:[%s0 + $0x18] sm:$0xff]
          %vm606 = vcmask 261120
          %607 = vst.msk [vmem:[%s14] sm:$0xff] %vm606, %v602
          %608 = vst.msk [vmem:[%s14 + $0x8] sm:$0xff] %vm606, %v603
          %609 = vst.msk [vmem:[%s14 + $0x10] sm:$0xff] %vm606, %v604
          %610 = vst.msk [vmem:[%s14 + $0x18] sm:$0xff] %vm606, %v605
        $region80: #{t5_multitask_relation_forward.2} parent=75 // pred_fallthru
          _
        %v611 = vld [vmem:[%s14] sm:$0xff]
        %v612 = vld [vmem:[%s14 + $0x8] sm:$0xff]
        %v613 = vld [vmem:[%s14 + $0x10] sm:$0xff]
        %v614 = vld [vmem:[%s14 + $0x18] sm:$0xff]
        %v615 = vld [vmem:[%s567] sm:$0x3]
        %v616 = vmul.f32 %v611, %v611
        %v617 = vmul.f32 %v612, %v612
        %v618 = vmul.f32 %v613, %v613
        %v619 = vmul.f32 %v614, %v614
        %vm620 = vcmask 261120
        %v621 = vsel %vm620, %v616, 0.0
        %622 = vadd.xlane.f32.xlu0 %v621
        %v623 = vpop.xlane.xlu0 %622
        %v624 = vsel %vm620, %v617, 0.0
        %625 = vadd.xlane.f32.xlu0 %v624
        %v626 = vpop.xlane.xlu0 %625
        %v627 = vsel %vm620, %v618, 0.0
        %628 = vadd.xlane.f32.xlu0 %v627
        %v629 = vpop.xlane.xlu0 %628
        %v630 = vsel %vm620, %v619, 0.0
        %631 = vadd.xlane.f32.xlu0 %v630
        %v632 = vpop.xlane.xlu0 %631
        %v633 = vrcp.pop 32.0
        %v634 = vmul.f32 32.0, %v633
        %v635 = vsub.f32 1.0, %v634
        %v636 = vmul.f32 %v633, %v635
        %v637 = vadd.f32 %v633, %v636
        %vm638 = vweird.f32 %v633
        %v639 = vsel %vm638, %v633, %v637
        %v640 = vmul.f32 %v623, %v639
        %v641 = vmul.f32 %v626, %v639
        %v642 = vmul.f32 %v629, %v639
        %v643 = vmul.f32 %v632, %v639
        %v644 = vadd.f32 %v640, 1e-06
        %v645 = vadd.f32 %v641, 1e-06
        %v646 = vadd.f32 %v642, 1e-06
        %v647 = vadd.f32 %v643, 1e-06
        %v648 = vrsqrt.pop %v644
        %v649 = vmul.f32 %v648, %v644
        %v650 = vmul.f32 %v649, %v648
        %v651 = vmul.f32 0.5, %v650
        %v652 = vsub.f32 1.5, %v651
        %v653 = vmul.f32 %v648, %v652
        %vm654 = vweird.f32 %v644
        %vm655 = vweird.f32 %v648
        %vm656 = vmor %vm654, %vm655
        %v657 = vsel %vm656, %v648, %v653
        %v658 = vrsqrt.pop %v645
        %v659 = vmul.f32 %v658, %v645
        %v660 = vmul.f32 %v659, %v658
        %v661 = vmul.f32 0.5, %v660
        %v662 = vsub.f32 1.5, %v661
        %v663 = vmul.f32 %v658, %v662
        %vm664 = vweird.f32 %v645
        %vm665 = vweird.f32 %v658
        %vm666 = vmor %vm664, %vm665
        %v667 = vsel %vm666, %v658, %v663
        %v668 = vrsqrt.pop %v646
        %v669 = vmul.f32 %v668, %v646
        %v670 = vmul.f32 %v669, %v668
        %v671 = vmul.f32 0.5, %v670
        %v672 = vsub.f32 1.5, %v671
        %v673 = vmul.f32 %v668, %v672
        %vm674 = vweird.f32 %v646
        %vm675 = vweird.f32 %v668
        %vm676 = vmor %vm674, %vm675
        %v677 = vsel %vm676, %v668, %v673
        %v678 = vrsqrt.pop %v647
        %v679 = vmul.f32 %v678, %v647
        %v680 = vmul.f32 %v679, %v678
        %v681 = vmul.f32 0.5, %v680
        %v682 = vsub.f32 1.5, %v681
        %v683 = vmul.f32 %v678, %v682
        %vm684 = vweird.f32 %v647
        %vm685 = vweird.f32 %v678
        %vm686 = vmor %vm684, %vm685
        %v687 = vsel %vm686, %v678, %v683
        %v688 = vmul.f32 %v611, %v657
        %v689 = vmul.f32 %v612, %v667
        %v690 = vmul.f32 %v613, %v677
        %v691 = vmul.f32 %v614, %v687
        %v692 = vperm.slane %v615, 0
        %v693 = vmul.f32 %v688, %v692
        %v694 = vmul.f32 %v689, %v692
        %v695 = vmul.f32 %v690, %v692
        %v696 = vmul.f32 %v691, %v692
        %v697 = vld [vmem:[%s572] sm:$0xff]
        %v698 = vld [vmem:[%s572 + $0x8] sm:$0xff]
        %v699 = vld [vmem:[%s572 + $0x10] sm:$0xff]
        %v700 = vld [vmem:[%s572 + $0x18] sm:$0xff]
        %v701 = vld [vmem:[%s572 + $0x20] sm:$0xff]
        %v702 = vld [vmem:[%s572 + $0x28] sm:$0xff]
        %v703 = vld [vmem:[%s572 + $0x30] sm:$0xff]
        %v704 = vld [vmem:[%s572 + $0x38] sm:$0xff]
        %v705 = vld [vmem:[%s572 + $0x40] sm:$0xff]
        %v706 = vld [vmem:[%s572 + $0x48] sm:$0xff]
        %v707 = vld [vmem:[%s572 + $0x50] sm:$0xff]
        %v708 = vld [vmem:[%s572 + $0x58] sm:$0xff]
        %v709 = vld [vmem:[%s572 + $0x60] sm:$0xff]
        %v710 = vld [vmem:[%s572 + $0x68] sm:$0xff]
        %v711 = vld [vmem:[%s572 + $0x70] sm:$0xff]
        %v712 = vld [vmem:[%s572 + $0x78] sm:$0xff]
        %v713 = vld [vmem:[%s577] sm:$0xff]
        %v714 = vld [vmem:[%s577 + $0x8] sm:$0xff]
        %v715 = vld [vmem:[%s577 + $0x10] sm:$0xff]
        %v716 = vld [vmem:[%s577 + $0x18] sm:$0xff]
        %v717 = vld [vmem:[%s577 + $0x20] sm:$0xff]
        %v718 = vld [vmem:[%s577 + $0x28] sm:$0xff]
        %v719 = vld [vmem:[%s577 + $0x30] sm:$0xff]
        %v720 = vld [vmem:[%s577 + $0x38] sm:$0xff]
        %v721 = vld [vmem:[%s577 + $0x40] sm:$0xff]
        %v722 = vld [vmem:[%s577 + $0x48] sm:$0xff]
        %v723 = vld [vmem:[%s577 + $0x50] sm:$0xff]
        %v724 = vld [vmem:[%s577 + $0x58] sm:$0xff]
        %v725 = vld [vmem:[%s577 + $0x60] sm:$0xff]
        %v726 = vld [vmem:[%s577 + $0x68] sm:$0xff]
        %v727 = vld [vmem:[%s577 + $0x70] sm:$0xff]
        %v728 = vld [vmem:[%s577 + $0x78] sm:$0xff]
        %v729 = vld [vmem:[%s582] sm:$0xff]
        %v730 = vld [vmem:[%s582 + $0x8] sm:$0xff]
        %v731 = vld [vmem:[%s582 + $0x10] sm:$0xff]
        %v732 = vld [vmem:[%s582 + $0x18] sm:$0xff]
        %v733 = vld [vmem:[%s582 + $0x20] sm:$0xff]
        %v734 = vld [vmem:[%s582 + $0x28] sm:$0xff]
        %v735 = vld [vmem:[%s582 + $0x30] sm:$0xff]
        %v736 = vld [vmem:[%s582 + $0x38] sm:$0xff]
        %v737 = vld [vmem:[%s582 + $0x40] sm:$0xff]
        %v738 = vld [vmem:[%s582 + $0x48] sm:$0xff]
        %v739 = vld [vmem:[%s582 + $0x50] sm:$0xff]
        %v740 = vld [vmem:[%s582 + $0x58] sm:$0xff]
        %v741 = vld [vmem:[%s582 + $0x60] sm:$0xff]
        %v742 = vld [vmem:[%s582 + $0x68] sm:$0xff]
        %v743 = vld [vmem:[%s582 + $0x70] sm:$0xff]
        %v744 = vld [vmem:[%s582 + $0x78] sm:$0xff]
        %v745 = vld [vmem:[%s587] sm:$0xff]
        %v746 = vld [vmem:[%s587 + $0x8] sm:$0xff]
        %v747 = vld [vmem:[%s587 + $0x10] sm:$0xff]
        %v748 = vld [vmem:[%s587 + $0x18] sm:$0xff]
        %v749 = vld [vmem:[%s1] sm:$0xff]
        %v750 = vld [vmem:[%s1 + $0x8] sm:$0xff]
        %v751 = vld [vmem:[%s1 + $0x10] sm:$0xff]
        %v752 = vld [vmem:[%s1 + $0x18] sm:$0xff]
        %v753 = vld [vmem:[%s2] sm:$0x1]
        %v754 = vld [vmem:[%s2 + $0x1] sm:$0x1]
        %v755 = vld [vmem:[%s2 + $0x2] sm:$0x1]
        %v756 = vld [vmem:[%s2 + $0x3] sm:$0x1]
        %v758 = vsel %vm620, %v693, 0
        %v761 = vsel %vm620, %v694, 0
        %v764 = vsel %vm620, %v695, 0
        %v767 = vsel %vm620, %v696, 0
        %769 = vmatpush.msra.mxu0 0.0
        %770 = vmatpush.msra.mxu0 0.0
        %771 = vmatpush.msra.mxu0 0.0
        %772 = vmatpush.msra.mxu0 0.0
        %773 = vmatpush.msra.mxu0 0.0
        %774 = vmatpush.msra.mxu0 0.0
        %775 = vmatpush.msra.mxu0 0.0
        %776 = vmatpush.msra.mxu0 0.0
        %777 = vmatpush.msra.mxu0 0.0
        %778 = vmatpush.msra.mxu0 0.0
        %779 = vmatpush.msra.mxu0 0.0
        %780 = vmatpush.msra.mxu0 0.0
        %781 = vmatpush.msra.mxu0 %v700
        %782 = vmatpush.msra.mxu0 %v699
        %783 = vmatpush.msra.mxu0 %v698
        %784 = vmatpush.msra.mxu0 %v697
        %785 = vmatmul.f32.gmra.mxu0 %v758
        %v786 = vpop.f32.mrf.mxu0
        %v787 = vadd.f32 0.0, %v786
        %788 = vmatmul.f32.gmra.mxu0 %v761
        %v789 = vpop.f32.mrf.mxu0
        %v790 = vadd.f32 0.0, %v789
        %791 = vmatmul.f32.gmra.mxu0 %v764
        %v792 = vpop.f32.mrf.mxu0
        %v793 = vadd.f32 0.0, %v792
        %794 = vmatmul.f32.gmra.mxu0 %v767
        %v795 = vpop.f32.mrf.mxu0
        %v796 = vadd.f32 0.0, %v795
        %797 = vdwg.mxu0
        %798 = vmatpush.msra.mxu0 0.0
        %799 = vmatpush.msra.mxu0 0.0
        %800 = vmatpush.msra.mxu0 0.0
        %801 = vmatpush.msra.mxu0 0.0
        %802 = vmatpush.msra.mxu0 0.0
        %803 = vmatpush.msra.mxu0 0.0
        %804 = vmatpush.msra.mxu0 0.0
        %805 = vmatpush.msra.mxu0 0.0
        %806 = vmatpush.msra.mxu0 0.0
        %807 = vmatpush.msra.mxu0 0.0
        %808 = vmatpush.msra.mxu0 0.0
        %809 = vmatpush.msra.mxu0 0.0
        %810 = vmatpush.msra.mxu0 %v716
        %811 = vmatpush.msra.mxu0 %v715
        %812 = vmatpush.msra.mxu0 %v714
        %813 = vmatpush.msra.mxu0 %v713
        %814 = vmatmul.f32.gmra.mxu0 %v758
        %v815 = vpop.f32.mrf.mxu0
        %v816 = vadd.f32 0.0, %v815
        %817 = vmatmul.f32.gmra.mxu0 %v761
        %v818 = vpop.f32.mrf.mxu0
        %v819 = vadd.f32 0.0, %v818
        %820 = vmatmul.f32.gmra.mxu0 %v764
        %v821 = vpop.f32.mrf.mxu0
        %v822 = vadd.f32 0.0, %v821
        %823 = vmatmul.f32.gmra.mxu0 %v767
        %v824 = vpop.f32.mrf.mxu0
        %v825 = vadd.f32 0.0, %v824
        %826 = vdwg.mxu0
        %827 = vmatpush.msra.mxu0 0.0
        %828 = vmatpush.msra.mxu0 0.0
        %829 = vmatpush.msra.mxu0 0.0
        %830 = vmatpush.msra.mxu0 0.0
        %831 = vmatpush.msra.mxu0 0.0
        %832 = vmatpush.msra.mxu0 0.0
        %833 = vmatpush.msra.mxu0 0.0
        %834 = vmatpush.msra.mxu0 0.0
        %835 = vmatpush.msra.mxu0 0.0
        %836 = vmatpush.msra.mxu0 0.0
        %837 = vmatpush.msra.mxu0 0.0
        %838 = vmatpush.msra.mxu0 0.0
        %839 = vmatpush.msra.mxu0 %v732
        %840 = vmatpush.msra.mxu0 %v731
        %841 = vmatpush.msra.mxu0 %v730
        %842 = vmatpush.msra.mxu0 %v729
        %843 = vmatmul.f32.gmra.mxu0 %v758
        %v844 = vpop.f32.mrf.mxu0
        %v845 = vadd.f32 0.0, %v844
        %846 = vmatmul.f32.gmra.mxu0 %v761
        %v847 = vpop.f32.mrf.mxu0
        %v848 = vadd.f32 0.0, %v847
        %849 = vmatmul.f32.gmra.mxu0 %v764
        %v850 = vpop.f32.mrf.mxu0
        %v851 = vadd.f32 0.0, %v850
        %852 = vmatmul.f32.gmra.mxu0 %v767
        %v853 = vpop.f32.mrf.mxu0
        %v854 = vadd.f32 0.0, %v853
        %855 = vdwg.mxu0
        %vm856 = vcmask 64512
        %v858 = vsel %vm856, %v787, 0
        %v861 = vsel %vm856, %v816, 0
        %863 = vmatpush.xpose.msra.mxu0 0.0
        %864 = vmatpush.xpose.msra.mxu0 0.0
        %865 = vmatpush.xpose.msra.mxu0 0.0
        %866 = vmatpush.xpose.msra.mxu0 0.0
        %867 = vmatpush.xpose.msra.mxu0 0.0
        %868 = vmatpush.xpose.msra.mxu0 0.0
        %869 = vmatpush.xpose.msra.mxu0 0.0
        %870 = vmatpush.xpose.msra.mxu0 0.0
        %871 = vmatpush.xpose.msra.mxu0 0.0
        %872 = vmatpush.xpose.msra.mxu0 0.0
        %873 = vmatpush.xpose.msra.mxu0 0.0
        %874 = vmatpush.xpose.msra.mxu0 0.0
        %875 = vmatpush.xpose.msra.mxu0 0.0
        %876 = vmatpush.xpose.msra.mxu0 0.0
        %877 = vmatpush.xpose.msra.mxu0 0.0
        %878 = vmatpush.xpose.msra.mxu0 %v861
        %879 = vmatmul.f32.gmra.mxu0 %v858
        %v880 = vpop.f32.mrf.mxu0
        %v881 = vadd.f32 %v749, %v880
        %882 = vdwg.mxu0
        %v884 = vsel %vm856, %v790, 0
        %v887 = vsel %vm856, %v819, 0
        %889 = vmatpush.xpose.msra.mxu0 0.0
        %890 = vmatpush.xpose.msra.mxu0 0.0
        %891 = vmatpush.xpose.msra.mxu0 0.0
        %892 = vmatpush.xpose.msra.mxu0 0.0
        %893 = vmatpush.xpose.msra.mxu0 0.0
        %894 = vmatpush.xpose.msra.mxu0 0.0
        %895 = vmatpush.xpose.msra.mxu0 0.0
        %896 = vmatpush.xpose.msra.mxu0 0.0
        %897 = vmatpush.xpose.msra.mxu0 0.0
        %898 = vmatpush.xpose.msra.mxu0 0.0
        %899 = vmatpush.xpose.msra.mxu0 0.0
        %900 = vmatpush.xpose.msra.mxu0 0.0
        %901 = vmatpush.xpose.msra.mxu0 0.0
        %902 = vmatpush.xpose.msra.mxu0 0.0
        %903 = vmatpush.xpose.msra.mxu0 0.0
        %904 = vmatpush.xpose.msra.mxu0 %v887
        %905 = vmatmul.f32.gmra.mxu0 %v884
        %v906 = vpop.f32.mrf.mxu0
        %v907 = vadd.f32 %v749, %v906
        %908 = vdwg.mxu0
        %v910 = vsel %vm856, %v793, 0
        %v913 = vsel %vm856, %v822, 0
        %915 = vmatpush.xpose.msra.mxu0 0.0
        %916 = vmatpush.xpose.msra.mxu0 0.0
        %917 = vmatpush.xpose.msra.mxu0 0.0
        %918 = vmatpush.xpose.msra.mxu0 0.0
        %919 = vmatpush.xpose.msra.mxu0 0.0
        %920 = vmatpush.xpose.msra.mxu0 0.0
        %921 = vmatpush.xpose.msra.mxu0 0.0
        %922 = vmatpush.xpose.msra.mxu0 0.0
        %923 = vmatpush.xpose.msra.mxu0 0.0
        %924 = vmatpush.xpose.msra.mxu0 0.0
        %925 = vmatpush.xpose.msra.mxu0 0.0
        %926 = vmatpush.xpose.msra.mxu0 0.0
        %927 = vmatpush.xpose.msra.mxu0 0.0
        %928 = vmatpush.xpose.msra.mxu0 0.0
        %929 = vmatpush.xpose.msra.mxu0 0.0
        %930 = vmatpush.xpose.msra.mxu0 %v913
        %931 = vmatmul.f32.gmra.mxu0 %v910
        %v932 = vpop.f32.mrf.mxu0
        %v933 = vadd.f32 %v749, %v932
        %934 = vdwg.mxu0
        %v936 = vsel %vm856, %v796, 0
        %v939 = vsel %vm856, %v825, 0
        %941 = vmatpush.xpose.msra.mxu0 0.0
        %942 = vmatpush.xpose.msra.mxu0 0.0
        %943 = vmatpush.xpose.msra.mxu0 0.0
        %944 = vmatpush.xpose.msra.mxu0 0.0
        %945 = vmatpush.xpose.msra.mxu0 0.0
        %946 = vmatpush.xpose.msra.mxu0 0.0
        %947 = vmatpush.xpose.msra.mxu0 0.0
        %948 = vmatpush.xpose.msra.mxu0 0.0
        %949 = vmatpush.xpose.msra.mxu0 0.0
        %950 = vmatpush.xpose.msra.mxu0 0.0
        %951 = vmatpush.xpose.msra.mxu0 0.0
        %952 = vmatpush.xpose.msra.mxu0 0.0
        %953 = vmatpush.xpose.msra.mxu0 0.0
        %954 = vmatpush.xpose.msra.mxu0 0.0
        %955 = vmatpush.xpose.msra.mxu0 0.0
        %956 = vmatpush.xpose.msra.mxu0 %v939
        %957 = vmatmul.f32.gmra.mxu0 %v936
        %v958 = vpop.f32.mrf.mxu0
        %v959 = vadd.f32 %v749, %v958
        %960 = vdwg.mxu0
        %v965 = vperm.slane %v753, 0
        %v966 = vperm.slane %v754, 0
        %v967 = vperm.slane %v755, 0
        %v968 = vperm.slane %v756, 0
        %v973 = vadd.f32 %v881, %v965
        %v974 = vadd.f32 %v907, %v966
        %v975 = vadd.f32 %v933, %v967
        %v976 = vadd.f32 %v959, %v968
        %v977 = vsel %vm856, %v973, -inf
        %978 = vmax.xlane.f32.xlu0 %v977
        %v979 = vpop.xlane.xlu0 %978
        %v980 = vsel %vm856, %v974, -inf
        %981 = vmax.xlane.f32.xlu0 %v980
        %v982 = vpop.xlane.xlu0 %981
        %v983 = vsel %vm856, %v975, -inf
        %984 = vmax.xlane.f32.xlu0 %v983
        %v985 = vpop.xlane.xlu0 %984
        %v986 = vsel %vm856, %v976, -inf
        %987 = vmax.xlane.f32.xlu0 %v986
        %v988 = vpop.xlane.xlu0 %987
        %v989 = vsub.f32 %v973, %v979
        %v990 = vsub.f32 %v974, %v982
        %v991 = vsub.f32 %v975, %v985
        %v992 = vsub.f32 %v976, %v988
        %v993 = vmul.f32 %v989, 1.442695
        %v994 = vpow.pop %v993
        %v995 = vmul.f32 %v990, 1.442695
        %v996 = vpow.pop %v995
        %v997 = vmul.f32 %v991, 1.442695
        %v998 = vpow.pop %v997
        %v999 = vmul.f32 %v992, 1.442695
        %v1000 = vpow.pop %v999
        %v1001 = vsel %vm856, %v994, 0.0
        %1002 = vadd.xlane.f32.xlu0 %v1001
        %v1003 = vpop.xlane.xlu0 %1002
        %v1004 = vsel %vm856, %v996, 0.0
        %1005 = vadd.xlane.f32.xlu0 %v1004
        %v1006 = vpop.xlane.xlu0 %1005
        %v1007 = vsel %vm856, %v998, 0.0
        %1008 = vadd.xlane.f32.xlu0 %v1007
        %v1009 = vpop.xlane.xlu0 %1008
        %v1010 = vsel %vm856, %v1000, 0.0
        %1011 = vadd.xlane.f32.xlu0 %v1010
        %v1012 = vpop.xlane.xlu0 %1011
        %v1013 = vrcp.pop %v1003
        %v1014 = vrcp.pop %v1006
        %v1015 = vrcp.pop %v1009
        %v1016 = vrcp.pop %v1012
        %v1017 = vmul.f32 %v994, %v1013
        %v1018 = vmul.f32 %v996, %v1014
        %v1019 = vmul.f32 %v998, %v1015
        %v1020 = vmul.f32 %v1000, %v1016
        %v1022 = vsel %vm856, %v1017, 0
        %1024 = vmatpush.msra.mxu0 0.0
        %1025 = vmatpush.msra.mxu0 0.0
        %1026 = vmatpush.msra.mxu0 0.0
        %1027 = vmatpush.msra.mxu0 0.0
        %1028 = vmatpush.msra.mxu0 0.0
        %1029 = vmatpush.msra.mxu0 0.0
        %1030 = vmatpush.msra.mxu0 0.0
        %1031 = vmatpush.msra.mxu0 0.0
        %1032 = vmatpush.msra.mxu0 0.0
        %1033 = vmatpush.msra.mxu0 0.0
        %1034 = vmatpush.msra.mxu0 0.0
        %1035 = vmatpush.msra.mxu0 0.0
        %1036 = vmatpush.msra.mxu0 0.0
        %1037 = vmatpush.msra.mxu0 0.0
        %1038 = vmatpush.msra.mxu0 0.0
        %1039 = vmatpush.msra.mxu0 %v845
        %1040 = vmatmul.f32.gmra.mxu0 %v1022
        %v1041 = vpop.f32.mrf.mxu0
        %v1042 = vadd.f32 0.0, %v1041
        %1043 = vdwg.mxu0
        %v1045 = vsel %vm856, %v1018, 0
        %1047 = vmatpush.msra.mxu0 0.0
        %1048 = vmatpush.msra.mxu0 0.0
        %1049 = vmatpush.msra.mxu0 0.0
        %1050 = vmatpush.msra.mxu0 0.0
        %1051 = vmatpush.msra.mxu0 0.0
        %1052 = vmatpush.msra.mxu0 0.0
        %1053 = vmatpush.msra.mxu0 0.0
        %1054 = vmatpush.msra.mxu0 0.0
        %1055 = vmatpush.msra.mxu0 0.0
        %1056 = vmatpush.msra.mxu0 0.0
        %1057 = vmatpush.msra.mxu0 0.0
        %1058 = vmatpush.msra.mxu0 0.0
        %1059 = vmatpush.msra.mxu0 0.0
        %1060 = vmatpush.msra.mxu0 0.0
        %1061 = vmatpush.msra.mxu0 0.0
        %1062 = vmatpush.msra.mxu0 %v848
        %1063 = vmatmul.f32.gmra.mxu0 %v1045
        %v1064 = vpop.f32.mrf.mxu0
        %v1065 = vadd.f32 0.0, %v1064
        %1066 = vdwg.mxu0
        %v1068 = vsel %vm856, %v1019, 0
        %1070 = vmatpush.msra.mxu0 0.0
        %1071 = vmatpush.msra.mxu0 0.0
        %1072 = vmatpush.msra.mxu0 0.0
        %1073 = vmatpush.msra.mxu0 0.0
        %1074 = vmatpush.msra.mxu0 0.0
        %1075 = vmatpush.msra.mxu0 0.0
        %1076 = vmatpush.msra.mxu0 0.0
        %1077 = vmatpush.msra.mxu0 0.0
        %1078 = vmatpush.msra.mxu0 0.0
        %1079 = vmatpush.msra.mxu0 0.0
        %1080 = vmatpush.msra.mxu0 0.0
        %1081 = vmatpush.msra.mxu0 0.0
        %1082 = vmatpush.msra.mxu0 0.0
        %1083 = vmatpush.msra.mxu0 0.0
        %1084 = vmatpush.msra.mxu0 0.0
        %1085 = vmatpush.msra.mxu0 %v851
        %1086 = vmatmul.f32.gmra.mxu0 %v1068
        %v1087 = vpop.f32.mrf.mxu0
        %v1088 = vadd.f32 0.0, %v1087
        %1089 = vdwg.mxu0
        %v1091 = vsel %vm856, %v1020, 0
        %1093 = vmatpush.msra.mxu0 0.0
        %1094 = vmatpush.msra.mxu0 0.0
        %1095 = vmatpush.msra.mxu0 0.0
        %1096 = vmatpush.msra.mxu0 0.0
        %1097 = vmatpush.msra.mxu0 0.0
        %1098 = vmatpush.msra.mxu0 0.0
        %1099 = vmatpush.msra.mxu0 0.0
        %1100 = vmatpush.msra.mxu0 0.0
        %1101 = vmatpush.msra.mxu0 0.0
        %1102 = vmatpush.msra.mxu0 0.0
        %1103 = vmatpush.msra.mxu0 0.0
        %1104 = vmatpush.msra.mxu0 0.0
        %1105 = vmatpush.msra.mxu0 0.0
        %1106 = vmatpush.msra.mxu0 0.0
        %1107 = vmatpush.msra.mxu0 0.0
        %1108 = vmatpush.msra.mxu0 %v854
        %1109 = vmatmul.f32.gmra.mxu0 %v1091
        %v1110 = vpop.f32.mrf.mxu0
        %v1111 = vadd.f32 0.0, %v1110
        %1112 = vdwg.mxu0
        %1113 = vmatpush.msra.mxu0 0.0
        %1114 = vmatpush.msra.mxu0 0.0
        %1115 = vmatpush.msra.mxu0 0.0
        %1116 = vmatpush.msra.mxu0 0.0
        %1117 = vmatpush.msra.mxu0 0.0
        %1118 = vmatpush.msra.mxu0 0.0
        %1119 = vmatpush.msra.mxu0 0.0
        %1120 = vmatpush.msra.mxu0 0.0
        %1121 = vmatpush.msra.mxu0 0.0
        %1122 = vmatpush.msra.mxu0 0.0
        %1123 = vmatpush.msra.mxu0 0.0
        %1124 = vmatpush.msra.mxu0 0.0
        %1125 = vmatpush.msra.mxu0 %v704
        %1126 = vmatpush.msra.mxu0 %v703
        %1127 = vmatpush.msra.mxu0 %v702
        %1128 = vmatpush.msra.mxu0 %v701
        %1129 = vmatmul.f32.gmra.mxu0 %v758
        %v1130 = vpop.f32.mrf.mxu0
        %v1131 = vadd.f32 0.0, %v1130
        %1132 = vmatmul.f32.gmra.mxu0 %v761
        %v1133 = vpop.f32.mrf.mxu0
        %v1134 = vadd.f32 0.0, %v1133
        %1135 = vmatmul.f32.gmra.mxu0 %v764
        %v1136 = vpop.f32.mrf.mxu0
        %v1137 = vadd.f32 0.0, %v1136
        %1138 = vmatmul.f32.gmra.mxu0 %v767
        %v1139 = vpop.f32.mrf.mxu0
        %v1140 = vadd.f32 0.0, %v1139
        %1141 = vdwg.mxu0
        %1142 = vmatpush.msra.mxu0 0.0
        %1143 = vmatpush.msra.mxu0 0.0
        %1144 = vmatpush.msra.mxu0 0.0
        %1145 = vmatpush.msra.mxu0 0.0
        %1146 = vmatpush.msra.mxu0 0.0
        %1147 = vmatpush.msra.mxu0 0.0
        %1148 = vmatpush.msra.mxu0 0.0
        %1149 = vmatpush.msra.mxu0 0.0
        %1150 = vmatpush.msra.mxu0 0.0
        %1151 = vmatpush.msra.mxu0 0.0
        %1152 = vmatpush.msra.mxu0 0.0
        %1153 = vmatpush.msra.mxu0 0.0
        %1154 = vmatpush.msra.mxu0 %v720
        %1155 = vmatpush.msra.mxu0 %v719
        %1156 = vmatpush.msra.mxu0 %v718
        %1157 = vmatpush.msra.mxu0 %v717
        %1158 = vmatmul.f32.gmra.mxu0 %v758
        %v1159 = vpop.f32.mrf.mxu0
        %v1160 = vadd.f32 0.0, %v1159
        %1161 = vmatmul.f32.gmra.mxu0 %v761
        %v1162 = vpop.f32.mrf.mxu0
        %v1163 = vadd.f32 0.0, %v1162
        %1164 = vmatmul.f32.gmra.mxu0 %v764
        %v1165 = vpop.f32.mrf.mxu0
        %v1166 = vadd.f32 0.0, %v1165
        %1167 = vmatmul.f32.gmra.mxu0 %v767
        %v1168 = vpop.f32.mrf.mxu0
        %v1169 = vadd.f32 0.0, %v1168
        %1170 = vdwg.mxu0
        %1171 = vmatpush.msra.mxu0 0.0
        %1172 = vmatpush.msra.mxu0 0.0
        %1173 = vmatpush.msra.mxu0 0.0
        %1174 = vmatpush.msra.mxu0 0.0
        %1175 = vmatpush.msra.mxu0 0.0
        %1176 = vmatpush.msra.mxu0 0.0
        %1177 = vmatpush.msra.mxu0 0.0
        %1178 = vmatpush.msra.mxu0 0.0
        %1179 = vmatpush.msra.mxu0 0.0
        %1180 = vmatpush.msra.mxu0 0.0
        %1181 = vmatpush.msra.mxu0 0.0
        %1182 = vmatpush.msra.mxu0 0.0
        %1183 = vmatpush.msra.mxu0 %v736
        %1184 = vmatpush.msra.mxu0 %v735
        %1185 = vmatpush.msra.mxu0 %v734
        %1186 = vmatpush.msra.mxu0 %v733
        %1187 = vmatmul.f32.gmra.mxu0 %v758
        %v1188 = vpop.f32.mrf.mxu0
        %v1189 = vadd.f32 0.0, %v1188
        %1190 = vmatmul.f32.gmra.mxu0 %v761
        %v1191 = vpop.f32.mrf.mxu0
        %v1192 = vadd.f32 0.0, %v1191
        %1193 = vmatmul.f32.gmra.mxu0 %v764
        %v1194 = vpop.f32.mrf.mxu0
        %v1195 = vadd.f32 0.0, %v1194
        %1196 = vmatmul.f32.gmra.mxu0 %v767
        %v1197 = vpop.f32.mrf.mxu0
        %v1198 = vadd.f32 0.0, %v1197
        %1199 = vdwg.mxu0
        %v1201 = vsel %vm856, %v1131, 0
        %v1204 = vsel %vm856, %v1160, 0
        %1206 = vmatpush.xpose.msra.mxu0 0.0
        %1207 = vmatpush.xpose.msra.mxu0 0.0
        %1208 = vmatpush.xpose.msra.mxu0 0.0
        %1209 = vmatpush.xpose.msra.mxu0 0.0
        %1210 = vmatpush.xpose.msra.mxu0 0.0
        %1211 = vmatpush.xpose.msra.mxu0 0.0
        %1212 = vmatpush.xpose.msra.mxu0 0.0
        %1213 = vmatpush.xpose.msra.mxu0 0.0
        %1214 = vmatpush.xpose.msra.mxu0 0.0
        %1215 = vmatpush.xpose.msra.mxu0 0.0
        %1216 = vmatpush.xpose.msra.mxu0 0.0
        %1217 = vmatpush.xpose.msra.mxu0 0.0
        %1218 = vmatpush.xpose.msra.mxu0 0.0
        %1219 = vmatpush.xpose.msra.mxu0 0.0
        %1220 = vmatpush.xpose.msra.mxu0 0.0
        %1221 = vmatpush.xpose.msra.mxu0 %v1204
        %1222 = vmatmul.f32.gmra.mxu0 %v1201
        %v1223 = vpop.f32.mrf.mxu0
        %v1224 = vadd.f32 %v750, %v1223
        %1225 = vdwg.mxu0
        %v1227 = vsel %vm856, %v1134, 0
        %v1230 = vsel %vm856, %v1163, 0
        %1232 = vmatpush.xpose.msra.mxu0 0.0
        %1233 = vmatpush.xpose.msra.mxu0 0.0
        %1234 = vmatpush.xpose.msra.mxu0 0.0
        %1235 = vmatpush.xpose.msra.mxu0 0.0
        %1236 = vmatpush.xpose.msra.mxu0 0.0
        %1237 = vmatpush.xpose.msra.mxu0 0.0
        %1238 = vmatpush.xpose.msra.mxu0 0.0
        %1239 = vmatpush.xpose.msra.mxu0 0.0
        %1240 = vmatpush.xpose.msra.mxu0 0.0
        %1241 = vmatpush.xpose.msra.mxu0 0.0
        %1242 = vmatpush.xpose.msra.mxu0 0.0
        %1243 = vmatpush.xpose.msra.mxu0 0.0
        %1244 = vmatpush.xpose.msra.mxu0 0.0
        %1245 = vmatpush.xpose.msra.mxu0 0.0
        %1246 = vmatpush.xpose.msra.mxu0 0.0
        %1247 = vmatpush.xpose.msra.mxu0 %v1230
        %1248 = vmatmul.f32.gmra.mxu0 %v1227
        %v1249 = vpop.f32.mrf.mxu0
        %v1250 = vadd.f32 %v750, %v1249
        %1251 = vdwg.mxu0
        %v1253 = vsel %vm856, %v1137, 0
        %v1256 = vsel %vm856, %v1166, 0
        %1258 = vmatpush.xpose.msra.mxu0 0.0
        %1259 = vmatpush.xpose.msra.mxu0 0.0
        %1260 = vmatpush.xpose.msra.mxu0 0.0
        %1261 = vmatpush.xpose.msra.mxu0 0.0
        %1262 = vmatpush.xpose.msra.mxu0 0.0
        %1263 = vmatpush.xpose.msra.mxu0 0.0
        %1264 = vmatpush.xpose.msra.mxu0 0.0
        %1265 = vmatpush.xpose.msra.mxu0 0.0
        %1266 = vmatpush.xpose.msra.mxu0 0.0
        %1267 = vmatpush.xpose.msra.mxu0 0.0
        %1268 = vmatpush.xpose.msra.mxu0 0.0
        %1269 = vmatpush.xpose.msra.mxu0 0.0
        %1270 = vmatpush.xpose.msra.mxu0 0.0
        %1271 = vmatpush.xpose.msra.mxu0 0.0
        %1272 = vmatpush.xpose.msra.mxu0 0.0
        %1273 = vmatpush.xpose.msra.mxu0 %v1256
        %1274 = vmatmul.f32.gmra.mxu0 %v1253
        %v1275 = vpop.f32.mrf.mxu0
        %v1276 = vadd.f32 %v750, %v1275
        %1277 = vdwg.mxu0
        %v1279 = vsel %vm856, %v1140, 0
        %v1282 = vsel %vm856, %v1169, 0
        %1284 = vmatpush.xpose.msra.mxu0 0.0
        %1285 = vmatpush.xpose.msra.mxu0 0.0
        %1286 = vmatpush.xpose.msra.mxu0 0.0
        %1287 = vmatpush.xpose.msra.mxu0 0.0
        %1288 = vmatpush.xpose.msra.mxu0 0.0
        %1289 = vmatpush.xpose.msra.mxu0 0.0
        %1290 = vmatpush.xpose.msra.mxu0 0.0
        %1291 = vmatpush.xpose.msra.mxu0 0.0
        %1292 = vmatpush.xpose.msra.mxu0 0.0
        %1293 = vmatpush.xpose.msra.mxu0 0.0
        %1294 = vmatpush.xpose.msra.mxu0 0.0
        %1295 = vmatpush.xpose.msra.mxu0 0.0
        %1296 = vmatpush.xpose.msra.mxu0 0.0
        %1297 = vmatpush.xpose.msra.mxu0 0.0
        %1298 = vmatpush.xpose.msra.mxu0 0.0
        %1299 = vmatpush.xpose.msra.mxu0 %v1282
        %1300 = vmatmul.f32.gmra.mxu0 %v1279
        %v1301 = vpop.f32.mrf.mxu0
        %v1302 = vadd.f32 %v750, %v1301
        %1303 = vdwg.mxu0
        %v1304 = vadd.f32 %v1224, %v965
        %v1305 = vadd.f32 %v1250, %v966
        %v1306 = vadd.f32 %v1276, %v967
        %v1307 = vadd.f32 %v1302, %v968
        %v1308 = vsel %vm856, %v1304, -inf
        %1309 = vmax.xlane.f32.xlu0 %v1308
        %v1310 = vpop.xlane.xlu0 %1309
        %v1311 = vsel %vm856, %v1305, -inf
        %1312 = vmax.xlane.f32.xlu0 %v1311
        %v1313 = vpop.xlane.xlu0 %1312
        %v1314 = vsel %vm856, %v1306, -inf
        %1315 = vmax.xlane.f32.xlu0 %v1314
        %v1316 = vpop.xlane.xlu0 %1315
        %v1317 = vsel %vm856, %v1307, -inf
        %1318 = vmax.xlane.f32.xlu0 %v1317
        %v1319 = vpop.xlane.xlu0 %1318
        %v1320 = vsub.f32 %v1304, %v1310
        %v1321 = vsub.f32 %v1305, %v1313
        %v1322 = vsub.f32 %v1306, %v1316
        %v1323 = vsub.f32 %v1307, %v1319
        %v1324 = vmul.f32 %v1320, 1.442695
        %v1325 = vpow.pop %v1324
        %v1326 = vmul.f32 %v1321, 1.442695
        %v1327 = vpow.pop %v1326
        %v1328 = vmul.f32 %v1322, 1.442695
        %v1329 = vpow.pop %v1328
        %v1330 = vmul.f32 %v1323, 1.442695
        %v1331 = vpow.pop %v1330
        %v1332 = vsel %vm856, %v1325, 0.0
        %1333 = vadd.xlane.f32.xlu0 %v1332
        %v1334 = vpop.xlane.xlu0 %1333
        %v1335 = vsel %vm856, %v1327, 0.0
        %1336 = vadd.xlane.f32.xlu0 %v1335
        %v1337 = vpop.xlane.xlu0 %1336
        %v1338 = vsel %vm856, %v1329, 0.0
        %1339 = vadd.xlane.f32.xlu0 %v1338
        %v1340 = vpop.xlane.xlu0 %1339
        %v1341 = vsel %vm856, %v1331, 0.0
        %1342 = vadd.xlane.f32.xlu0 %v1341
        %v1343 = vpop.xlane.xlu0 %1342
        %v1344 = vrcp.pop %v1334
        %v1345 = vrcp.pop %v1337
        %v1346 = vrcp.pop %v1340
        %v1347 = vrcp.pop %v1343
        %v1348 = vmul.f32 %v1325, %v1344
        %v1349 = vmul.f32 %v1327, %v1345
        %v1350 = vmul.f32 %v1329, %v1346
        %v1351 = vmul.f32 %v1331, %v1347
        %v1353 = vsel %vm856, %v1348, 0
        %1355 = vmatpush.msra.mxu0 0.0
        %1356 = vmatpush.msra.mxu0 0.0
        %1357 = vmatpush.msra.mxu0 0.0
        %1358 = vmatpush.msra.mxu0 0.0
        %1359 = vmatpush.msra.mxu0 0.0
        %1360 = vmatpush.msra.mxu0 0.0
        %1361 = vmatpush.msra.mxu0 0.0
        %1362 = vmatpush.msra.mxu0 0.0
        %1363 = vmatpush.msra.mxu0 0.0
        %1364 = vmatpush.msra.mxu0 0.0
        %1365 = vmatpush.msra.mxu0 0.0
        %1366 = vmatpush.msra.mxu0 0.0
        %1367 = vmatpush.msra.mxu0 0.0
        %1368 = vmatpush.msra.mxu0 0.0
        %1369 = vmatpush.msra.mxu0 0.0
        %1370 = vmatpush.msra.mxu0 %v1189
        %1371 = vmatmul.f32.gmra.mxu0 %v1353
        %v1372 = vpop.f32.mrf.mxu0
        %v1373 = vadd.f32 0.0, %v1372
        %1374 = vdwg.mxu0
        %v1376 = vsel %vm856, %v1349, 0
        %1378 = vmatpush.msra.mxu0 0.0
        %1379 = vmatpush.msra.mxu0 0.0
        %1380 = vmatpush.msra.mxu0 0.0
        %1381 = vmatpush.msra.mxu0 0.0
        %1382 = vmatpush.msra.mxu0 0.0
        %1383 = vmatpush.msra.mxu0 0.0
        %1384 = vmatpush.msra.mxu0 0.0
        %1385 = vmatpush.msra.mxu0 0.0
        %1386 = vmatpush.msra.mxu0 0.0
        %1387 = vmatpush.msra.mxu0 0.0
        %1388 = vmatpush.msra.mxu0 0.0
        %1389 = vmatpush.msra.mxu0 0.0
        %1390 = vmatpush.msra.mxu0 0.0
        %1391 = vmatpush.msra.mxu0 0.0
        %1392 = vmatpush.msra.mxu0 0.0
        %1393 = vmatpush.msra.mxu0 %v1192
        %1394 = vmatmul.f32.gmra.mxu0 %v1376
        %v1395 = vpop.f32.mrf.mxu0
        %v1396 = vadd.f32 0.0, %v1395
        %1397 = vdwg.mxu0
        %v1399 = vsel %vm856, %v1350, 0
        %1401 = vmatpush.msra.mxu0 0.0
        %1402 = vmatpush.msra.mxu0 0.0
        %1403 = vmatpush.msra.mxu0 0.0
        %1404 = vmatpush.msra.mxu0 0.0
        %1405 = vmatpush.msra.mxu0 0.0
        %1406 = vmatpush.msra.mxu0 0.0
        %1407 = vmatpush.msra.mxu0 0.0
        %1408 = vmatpush.msra.mxu0 0.0
        %1409 = vmatpush.msra.mxu0 0.0
        %1410 = vmatpush.msra.mxu0 0.0
        %1411 = vmatpush.msra.mxu0 0.0
        %1412 = vmatpush.msra.mxu0 0.0
        %1413 = vmatpush.msra.mxu0 0.0
        %1414 = vmatpush.msra.mxu0 0.0
        %1415 = vmatpush.msra.mxu0 0.0
        %1416 = vmatpush.msra.mxu0 %v1195
        %1417 = vmatmul.f32.gmra.mxu0 %v1399
        %v1418 = vpop.f32.mrf.mxu0
        %v1419 = vadd.f32 0.0, %v1418
        %1420 = vdwg.mxu0
        %v1422 = vsel %vm856, %v1351, 0
        %1424 = vmatpush.msra.mxu0 0.0
        %1425 = vmatpush.msra.mxu0 0.0
        %1426 = vmatpush.msra.mxu0 0.0
        %1427 = vmatpush.msra.mxu0 0.0
        %1428 = vmatpush.msra.mxu0 0.0
        %1429 = vmatpush.msra.mxu0 0.0
        %1430 = vmatpush.msra.mxu0 0.0
        %1431 = vmatpush.msra.mxu0 0.0
        %1432 = vmatpush.msra.mxu0 0.0
        %1433 = vmatpush.msra.mxu0 0.0
        %1434 = vmatpush.msra.mxu0 0.0
        %1435 = vmatpush.msra.mxu0 0.0
        %1436 = vmatpush.msra.mxu0 0.0
        %1437 = vmatpush.msra.mxu0 0.0
        %1438 = vmatpush.msra.mxu0 0.0
        %1439 = vmatpush.msra.mxu0 %v1198
        %1440 = vmatmul.f32.gmra.mxu0 %v1422
        %v1441 = vpop.f32.mrf.mxu0
        %v1442 = vadd.f32 0.0, %v1441
        %1443 = vdwg.mxu0
        %v1445 = vsel %vm856, %v1373, 0
        %v1448 = vsel %vm856, %v1396, 0
        %v1451 = vsel %vm856, %v1419, 0
        %v1454 = vsel %vm856, %v1442, 0
        %1456 = vmatpush.msra.mxu0 0.0
        %1457 = vmatpush.msra.mxu0 0.0
        %1458 = vmatpush.msra.mxu0 0.0
        %1459 = vmatpush.msra.mxu0 0.0
        %1460 = vmatpush.msra.mxu0 0.0
        %1461 = vmatpush.msra.mxu0 0.0
        %1462 = vmatpush.msra.mxu0 0.0
        %1463 = vmatpush.msra.mxu0 0.0
        %1464 = vmatpush.msra.mxu0 0.0
        %1465 = vmatpush.msra.mxu0 0.0
        %1466 = vmatpush.msra.mxu0 0.0
        %1467 = vmatpush.msra.mxu0 0.0
        %1468 = vmatpush.msra.mxu0 0.0
        %1469 = vmatpush.msra.mxu0 0.0
        %1470 = vmatpush.msra.mxu0 0.0
        %1471 = vmatpush.msra.mxu0 %v746
        %1472 = vmatmul.f32.gmra.mxu0 %v1445
        %v1473 = vpop.f32.mrf.mxu0
        %v1474 = vadd.f32 0.0, %v1473
        %1475 = vmatmul.f32.gmra.mxu0 %v1448
        %v1476 = vpop.f32.mrf.mxu0
        %v1477 = vadd.f32 0.0, %v1476
        %1478 = vmatmul.f32.gmra.mxu0 %v1451
        %v1479 = vpop.f32.mrf.mxu0
        %v1480 = vadd.f32 0.0, %v1479
        %1481 = vmatmul.f32.gmra.mxu0 %v1454
        %v1482 = vpop.f32.mrf.mxu0
        %v1483 = vadd.f32 0.0, %v1482
        %1484 = vdwg.mxu0
        %v1486 = vsel %vm856, %v1042, 0
        %v1489 = vsel %vm856, %v1065, 0
        %v1492 = vsel %vm856, %v1088, 0
        %v1495 = vsel %vm856, %v1111, 0
        %1497 = vmatpush.msra.mxu0 0.0
        %1498 = vmatpush.msra.mxu0 0.0
        %1499 = vmatpush.msra.mxu0 0.0
        %1500 = vmatpush.msra.mxu0 0.0
        %1501 = vmatpush.msra.mxu0 0.0
        %1502 = vmatpush.msra.mxu0 0.0
        %1503 = vmatpush.msra.mxu0 0.0
        %1504 = vmatpush.msra.mxu0 0.0
        %1505 = vmatpush.msra.mxu0 0.0
        %1506 = vmatpush.msra.mxu0 0.0
        %1507 = vmatpush.msra.mxu0 0.0
        %1508 = vmatpush.msra.mxu0 0.0
        %1509 = vmatpush.msra.mxu0 0.0
        %1510 = vmatpush.msra.mxu0 0.0
        %1511 = vmatpush.msra.mxu0 0.0
        %1512 = vmatpush.msra.mxu0 %v745
        %1513 = vmatmul.f32.gmra.mxu0 %v1486
        %v1514 = vpop.f32.mrf.mxu0
        %v1515 = vadd.f32 %v1474, %v1514
        %1516 = vmatmul.f32.gmra.mxu0 %v1489
        %v1517 = vpop.f32.mrf.mxu0
        %v1518 = vadd.f32 %v1477, %v1517
        %1519 = vmatmul.f32.gmra.mxu0 %v1492
        %v1520 = vpop.f32.mrf.mxu0
        %v1521 = vadd.f32 %v1480, %v1520
        %1522 = vmatmul.f32.gmra.mxu0 %v1495
        %v1523 = vpop.f32.mrf.mxu0
        %v1524 = vadd.f32 %v1483, %v1523
        %1525 = vdwg.mxu0
        %1526 = vmatpush.msra.mxu0 0.0
        %1527 = vmatpush.msra.mxu0 0.0
        %1528 = vmatpush.msra.mxu0 0.0
        %1529 = vmatpush.msra.mxu0 0.0
        %1530 = vmatpush.msra.mxu0 0.0
        %1531 = vmatpush.msra.mxu0 0.0
        %1532 = vmatpush.msra.mxu0 0.0
        %1533 = vmatpush.msra.mxu0 0.0
        %1534 = vmatpush.msra.mxu0 0.0
        %1535 = vmatpush.msra.mxu0 0.0
        %1536 = vmatpush.msra.mxu0 0.0
        %1537 = vmatpush.msra.mxu0 0.0
        %1538 = vmatpush.msra.mxu0 %v708
        %1539 = vmatpush.msra.mxu0 %v707
        %1540 = vmatpush.msra.mxu0 %v706
        %1541 = vmatpush.msra.mxu0 %v705
        %1542 = vmatmul.f32.gmra.mxu0 %v758
        %v1543 = vpop.f32.mrf.mxu0
        %v1544 = vadd.f32 0.0, %v1543
        %1545 = vmatmul.f32.gmra.mxu0 %v761
        %v1546 = vpop.f32.mrf.mxu0
        %v1547 = vadd.f32 0.0, %v1546
        %1548 = vmatmul.f32.gmra.mxu0 %v764
        %v1549 = vpop.f32.mrf.mxu0
        %v1550 = vadd.f32 0.0, %v1549
        %1551 = vmatmul.f32.gmra.mxu0 %v767
        %v1552 = vpop.f32.mrf.mxu0
        %v1553 = vadd.f32 0.0, %v1552
        %1554 = vdwg.mxu0
        %1555 = vmatpush.msra.mxu0 0.0
        %1556 = vmatpush.msra.mxu0 0.0
        %1557 = vmatpush.msra.mxu0 0.0
        %1558 = vmatpush.msra.mxu0 0.0
        %1559 = vmatpush.msra.mxu0 0.0
        %1560 = vmatpush.msra.mxu0 0.0
        %1561 = vmatpush.msra.mxu0 0.0
        %1562 = vmatpush.msra.mxu0 0.0
        %1563 = vmatpush.msra.mxu0 0.0
        %1564 = vmatpush.msra.mxu0 0.0
        %1565 = vmatpush.msra.mxu0 0.0
        %1566 = vmatpush.msra.mxu0 0.0
        %1567 = vmatpush.msra.mxu0 %v724
        %1568 = vmatpush.msra.mxu0 %v723
        %1569 = vmatpush.msra.mxu0 %v722
        %1570 = vmatpush.msra.mxu0 %v721
        %1571 = vmatmul.f32.gmra.mxu0 %v758
        %v1572 = vpop.f32.mrf.mxu0
        %v1573 = vadd.f32 0.0, %v1572
        %1574 = vmatmul.f32.gmra.mxu0 %v761
        %v1575 = vpop.f32.mrf.mxu0
        %v1576 = vadd.f32 0.0, %v1575
        %1577 = vmatmul.f32.gmra.mxu0 %v764
        %v1578 = vpop.f32.mrf.mxu0
        %v1579 = vadd.f32 0.0, %v1578
        %1580 = vmatmul.f32.gmra.mxu0 %v767
        %v1581 = vpop.f32.mrf.mxu0
        %v1582 = vadd.f32 0.0, %v1581
        %1583 = vdwg.mxu0
        %1584 = vmatpush.msra.mxu0 0.0
        %1585 = vmatpush.msra.mxu0 0.0
        %1586 = vmatpush.msra.mxu0 0.0
        %1587 = vmatpush.msra.mxu0 0.0
        %1588 = vmatpush.msra.mxu0 0.0
        %1589 = vmatpush.msra.mxu0 0.0
        %1590 = vmatpush.msra.mxu0 0.0
        %1591 = vmatpush.msra.mxu0 0.0
        %1592 = vmatpush.msra.mxu0 0.0
        %1593 = vmatpush.msra.mxu0 0.0
        %1594 = vmatpush.msra.mxu0 0.0
        %1595 = vmatpush.msra.mxu0 0.0
        %1596 = vmatpush.msra.mxu0 %v740
        %1597 = vmatpush.msra.mxu0 %v739
        %1598 = vmatpush.msra.mxu0 %v738
        %1599 = vmatpush.msra.mxu0 %v737
        %1600 = vmatmul.f32.gmra.mxu0 %v758
        %v1601 = vpop.f32.mrf.mxu0
        %v1602 = vadd.f32 0.0, %v1601
        %1603 = vmatmul.f32.gmra.mxu0 %v761
        %v1604 = vpop.f32.mrf.mxu0
        %v1605 = vadd.f32 0.0, %v1604
        %1606 = vmatmul.f32.gmra.mxu0 %v764
        %v1607 = vpop.f32.mrf.mxu0
        %v1608 = vadd.f32 0.0, %v1607
        %1609 = vmatmul.f32.gmra.mxu0 %v767
        %v1610 = vpop.f32.mrf.mxu0
        %v1611 = vadd.f32 0.0, %v1610
        %1612 = vdwg.mxu0
        %v1614 = vsel %vm856, %v1544, 0
        %v1617 = vsel %vm856, %v1573, 0
        %1619 = vmatpush.xpose.msra.mxu0 0.0
        %1620 = vmatpush.xpose.msra.mxu0 0.0
        %1621 = vmatpush.xpose.msra.mxu0 0.0
        %1622 = vmatpush.xpose.msra.mxu0 0.0
        %1623 = vmatpush.xpose.msra.mxu0 0.0
        %1624 = vmatpush.xpose.msra.mxu0 0.0
        %1625 = vmatpush.xpose.msra.mxu0 0.0
        %1626 = vmatpush.xpose.msra.mxu0 0.0
        %1627 = vmatpush.xpose.msra.mxu0 0.0
        %1628 = vmatpush.xpose.msra.mxu0 0.0
        %1629 = vmatpush.xpose.msra.mxu0 0.0
        %1630 = vmatpush.xpose.msra.mxu0 0.0
        %1631 = vmatpush.xpose.msra.mxu0 0.0
        %1632 = vmatpush.xpose.msra.mxu0 0.0
        %1633 = vmatpush.xpose.msra.mxu0 0.0
        %1634 = vmatpush.xpose.msra.mxu0 %v1617
        %1635 = vmatmul.f32.gmra.mxu0 %v1614
        %v1636 = vpop.f32.mrf.mxu0
        %v1637 = vadd.f32 %v751, %v1636
        %1638 = vdwg.mxu0
        %v1640 = vsel %vm856, %v1547, 0
        %v1643 = vsel %vm856, %v1576, 0
        %1645 = vmatpush.xpose.msra.mxu0 0.0
        %1646 = vmatpush.xpose.msra.mxu0 0.0
        %1647 = vmatpush.xpose.msra.mxu0 0.0
        %1648 = vmatpush.xpose.msra.mxu0 0.0
        %1649 = vmatpush.xpose.msra.mxu0 0.0
        %1650 = vmatpush.xpose.msra.mxu0 0.0
        %1651 = vmatpush.xpose.msra.mxu0 0.0
        %1652 = vmatpush.xpose.msra.mxu0 0.0
        %1653 = vmatpush.xpose.msra.mxu0 0.0
        %1654 = vmatpush.xpose.msra.mxu0 0.0
        %1655 = vmatpush.xpose.msra.mxu0 0.0
        %1656 = vmatpush.xpose.msra.mxu0 0.0
        %1657 = vmatpush.xpose.msra.mxu0 0.0
        %1658 = vmatpush.xpose.msra.mxu0 0.0
        %1659 = vmatpush.xpose.msra.mxu0 0.0
        %1660 = vmatpush.xpose.msra.mxu0 %v1643
        %1661 = vmatmul.f32.gmra.mxu0 %v1640
        %v1662 = vpop.f32.mrf.mxu0
        %v1663 = vadd.f32 %v751, %v1662
        %1664 = vdwg.mxu0
        %v1666 = vsel %vm856, %v1550, 0
        %v1669 = vsel %vm856, %v1579, 0
        %1671 = vmatpush.xpose.msra.mxu0 0.0
        %1672 = vmatpush.xpose.msra.mxu0 0.0
        %1673 = vmatpush.xpose.msra.mxu0 0.0
        %1674 = vmatpush.xpose.msra.mxu0 0.0
        %1675 = vmatpush.xpose.msra.mxu0 0.0
        %1676 = vmatpush.xpose.msra.mxu0 0.0
        %1677 = vmatpush.xpose.msra.mxu0 0.0
        %1678 = vmatpush.xpose.msra.mxu0 0.0
        %1679 = vmatpush.xpose.msra.mxu0 0.0
        %1680 = vmatpush.xpose.msra.mxu0 0.0
        %1681 = vmatpush.xpose.msra.mxu0 0.0
        %1682 = vmatpush.xpose.msra.mxu0 0.0
        %1683 = vmatpush.xpose.msra.mxu0 0.0
        %1684 = vmatpush.xpose.msra.mxu0 0.0
        %1685 = vmatpush.xpose.msra.mxu0 0.0
        %1686 = vmatpush.xpose.msra.mxu0 %v1669
        %1687 = vmatmul.f32.gmra.mxu0 %v1666
        %v1688 = vpop.f32.mrf.mxu0
        %v1689 = vadd.f32 %v751, %v1688
        %1690 = vdwg.mxu0
        %v1692 = vsel %vm856, %v1553, 0
        %v1695 = vsel %vm856, %v1582, 0
        %1697 = vmatpush.xpose.msra.mxu0 0.0
        %1698 = vmatpush.xpose.msra.mxu0 0.0
        %1699 = vmatpush.xpose.msra.mxu0 0.0
        %1700 = vmatpush.xpose.msra.mxu0 0.0
        %1701 = vmatpush.xpose.msra.mxu0 0.0
        %1702 = vmatpush.xpose.msra.mxu0 0.0
        %1703 = vmatpush.xpose.msra.mxu0 0.0
        %1704 = vmatpush.xpose.msra.mxu0 0.0
        %1705 = vmatpush.xpose.msra.mxu0 0.0
        %1706 = vmatpush.xpose.msra.mxu0 0.0
        %1707 = vmatpush.xpose.msra.mxu0 0.0
        %1708 = vmatpush.xpose.msra.mxu0 0.0
        %1709 = vmatpush.xpose.msra.mxu0 0.0
        %1710 = vmatpush.xpose.msra.mxu0 0.0
        %1711 = vmatpush.xpose.msra.mxu0 0.0
        %1712 = vmatpush.xpose.msra.mxu0 %v1695
        %1713 = vmatmul.f32.gmra.mxu0 %v1692
        %v1714 = vpop.f32.mrf.mxu0
        %v1715 = vadd.f32 %v751, %v1714
        %1716 = vdwg.mxu0
        %v1717 = vadd.f32 %v1637, %v965
        %v1718 = vadd.f32 %v1663, %v966
        %v1719 = vadd.f32 %v1689, %v967
        %v1720 = vadd.f32 %v1715, %v968
        %v1721 = vsel %vm856, %v1717, -inf
        %1722 = vmax.xlane.f32.xlu0 %v1721
        %v1723 = vpop.xlane.xlu0 %1722
        %v1724 = vsel %vm856, %v1718, -inf
        %1725 = vmax.xlane.f32.xlu0 %v1724
        %v1726 = vpop.xlane.xlu0 %1725
        %v1727 = vsel %vm856, %v1719, -inf
        %1728 = vmax.xlane.f32.xlu0 %v1727
        %v1729 = vpop.xlane.xlu0 %1728
        %v1730 = vsel %vm856, %v1720, -inf
        %1731 = vmax.xlane.f32.xlu0 %v1730
        %v1732 = vpop.xlane.xlu0 %1731
        %v1733 = vsub.f32 %v1717, %v1723
        %v1734 = vsub.f32 %v1718, %v1726
        %v1735 = vsub.f32 %v1719, %v1729
        %v1736 = vsub.f32 %v1720, %v1732
        %v1737 = vmul.f32 %v1733, 1.442695
        %v1738 = vpow.pop %v1737
        %v1739 = vmul.f32 %v1734, 1.442695
        %v1740 = vpow.pop %v1739
        %v1741 = vmul.f32 %v1735, 1.442695
        %v1742 = vpow.pop %v1741
        %v1743 = vmul.f32 %v1736, 1.442695
        %v1744 = vpow.pop %v1743
        %v1745 = vsel %vm856, %v1738, 0.0
        %1746 = vadd.xlane.f32.xlu0 %v1745
        %v1747 = vpop.xlane.xlu0 %1746
        %v1748 = vsel %vm856, %v1740, 0.0
        %1749 = vadd.xlane.f32.xlu0 %v1748
        %v1750 = vpop.xlane.xlu0 %1749
        %v1751 = vsel %vm856, %v1742, 0.0
        %1752 = vadd.xlane.f32.xlu0 %v1751
        %v1753 = vpop.xlane.xlu0 %1752
        %v1754 = vsel %vm856, %v1744, 0.0
        %1755 = vadd.xlane.f32.xlu0 %v1754
        %v1756 = vpop.xlane.xlu0 %1755
        %v1757 = vrcp.pop %v1747
        %v1758 = vrcp.pop %v1750
        %v1759 = vrcp.pop %v1753
        %v1760 = vrcp.pop %v1756
        %v1761 = vmul.f32 %v1738, %v1757
        %v1762 = vmul.f32 %v1740, %v1758
        %v1763 = vmul.f32 %v1742, %v1759
        %v1764 = vmul.f32 %v1744, %v1760
        %v1766 = vsel %vm856, %v1761, 0
        %1768 = vmatpush.msra.mxu0 0.0
        %1769 = vmatpush.msra.mxu0 0.0
        %1770 = vmatpush.msra.mxu0 0.0
        %1771 = vmatpush.msra.mxu0 0.0
        %1772 = vmatpush.msra.mxu0 0.0
        %1773 = vmatpush.msra.mxu0 0.0
        %1774 = vmatpush.msra.mxu0 0.0
        %1775 = vmatpush.msra.mxu0 0.0
        %1776 = vmatpush.msra.mxu0 0.0
        %1777 = vmatpush.msra.mxu0 0.0
        %1778 = vmatpush.msra.mxu0 0.0
        %1779 = vmatpush.msra.mxu0 0.0
        %1780 = vmatpush.msra.mxu0 0.0
        %1781 = vmatpush.msra.mxu0 0.0
        %1782 = vmatpush.msra.mxu0 0.0
        %1783 = vmatpush.msra.mxu0 %v1602
        %1784 = vmatmul.f32.gmra.mxu0 %v1766
        %v1785 = vpop.f32.mrf.mxu0
        %v1786 = vadd.f32 0.0, %v1785
        %1787 = vdwg.mxu0
        %v1789 = vsel %vm856, %v1762, 0
        %1791 = vmatpush.msra.mxu0 0.0
        %1792 = vmatpush.msra.mxu0 0.0
        %1793 = vmatpush.msra.mxu0 0.0
        %1794 = vmatpush.msra.mxu0 0.0
        %1795 = vmatpush.msra.mxu0 0.0
        %1796 = vmatpush.msra.mxu0 0.0
        %1797 = vmatpush.msra.mxu0 0.0
        %1798 = vmatpush.msra.mxu0 0.0
        %1799 = vmatpush.msra.mxu0 0.0
        %1800 = vmatpush.msra.mxu0 0.0
        %1801 = vmatpush.msra.mxu0 0.0
        %1802 = vmatpush.msra.mxu0 0.0
        %1803 = vmatpush.msra.mxu0 0.0
        %1804 = vmatpush.msra.mxu0 0.0
        %1805 = vmatpush.msra.mxu0 0.0
        %1806 = vmatpush.msra.mxu0 %v1605
        %1807 = vmatmul.f32.gmra.mxu0 %v1789
        %v1808 = vpop.f32.mrf.mxu0
        %v1809 = vadd.f32 0.0, %v1808
        %1810 = vdwg.mxu0
        %v1812 = vsel %vm856, %v1763, 0
        %1814 = vmatpush.msra.mxu0 0.0
        %1815 = vmatpush.msra.mxu0 0.0
        %1816 = vmatpush.msra.mxu0 0.0
        %1817 = vmatpush.msra.mxu0 0.0
        %1818 = vmatpush.msra.mxu0 0.0
        %1819 = vmatpush.msra.mxu0 0.0
        %1820 = vmatpush.msra.mxu0 0.0
        %1821 = vmatpush.msra.mxu0 0.0
        %1822 = vmatpush.msra.mxu0 0.0
        %1823 = vmatpush.msra.mxu0 0.0
        %1824 = vmatpush.msra.mxu0 0.0
        %1825 = vmatpush.msra.mxu0 0.0
        %1826 = vmatpush.msra.mxu0 0.0
        %1827 = vmatpush.msra.mxu0 0.0
        %1828 = vmatpush.msra.mxu0 0.0
        %1829 = vmatpush.msra.mxu0 %v1608
        %1830 = vmatmul.f32.gmra.mxu0 %v1812
        %v1831 = vpop.f32.mrf.mxu0
        %v1832 = vadd.f32 0.0, %v1831
        %1833 = vdwg.mxu0
        %v1835 = vsel %vm856, %v1764, 0
        %1837 = vmatpush.msra.mxu0 0.0
        %1838 = vmatpush.msra.mxu0 0.0
        %1839 = vmatpush.msra.mxu0 0.0
        %1840 = vmatpush.msra.mxu0 0.0
        %1841 = vmatpush.msra.mxu0 0.0
        %1842 = vmatpush.msra.mxu0 0.0
        %1843 = vmatpush.msra.mxu0 0.0
        %1844 = vmatpush.msra.mxu0 0.0
        %1845 = vmatpush.msra.mxu0 0.0
        %1846 = vmatpush.msra.mxu0 0.0
        %1847 = vmatpush.msra.mxu0 0.0
        %1848 = vmatpush.msra.mxu0 0.0
        %1849 = vmatpush.msra.mxu0 0.0
        %1850 = vmatpush.msra.mxu0 0.0
        %1851 = vmatpush.msra.mxu0 0.0
        %1852 = vmatpush.msra.mxu0 %v1611
        %1853 = vmatmul.f32.gmra.mxu0 %v1835
        %v1854 = vpop.f32.mrf.mxu0
        %v1855 = vadd.f32 0.0, %v1854
        %1856 = vdwg.mxu0
        %v1858 = vsel %vm856, %v1786, 0
        %v1861 = vsel %vm856, %v1809, 0
        %v1864 = vsel %vm856, %v1832, 0
        %v1867 = vsel %vm856, %v1855, 0
        %1869 = vmatpush.msra.mxu0 0.0
        %1870 = vmatpush.msra.mxu0 0.0
        %1871 = vmatpush.msra.mxu0 0.0
        %1872 = vmatpush.msra.mxu0 0.0
        %1873 = vmatpush.msra.mxu0 0.0
        %1874 = vmatpush.msra.mxu0 0.0
        %1875 = vmatpush.msra.mxu0 0.0
        %1876 = vmatpush.msra.mxu0 0.0
        %1877 = vmatpush.msra.mxu0 0.0
        %1878 = vmatpush.msra.mxu0 0.0
        %1879 = vmatpush.msra.mxu0 0.0
        %1880 = vmatpush.msra.mxu0 0.0
        %1881 = vmatpush.msra.mxu0 0.0
        %1882 = vmatpush.msra.mxu0 0.0
        %1883 = vmatpush.msra.mxu0 0.0
        %1884 = vmatpush.msra.mxu0 %v747
        %1885 = vmatmul.f32.gmra.mxu0 %v1858
        %v1886 = vpop.f32.mrf.mxu0
        %v1887 = vadd.f32 0.0, %v1886
        %1888 = vmatmul.f32.gmra.mxu0 %v1861
        %v1889 = vpop.f32.mrf.mxu0
        %v1890 = vadd.f32 0.0, %v1889
        %1891 = vmatmul.f32.gmra.mxu0 %v1864
        %v1892 = vpop.f32.mrf.mxu0
        %v1893 = vadd.f32 0.0, %v1892
        %1894 = vmatmul.f32.gmra.mxu0 %v1867
        %v1895 = vpop.f32.mrf.mxu0
        %v1896 = vadd.f32 0.0, %v1895
        %1897 = vdwg.mxu0
        %v1898 = vadd.f32 %v1515, %v1887
        %v1899 = vadd.f32 %v1518, %v1890
        %v1900 = vadd.f32 %v1521, %v1893
        %v1901 = vadd.f32 %v1524, %v1896
        %1902 = vmatpush.msra.mxu0 0.0
        %1903 = vmatpush.msra.mxu0 0.0
        %1904 = vmatpush.msra.mxu0 0.0
        %1905 = vmatpush.msra.mxu0 0.0
        %1906 = vmatpush.msra.mxu0 0.0
        %1907 = vmatpush.msra.mxu0 0.0
        %1908 = vmatpush.msra.mxu0 0.0
        %1909 = vmatpush.msra.mxu0 0.0
        %1910 = vmatpush.msra.mxu0 0.0
        %1911 = vmatpush.msra.mxu0 0.0
        %1912 = vmatpush.msra.mxu0 0.0
        %1913 = vmatpush.msra.mxu0 0.0
        %1914 = vmatpush.msra.mxu0 %v712
        %1915 = vmatpush.msra.mxu0 %v711
        %1916 = vmatpush.msra.mxu0 %v710
        %1917 = vmatpush.msra.mxu0 %v709
        %1918 = vmatmul.f32.gmra.mxu0 %v758
        %v1919 = vpop.f32.mrf.mxu0
        %v1920 = vadd.f32 0.0, %v1919
        %1921 = vmatmul.f32.gmra.mxu0 %v761
        %v1922 = vpop.f32.mrf.mxu0
        %v1923 = vadd.f32 0.0, %v1922
        %1924 = vmatmul.f32.gmra.mxu0 %v764
        %v1925 = vpop.f32.mrf.mxu0
        %v1926 = vadd.f32 0.0, %v1925
        %1927 = vmatmul.f32.gmra.mxu0 %v767
        %v1928 = vpop.f32.mrf.mxu0
        %v1929 = vadd.f32 0.0, %v1928
        %1930 = vdwg.mxu0
        %1931 = vmatpush.msra.mxu0 0.0
        %1932 = vmatpush.msra.mxu0 0.0
        %1933 = vmatpush.msra.mxu0 0.0
        %1934 = vmatpush.msra.mxu0 0.0
        %1935 = vmatpush.msra.mxu0 0.0
        %1936 = vmatpush.msra.mxu0 0.0
        %1937 = vmatpush.msra.mxu0 0.0
        %1938 = vmatpush.msra.mxu0 0.0
        %1939 = vmatpush.msra.mxu0 0.0
        %1940 = vmatpush.msra.mxu0 0.0
        %1941 = vmatpush.msra.mxu0 0.0
        %1942 = vmatpush.msra.mxu0 0.0
        %1943 = vmatpush.msra.mxu0 %v728
        %1944 = vmatpush.msra.mxu0 %v727
        %1945 = vmatpush.msra.mxu0 %v726
        %1946 = vmatpush.msra.mxu0 %v725
        %1947 = vmatmul.f32.gmra.mxu0 %v758
        %v1948 = vpop.f32.mrf.mxu0
        %v1949 = vadd.f32 0.0, %v1948
        %1950 = vmatmul.f32.gmra.mxu0 %v761
        %v1951 = vpop.f32.mrf.mxu0
        %v1952 = vadd.f32 0.0, %v1951
        %1953 = vmatmul.f32.gmra.mxu0 %v764
        %v1954 = vpop.f32.mrf.mxu0
        %v1955 = vadd.f32 0.0, %v1954
        %1956 = vmatmul.f32.gmra.mxu0 %v767
        %v1957 = vpop.f32.mrf.mxu0
        %v1958 = vadd.f32 0.0, %v1957
        %1959 = vdwg.mxu0
        %1960 = vmatpush.msra.mxu0 0.0
        %1961 = vmatpush.msra.mxu0 0.0
        %1962 = vmatpush.msra.mxu0 0.0
        %1963 = vmatpush.msra.mxu0 0.0
        %1964 = vmatpush.msra.mxu0 0.0
        %1965 = vmatpush.msra.mxu0 0.0
        %1966 = vmatpush.msra.mxu0 0.0
        %1967 = vmatpush.msra.mxu0 0.0
        %1968 = vmatpush.msra.mxu0 0.0
        %1969 = vmatpush.msra.mxu0 0.0
        %1970 = vmatpush.msra.mxu0 0.0
        %1971 = vmatpush.msra.mxu0 0.0
        %1972 = vmatpush.msra.mxu0 %v744
        %1973 = vmatpush.msra.mxu0 %v743
        %1974 = vmatpush.msra.mxu0 %v742
        %1975 = vmatpush.msra.mxu0 %v741
        %1976 = vmatmul.f32.gmra.mxu0 %v758
        %v1977 = vpop.f32.mrf.mxu0
        %v1978 = vadd.f32 0.0, %v1977
        %1979 = vmatmul.f32.gmra.mxu0 %v761
        %v1980 = vpop.f32.mrf.mxu0
        %v1981 = vadd.f32 0.0, %v1980
        %1982 = vmatmul.f32.gmra.mxu0 %v764
        %v1983 = vpop.f32.mrf.mxu0
        %v1984 = vadd.f32 0.0, %v1983
        %1985 = vmatmul.f32.gmra.mxu0 %v767
        %v1986 = vpop.f32.mrf.mxu0
        %v1987 = vadd.f32 0.0, %v1986
        %1988 = vdwg.mxu0
        %v1990 = vsel %vm856, %v1920, 0
        %v1993 = vsel %vm856, %v1949, 0
        %1995 = vmatpush.xpose.msra.mxu0 0.0
        %1996 = vmatpush.xpose.msra.mxu0 0.0
        %1997 = vmatpush.xpose.msra.mxu0 0.0
        %1998 = vmatpush.xpose.msra.mxu0 0.0
        %1999 = vmatpush.xpose.msra.mxu0 0.0
        %2000 = vmatpush.xpose.msra.mxu0 0.0
        %2001 = vmatpush.xpose.msra.mxu0 0.0
        %2002 = vmatpush.xpose.msra.mxu0 0.0
        %2003 = vmatpush.xpose.msra.mxu0 0.0
        %2004 = vmatpush.xpose.msra.mxu0 0.0
        %2005 = vmatpush.xpose.msra.mxu0 0.0
        %2006 = vmatpush.xpose.msra.mxu0 0.0
        %2007 = vmatpush.xpose.msra.mxu0 0.0
        %2008 = vmatpush.xpose.msra.mxu0 0.0
        %2009 = vmatpush.xpose.msra.mxu0 0.0
        %2010 = vmatpush.xpose.msra.mxu0 %v1993
        %2011 = vmatmul.f32.gmra.mxu0 %v1990
        %v2012 = vpop.f32.mrf.mxu0
        %v2013 = vadd.f32 %v752, %v2012
        %2014 = vdwg.mxu0
        %v2016 = vsel %vm856, %v1923, 0
        %v2019 = vsel %vm856, %v1952, 0
        %2021 = vmatpush.xpose.msra.mxu0 0.0
        %2022 = vmatpush.xpose.msra.mxu0 0.0
        %2023 = vmatpush.xpose.msra.mxu0 0.0
        %2024 = vmatpush.xpose.msra.mxu0 0.0
        %2025 = vmatpush.xpose.msra.mxu0 0.0
        %2026 = vmatpush.xpose.msra.mxu0 0.0
        %2027 = vmatpush.xpose.msra.mxu0 0.0
        %2028 = vmatpush.xpose.msra.mxu0 0.0
        %2029 = vmatpush.xpose.msra.mxu0 0.0
        %2030 = vmatpush.xpose.msra.mxu0 0.0
        %2031 = vmatpush.xpose.msra.mxu0 0.0
        %2032 = vmatpush.xpose.msra.mxu0 0.0
        %2033 = vmatpush.xpose.msra.mxu0 0.0
        %2034 = vmatpush.xpose.msra.mxu0 0.0
        %2035 = vmatpush.xpose.msra.mxu0 0.0
        %2036 = vmatpush.xpose.msra.mxu0 %v2019
        %2037 = vmatmul.f32.gmra.mxu0 %v2016
        %v2038 = vpop.f32.mrf.mxu0
        %v2039 = vadd.f32 %v752, %v2038
        %2040 = vdwg.mxu0
        %v2042 = vsel %vm856, %v1926, 0
        %v2045 = vsel %vm856, %v1955, 0
        %2047 = vmatpush.xpose.msra.mxu0 0.0
        %2048 = vmatpush.xpose.msra.mxu0 0.0
        %2049 = vmatpush.xpose.msra.mxu0 0.0
        %2050 = vmatpush.xpose.msra.mxu0 0.0
        %2051 = vmatpush.xpose.msra.mxu0 0.0
        %2052 = vmatpush.xpose.msra.mxu0 0.0
        %2053 = vmatpush.xpose.msra.mxu0 0.0
        %2054 = vmatpush.xpose.msra.mxu0 0.0
        %2055 = vmatpush.xpose.msra.mxu0 0.0
        %2056 = vmatpush.xpose.msra.mxu0 0.0
        %2057 = vmatpush.xpose.msra.mxu0 0.0
        %2058 = vmatpush.xpose.msra.mxu0 0.0
        %2059 = vmatpush.xpose.msra.mxu0 0.0
        %2060 = vmatpush.xpose.msra.mxu0 0.0
        %2061 = vmatpush.xpose.msra.mxu0 0.0
        %2062 = vmatpush.xpose.msra.mxu0 %v2045
        %2063 = vmatmul.f32.gmra.mxu0 %v2042
        %v2064 = vpop.f32.mrf.mxu0
        %v2065 = vadd.f32 %v752, %v2064
        %2066 = vdwg.mxu0
        %v2068 = vsel %vm856, %v1929, 0
        %v2071 = vsel %vm856, %v1958, 0
        %2073 = vmatpush.xpose.msra.mxu0 0.0
        %2074 = vmatpush.xpose.msra.mxu0 0.0
        %2075 = vmatpush.xpose.msra.mxu0 0.0
        %2076 = vmatpush.xpose.msra.mxu0 0.0
        %2077 = vmatpush.xpose.msra.mxu0 0.0
        %2078 = vmatpush.xpose.msra.mxu0 0.0
        %2079 = vmatpush.xpose.msra.mxu0 0.0
        %2080 = vmatpush.xpose.msra.mxu0 0.0
        %2081 = vmatpush.xpose.msra.mxu0 0.0
        %2082 = vmatpush.xpose.msra.mxu0 0.0
        %2083 = vmatpush.xpose.msra.mxu0 0.0
        %2084 = vmatpush.xpose.msra.mxu0 0.0
        %2085 = vmatpush.xpose.msra.mxu0 0.0
        %2086 = vmatpush.xpose.msra.mxu0 0.0
        %2087 = vmatpush.xpose.msra.mxu0 0.0
        %2088 = vmatpush.xpose.msra.mxu0 %v2071
        %2089 = vmatmul.f32.gmra.mxu0 %v2068
        %v2090 = vpop.f32.mrf.mxu0
        %v2091 = vadd.f32 %v752, %v2090
        %2092 = vdwg.mxu0
        %v2093 = vadd.f32 %v2013, %v965
        %v2094 = vadd.f32 %v2039, %v966
        %v2095 = vadd.f32 %v2065, %v967
        %v2096 = vadd.f32 %v2091, %v968
        %v2097 = vsel %vm856, %v2093, -inf
        %2098 = vmax.xlane.f32.xlu0 %v2097
        %v2099 = vpop.xlane.xlu0 %2098
        %v2100 = vsel %vm856, %v2094, -inf
        %2101 = vmax.xlane.f32.xlu0 %v2100
        %v2102 = vpop.xlane.xlu0 %2101
        %v2103 = vsel %vm856, %v2095, -inf
        %2104 = vmax.xlane.f32.xlu0 %v2103
        %v2105 = vpop.xlane.xlu0 %2104
        %v2106 = vsel %vm856, %v2096, -inf
        %2107 = vmax.xlane.f32.xlu0 %v2106
        %v2108 = vpop.xlane.xlu0 %2107
        %v2109 = vsub.f32 %v2093, %v2099
        %v2110 = vsub.f32 %v2094, %v2102
        %v2111 = vsub.f32 %v2095, %v2105
        %v2112 = vsub.f32 %v2096, %v2108
        %v2113 = vmul.f32 %v2109, 1.442695
        %v2114 = vpow.pop %v2113
        %v2115 = vmul.f32 %v2110, 1.442695
        %v2116 = vpow.pop %v2115
        %v2117 = vmul.f32 %v2111, 1.442695
        %v2118 = vpow.pop %v2117
        %v2119 = vmul.f32 %v2112, 1.442695
        %v2120 = vpow.pop %v2119
        %v2121 = vsel %vm856, %v2114, 0.0
        %2122 = vadd.xlane.f32.xlu0 %v2121
        %v2123 = vpop.xlane.xlu0 %2122
        %v2124 = vsel %vm856, %v2116, 0.0
        %2125 = vadd.xlane.f32.xlu0 %v2124
        %v2126 = vpop.xlane.xlu0 %2125
        %v2127 = vsel %vm856, %v2118, 0.0
        %2128 = vadd.xlane.f32.xlu0 %v2127
        %v2129 = vpop.xlane.xlu0 %2128
        %v2130 = vsel %vm856, %v2120, 0.0
        %2131 = vadd.xlane.f32.xlu0 %v2130
        %v2132 = vpop.xlane.xlu0 %2131
        %v2133 = vrcp.pop %v2123
        %v2134 = vrcp.pop %v2126
        %v2135 = vrcp.pop %v2129
        %v2136 = vrcp.pop %v2132
        %v2137 = vmul.f32 %v2114, %v2133
        %v2138 = vmul.f32 %v2116, %v2134
        %v2139 = vmul.f32 %v2118, %v2135
        %v2140 = vmul.f32 %v2120, %v2136
        %v2142 = vsel %vm856, %v2137, 0
        %2144 = vmatpush.msra.mxu0 0.0
        %2145 = vmatpush.msra.mxu0 0.0
        %2146 = vmatpush.msra.mxu0 0.0
        %2147 = vmatpush.msra.mxu0 0.0
        %2148 = vmatpush.msra.mxu0 0.0
        %2149 = vmatpush.msra.mxu0 0.0
        %2150 = vmatpush.msra.mxu0 0.0
        %2151 = vmatpush.msra.mxu0 0.0
        %2152 = vmatpush.msra.mxu0 0.0
        %2153 = vmatpush.msra.mxu0 0.0
        %2154 = vmatpush.msra.mxu0 0.0
        %2155 = vmatpush.msra.mxu0 0.0
        %2156 = vmatpush.msra.mxu0 0.0
        %2157 = vmatpush.msra.mxu0 0.0
        %2158 = vmatpush.msra.mxu0 0.0
        %2159 = vmatpush.msra.mxu0 %v1978
        %2160 = vmatmul.f32.gmra.mxu0 %v2142
        %v2161 = vpop.f32.mrf.mxu0
        %v2162 = vadd.f32 0.0, %v2161
        %2163 = vdwg.mxu0
        %v2165 = vsel %vm856, %v2138, 0
        %2167 = vmatpush.msra.mxu0 0.0
        %2168 = vmatpush.msra.mxu0 0.0
        %2169 = vmatpush.msra.mxu0 0.0
        %2170 = vmatpush.msra.mxu0 0.0
        %2171 = vmatpush.msra.mxu0 0.0
        %2172 = vmatpush.msra.mxu0 0.0
        %2173 = vmatpush.msra.mxu0 0.0
        %2174 = vmatpush.msra.mxu0 0.0
        %2175 = vmatpush.msra.mxu0 0.0
        %2176 = vmatpush.msra.mxu0 0.0
        %2177 = vmatpush.msra.mxu0 0.0
        %2178 = vmatpush.msra.mxu0 0.0
        %2179 = vmatpush.msra.mxu0 0.0
        %2180 = vmatpush.msra.mxu0 0.0
        %2181 = vmatpush.msra.mxu0 0.0
        %2182 = vmatpush.msra.mxu0 %v1981
        %2183 = vmatmul.f32.gmra.mxu0 %v2165
        %v2184 = vpop.f32.mrf.mxu0
        %v2185 = vadd.f32 0.0, %v2184
        %2186 = vdwg.mxu0
        %v2188 = vsel %vm856, %v2139, 0
        %2190 = vmatpush.msra.mxu0 0.0
        %2191 = vmatpush.msra.mxu0 0.0
        %2192 = vmatpush.msra.mxu0 0.0
        %2193 = vmatpush.msra.mxu0 0.0
        %2194 = vmatpush.msra.mxu0 0.0
        %2195 = vmatpush.msra.mxu0 0.0
        %2196 = vmatpush.msra.mxu0 0.0
        %2197 = vmatpush.msra.mxu0 0.0
        %2198 = vmatpush.msra.mxu0 0.0
        %2199 = vmatpush.msra.mxu0 0.0
        %2200 = vmatpush.msra.mxu0 0.0
        %2201 = vmatpush.msra.mxu0 0.0
        %2202 = vmatpush.msra.mxu0 0.0
        %2203 = vmatpush.msra.mxu0 0.0
        %2204 = vmatpush.msra.mxu0 0.0
        %2205 = vmatpush.msra.mxu0 %v1984
        %2206 = vmatmul.f32.gmra.mxu0 %v2188
        %v2207 = vpop.f32.mrf.mxu0
        %v2208 = vadd.f32 0.0, %v2207
        %2209 = vdwg.mxu0
        %v2211 = vsel %vm856, %v2140, 0
        %2213 = vmatpush.msra.mxu0 0.0
        %2214 = vmatpush.msra.mxu0 0.0
        %2215 = vmatpush.msra.mxu0 0.0
        %2216 = vmatpush.msra.mxu0 0.0
        %2217 = vmatpush.msra.mxu0 0.0
        %2218 = vmatpush.msra.mxu0 0.0
        %2219 = vmatpush.msra.mxu0 0.0
        %2220 = vmatpush.msra.mxu0 0.0
        %2221 = vmatpush.msra.mxu0 0.0
        %2222 = vmatpush.msra.mxu0 0.0
        %2223 = vmatpush.msra.mxu0 0.0
        %2224 = vmatpush.msra.mxu0 0.0
        %2225 = vmatpush.msra.mxu0 0.0
        %2226 = vmatpush.msra.mxu0 0.0
        %2227 = vmatpush.msra.mxu0 0.0
        %2228 = vmatpush.msra.mxu0 %v1987
        %2229 = vmatmul.f32.gmra.mxu0 %v2211
        %v2230 = vpop.f32.mrf.mxu0
        %v2231 = vadd.f32 0.0, %v2230
        %2232 = vdwg.mxu0
        %v2234 = vsel %vm856, %v2162, 0
        %v2237 = vsel %vm856, %v2185, 0
        %v2240 = vsel %vm856, %v2208, 0
        %v2243 = vsel %vm856, %v2231, 0
        %2245 = vmatpush.msra.mxu0 0.0
        %2246 = vmatpush.msra.mxu0 0.0
        %2247 = vmatpush.msra.mxu0 0.0
        %2248 = vmatpush.msra.mxu0 0.0
        %2249 = vmatpush.msra.mxu0 0.0
        %2250 = vmatpush.msra.mxu0 0.0
        %2251 = vmatpush.msra.mxu0 0.0
        %2252 = vmatpush.msra.mxu0 0.0
        %2253 = vmatpush.msra.mxu0 0.0
        %2254 = vmatpush.msra.mxu0 0.0
        %2255 = vmatpush.msra.mxu0 0.0
        %2256 = vmatpush.msra.mxu0 0.0
        %2257 = vmatpush.msra.mxu0 0.0
        %2258 = vmatpush.msra.mxu0 0.0
        %2259 = vmatpush.msra.mxu0 0.0
        %2260 = vmatpush.msra.mxu0 %v748
        %2261 = vmatmul.f32.gmra.mxu0 %v2234
        %v2262 = vpop.f32.mrf.mxu0
        %v2263 = vadd.f32 0.0, %v2262
        %2264 = vmatmul.f32.gmra.mxu0 %v2237
        %v2265 = vpop.f32.mrf.mxu0
        %v2266 = vadd.f32 0.0, %v2265
        %2267 = vmatmul.f32.gmra.mxu0 %v2240
        %v2268 = vpop.f32.mrf.mxu0
        %v2269 = vadd.f32 0.0, %v2268
        %2270 = vmatmul.f32.gmra.mxu0 %v2243
        %v2271 = vpop.f32.mrf.mxu0
        %v2272 = vadd.f32 0.0, %v2271
        %2273 = vdwg.mxu0
        %v2274 = vadd.f32 %v1898, %v2263
        %v2275 = vadd.f32 %v1899, %v2266
        %v2276 = vadd.f32 %v1900, %v2269
        %v2277 = vadd.f32 %v1901, %v2272
        %v2278 = vadd.f32 %v611, %v2274
        %v2279 = vadd.f32 %v612, %v2275
        %v2280 = vadd.f32 %v613, %v2276
        %v2281 = vadd.f32 %v614, %v2277
        %v2282 = vmul.f32 %v2278, %v2278
        %v2283 = vmul.f32 %v2279, %v2279
        %v2284 = vmul.f32 %v2280, %v2280
        %v2285 = vmul.f32 %v2281, %v2281
        %v2286 = vsel %vm620, %v2282, 0.0
        %2287 = vadd.xlane.f32.xlu0 %v2286
        %v2288 = vpop.xlane.xlu0 %2287
        %v2289 = vsel %vm620, %v2283, 0.0
        %2290 = vadd.xlane.f32.xlu0 %v2289
        %v2291 = vpop.xlane.xlu0 %2290
        %v2292 = vsel %vm620, %v2284, 0.0
        %2293 = vadd.xlane.f32.xlu0 %v2292
        %v2294 = vpop.xlane.xlu0 %2293
        %v2295 = vsel %vm620, %v2285, 0.0
        %2296 = vadd.xlane.f32.xlu0 %v2295
        %v2297 = vpop.xlane.xlu0 %2296
        %v2298 = vmul.f32 %v2288, %v639
        %v2299 = vmul.f32 %v2291, %v639
        %v2300 = vmul.f32 %v2294, %v639
        %v2301 = vmul.f32 %v2297, %v639
        %v2302 = vadd.f32 %v2298, 1e-06
        %v2303 = vadd.f32 %v2299, 1e-06
        %v2304 = vadd.f32 %v2300, 1e-06
        %v2305 = vadd.f32 %v2301, 1e-06
        %v2306 = vrsqrt.pop %v2302
        %v2307 = vmul.f32 %v2306, %v2302
        %v2308 = vmul.f32 %v2307, %v2306
        %v2309 = vmul.f32 0.5, %v2308
        %v2310 = vsub.f32 1.5, %v2309
        %v2311 = vmul.f32 %v2306, %v2310
        %vm2312 = vweird.f32 %v2302
        %vm2313 = vweird.f32 %v2306
        %vm2314 = vmor %vm2312, %vm2313
        %v2315 = vsel %vm2314, %v2306, %v2311
        %v2316 = vrsqrt.pop %v2303
        %v2317 = vmul.f32 %v2316, %v2303
        %v2318 = vmul.f32 %v2317, %v2316
        %v2319 = vmul.f32 0.5, %v2318
        %v2320 = vsub.f32 1.5, %v2319
        %v2321 = vmul.f32 %v2316, %v2320
        %vm2322 = vweird.f32 %v2303
        %vm2323 = vweird.f32 %v2316
        %vm2324 = vmor %vm2322, %vm2323
        %v2325 = vsel %vm2324, %v2316, %v2321
        %v2326 = vrsqrt.pop %v2304
        %v2327 = vmul.f32 %v2326, %v2304
        %v2328 = vmul.f32 %v2327, %v2326
        %v2329 = vmul.f32 0.5, %v2328
        %v2330 = vsub.f32 1.5, %v2329
        %v2331 = vmul.f32 %v2326, %v2330
        %vm2332 = vweird.f32 %v2304
        %vm2333 = vweird.f32 %v2326
        %vm2334 = vmor %vm2332, %vm2333
        %v2335 = vsel %vm2334, %v2326, %v2331
        %v2336 = vrsqrt.pop %v2305
        %v2337 = vmul.f32 %v2336, %v2305
        %v2338 = vmul.f32 %v2337, %v2336
        %v2339 = vmul.f32 0.5, %v2338
        %v2340 = vsub.f32 1.5, %v2339
        %v2341 = vmul.f32 %v2336, %v2340
        %vm2342 = vweird.f32 %v2305
        %vm2343 = vweird.f32 %v2336
        %vm2344 = vmor %vm2342, %vm2343
        %v2345 = vsel %vm2344, %v2336, %v2341
        %v2346 = vmul.f32 %v2278, %v2315
        %v2347 = vmul.f32 %v2279, %v2325
        %v2348 = vmul.f32 %v2280, %v2335
        %v2349 = vmul.f32 %v2281, %v2345
        %v2350 = vperm.slane %v615, 1
        %v2351 = vmul.f32 %v2346, %v2350
        %v2352 = vmul.f32 %v2347, %v2350
        %v2353 = vmul.f32 %v2348, %v2350
        %v2354 = vmul.f32 %v2349, %v2350
        %v2355 = vld [vmem:[%s592] sm:$0xff]
        %v2356 = vld [vmem:[%s592 + $0x8] sm:$0xff]
        %v2357 = vld [vmem:[%s592 + $0x10] sm:$0xff]
        %v2358 = vld [vmem:[%s592 + $0x18] sm:$0xff]
        %v2360 = vsel %vm620, %v2351, 0
        %v2363 = vsel %vm620, %v2352, 0
        %v2366 = vsel %vm620, %v2353, 0
        %v2369 = vsel %vm620, %v2354, 0
        %2371 = vmatpush.msra.mxu0 0.0
        %2372 = vmatpush.msra.mxu0 0.0
        %2373 = vmatpush.msra.mxu0 0.0
        %2374 = vmatpush.msra.mxu0 0.0
        %2375 = vmatpush.msra.mxu0 0.0
        %2376 = vmatpush.msra.mxu0 0.0
        %2377 = vmatpush.msra.mxu0 0.0
        %2378 = vmatpush.msra.mxu0 0.0
        %2379 = vmatpush.msra.mxu0 0.0
        %2380 = vmatpush.msra.mxu0 0.0
        %2381 = vmatpush.msra.mxu0 0.0
        %2382 = vmatpush.msra.mxu0 0.0
        %2383 = vmatpush.msra.mxu0 %v2358
        %2384 = vmatpush.msra.mxu0 %v2357
        %2385 = vmatpush.msra.mxu0 %v2356
        %2386 = vmatpush.msra.mxu0 %v2355
        %2387 = vmatmul.f32.gmra.mxu0 %v2360
        %v2388 = vpop.f32.mrf.mxu0
        %v2389 = vadd.f32 0.0, %v2388
        %2390 = vmatmul.f32.gmra.mxu0 %v2363
        %v2391 = vpop.f32.mrf.mxu0
        %v2392 = vadd.f32 0.0, %v2391
        %2393 = vmatmul.f32.gmra.mxu0 %v2366
        %v2394 = vpop.f32.mrf.mxu0
        %v2395 = vadd.f32 0.0, %v2394
        %2396 = vmatmul.f32.gmra.mxu0 %v2369
        %v2397 = vpop.f32.mrf.mxu0
        %v2398 = vadd.f32 0.0, %v2397
        %2399 = vdwg.mxu0
        %v2400 = vmax.f32 %v2389, 0.0
        %v2401 = vmax.f32 %v2392, 0.0
        %v2402 = vmax.f32 %v2395, 0.0
        %v2403 = vmax.f32 %v2398, 0.0
        %v2404 = vld [vmem:[%s597] sm:$0xff]
        %v2405 = vld [vmem:[%s597 + $0x8] sm:$0xff]
        %v2406 = vld [vmem:[%s597 + $0x10] sm:$0xff]
        %v2407 = vld [vmem:[%s597 + $0x18] sm:$0xff]
        %v2408 = vld [vmem:[%s597 + $0x20] sm:$0xff]
        %v2409 = vld [vmem:[%s597 + $0x28] sm:$0xff]
        %v2410 = vld [vmem:[%s597 + $0x30] sm:$0xff]
        %v2411 = vld [vmem:[%s597 + $0x38] sm:$0xff]
        %vm2412 = vcmask 523264
        %v2414 = vsel %vm2412, %v2400, 0
        %v2417 = vsel %vm2412, %v2401, 0
        %v2420 = vsel %vm2412, %v2402, 0
        %v2423 = vsel %vm2412, %v2403, 0
        %2425 = vmatpush.msra.mxu0 0.0
        %2426 = vmatpush.msra.mxu0 0.0
        %2427 = vmatpush.msra.mxu0 0.0
        %2428 = vmatpush.msra.mxu0 0.0
        %2429 = vmatpush.msra.mxu0 0.0
        %2430 = vmatpush.msra.mxu0 0.0
        %2431 = vmatpush.msra.mxu0 0.0
        %2432 = vmatpush.msra.mxu0 0.0
        %2433 = vmatpush.msra.mxu0 %v2411
        %2434 = vmatpush.msra.mxu0 %v2410
        %2435 = vmatpush.msra.mxu0 %v2409
        %2436 = vmatpush.msra.mxu0 %v2408
        %2437 = vmatpush.msra.mxu0 %v2407
        %2438 = vmatpush.msra.mxu0 %v2406
        %2439 = vmatpush.msra.mxu0 %v2405
        %2440 = vmatpush.msra.mxu0 %v2404
        %2441 = vmatmul.f32.gmra.mxu0 %v2414
        %v2442 = vpop.f32.mrf.mxu0
        %v2443 = vadd.f32 0.0, %v2442
        %2444 = vmatmul.f32.gmra.mxu0 %v2417
        %v2445 = vpop.f32.mrf.mxu0
        %v2446 = vadd.f32 0.0, %v2445
        %2447 = vmatmul.f32.gmra.mxu0 %v2420
        %v2448 = vpop.f32.mrf.mxu0
        %v2449 = vadd.f32 0.0, %v2448
        %2450 = vmatmul.f32.gmra.mxu0 %v2423
        %v2451 = vpop.f32.mrf.mxu0
        %v2452 = vadd.f32 0.0, %v2451
        %2453 = vdwg.mxu0
        %v2454 = vadd.f32 %v2278, %v2443
        %v2455 = vadd.f32 %v2279, %v2446
        %v2456 = vadd.f32 %v2280, %v2449
        %v2457 = vadd.f32 %v2281, %v2452
        %2458 = vst.msk [vmem:[%s14] sm:$0xff] %vm620, %v2454
        %2459 = vst.msk [vmem:[%s14 + $0x8] sm:$0xff] %vm620, %v2455
        %2460 = vst.msk [vmem:[%s14 + $0x10] sm:$0xff] %vm620, %v2456
        %2461 = vst.msk [vmem:[%s14 + $0x18] sm:$0xff] %vm620, %v2457
        %p2462 = scmp.eq.s32.totalorder %s30, 1
        // Predicated region
        $region81: #{t5_multitask_relation_forward.2} parent=75 // pred_check
          %p2463 = pneg %p2462
        $region82: #{t5_multitask_relation_forward.2} parent=75 // pred_check_branch
          %2465 = sbr.rel (%p2463) target = $region84
        $region83: #{t5_multitask_relation_forward.2} parent=75 // pred_region
          %v2466 = vld [vmem:[%s13] sm:$0x1]
          %v2467 = vmul.f32 %v2454, %v2454
          %v2468 = vmul.f32 %v2455, %v2455
          %v2469 = vmul.f32 %v2456, %v2456
          %v2470 = vmul.f32 %v2457, %v2457
          %v2471 = vsel %vm620, %v2467, 0.0
          %2472 = vadd.xlane.f32.xlu0 %v2471
          %v2473 = vpop.xlane.xlu0 %2472
          %v2474 = vsel %vm620, %v2468, 0.0
          %2475 = vadd.xlane.f32.xlu0 %v2474
          %v2476 = vpop.xlane.xlu0 %2475
          %v2477 = vsel %vm620, %v2469, 0.0
          %2478 = vadd.xlane.f32.xlu0 %v2477
          %v2479 = vpop.xlane.xlu0 %2478
          %v2480 = vsel %vm620, %v2470, 0.0
          %2481 = vadd.xlane.f32.xlu0 %v2480
          %v2482 = vpop.xlane.xlu0 %2481
          %v2483 = vmul.f32 %v2473, %v639
          %v2484 = vmul.f32 %v2476, %v639
          %v2485 = vmul.f32 %v2479, %v639
          %v2486 = vmul.f32 %v2482, %v639
          %v2487 = vadd.f32 %v2483, 1e-06
          %v2488 = vadd.f32 %v2484, 1e-06
          %v2489 = vadd.f32 %v2485, 1e-06
          %v2490 = vadd.f32 %v2486, 1e-06
          %v2491 = vrsqrt.pop %v2487
          %v2492 = vmul.f32 %v2491, %v2487
          %v2493 = vmul.f32 %v2492, %v2491
          %v2494 = vmul.f32 0.5, %v2493
          %v2495 = vsub.f32 1.5, %v2494
          %v2496 = vmul.f32 %v2491, %v2495
          %vm2497 = vweird.f32 %v2487
          %vm2498 = vweird.f32 %v2491
          %vm2499 = vmor %vm2497, %vm2498
          %v2500 = vsel %vm2499, %v2491, %v2496
          %v2501 = vrsqrt.pop %v2488
          %v2502 = vmul.f32 %v2501, %v2488
          %v2503 = vmul.f32 %v2502, %v2501
          %v2504 = vmul.f32 0.5, %v2503
          %v2505 = vsub.f32 1.5, %v2504
          %v2506 = vmul.f32 %v2501, %v2505
          %vm2507 = vweird.f32 %v2488
          %vm2508 = vweird.f32 %v2501
          %vm2509 = vmor %vm2507, %vm2508
          %v2510 = vsel %vm2509, %v2501, %v2506
          %v2511 = vrsqrt.pop %v2489
          %v2512 = vmul.f32 %v2511, %v2489
          %v2513 = vmul.f32 %v2512, %v2511
          %v2514 = vmul.f32 0.5, %v2513
          %v2515 = vsub.f32 1.5, %v2514
          %v2516 = vmul.f32 %v2511, %v2515
          %vm2517 = vweird.f32 %v2489
          %vm2518 = vweird.f32 %v2511
          %vm2519 = vmor %vm2517, %vm2518
          %v2520 = vsel %vm2519, %v2511, %v2516
          %v2521 = vrsqrt.pop %v2490
          %v2522 = vmul.f32 %v2521, %v2490
          %v2523 = vmul.f32 %v2522, %v2521
          %v2524 = vmul.f32 0.5, %v2523
          %v2525 = vsub.f32 1.5, %v2524
          %v2526 = vmul.f32 %v2521, %v2525
          %vm2527 = vweird.f32 %v2490
          %vm2528 = vweird.f32 %v2521
          %vm2529 = vmor %vm2527, %vm2528
          %v2530 = vsel %vm2529, %v2521, %v2526
          %v2531 = vmul.f32 %v2454, %v2500
          %v2532 = vmul.f32 %v2455, %v2510
          %v2533 = vmul.f32 %v2456, %v2520
          %v2534 = vmul.f32 %v2457, %v2530
          %v2536 = vperm.slane %v2466, 0
          %v2538 = vmul.f32 %v2531, %v2536
          %v2539 = vmul.f32 %v2532, %v2536
          %v2540 = vmul.f32 %v2533, %v2536
          %v2541 = vmul.f32 %v2534, %v2536
          %2542 = vst.msk [vmem:[%s14] sm:$0xff] %vm620, %v2538
          %2543 = vst.msk [vmem:[%s14 + $0x8] sm:$0xff] %vm620, %v2539
          %2544 = vst.msk [vmem:[%s14 + $0x10] sm:$0xff] %vm620, %v2540
          %2545 = vst.msk [vmem:[%s14 + $0x18] sm:$0xff] %vm620, %v2541
          %v2546 = vsel %vm620, %v2540, 0.0
          %v2547 = vrot.slane %v2546, 4
          %v2548 = vadd.f32 %v2546, %v2547
          %v2549 = vrot.slane %v2548, 2
          %v2550 = vadd.f32 %v2548, %v2549
          %v2551 = vrot.slane %v2550, 1
          %v2552 = vadd.f32 %v2550, %v2551
          %v2553 = vsel %vm620, %v2541, 0.0
          %v2554 = vrot.slane %v2553, 4
          %v2555 = vadd.f32 %v2553, %v2554
          %v2556 = vrot.slane %v2555, 2
          %v2557 = vadd.f32 %v2555, %v2556
          %v2558 = vrot.slane %v2557, 1
          %v2559 = vadd.f32 %v2557, %v2558
          %v2560 = vrcp.pop 8.0
          %v2561 = vmul.f32 8.0, %v2560
          %v2562 = vsub.f32 1.0, %v2561
          %v2563 = vmul.f32 %v2560, %v2562
          %v2564 = vadd.f32 %v2560, %v2563
          %vm2565 = vweird.f32 %v2560
          %v2566 = vsel %vm2565, %v2560, %v2564
          %v2567 = vmul.f32 %v2552, %v2566
          %v2568 = vmul.f32 %v2559, %v2566
          %v2569 = vld [vmem:[%s3] sm:$0xff]
          %v2570 = vld [vmem:[%s3 + $0x8] sm:$0xff]
          %v2571 = vld [vmem:[%s3 + $0x10] sm:$0xff]
          %v2572 = vld [vmem:[%s3 + $0x18] sm:$0xff]
          %v2573 = vld [vmem:[#allocation2] sm:$0x1]
          %v2575 = vperm.slane %v2573, 0
          %vm2579 = vcmask 1041409
          %v2580 = vsel %vm2579, %v2568, %v2567
          %v2581 = vsel %vm620, %v2580, 0
          %2583 = vmatpush.msra.mxu0 0.0
          %2584 = vmatpush.msra.mxu0 0.0
          %2585 = vmatpush.msra.mxu0 0.0
          %2586 = vmatpush.msra.mxu0 0.0
          %2587 = vmatpush.msra.mxu0 0.0
          %2588 = vmatpush.msra.mxu0 0.0
          %2589 = vmatpush.msra.mxu0 0.0
          %2590 = vmatpush.msra.mxu0 0.0
          %2591 = vmatpush.msra.mxu0 0.0
          %2592 = vmatpush.msra.mxu0 0.0
          %2593 = vmatpush.msra.mxu0 0.0
          %2594 = vmatpush.msra.mxu0 0.0
          %2595 = vmatpush.msra.mxu0 %v2572
          %2596 = vmatpush.msra.mxu0 %v2571
          %2597 = vmatpush.msra.mxu0 %v2570
          %2598 = vmatpush.msra.mxu0 %v2569
          %2599 = vmatmul.f32.gmra.mxu0 %v2581
          %v2600 = vpop.f32.mrf.mxu0
          %v2601 = vadd.f32 %v2575, %v2600
          %2602 = vdwg.mxu0
          %v2603 = vld [vmem:[%s5] sm:$0x3]
          %v2604 = vmax.f32 %v2601, 0.0
          %v2605 = vmul.f32 %v2601, %v2603
          %v2606 = vsub.f32 %v2604, %v2605
          %v2607 = vand.u32 2147483647, %v2601
          %v2608 = vsub.f32 0.0, %v2607
          %v2609 = vmul.f32 %v2608, 1.442695
          %v2610 = vpow.pop %v2609
          %v2611 = vadd.f32 %v2610, 1.0
          %v2612 = vlog2.pop %v2611
          %v2613 = vmul.f32 %v2612, 0.6931472
          %v2614 = vadd.f32 %v2606, %v2613
          %vm2615 = vcmask 1024
          %v2616 = vsel %vm2615, %v2614, 0.0
          %v2617 = vrot.slane %v2616, 4
          %v2618 = vadd.f32 %v2616, %v2617
          %v2619 = vrot.slane %v2618, 2
          %v2620 = vadd.f32 %v2618, %v2619
          %v2621 = vrot.slane %v2620, 1
          %v2622 = vadd.f32 %v2620, %v2621
          %v2623 = vrcp.pop 2.0
          %v2624 = vmul.f32 2.0, %v2623
          %v2625 = vsub.f32 1.0, %v2624
          %v2626 = vmul.f32 %v2623, %v2625
          %v2627 = vadd.f32 %v2623, %v2626
          %vm2628 = vweird.f32 %v2623
          %v2629 = vsel %vm2628, %v2623, %v2627
          %v2630 = vmul.f32 %v2622, %v2629
          %vm2631 = vcmask 0
          %2632 = vst.msk [vmem:[#allocation3] sm:$0x1] %vm2631, %v2630
        $region84: #{t5_multitask_relation_forward.2} parent=75 // pred_fallthru
          _
        // Predicated region
        $region85: #{t5_multitask_relation_forward.2} parent=75 // pred_check
          %p2633 = pneg %p372
        $region86: #{t5_multitask_relation_forward.2} parent=75 // pred_check_branch
          %2635 = sbr.rel (%p2633) target = $region88
        $region87: #{t5_multitask_relation_forward.2} parent=75 // pred_region
          _
        $region88: #{t5_multitask_relation_forward.2} parent=75 // pred_fallthru
          _
        // Predicated region
        $region89: #{t5_multitask_relation_forward.2} parent=75 // pred_check
          %p2636 = pneg %p393
        $region90: #{t5_multitask_relation_forward.2} parent=75 // pred_check_branch
          %2638 = sbr.rel (%p2636) target = $region92
        $region91: #{t5_multitask_relation_forward.2} parent=75 // pred_region
          %2640 = vsyncadd [#allocation4], 0
          %s2642 = sshll.u32 [#allocation3], 4
          %s2643 = int_to_ptr.vmem [resolvable:$true] %s2642
          %s2644 = sshll.u32 %s15, 4
          %s2645 = int_to_ptr.hbm [resolvable:$true] %s2644
          %2647 = dma.vmem_to_hbm [thread:$0]  %s2643, 16, %s2645, [#allocation4]
        $region92: #{t5_multitask_relation_forward.2} parent=75 // pred_fallthru
          _
        // Predicated region
        $region93: #{t5_multitask_relation_forward.2} parent=75 // pred_check
          %p2648 = pneg %p372
        $region94: #{t5_multitask_relation_forward.2} parent=75 // pred_check_branch
          %2650 = sbr.rel (%p2648) target = $region96
        $region95: #{t5_multitask_relation_forward.2} parent=75 // pred_region
          _
        $region96: #{t5_multitask_relation_forward.2} parent=75 // pred_fallthru
          _
        // Predicated region
        $region97: #{t5_multitask_relation_forward.2} parent=75 // pred_check
          %p2651 = pneg %p393
        $region98: #{t5_multitask_relation_forward.2} parent=75 // pred_check_branch
          %2653 = sbr.rel (%p2651) target = $region100
        $region99: #{t5_multitask_relation_forward.2} parent=75 // pred_region
          %2655 = dma.done [#allocation4], 16
        $region100: #{t5_multitask_relation_forward.2} parent=75 // pred_fallthru
          _
      $region76: #{t5_multitask_relation_forward.2} parent=5 // pred_fallthru
        _
      %p2656 = scmp.le.s32.totalorder 2, %s25
      // Predicated region
      $region101: #{t5_multitask_relation_forward.2} parent=5 // pred_check
        %p2657 = pneg %p2656
      $region102: #{t5_multitask_relation_forward.2} parent=5 // pred_check_branch
        %2659 = sbr.rel (%p2657) target = $region104
      $region103: #{t5_multitask_relation_forward.2} parent=5 // pred_region
        %s2660 = ssub.s32 %s25, 2
      $region104: #{t5_multitask_relation_forward.2} parent=5 // pred_fallthru
        _
    $region6: #{t5_multitask_relation_forward.2} parent=1 // loop_footer
      %s29 = sadd.s32 1, %s25
    $region7: #{t5_multitask_relation_forward.2} parent=1 // loop_footer_branch
      %24 = sbr.rel target = $region3
    $region8: #{t5_multitask_relation_forward.2} parent=1 // loop_exit
      _
    %2661 = vsyncpa [#allocation4], 1
    %s2662 = scalar_lea.sflag [#allocation4], 1
    %2663 = vsyncpa %s2662, 1

// kernel: t5_multitask_relation_forward.3
$region0: #{t5_multitask_relation_forward.3}
  #allocation0 [shape = 'u32[]', space=smem, size = 0x4, offset = 0x4, fixed_abs, tag = 'smem constant byte address 0x4 - core index']
  #allocation1 [shape = 'u32[72,128]{1,0:T(1,128)}', space=vmem, size = 0x9000, scoped, tag = 'internal scratch']
  %s0 = inlined_call_operand.vmem [shape: f32[2,8,32], index: 0, kind: input, shape index: {}]
  %s1 = inlined_call_operand.vmem [shape: f32[4,8,8], index: 1, kind: input, shape index: {}]
  %s2 = inlined_call_operand.vmem [shape: f32[2,8,32], index: 2, kind: input, shape index: {}]
  %s3 = inlined_call_operand.vmem [shape: f32[2,1,8], index: 3, kind: input, shape index: {}]
  %s4 = inlined_call_operand.vmem [shape: f32[32,64], index: 4, kind: input, shape index: {}]
  %s5 = inlined_call_operand.vmem [shape: s32[16,1], index: 5, kind: input, shape index: {}]
  %s6 = inlined_call_operand.vmem [shape: f32[2,3,32], index: 6, kind: input, shape index: {}]
  %s7 = inlined_call_operand.vmem [shape: f32[2,4,32,8], index: 7, kind: input, shape index: {}]
  %s8 = inlined_call_operand.vmem [shape: f32[2,4,32,8], index: 8, kind: input, shape index: {}]
  %s9 = inlined_call_operand.vmem [shape: f32[2,4,32,8], index: 9, kind: input, shape index: {}]
  %s10 = inlined_call_operand.vmem [shape: f32[2,4,8,32], index: 10, kind: input, shape index: {}]
  %s11 = inlined_call_operand.vmem [shape: f32[2,4,32,8], index: 11, kind: input, shape index: {}]
  %s12 = inlined_call_operand.vmem [shape: f32[2,4,32,8], index: 12, kind: input, shape index: {}]
  %s13 = inlined_call_operand.vmem [shape: f32[2,4,32,8], index: 13, kind: input, shape index: {}]
  %s14 = inlined_call_operand.vmem [shape: f32[2,4,8,32], index: 14, kind: input, shape index: {}]
  %s15 = inlined_call_operand.vmem [shape: f32[2,32,64], index: 15, kind: input, shape index: {}]
  %s16 = inlined_call_operand.vmem [shape: f32[2,64,32], index: 16, kind: input, shape index: {}]
  %s17 = inlined_call_operand.vmem [shape: f32[1,32], index: 17, kind: input, shape index: {}]
  %s18 = inlined_call_operand.hbm [shape: f32[2,8,32], index: 18, kind: output, shape index: {0}]
  %s19 = inlined_call_operand.hbm [shape: f32[1,1], index: 19, kind: output, shape index: {1}]
  %20 = xla_tuple %s18, %s19
  %s21 = sld [smem:[#allocation0]]
  $region121: #{t5_multitask_relation_forward.3} parent=0
    _
  %s23 = ssub.s32 1, %s21
  %s24 = scalar_select 0, %s23, %s21
  $region1: #{t5_multitask_relation_forward.3} parent=0
    #allocation2 [shape = 'u8[8192]{0}', space=vmem, size = 0x2000, scoped, tag = 'output window, operand 0, single buffered']
    #allocation3 [shape = 's32[2]{0}', space=sflag, size = 0x8, scoped, tag = 'scoped memory for t5_multitask_relation_forward.3']
    #allocation4 [shape = 'u8[512]{0}', space=vmem, size = 0x400, scoped, tag = 'output window, operand 1, single buffered']
    #allocation5 [shape = 's32[1]{0}', space=sflag, size = 0x4, scoped, tag = 'scoped memory for t5_multitask_relation_forward.3']
    %25 = vsyncpa [#allocation3], 0
    %26 = vsyncpa [#allocation5], 0
    loop: start=0, step=1, limit=4
    $region2: #{t5_multitask_relation_forward.3} parent=1 // loop_pre_header
      _
    $region3: #{t5_multitask_relation_forward.3} parent=1 // loop_header
      %s28 = sphi 0, %s32
      %p29 = scmp.ge.s32.totalorder %s28, 4
      %s36 = sphi 0, %s36
      %s38 = sphi 0, %s36
      %s39 = sphi 0, %s38
      %s53 = sphi 0, %s39
      %s57 = sphi 0, %s57
      %s59 = sphi 0, %s57
      %s60 = sphi 0, %s59
      %s74 = sphi 0, %s60
      %s78 = sphi 0, %s78
      %s80 = sphi 0, %s78
      %s81 = sphi 0, %s80
      %s95 = sphi 0, %s81
      %s99 = sphi 0, %s99
      %s101 = sphi 0, %s99
      %s102 = sphi 0, %s101
      %s116 = sphi 0, %s102
      %s120 = sphi 0, %s120
      %s122 = sphi 0, %s120
      %s123 = sphi 0, %s122
      %s137 = sphi 0, %s123
      %s141 = sphi 0, %s141
      %s143 = sphi 0, %s141
      %s144 = sphi 0, %s143
      %s158 = sphi 0, %s144
      %s164 = sphi 0, %s166
      %s167 = sphi 0, %s164
      %s168 = sphi 0, %s167
      %s184 = sphi 0, %s168
      %s190 = sphi 0, %s192
      %s193 = sphi 0, %s190
      %s194 = sphi 0, %s193
      %s210 = sphi 0, %s194
      %s216 = sphi 0, %s218
      %s219 = sphi 0, %s216
      %s220 = sphi 0, %s219
      %s236 = sphi 0, %s220
      %s242 = sphi 0, %s244
      %s245 = sphi 0, %s242
      %s246 = sphi 0, %s245
      %s262 = sphi 0, %s246
      %s268 = sphi 0, %s270
      %s271 = sphi 0, %s268
      %s272 = sphi 0, %s271
      %s288 = sphi 0, %s272
      %s294 = sphi 0, %s296
      %s297 = sphi 0, %s294
      %s298 = sphi 0, %s297
      %s314 = sphi 0, %s298
      %s320 = sphi 0, %s322
      %s323 = sphi 0, %s320
      %s324 = sphi 0, %s323
      %s340 = sphi 0, %s324
      %s346 = sphi 0, %s348
      %s349 = sphi 0, %s346
      %s350 = sphi 0, %s349
      %s366 = sphi 0, %s350
      %s372 = sphi 0, %s374
      %s375 = sphi 0, %s372
      %s376 = sphi 0, %s375
      %s392 = sphi 0, %s376
      %s398 = sphi 0, %s400
      %s401 = sphi 0, %s398
      %s402 = sphi 0, %s401
      %s418 = sphi 0, %s402
      %s424 = sphi 0, %s426
      %s427 = sphi 0, %s424
      %s428 = sphi 0, %s427
      %s444 = sphi 0, %s428
      %s448 = sphi 0, %s448
      %s450 = sphi 0, %s448
      %s451 = sphi 0, %s450
      %s465 = sphi 0, %s451
      %s469 = sphi 0, %s469
      %s471 = sphi 0, %s469
      %s472 = sphi 0, %s471
      %s486 = sphi 0, %s472
      %s490 = sphi 0, %s490
      %s492 = sphi 0, %s490
      %s493 = sphi 0, %s492
      %s507 = sphi 0, %s493
    $region4: #{t5_multitask_relation_forward.3} parent=1 // loop_header_branch
      %31 = sbr.rel (%p29) target = $region8
    $region5: #{t5_multitask_relation_forward.3} parent=1 // loop_body
      %s33 = ssub.s32 %s28, 1
      %s34 = ssub.s32 %s28, 2
      %s35 = sadd.s32 %s28, 1
      %s37 = sadd.s32 %s36, 1
      %p40 = scmp.eq.s32.totalorder %s28, 1
      %p41 = scmp.ne.s32.totalorder %s36, %s38
      %p42 = scmp.eq.s32.totalorder %s28, 0
      %p43 = por %p41, %p42
      %p44 = scmp.ne.s32.totalorder %s36, %s38
      %p45 = scmp.eq.s32.totalorder %s33, 1
      %p46 = por %p44, %p45
      %p47 = scmp.ne.s32.totalorder %s38, %s39
      %p48 = scmp.eq.s32.totalorder %s33, 0
      %p49 = por %p47, %p48
      %p50 = scmp.ne.s32.totalorder %s38, %s39
      %p51 = scmp.eq.s32.totalorder %s34, 1
      %p52 = por %p50, %p51
      %p54 = scmp.ne.s32.totalorder %s39, %s53
      %p55 = scmp.eq.s32.totalorder %s34, 0
      %p56 = por %p54, %p55
      %s58 = sadd.s32 %s57, 1
      %p61 = scmp.eq.s32.totalorder %s28, 1
      %p62 = scmp.ne.s32.totalorder %s57, %s59
      %p63 = scmp.eq.s32.totalorder %s28, 0
      %p64 = por %p62, %p63
      %p65 = scmp.ne.s32.totalorder %s57, %s59
      %p66 = scmp.eq.s32.totalorder %s33, 1
      %p67 = por %p65, %p66
      %p68 = scmp.ne.s32.totalorder %s59, %s60
      %p69 = scmp.eq.s32.totalorder %s33, 0
      %p70 = por %p68, %p69
      %p71 = scmp.ne.s32.totalorder %s59, %s60
      %p72 = scmp.eq.s32.totalorder %s34, 1
      %p73 = por %p71, %p72
      %p75 = scmp.ne.s32.totalorder %s60, %s74
      %p76 = scmp.eq.s32.totalorder %s34, 0
      %p77 = por %p75, %p76
      %s79 = sadd.s32 %s78, 1
      %p82 = scmp.eq.s32.totalorder %s28, 1
      %p83 = scmp.ne.s32.totalorder %s78, %s80
      %p84 = scmp.eq.s32.totalorder %s28, 0
      %p85 = por %p83, %p84
      %p86 = scmp.ne.s32.totalorder %s78, %s80
      %p87 = scmp.eq.s32.totalorder %s33, 1
      %p88 = por %p86, %p87
      %p89 = scmp.ne.s32.totalorder %s80, %s81
      %p90 = scmp.eq.s32.totalorder %s33, 0
      %p91 = por %p89, %p90
      %p92 = scmp.ne.s32.totalorder %s80, %s81
      %p93 = scmp.eq.s32.totalorder %s34, 1
      %p94 = por %p92, %p93
      %p96 = scmp.ne.s32.totalorder %s81, %s95
      %p97 = scmp.eq.s32.totalorder %s34, 0
      %p98 = por %p96, %p97
      %s100 = sadd.s32 %s99, 1
      %p103 = scmp.eq.s32.totalorder %s28, 1
      %p104 = scmp.ne.s32.totalorder %s99, %s101
      %p105 = scmp.eq.s32.totalorder %s28, 0
      %p106 = por %p104, %p105
      %p107 = scmp.ne.s32.totalorder %s99, %s101
      %p108 = scmp.eq.s32.totalorder %s33, 1
      %p109 = por %p107, %p108
      %p110 = scmp.ne.s32.totalorder %s101, %s102
      %p111 = scmp.eq.s32.totalorder %s33, 0
      %p112 = por %p110, %p111
      %p113 = scmp.ne.s32.totalorder %s101, %s102
      %p114 = scmp.eq.s32.totalorder %s34, 1
      %p115 = por %p113, %p114
      %p117 = scmp.ne.s32.totalorder %s102, %s116
      %p118 = scmp.eq.s32.totalorder %s34, 0
      %p119 = por %p117, %p118
      %s121 = sadd.s32 %s120, 1
      %p124 = scmp.eq.s32.totalorder %s28, 1
      %p125 = scmp.ne.s32.totalorder %s120, %s122
      %p126 = scmp.eq.s32.totalorder %s28, 0
      %p127 = por %p125, %p126
      %p128 = scmp.ne.s32.totalorder %s120, %s122
      %p129 = scmp.eq.s32.totalorder %s33, 1
      %p130 = por %p128, %p129
      %p131 = scmp.ne.s32.totalorder %s122, %s123
      %p132 = scmp.eq.s32.totalorder %s33, 0
      %p133 = por %p131, %p132
      %p134 = scmp.ne.s32.totalorder %s122, %s123
      %p135 = scmp.eq.s32.totalorder %s34, 1
      %p136 = por %p134, %p135
      %p138 = scmp.ne.s32.totalorder %s123, %s137
      %p139 = scmp.eq.s32.totalorder %s34, 0
      %p140 = por %p138, %p139
      %s142 = sadd.s32 %s141, 1
      %p145 = scmp.eq.s32.totalorder %s28, 1
      %p146 = scmp.ne.s32.totalorder %s141, %s143
      %p147 = scmp.eq.s32.totalorder %s28, 0
      %p148 = por %p146, %p147
      %p149 = scmp.ne.s32.totalorder %s141, %s143
      %p150 = scmp.eq.s32.totalorder %s33, 1
      %p151 = por %p149, %p150
      %p152 = scmp.ne.s32.totalorder %s143, %s144
      %p153 = scmp.eq.s32.totalorder %s33, 0
      %p154 = por %p152, %p153
      %p155 = scmp.ne.s32.totalorder %s143, %s144
      %p156 = scmp.eq.s32.totalorder %s34, 1
      %p157 = por %p155, %p156
      %p159 = scmp.ne.s32.totalorder %s144, %s158
      %p160 = scmp.eq.s32.totalorder %s34, 0
      %p161 = por %p159, %p160
      %s162 = ssub.s32 %s28, %s35
      %p163 = scmp.eq.s32.totalorder %s162, 0
      %s165 = sadd.s32 %s164, 1
      %s166 = scalar_select %p163, %s164, %s165
      %p169 = pneg %p163
      %p170 = scmp.eq.s32.totalorder %s28, 1
      %p171 = por %p169, %p170
      %p172 = scmp.ne.s32.totalorder %s164, %s167
      %p173 = scmp.eq.s32.totalorder %s28, 0
      %p174 = por %p172, %p173
      %p175 = scmp.ne.s32.totalorder %s164, %s167
      %p176 = scmp.eq.s32.totalorder %s33, 1
      %p177 = por %p175, %p176
      %p178 = scmp.ne.s32.totalorder %s167, %s168
      %p179 = scmp.eq.s32.totalorder %s33, 0
      %p180 = por %p178, %p179
      %p181 = scmp.ne.s32.totalorder %s167, %s168
      %p182 = scmp.eq.s32.totalorder %s34, 1
      %p183 = por %p181, %p182
      %p185 = scmp.ne.s32.totalorder %s168, %s184
      %p186 = scmp.eq.s32.totalorder %s34, 0
      %p187 = por %p185, %p186
      %s188 = ssub.s32 %s28, %s35
      %p189 = scmp.eq.s32.totalorder %s188, 0
      %s191 = sadd.s32 %s190, 1
      %s192 = scalar_select %p189, %s190, %s191
      %p195 = pneg %p189
      %p196 = scmp.eq.s32.totalorder %s28, 1
      %p197 = por %p195, %p196
      %p198 = scmp.ne.s32.totalorder %s190, %s193
      %p199 = scmp.eq.s32.totalorder %s28, 0
      %p200 = por %p198, %p199
      %p201 = scmp.ne.s32.totalorder %s190, %s193
      %p202 = scmp.eq.s32.totalorder %s33, 1
      %p203 = por %p201, %p202
      %p204 = scmp.ne.s32.totalorder %s193, %s194
      %p205 = scmp.eq.s32.totalorder %s33, 0
      %p206 = por %p204, %p205
      %p207 = scmp.ne.s32.totalorder %s193, %s194
      %p208 = scmp.eq.s32.totalorder %s34, 1
      %p209 = por %p207, %p208
      %p211 = scmp.ne.s32.totalorder %s194, %s210
      %p212 = scmp.eq.s32.totalorder %s34, 0
      %p213 = por %p211, %p212
      %s214 = ssub.s32 %s28, %s35
      %p215 = scmp.eq.s32.totalorder %s214, 0
      %s217 = sadd.s32 %s216, 1
      %s218 = scalar_select %p215, %s216, %s217
      %p221 = pneg %p215
      %p222 = scmp.eq.s32.totalorder %s28, 1
      %p223 = por %p221, %p222
      %p224 = scmp.ne.s32.totalorder %s216, %s219
      %p225 = scmp.eq.s32.totalorder %s28, 0
      %p226 = por %p224, %p225
      %p227 = scmp.ne.s32.totalorder %s216, %s219
      %p228 = scmp.eq.s32.totalorder %s33, 1
      %p229 = por %p227, %p228
      %p230 = scmp.ne.s32.totalorder %s219, %s220
      %p231 = scmp.eq.s32.totalorder %s33, 0
      %p232 = por %p230, %p231
      %p233 = scmp.ne.s32.totalorder %s219, %s220
      %p234 = scmp.eq.s32.totalorder %s34, 1
      %p235 = por %p233, %p234
      %p237 = scmp.ne.s32.totalorder %s220, %s236
      %p238 = scmp.eq.s32.totalorder %s34, 0
      %p239 = por %p237, %p238
      %s240 = ssub.s32 %s28, %s35
      %p241 = scmp.eq.s32.totalorder %s240, 0
      %s243 = sadd.s32 %s242, 1
      %s244 = scalar_select %p241, %s242, %s243
      %p247 = pneg %p241
      %p248 = scmp.eq.s32.totalorder %s28, 1
      %p249 = por %p247, %p248
      %p250 = scmp.ne.s32.totalorder %s242, %s245
      %p251 = scmp.eq.s32.totalorder %s28, 0
      %p252 = por %p250, %p251
      %p253 = scmp.ne.s32.totalorder %s242, %s245
      %p254 = scmp.eq.s32.totalorder %s33, 1
      %p255 = por %p253, %p254
      %p256 = scmp.ne.s32.totalorder %s245, %s246
      %p257 = scmp.eq.s32.totalorder %s33, 0
      %p258 = por %p256, %p257
      %p259 = scmp.ne.s32.totalorder %s245, %s246
      %p260 = scmp.eq.s32.totalorder %s34, 1
      %p261 = por %p259, %p260
      %p263 = scmp.ne.s32.totalorder %s246, %s262
      %p264 = scmp.eq.s32.totalorder %s34, 0
      %p265 = por %p263, %p264
      %s266 = ssub.s32 %s28, %s35
      %p267 = scmp.eq.s32.totalorder %s266, 0
      %s269 = sadd.s32 %s268, 1
      %s270 = scalar_select %p267, %s268, %s269
      %p273 = pneg %p267
      %p274 = scmp.eq.s32.totalorder %s28, 1
      %p275 = por %p273, %p274
      %p276 = scmp.ne.s32.totalorder %s268, %s271
      %p277 = scmp.eq.s32.totalorder %s28, 0
      %p278 = por %p276, %p277
      %p279 = scmp.ne.s32.totalorder %s268, %s271
      %p280 = scmp.eq.s32.totalorder %s33, 1
      %p281 = por %p279, %p280
      %p282 = scmp.ne.s32.totalorder %s271, %s272
      %p283 = scmp.eq.s32.totalorder %s33, 0
      %p284 = por %p282, %p283
      %p285 = scmp.ne.s32.totalorder %s271, %s272
      %p286 = scmp.eq.s32.totalorder %s34, 1
      %p287 = por %p285, %p286
      %p289 = scmp.ne.s32.totalorder %s272, %s288
      %p290 = scmp.eq.s32.totalorder %s34, 0
      %p291 = por %p289, %p290
      %s292 = ssub.s32 %s28, %s35
      %p293 = scmp.eq.s32.totalorder %s292, 0
      %s295 = sadd.s32 %s294, 1
      %s296 = scalar_select %p293, %s294, %s295
      %p299 = pneg %p293
      %p300 = scmp.eq.s32.totalorder %s28, 1
      %p301 = por %p299, %p300
      %p302 = scmp.ne.s32.totalorder %s294, %s297
      %p303 = scmp.eq.s32.totalorder %s28, 0
      %p304 = por %p302, %p303
      %p305 = scmp.ne.s32.totalorder %s294, %s297
      %p306 = scmp.eq.s32.totalorder %s33, 1
      %p307 = por %p305, %p306
      %p308 = scmp.ne.s32.totalorder %s297, %s298
      %p309 = scmp.eq.s32.totalorder %s33, 0
      %p310 = por %p308, %p309
      %p311 = scmp.ne.s32.totalorder %s297, %s298
      %p312 = scmp.eq.s32.totalorder %s34, 1
      %p313 = por %p311, %p312
      %p315 = scmp.ne.s32.totalorder %s298, %s314
      %p316 = scmp.eq.s32.totalorder %s34, 0
      %p317 = por %p315, %p316
      %s318 = ssub.s32 %s28, %s35
      %p319 = scmp.eq.s32.totalorder %s318, 0
      %s321 = sadd.s32 %s320, 1
      %s322 = scalar_select %p319, %s320, %s321
      %p325 = pneg %p319
      %p326 = scmp.eq.s32.totalorder %s28, 1
      %p327 = por %p325, %p326
      %p328 = scmp.ne.s32.totalorder %s320, %s323
      %p329 = scmp.eq.s32.totalorder %s28, 0
      %p330 = por %p328, %p329
      %p331 = scmp.ne.s32.totalorder %s320, %s323
      %p332 = scmp.eq.s32.totalorder %s33, 1
      %p333 = por %p331, %p332
      %p334 = scmp.ne.s32.totalorder %s323, %s324
      %p335 = scmp.eq.s32.totalorder %s33, 0
      %p336 = por %p334, %p335
      %p337 = scmp.ne.s32.totalorder %s323, %s324
      %p338 = scmp.eq.s32.totalorder %s34, 1
      %p339 = por %p337, %p338
      %p341 = scmp.ne.s32.totalorder %s324, %s340
      %p342 = scmp.eq.s32.totalorder %s34, 0
      %p343 = por %p341, %p342
      %s344 = ssub.s32 %s28, %s35
      %p345 = scmp.eq.s32.totalorder %s344, 0
      %s347 = sadd.s32 %s346, 1
      %s348 = scalar_select %p345, %s346, %s347
      %p351 = pneg %p345
      %p352 = scmp.eq.s32.totalorder %s28, 1
      %p353 = por %p351, %p352
      %p354 = scmp.ne.s32.totalorder %s346, %s349
      %p355 = scmp.eq.s32.totalorder %s28, 0
      %p356 = por %p354, %p355
      %p357 = scmp.ne.s32.totalorder %s346, %s349
      %p358 = scmp.eq.s32.totalorder %s33, 1
      %p359 = por %p357, %p358
      %p360 = scmp.ne.s32.totalorder %s349, %s350
      %p361 = scmp.eq.s32.totalorder %s33, 0
      %p362 = por %p360, %p361
      %p363 = scmp.ne.s32.totalorder %s349, %s350
      %p364 = scmp.eq.s32.totalorder %s34, 1
      %p365 = por %p363, %p364
      %p367 = scmp.ne.s32.totalorder %s350, %s366
      %p368 = scmp.eq.s32.totalorder %s34, 0
      %p369 = por %p367, %p368
      %s370 = ssub.s32 %s28, %s35
      %p371 = scmp.eq.s32.totalorder %s370, 0
      %s373 = sadd.s32 %s372, 1
      %s374 = scalar_select %p371, %s372, %s373
      %p377 = pneg %p371
      %p378 = scmp.eq.s32.totalorder %s28, 1
      %p379 = por %p377, %p378
      %p380 = scmp.ne.s32.totalorder %s372, %s375
      %p381 = scmp.eq.s32.totalorder %s28, 0
      %p382 = por %p380, %p381
      %p383 = scmp.ne.s32.totalorder %s372, %s375
      %p384 = scmp.eq.s32.totalorder %s33, 1
      %p385 = por %p383, %p384
      %p386 = scmp.ne.s32.totalorder %s375, %s376
      %p387 = scmp.eq.s32.totalorder %s33, 0
      %p388 = por %p386, %p387
      %p389 = scmp.ne.s32.totalorder %s375, %s376
      %p390 = scmp.eq.s32.totalorder %s34, 1
      %p391 = por %p389, %p390
      %p393 = scmp.ne.s32.totalorder %s376, %s392
      %p394 = scmp.eq.s32.totalorder %s34, 0
      %p395 = por %p393, %p394
      %s396 = ssub.s32 %s28, %s35
      %p397 = scmp.eq.s32.totalorder %s396, 0
      %s399 = sadd.s32 %s398, 1
      %s400 = scalar_select %p397, %s398, %s399
      %p403 = pneg %p397
      %p404 = scmp.eq.s32.totalorder %s28, 1
      %p405 = por %p403, %p404
      %p406 = scmp.ne.s32.totalorder %s398, %s401
      %p407 = scmp.eq.s32.totalorder %s28, 0
      %p408 = por %p406, %p407
      %p409 = scmp.ne.s32.totalorder %s398, %s401
      %p410 = scmp.eq.s32.totalorder %s33, 1
      %p411 = por %p409, %p410
      %p412 = scmp.ne.s32.totalorder %s401, %s402
      %p413 = scmp.eq.s32.totalorder %s33, 0
      %p414 = por %p412, %p413
      %p415 = scmp.ne.s32.totalorder %s401, %s402
      %p416 = scmp.eq.s32.totalorder %s34, 1
      %p417 = por %p415, %p416
      %p419 = scmp.ne.s32.totalorder %s402, %s418
      %p420 = scmp.eq.s32.totalorder %s34, 0
      %p421 = por %p419, %p420
      %s422 = ssub.s32 %s28, %s35
      %p423 = scmp.eq.s32.totalorder %s422, 0
      %s425 = sadd.s32 %s424, 1
      %s426 = scalar_select %p423, %s424, %s425
      %p429 = pneg %p423
      %p430 = scmp.eq.s32.totalorder %s28, 1
      %p431 = por %p429, %p430
      %p432 = scmp.ne.s32.totalorder %s424, %s427
      %p433 = scmp.eq.s32.totalorder %s28, 0
      %p434 = por %p432, %p433
      %p435 = scmp.ne.s32.totalorder %s424, %s427
      %p436 = scmp.eq.s32.totalorder %s33, 1
      %p437 = por %p435, %p436
      %p438 = scmp.ne.s32.totalorder %s427, %s428
      %p439 = scmp.eq.s32.totalorder %s33, 0
      %p440 = por %p438, %p439
      %p441 = scmp.ne.s32.totalorder %s427, %s428
      %p442 = scmp.eq.s32.totalorder %s34, 1
      %p443 = por %p441, %p442
      %p445 = scmp.ne.s32.totalorder %s428, %s444
      %p446 = scmp.eq.s32.totalorder %s34, 0
      %p447 = por %p445, %p446
      %s449 = sadd.s32 %s448, 1
      %p452 = scmp.eq.s32.totalorder %s28, 1
      %p453 = scmp.ne.s32.totalorder %s448, %s450
      %p454 = scmp.eq.s32.totalorder %s28, 0
      %p455 = por %p453, %p454
      %p456 = scmp.ne.s32.totalorder %s448, %s450
      %p457 = scmp.eq.s32.totalorder %s33, 1
      %p458 = por %p456, %p457
      %p459 = scmp.ne.s32.totalorder %s450, %s451
      %p460 = scmp.eq.s32.totalorder %s33, 0
      %p461 = por %p459, %p460
      %p462 = scmp.ne.s32.totalorder %s450, %s451
      %p463 = scmp.eq.s32.totalorder %s34, 1
      %p464 = por %p462, %p463
      %p466 = scmp.ne.s32.totalorder %s451, %s465
      %p467 = scmp.eq.s32.totalorder %s34, 0
      %p468 = por %p466, %p467
      %s470 = sadd.s32 %s469, 1
      %p473 = scmp.eq.s32.totalorder %s28, 1
      %p474 = scmp.ne.s32.totalorder %s469, %s471
      %p475 = scmp.eq.s32.totalorder %s28, 0
      %p476 = por %p474, %p475
      %p477 = scmp.ne.s32.totalorder %s469, %s471
      %p478 = scmp.eq.s32.totalorder %s33, 1
      %p479 = por %p477, %p478
      %p480 = scmp.ne.s32.totalorder %s471, %s472
      %p481 = scmp.eq.s32.totalorder %s33, 0
      %p482 = por %p480, %p481
      %p483 = scmp.ne.s32.totalorder %s471, %s472
      %p484 = scmp.eq.s32.totalorder %s34, 1
      %p485 = por %p483, %p484
      %p487 = scmp.ne.s32.totalorder %s472, %s486
      %p488 = scmp.eq.s32.totalorder %s34, 0
      %p489 = por %p487, %p488
      %s491 = sadd.s32 %s490, 1
      %p494 = scmp.eq.s32.totalorder %s28, 1
      %p495 = scmp.ne.s32.totalorder %s490, %s492
      %p496 = scmp.eq.s32.totalorder %s28, 0
      %p497 = por %p495, %p496
      %p498 = scmp.ne.s32.totalorder %s490, %s492
      %p499 = scmp.eq.s32.totalorder %s33, 1
      %p500 = por %p498, %p499
      %p501 = scmp.ne.s32.totalorder %s492, %s493
      %p502 = scmp.eq.s32.totalorder %s33, 0
      %p503 = por %p501, %p502
      %p504 = scmp.ne.s32.totalorder %s492, %s493
      %p505 = scmp.eq.s32.totalorder %s34, 1
      %p506 = por %p504, %p505
      %p508 = scmp.ne.s32.totalorder %s493, %s507
      %p509 = scmp.eq.s32.totalorder %s34, 0
      %p510 = por %p508, %p509
      %p511 = scmp.le.s32.totalorder 1, %s28
      %p512 = scmp.lt.s32.totalorder %s28, 3
      %p513 = pnand %p511, %p512
      %p514 = pneg %p513
      // Predicated region
      $region9: #{t5_multitask_relation_forward.3} parent=5 // pred_check
        _
      $region10: #{t5_multitask_relation_forward.3} parent=5 // pred_check_branch
        %516 = sbr.rel (%p513) target = $region12
      $region11: #{t5_multitask_relation_forward.3} parent=5 // pred_region
        %s517 = ssub.s32 %s28, 1
        // Predicated region
        $region13: #{t5_multitask_relation_forward.3} parent=11 // pred_check
          %p518 = pneg %p49
        $region14: #{t5_multitask_relation_forward.3} parent=11 // pred_check_branch
          %520 = sbr.rel (%p518) target = $region16
        $region15: #{t5_multitask_relation_forward.3} parent=11 // pred_region
          _
        $region16: #{t5_multitask_relation_forward.3} parent=11 // pred_fallthru
          _
        // Predicated region
        $region17: #{t5_multitask_relation_forward.3} parent=11 // pred_check
          %p521 = pneg %p70
        $region18: #{t5_multitask_relation_forward.3} parent=11 // pred_check_branch
          %523 = sbr.rel (%p521) target = $region20
        $region19: #{t5_multitask_relation_forward.3} parent=11 // pred_region
          _
        $region20: #{t5_multitask_relation_forward.3} parent=11 // pred_fallthru
          _
        // Predicated region
        $region21: #{t5_multitask_relation_forward.3} parent=11 // pred_check
          %p524 = pneg %p91
        $region22: #{t5_multitask_relation_forward.3} parent=11 // pred_check_branch
          %526 = sbr.rel (%p524) target = $region24
        $region23: #{t5_multitask_relation_forward.3} parent=11 // pred_region
          _
        $region24: #{t5_multitask_relation_forward.3} parent=11 // pred_fallthru
          _
        // Predicated region
        $region25: #{t5_multitask_relation_forward.3} parent=11 // pred_check
          %p527 = pneg %p112
        $region26: #{t5_multitask_relation_forward.3} parent=11 // pred_check_branch
          %529 = sbr.rel (%p527) target = $region28
        $region27: #{t5_multitask_relation_forward.3} parent=11 // pred_region
          _
        $region28: #{t5_multitask_relation_forward.3} parent=11 // pred_fallthru
          _
        // Predicated region
        $region29: #{t5_multitask_relation_forward.3} parent=11 // pred_check
          %p530 = pneg %p133
        $region30: #{t5_multitask_relation_forward.3} parent=11 // pred_check_branch
          %532 = sbr.rel (%p530) target = $region32
        $region31: #{t5_multitask_relation_forward.3} parent=11 // pred_region
          _
        $region32: #{t5_multitask_relation_forward.3} parent=11 // pred_fallthru
          _
        // Predicated region
        $region33: #{t5_multitask_relation_forward.3} parent=11 // pred_check
          %p533 = pneg %p154
        $region34: #{t5_multitask_relation_forward.3} parent=11 // pred_check_branch
          %535 = sbr.rel (%p533) target = $region36
        $region35: #{t5_multitask_relation_forward.3} parent=11 // pred_region
          _
        $region36: #{t5_multitask_relation_forward.3} parent=11 // pred_fallthru
          _
        // Predicated region
        $region37: #{t5_multitask_relation_forward.3} parent=11 // pred_check
          %p536 = pneg %p461
        $region38: #{t5_multitask_relation_forward.3} parent=11 // pred_check_branch
          %538 = sbr.rel (%p536) target = $region40
        $region39: #{t5_multitask_relation_forward.3} parent=11 // pred_region
          _
        $region40: #{t5_multitask_relation_forward.3} parent=11 // pred_fallthru
          _
      $region12: #{t5_multitask_relation_forward.3} parent=5 // pred_fallthru
        _
      %p539 = scmp.lt.s32.totalorder %s28, 2
      // Predicated region
      $region41: #{t5_multitask_relation_forward.3} parent=5 // pred_check
        %p540 = pneg %p539
      $region42: #{t5_multitask_relation_forward.3} parent=5 // pred_check_branch
        %542 = sbr.rel (%p540) target = $region44
      $region43: #{t5_multitask_relation_forward.3} parent=5 // pred_region
        // Predicated region
        $region45: #{t5_multitask_relation_forward.3} parent=43 // pred_check
          %p543 = pneg %p174
        $region46: #{t5_multitask_relation_forward.3} parent=43 // pred_check_branch
          %545 = sbr.rel (%p543) target = $region48
        $region47: #{t5_multitask_relation_forward.3} parent=43 // pred_region
          %p546 = scmp.lt.s32.totalorder %s28, 1
          %s547 = scalar_select %p546, %s28, 1
          %s548 = smul.addr %s547, 4
          %s549 = scalar_lea.vmem %s6, %s548
        $region48: #{t5_multitask_relation_forward.3} parent=43 // pred_fallthru
          _
        // Predicated region
        $region49: #{t5_multitask_relation_forward.3} parent=43 // pred_check
          %p550 = pneg %p200
        $region50: #{t5_multitask_relation_forward.3} parent=43 // pred_check_branch
          %552 = sbr.rel (%p550) target = $region52
        $region51: #{t5_multitask_relation_forward.3} parent=43 // pred_region
          %p553 = scmp.lt.s32.totalorder %s28, 1
          %s554 = scalar_select %p553, %s28, 1
          %s555 = smul.addr %s554, 16
          %s556 = smul.addr %s555, 8
          %s557 = scalar_lea.vmem %s7, %s556
        $region52: #{t5_multitask_relation_forward.3} parent=43 // pred_fallthru
          _
        // Predicated region
        $region53: #{t5_multitask_relation_forward.3} parent=43 // pred_check
          %p558 = pneg %p226
        $region54: #{t5_multitask_relation_forward.3} parent=43 // pred_check_branch
          %560 = sbr.rel (%p558) target = $region56
        $region55: #{t5_multitask_relation_forward.3} parent=43 // pred_region
          %p561 = scmp.lt.s32.totalorder %s28, 1
          %s562 = scalar_select %p561, %s28, 1
          %s563 = smul.addr %s562, 16
          %s564 = smul.addr %s563, 8
          %s565 = scalar_lea.vmem %s8, %s564
        $region56: #{t5_multitask_relation_forward.3} parent=43 // pred_fallthru
          _
        // Predicated region
        $region57: #{t5_multitask_relation_forward.3} parent=43 // pred_check
          %p566 = pneg %p252
        $region58: #{t5_multitask_relation_forward.3} parent=43 // pred_check_branch
          %568 = sbr.rel (%p566) target = $region60
        $region59: #{t5_multitask_relation_forward.3} parent=43 // pred_region
          %p569 = scmp.lt.s32.totalorder %s28, 1
          %s570 = scalar_select %p569, %s28, 1
          %s571 = smul.addr %s570, 16
          %s572 = smul.addr %s571, 8
          %s573 = scalar_lea.vmem %s9, %s572
        $region60: #{t5_multitask_relation_forward.3} parent=43 // pred_fallthru
          _
        // Predicated region
        $region61: #{t5_multitask_relation_forward.3} parent=43 // pred_check
          %p574 = pneg %p278
        $region62: #{t5_multitask_relation_forward.3} parent=43 // pred_check_branch
          %576 = sbr.rel (%p574) target = $region64
        $region63: #{t5_multitask_relation_forward.3} parent=43 // pred_region
          %p577 = scmp.lt.s32.totalorder %s28, 1
          %s578 = scalar_select %p577, %s28, 1
          %s579 = smul.addr %s578, 4
          %s580 = smul.addr %s579, 8
          %s581 = scalar_lea.vmem %s10, %s580
        $region64: #{t5_multitask_relation_forward.3} parent=43 // pred_fallthru
          _
        // Predicated region
        $region65: #{t5_multitask_relation_forward.3} parent=43 // pred_check
          %p582 = pneg %p304
        $region66: #{t5_multitask_relation_forward.3} parent=43 // pred_check_branch
          %584 = sbr.rel (%p582) target = $region68
        $region67: #{t5_multitask_relation_forward.3} parent=43 // pred_region
          %p585 = scmp.lt.s32.totalorder %s28, 1
          %s586 = scalar_select %p585, %s28, 1
          %s587 = smul.addr %s586, 16
          %s588 = smul.addr %s587, 8
          %s589 = scalar_lea.vmem %s11, %s588
        $region68: #{t5_multitask_relation_forward.3} parent=43 // pred_fallthru
          _
        // Predicated region
        $region69: #{t5_multitask_relation_forward.3} parent=43 // pred_check
          %p590 = pneg %p330
        $region70: #{t5_multitask_relation_forward.3} parent=43 // pred_check_branch
          %592 = sbr.rel (%p590) target = $region72
        $region71: #{t5_multitask_relation_forward.3} parent=43 // pred_region
          %p593 = scmp.lt.s32.totalorder %s28, 1
          %s594 = scalar_select %p593, %s28, 1
          %s595 = smul.addr %s594, 16
          %s596 = smul.addr %s595, 8
          %s597 = scalar_lea.vmem %s12, %s596
        $region72: #{t5_multitask_relation_forward.3} parent=43 // pred_fallthru
          _
        // Predicated region
        $region73: #{t5_multitask_relation_forward.3} parent=43 // pred_check
          %p598 = pneg %p356
        $region74: #{t5_multitask_relation_forward.3} parent=43 // pred_check_branch
          %600 = sbr.rel (%p598) target = $region76
        $region75: #{t5_multitask_relation_forward.3} parent=43 // pred_region
          %p601 = scmp.lt.s32.totalorder %s28, 1
          %s602 = scalar_select %p601, %s28, 1
          %s603 = smul.addr %s602, 16
          %s604 = smul.addr %s603, 8
          %s605 = scalar_lea.vmem %s13, %s604
        $region76: #{t5_multitask_relation_forward.3} parent=43 // pred_fallthru
          _
        // Predicated region
        $region77: #{t5_multitask_relation_forward.3} parent=43 // pred_check
          %p606 = pneg %p382
        $region78: #{t5_multitask_relation_forward.3} parent=43 // pred_check_branch
          %608 = sbr.rel (%p606) target = $region80
        $region79: #{t5_multitask_relation_forward.3} parent=43 // pred_region
          %p609 = scmp.lt.s32.totalorder %s28, 1
          %s610 = scalar_select %p609, %s28, 1
          %s611 = smul.addr %s610, 4
          %s612 = smul.addr %s611, 8
          %s613 = scalar_lea.vmem %s14, %s612
        $region80: #{t5_multitask_relation_forward.3} parent=43 // pred_fallthru
          _
        // Predicated region
        $region81: #{t5_multitask_relation_forward.3} parent=43 // pred_check
          %p614 = pneg %p408
        $region82: #{t5_multitask_relation_forward.3} parent=43 // pred_check_branch
          %616 = sbr.rel (%p614) target = $region84
        $region83: #{t5_multitask_relation_forward.3} parent=43 // pred_region
          %p617 = scmp.lt.s32.totalorder %s28, 1
          %s618 = scalar_select %p617, %s28, 1
          %s619 = smul.addr %s618, 4
          %s620 = smul.addr %s619, 8
          %s621 = scalar_lea.vmem %s15, %s620
        $region84: #{t5_multitask_relation_forward.3} parent=43 // pred_fallthru
          _
        // Predicated region
        $region85: #{t5_multitask_relation_forward.3} parent=43 // pred_check
          %p622 = pneg %p434
        $region86: #{t5_multitask_relation_forward.3} parent=43 // pred_check_branch
          %624 = sbr.rel (%p622) target = $region88
        $region87: #{t5_multitask_relation_forward.3} parent=43 // pred_region
          %p625 = scmp.lt.s32.totalorder %s28, 1
          %s626 = scalar_select %p625, %s28, 1
          %s627 = smul.addr %s626, 8
          %s628 = smul.addr %s627, 8
          %s629 = scalar_lea.vmem %s16, %s628
        $region88: #{t5_multitask_relation_forward.3} parent=43 // pred_fallthru
          _
      $region44: #{t5_multitask_relation_forward.3} parent=5 // pred_fallthru
        _
      %p630 = scmp.le.s32.totalorder 1, %s28
      %p631 = scmp.lt.s32.totalorder %s28, 3
      %p632 = pnand %p630, %p631
      %p633 = pneg %p632
      // Predicated region
      $region89: #{t5_multitask_relation_forward.3} parent=5 // pred_check
        _
      $region90: #{t5_multitask_relation_forward.3} parent=5 // pred_check_branch
        %635 = sbr.rel (%p632) target = $region92
      $region91: #{t5_multitask_relation_forward.3} parent=5 // pred_region
        %s636 = ssub.s32 %s28, 1
        %p637 = pneg %p49
        %p638 = pneg %p46
        %p639 = pneg %p70
        %p640 = pneg %p67
        %p641 = pneg %p91
        %p642 = pneg %p88
        %p643 = pneg %p112
        %p644 = pneg %p109
        %p645 = pneg %p133
        %p646 = pneg %p130
        %p647 = pneg %p154
        %p648 = pneg %p151
        %p649 = scmp.lt.s32.totalorder %s33, 1
        %s650 = scalar_select %p649, %s33, 1
        %s651 = smul.addr %s650, 4
        %s652 = scalar_lea.vmem %s6, %s651
        %p653 = pneg %p180
        %p654 = pneg %p177
        %p655 = scmp.lt.s32.totalorder %s33, 1
        %s656 = scalar_select %p655, %s33, 1
        %s657 = smul.addr %s656, 16
        %s658 = smul.addr %s657, 8
        %s659 = scalar_lea.vmem %s7, %s658
        %p660 = pneg %p206
        %p661 = pneg %p203
        %p662 = scmp.lt.s32.totalorder %s33, 1
        %s663 = scalar_select %p662, %s33, 1
        %s664 = smul.addr %s663, 16
        %s665 = smul.addr %s664, 8
        %s666 = scalar_lea.vmem %s8, %s665
        %p667 = pneg %p232
        %p668 = pneg %p229
        %p669 = scmp.lt.s32.totalorder %s33, 1
        %s670 = scalar_select %p669, %s33, 1
        %s671 = smul.addr %s670, 16
        %s672 = smul.addr %s671, 8
        %s673 = scalar_lea.vmem %s9, %s672
        %p674 = pneg %p258
        %p675 = pneg %p255
        %p676 = scmp.lt.s32.totalorder %s33, 1
        %s677 = scalar_select %p676, %s33, 1
        %s678 = smul.addr %s677, 4
        %s679 = smul.addr %s678, 8
        %s680 = scalar_lea.vmem %s10, %s679
        %p681 = pneg %p284
        %p682 = pneg %p281
        %p683 = scmp.lt.s32.totalorder %s33, 1
        %s684 = scalar_select %p683, %s33, 1
        %s685 = smul.addr %s684, 16
        %s686 = smul.addr %s685, 8
        %s687 = scalar_lea.vmem %s11, %s686
        %p688 = pneg %p310
        %p689 = pneg %p307
        %p690 = scmp.lt.s32.totalorder %s33, 1
        %s691 = scalar_select %p690, %s33, 1
        %s692 = smul.addr %s691, 16
        %s693 = smul.addr %s692, 8
        %s694 = scalar_lea.vmem %s12, %s693
        %p695 = pneg %p336
        %p696 = pneg %p333
        %p697 = scmp.lt.s32.totalorder %s33, 1
        %s698 = scalar_select %p697, %s33, 1
        %s699 = smul.addr %s698, 16
        %s700 = smul.addr %s699, 8
        %s701 = scalar_lea.vmem %s13, %s700
        %p702 = pneg %p362
        %p703 = pneg %p359
        %p704 = scmp.lt.s32.totalorder %s33, 1
        %s705 = scalar_select %p704, %s33, 1
        %s706 = smul.addr %s705, 4
        %s707 = smul.addr %s706, 8
        %s708 = scalar_lea.vmem %s14, %s707
        %p709 = pneg %p388
        %p710 = pneg %p385
        %p711 = scmp.lt.s32.totalorder %s33, 1
        %s712 = scalar_select %p711, %s33, 1
        %s713 = smul.addr %s712, 4
        %s714 = smul.addr %s713, 8
        %s715 = scalar_lea.vmem %s15, %s714
        %p716 = pneg %p414
        %p717 = pneg %p411
        %p718 = scmp.lt.s32.totalorder %s33, 1
        %s719 = scalar_select %p718, %s33, 1
        %s720 = smul.addr %s719, 8
        %s721 = smul.addr %s720, 8
        %s722 = scalar_lea.vmem %s16, %s721
        %p723 = pneg %p440
        %p724 = pneg %p437
        %p725 = pneg %p461
        %p726 = pneg %p458
        %p727 = pneg %p482
        %p728 = pneg %p479
        %p729 = pneg %p503
        %p730 = pneg %p500
        %p731 = scmp.lt.s32.totalorder %s33, 1
        %s732 = scalar_select %p731, %s33, 1
        %s733 = smul.addr %s732, 4
        %s734 = scalar_lea.vmem %s6, %s733
        %p735 = scmp.lt.s32.totalorder %s33, 1
        %s736 = scalar_select %p735, %s33, 1
        %s737 = smul.addr %s736, 16
        %s738 = smul.addr %s737, 8
        %s739 = scalar_lea.vmem %s7, %s738
        %p740 = scmp.lt.s32.totalorder %s33, 1
        %s741 = scalar_select %p740, %s33, 1
        %s742 = smul.addr %s741, 16
        %s743 = smul.addr %s742, 8
        %s744 = scalar_lea.vmem %s8, %s743
        %p745 = scmp.lt.s32.totalorder %s33, 1
        %s746 = scalar_select %p745, %s33, 1
        %s747 = smul.addr %s746, 16
        %s748 = smul.addr %s747, 8
        %s749 = scalar_lea.vmem %s9, %s748
        %p750 = scmp.lt.s32.totalorder %s33, 1
        %s751 = scalar_select %p750, %s33, 1
        %s752 = smul.addr %s751, 4
        %s753 = smul.addr %s752, 8
        %s754 = scalar_lea.vmem %s10, %s753
        %p755 = scmp.lt.s32.totalorder %s33, 1
        %s756 = scalar_select %p755, %s33, 1
        %s757 = smul.addr %s756, 16
        %s758 = smul.addr %s757, 8
        %s759 = scalar_lea.vmem %s11, %s758
        %p760 = scmp.lt.s32.totalorder %s33, 1
        %s761 = scalar_select %p760, %s33, 1
        %s762 = smul.addr %s761, 16
        %s763 = smul.addr %s762, 8
        %s764 = scalar_lea.vmem %s12, %s763
        %p765 = scmp.lt.s32.totalorder %s33, 1
        %s766 = scalar_select %p765, %s33, 1
        %s767 = smul.addr %s766, 16
        %s768 = smul.addr %s767, 8
        %s769 = scalar_lea.vmem %s13, %s768
        %p770 = scmp.lt.s32.totalorder %s33, 1
        %s771 = scalar_select %p770, %s33, 1
        %s772 = smul.addr %s771, 4
        %s773 = smul.addr %s772, 8
        %s774 = scalar_lea.vmem %s14, %s773
        %p775 = scmp.lt.s32.totalorder %s33, 1
        %s776 = scalar_select %p775, %s33, 1
        %s777 = smul.addr %s776, 4
        %s778 = smul.addr %s777, 8
        %s779 = scalar_lea.vmem %s15, %s778
        %p780 = scmp.lt.s32.totalorder %s33, 1
        %s781 = scalar_select %p780, %s33, 1
        %s782 = smul.addr %s781, 8
        %s783 = smul.addr %s782, 8
        %s784 = scalar_lea.vmem %s16, %s783
        %p785 = scmp.eq.s32.totalorder %s33, 0
        // Predicated region
        $region93: #{t5_multitask_relation_forward.3} parent=91 // pred_check
          %p786 = pneg %p785
        $region94: #{t5_multitask_relation_forward.3} parent=91 // pred_check_branch
          %788 = sbr.rel (%p786) target = $region96
        $region95: #{t5_multitask_relation_forward.3} parent=91 // pred_region
          %v789 = vld [vmem:[%s0] sm:$0xff]
          %v790 = vld [vmem:[%s0 + $0x8] sm:$0xff]
          %vm791 = vcmask 261120
          %792 = vst.msk [vmem:[#allocation2] sm:$0xff] %vm791, %v789
          %793 = vst.msk [vmem:[#allocation2 + $0x8] sm:$0xff] %vm791, %v790
        $region96: #{t5_multitask_relation_forward.3} parent=91 // pred_fallthru
          _
        %v794 = vld [vmem:[#allocation2] sm:$0xff]
        %v795 = vld [vmem:[#allocation2 + $0x8] sm:$0xff]
        %v796 = vld [vmem:[%s2] sm:$0xff]
        %v797 = vld [vmem:[%s2 + $0x8] sm:$0xff]
        %v798 = vld [vmem:[%s734] sm:$0x7]
        %v799 = vmul.f32 %v794, %v794
        %v800 = vmul.f32 %v795, %v795
        %vm801 = vcmask 261120
        %v802 = vsel %vm801, %v799, 0.0
        %803 = vadd.xlane.f32.xlu0 %v802
        %v804 = vpop.xlane.xlu0 %803
        %v805 = vsel %vm801, %v800, 0.0
        %806 = vadd.xlane.f32.xlu0 %v805
        %v807 = vpop.xlane.xlu0 %806
        %v808 = vrcp.pop 32.0
        %v809 = vmul.f32 32.0, %v808
        %v810 = vsub.f32 1.0, %v809
        %v811 = vmul.f32 %v808, %v810
        %v812 = vadd.f32 %v808, %v811
        %vm813 = vweird.f32 %v808
        %v814 = vsel %vm813, %v808, %v812
        %v815 = vmul.f32 %v804, %v814
        %v816 = vmul.f32 %v807, %v814
        %v817 = vadd.f32 %v815, 1e-06
        %v818 = vadd.f32 %v816, 1e-06
        %v819 = vrsqrt.pop %v817
        %v820 = vmul.f32 %v819, %v817
        %v821 = vmul.f32 %v820, %v819
        %v822 = vmul.f32 0.5, %v821
        %v823 = vsub.f32 1.5, %v822
        %v824 = vmul.f32 %v819, %v823
        %vm825 = vweird.f32 %v817
        %vm826 = vweird.f32 %v819
        %vm827 = vmor %vm825, %vm826
        %v828 = vsel %vm827, %v819, %v824
        %v829 = vrsqrt.pop %v818
        %v830 = vmul.f32 %v829, %v818
        %v831 = vmul.f32 %v830, %v829
        %v832 = vmul.f32 0.5, %v831
        %v833 = vsub.f32 1.5, %v832
        %v834 = vmul.f32 %v829, %v833
        %vm835 = vweird.f32 %v818
        %vm836 = vweird.f32 %v829
        %vm837 = vmor %vm835, %vm836
        %v838 = vsel %vm837, %v829, %v834
        %v839 = vmul.f32 %v794, %v828
        %v840 = vmul.f32 %v795, %v838
        %v841 = vperm.slane %v798, 0
        %v842 = vmul.f32 %v839, %v841
        %v843 = vmul.f32 %v840, %v841
        %v844 = vld [vmem:[%s739] sm:$0xff]
        %v845 = vld [vmem:[%s739 + $0x8] sm:$0xff]
        %v846 = vld [vmem:[%s739 + $0x10] sm:$0xff]
        %v847 = vld [vmem:[%s739 + $0x18] sm:$0xff]
        %v848 = vld [vmem:[%s739 + $0x20] sm:$0xff]
        %v849 = vld [vmem:[%s739 + $0x28] sm:$0xff]
        %v850 = vld [vmem:[%s739 + $0x30] sm:$0xff]
        %v851 = vld [vmem:[%s739 + $0x38] sm:$0xff]
        %v852 = vld [vmem:[%s739 + $0x40] sm:$0xff]
        %v853 = vld [vmem:[%s739 + $0x48] sm:$0xff]
        %v854 = vld [vmem:[%s739 + $0x50] sm:$0xff]
        %v855 = vld [vmem:[%s739 + $0x58] sm:$0xff]
        %v856 = vld [vmem:[%s739 + $0x60] sm:$0xff]
        %v857 = vld [vmem:[%s739 + $0x68] sm:$0xff]
        %v858 = vld [vmem:[%s739 + $0x70] sm:$0xff]
        %v859 = vld [vmem:[%s739 + $0x78] sm:$0xff]
        %v860 = vld [vmem:[%s744] sm:$0xff]
        %v861 = vld [vmem:[%s744 + $0x8] sm:$0xff]
        %v862 = vld [vmem:[%s744 + $0x10] sm:$0xff]
        %v863 = vld [vmem:[%s744 + $0x18] sm:$0xff]
        %v864 = vld [vmem:[%s744 + $0x20] sm:$0xff]
        %v865 = vld [vmem:[%s744 + $0x28] sm:$0xff]
        %v866 = vld [vmem:[%s744 + $0x30] sm:$0xff]
        %v867 = vld [vmem:[%s744 + $0x38] sm:$0xff]
        %v868 = vld [vmem:[%s744 + $0x40] sm:$0xff]
        %v869 = vld [vmem:[%s744 + $0x48] sm:$0xff]
        %v870 = vld [vmem:[%s744 + $0x50] sm:$0xff]
        %v871 = vld [vmem:[%s744 + $0x58] sm:$0xff]
        %v872 = vld [vmem:[%s744 + $0x60] sm:$0xff]
        %v873 = vld [vmem:[%s744 + $0x68] sm:$0xff]
        %v874 = vld [vmem:[%s744 + $0x70] sm:$0xff]
        %v875 = vld [vmem:[%s744 + $0x78] sm:$0xff]
        %v876 = vld [vmem:[%s749] sm:$0xff]
        %v877 = vld [vmem:[%s749 + $0x8] sm:$0xff]
        %v878 = vld [vmem:[%s749 + $0x10] sm:$0xff]
        %v879 = vld [vmem:[%s749 + $0x18] sm:$0xff]
        %v880 = vld [vmem:[%s749 + $0x20] sm:$0xff]
        %v881 = vld [vmem:[%s749 + $0x28] sm:$0xff]
        %v882 = vld [vmem:[%s749 + $0x30] sm:$0xff]
        %v883 = vld [vmem:[%s749 + $0x38] sm:$0xff]
        %v884 = vld [vmem:[%s749 + $0x40] sm:$0xff]
        %v885 = vld [vmem:[%s749 + $0x48] sm:$0xff]
        %v886 = vld [vmem:[%s749 + $0x50] sm:$0xff]
        %v887 = vld [vmem:[%s749 + $0x58] sm:$0xff]
        %v888 = vld [vmem:[%s749 + $0x60] sm:$0xff]
        %v889 = vld [vmem:[%s749 + $0x68] sm:$0xff]
        %v890 = vld [vmem:[%s749 + $0x70] sm:$0xff]
        %v891 = vld [vmem:[%s749 + $0x78] sm:$0xff]
        %v892 = vld [vmem:[%s754] sm:$0xff]
        %v893 = vld [vmem:[%s754 + $0x8] sm:$0xff]
        %v894 = vld [vmem:[%s754 + $0x10] sm:$0xff]
        %v895 = vld [vmem:[%s754 + $0x18] sm:$0xff]
        %v896 = vld [vmem:[%s1] sm:$0xff]
        %v897 = vld [vmem:[%s1 + $0x8] sm:$0xff]
        %v898 = vld [vmem:[%s1 + $0x10] sm:$0xff]
        %v899 = vld [vmem:[%s1 + $0x18] sm:$0xff]
        %v901 = vsel %vm801, %v842, 0
        %v904 = vsel %vm801, %v843, 0
        %906 = vmatpush.msra.mxu0 0.0
        %907 = vmatpush.msra.mxu0 0.0
        %908 = vmatpush.msra.mxu0 0.0
        %909 = vmatpush.msra.mxu0 0.0
        %910 = vmatpush.msra.mxu0 0.0
        %911 = vmatpush.msra.mxu0 0.0
        %912 = vmatpush.msra.mxu0 0.0
        %913 = vmatpush.msra.mxu0 0.0
        %914 = vmatpush.msra.mxu0 0.0
        %915 = vmatpush.msra.mxu0 0.0
        %916 = vmatpush.msra.mxu0 0.0
        %917 = vmatpush.msra.mxu0 0.0
        %918 = vmatpush.msra.mxu0 %v847
        %919 = vmatpush.msra.mxu0 %v846
        %920 = vmatpush.msra.mxu0 %v845
        %921 = vmatpush.msra.mxu0 %v844
        %922 = vmatmul.f32.gmra.mxu0 %v901
        %v923 = vpop.f32.mrf.mxu0
        %v924 = vadd.f32 0.0, %v923
        %925 = vmatmul.f32.gmra.mxu0 %v904
        %v926 = vpop.f32.mrf.mxu0
        %v927 = vadd.f32 0.0, %v926
        %928 = vdwg.mxu0
        %929 = vmatpush.msra.mxu0 0.0
        %930 = vmatpush.msra.mxu0 0.0
        %931 = vmatpush.msra.mxu0 0.0
        %932 = vmatpush.msra.mxu0 0.0
        %933 = vmatpush.msra.mxu0 0.0
        %934 = vmatpush.msra.mxu0 0.0
        %935 = vmatpush.msra.mxu0 0.0
        %936 = vmatpush.msra.mxu0 0.0
        %937 = vmatpush.msra.mxu0 0.0
        %938 = vmatpush.msra.mxu0 0.0
        %939 = vmatpush.msra.mxu0 0.0
        %940 = vmatpush.msra.mxu0 0.0
        %941 = vmatpush.msra.mxu0 %v863
        %942 = vmatpush.msra.mxu0 %v862
        %943 = vmatpush.msra.mxu0 %v861
        %944 = vmatpush.msra.mxu0 %v860
        %945 = vmatmul.f32.gmra.mxu0 %v901
        %v946 = vpop.f32.mrf.mxu0
        %v947 = vadd.f32 0.0, %v946
        %948 = vmatmul.f32.gmra.mxu0 %v904
        %v949 = vpop.f32.mrf.mxu0
        %v950 = vadd.f32 0.0, %v949
        %951 = vdwg.mxu0
        %952 = vmatpush.msra.mxu0 0.0
        %953 = vmatpush.msra.mxu0 0.0
        %954 = vmatpush.msra.mxu0 0.0
        %955 = vmatpush.msra.mxu0 0.0
        %956 = vmatpush.msra.mxu0 0.0
        %957 = vmatpush.msra.mxu0 0.0
        %958 = vmatpush.msra.mxu0 0.0
        %959 = vmatpush.msra.mxu0 0.0
        %960 = vmatpush.msra.mxu0 0.0
        %961 = vmatpush.msra.mxu0 0.0
        %962 = vmatpush.msra.mxu0 0.0
        %963 = vmatpush.msra.mxu0 0.0
        %964 = vmatpush.msra.mxu0 %v879
        %965 = vmatpush.msra.mxu0 %v878
        %966 = vmatpush.msra.mxu0 %v877
        %967 = vmatpush.msra.mxu0 %v876
        %968 = vmatmul.f32.gmra.mxu0 %v901
        %v969 = vpop.f32.mrf.mxu0
        %v970 = vadd.f32 0.0, %v969
        %971 = vmatmul.f32.gmra.mxu0 %v904
        %v972 = vpop.f32.mrf.mxu0
        %v973 = vadd.f32 0.0, %v972
        %974 = vdwg.mxu0
        %vm975 = vcmask 64512
        %v977 = vsel %vm975, %v924, 0
        %v980 = vsel %vm975, %v947, 0
        %982 = vmatpush.xpose.msra.mxu0 0.0
        %983 = vmatpush.xpose.msra.mxu0 0.0
        %984 = vmatpush.xpose.msra.mxu0 0.0
        %985 = vmatpush.xpose.msra.mxu0 0.0
        %986 = vmatpush.xpose.msra.mxu0 0.0
        %987 = vmatpush.xpose.msra.mxu0 0.0
        %988 = vmatpush.xpose.msra.mxu0 0.0
        %989 = vmatpush.xpose.msra.mxu0 0.0
        %990 = vmatpush.xpose.msra.mxu0 0.0
        %991 = vmatpush.xpose.msra.mxu0 0.0
        %992 = vmatpush.xpose.msra.mxu0 0.0
        %993 = vmatpush.xpose.msra.mxu0 0.0
        %994 = vmatpush.xpose.msra.mxu0 0.0
        %995 = vmatpush.xpose.msra.mxu0 0.0
        %996 = vmatpush.xpose.msra.mxu0 0.0
        %997 = vmatpush.xpose.msra.mxu0 %v980
        %998 = vmatmul.f32.gmra.mxu0 %v977
        %v999 = vpop.f32.mrf.mxu0
        %v1000 = vadd.f32 %v896, %v999
        %1001 = vdwg.mxu0
        %v1003 = vsel %vm975, %v927, 0
        %v1006 = vsel %vm975, %v950, 0
        %1008 = vmatpush.xpose.msra.mxu0 0.0
        %1009 = vmatpush.xpose.msra.mxu0 0.0
        %1010 = vmatpush.xpose.msra.mxu0 0.0
        %1011 = vmatpush.xpose.msra.mxu0 0.0
        %1012 = vmatpush.xpose.msra.mxu0 0.0
        %1013 = vmatpush.xpose.msra.mxu0 0.0
        %1014 = vmatpush.xpose.msra.mxu0 0.0
        %1015 = vmatpush.xpose.msra.mxu0 0.0
        %1016 = vmatpush.xpose.msra.mxu0 0.0
        %1017 = vmatpush.xpose.msra.mxu0 0.0
        %1018 = vmatpush.xpose.msra.mxu0 0.0
        %1019 = vmatpush.xpose.msra.mxu0 0.0
        %1020 = vmatpush.xpose.msra.mxu0 0.0
        %1021 = vmatpush.xpose.msra.mxu0 0.0
        %1022 = vmatpush.xpose.msra.mxu0 0.0
        %1023 = vmatpush.xpose.msra.mxu0 %v1006
        %1024 = vmatmul.f32.gmra.mxu0 %v1003
        %v1025 = vpop.f32.mrf.mxu0
        %v1026 = vadd.f32 %v896, %v1025
        %1027 = vdwg.mxu0
        %v1028 = vsel %vm975, %v1000, -inf
        %1029 = vmax.xlane.f32.xlu0 %v1028
        %v1030 = vpop.xlane.xlu0 %1029
        %v1031 = vsel %vm975, %v1026, -inf
        %1032 = vmax.xlane.f32.xlu0 %v1031
        %v1033 = vpop.xlane.xlu0 %1032
        %v1034 = vsub.f32 %v1000, %v1030
        %v1035 = vsub.f32 %v1026, %v1033
        %v1036 = vmul.f32 %v1034, 1.442695
        %v1037 = vpow.pop %v1036
        %v1038 = vmul.f32 %v1035, 1.442695
        %v1039 = vpow.pop %v1038
        %v1040 = vsel %vm975, %v1037, 0.0
        %1041 = vadd.xlane.f32.xlu0 %v1040
        %v1042 = vpop.xlane.xlu0 %1041
        %v1043 = vsel %vm975, %v1039, 0.0
        %1044 = vadd.xlane.f32.xlu0 %v1043
        %v1045 = vpop.xlane.xlu0 %1044
        %v1046 = vrcp.pop %v1042
        %v1047 = vrcp.pop %v1045
        %v1048 = vmul.f32 %v1037, %v1046
        %v1049 = vmul.f32 %v1039, %v1047
        %v1051 = vsel %vm975, %v1048, 0
        %1053 = vmatpush.msra.mxu0 0.0
        %1054 = vmatpush.msra.mxu0 0.0
        %1055 = vmatpush.msra.mxu0 0.0
        %1056 = vmatpush.msra.mxu0 0.0
        %1057 = vmatpush.msra.mxu0 0.0
        %1058 = vmatpush.msra.mxu0 0.0
        %1059 = vmatpush.msra.mxu0 0.0
        %1060 = vmatpush.msra.mxu0 0.0
        %1061 = vmatpush.msra.mxu0 0.0
        %1062 = vmatpush.msra.mxu0 0.0
        %1063 = vmatpush.msra.mxu0 0.0
        %1064 = vmatpush.msra.mxu0 0.0
        %1065 = vmatpush.msra.mxu0 0.0
        %1066 = vmatpush.msra.mxu0 0.0
        %1067 = vmatpush.msra.mxu0 0.0
        %1068 = vmatpush.msra.mxu0 %v970
        %1069 = vmatmul.f32.gmra.mxu0 %v1051
        %v1070 = vpop.f32.mrf.mxu0
        %v1071 = vadd.f32 0.0, %v1070
        %1072 = vdwg.mxu0
        %v1074 = vsel %vm975, %v1049, 0
        %1076 = vmatpush.msra.mxu0 0.0
        %1077 = vmatpush.msra.mxu0 0.0
        %1078 = vmatpush.msra.mxu0 0.0
        %1079 = vmatpush.msra.mxu0 0.0
        %1080 = vmatpush.msra.mxu0 0.0
        %1081 = vmatpush.msra.mxu0 0.0
        %1082 = vmatpush.msra.mxu0 0.0
        %1083 = vmatpush.msra.mxu0 0.0
        %1084 = vmatpush.msra.mxu0 0.0
        %1085 = vmatpush.msra.mxu0 0.0
        %1086 = vmatpush.msra.mxu0 0.0
        %1087 = vmatpush.msra.mxu0 0.0
        %1088 = vmatpush.msra.mxu0 0.0
        %1089 = vmatpush.msra.mxu0 0.0
        %1090 = vmatpush.msra.mxu0 0.0
        %1091 = vmatpush.msra.mxu0 %v973
        %1092 = vmatmul.f32.gmra.mxu0 %v1074
        %v1093 = vpop.f32.mrf.mxu0
        %v1094 = vadd.f32 0.0, %v1093
        %1095 = vdwg.mxu0
        %1096 = vmatpush.msra.mxu0 0.0
        %1097 = vmatpush.msra.mxu0 0.0
        %1098 = vmatpush.msra.mxu0 0.0
        %1099 = vmatpush.msra.mxu0 0.0
        %1100 = vmatpush.msra.mxu0 0.0
        %1101 = vmatpush.msra.mxu0 0.0
        %1102 = vmatpush.msra.mxu0 0.0
        %1103 = vmatpush.msra.mxu0 0.0
        %1104 = vmatpush.msra.mxu0 0.0
        %1105 = vmatpush.msra.mxu0 0.0
        %1106 = vmatpush.msra.mxu0 0.0
        %1107 = vmatpush.msra.mxu0 0.0
        %1108 = vmatpush.msra.mxu0 %v851
        %1109 = vmatpush.msra.mxu0 %v850
        %1110 = vmatpush.msra.mxu0 %v849
        %1111 = vmatpush.msra.mxu0 %v848
        %1112 = vmatmul.f32.gmra.mxu0 %v901
        %v1113 = vpop.f32.mrf.mxu0
        %v1114 = vadd.f32 0.0, %v1113
        %1115 = vmatmul.f32.gmra.mxu0 %v904
        %v1116 = vpop.f32.mrf.mxu0
        %v1117 = vadd.f32 0.0, %v1116
        %1118 = vdwg.mxu0
        %1119 = vmatpush.msra.mxu0 0.0
        %1120 = vmatpush.msra.mxu0 0.0
        %1121 = vmatpush.msra.mxu0 0.0
        %1122 = vmatpush.msra.mxu0 0.0
        %1123 = vmatpush.msra.mxu0 0.0
        %1124 = vmatpush.msra.mxu0 0.0
        %1125 = vmatpush.msra.mxu0 0.0
        %1126 = vmatpush.msra.mxu0 0.0
        %1127 = vmatpush.msra.mxu0 0.0
        %1128 = vmatpush.msra.mxu0 0.0
        %1129 = vmatpush.msra.mxu0 0.0
        %1130 = vmatpush.msra.mxu0 0.0
        %1131 = vmatpush.msra.mxu0 %v867
        %1132 = vmatpush.msra.mxu0 %v866
        %1133 = vmatpush.msra.mxu0 %v865
        %1134 = vmatpush.msra.mxu0 %v864
        %1135 = vmatmul.f32.gmra.mxu0 %v901
        %v1136 = vpop.f32.mrf.mxu0
        %v1137 = vadd.f32 0.0, %v1136
        %1138 = vmatmul.f32.gmra.mxu0 %v904
        %v1139 = vpop.f32.mrf.mxu0
        %v1140 = vadd.f32 0.0, %v1139
        %1141 = vdwg.mxu0
        %1142 = vmatpush.msra.mxu0 0.0
        %1143 = vmatpush.msra.mxu0 0.0
        %1144 = vmatpush.msra.mxu0 0.0
        %1145 = vmatpush.msra.mxu0 0.0
        %1146 = vmatpush.msra.mxu0 0.0
        %1147 = vmatpush.msra.mxu0 0.0
        %1148 = vmatpush.msra.mxu0 0.0
        %1149 = vmatpush.msra.mxu0 0.0
        %1150 = vmatpush.msra.mxu0 0.0
        %1151 = vmatpush.msra.mxu0 0.0
        %1152 = vmatpush.msra.mxu0 0.0
        %1153 = vmatpush.msra.mxu0 0.0
        %1154 = vmatpush.msra.mxu0 %v883
        %1155 = vmatpush.msra.mxu0 %v882
        %1156 = vmatpush.msra.mxu0 %v881
        %1157 = vmatpush.msra.mxu0 %v880
        %1158 = vmatmul.f32.gmra.mxu0 %v901
        %v1159 = vpop.f32.mrf.mxu0
        %v1160 = vadd.f32 0.0, %v1159
        %1161 = vmatmul.f32.gmra.mxu0 %v904
        %v1162 = vpop.f32.mrf.mxu0
        %v1163 = vadd.f32 0.0, %v1162
        %1164 = vdwg.mxu0
        %v1166 = vsel %vm975, %v1114, 0
        %v1169 = vsel %vm975, %v1137, 0
        %1171 = vmatpush.xpose.msra.mxu0 0.0
        %1172 = vmatpush.xpose.msra.mxu0 0.0
        %1173 = vmatpush.xpose.msra.mxu0 0.0
        %1174 = vmatpush.xpose.msra.mxu0 0.0
        %1175 = vmatpush.xpose.msra.mxu0 0.0
        %1176 = vmatpush.xpose.msra.mxu0 0.0
        %1177 = vmatpush.xpose.msra.mxu0 0.0
        %1178 = vmatpush.xpose.msra.mxu0 0.0
        %1179 = vmatpush.xpose.msra.mxu0 0.0
        %1180 = vmatpush.xpose.msra.mxu0 0.0
        %1181 = vmatpush.xpose.msra.mxu0 0.0
        %1182 = vmatpush.xpose.msra.mxu0 0.0
        %1183 = vmatpush.xpose.msra.mxu0 0.0
        %1184 = vmatpush.xpose.msra.mxu0 0.0
        %1185 = vmatpush.xpose.msra.mxu0 0.0
        %1186 = vmatpush.xpose.msra.mxu0 %v1169
        %1187 = vmatmul.f32.gmra.mxu0 %v1166
        %v1188 = vpop.f32.mrf.mxu0
        %v1189 = vadd.f32 %v897, %v1188
        %1190 = vdwg.mxu0
        %v1192 = vsel %vm975, %v1117, 0
        %v1195 = vsel %vm975, %v1140, 0
        %1197 = vmatpush.xpose.msra.mxu0 0.0
        %1198 = vmatpush.xpose.msra.mxu0 0.0
        %1199 = vmatpush.xpose.msra.mxu0 0.0
        %1200 = vmatpush.xpose.msra.mxu0 0.0
        %1201 = vmatpush.xpose.msra.mxu0 0.0
        %1202 = vmatpush.xpose.msra.mxu0 0.0
        %1203 = vmatpush.xpose.msra.mxu0 0.0
        %1204 = vmatpush.xpose.msra.mxu0 0.0
        %1205 = vmatpush.xpose.msra.mxu0 0.0
        %1206 = vmatpush.xpose.msra.mxu0 0.0
        %1207 = vmatpush.xpose.msra.mxu0 0.0
        %1208 = vmatpush.xpose.msra.mxu0 0.0
        %1209 = vmatpush.xpose.msra.mxu0 0.0
        %1210 = vmatpush.xpose.msra.mxu0 0.0
        %1211 = vmatpush.xpose.msra.mxu0 0.0
        %1212 = vmatpush.xpose.msra.mxu0 %v1195
        %1213 = vmatmul.f32.gmra.mxu0 %v1192
        %v1214 = vpop.f32.mrf.mxu0
        %v1215 = vadd.f32 %v897, %v1214
        %1216 = vdwg.mxu0
        %v1217 = vsel %vm975, %v1189, -inf
        %1218 = vmax.xlane.f32.xlu0 %v1217
        %v1219 = vpop.xlane.xlu0 %1218
        %v1220 = vsel %vm975, %v1215, -inf
        %1221 = vmax.xlane.f32.xlu0 %v1220
        %v1222 = vpop.xlane.xlu0 %1221
        %v1223 = vsub.f32 %v1189, %v1219
        %v1224 = vsub.f32 %v1215, %v1222
        %v1225 = vmul.f32 %v1223, 1.442695
        %v1226 = vpow.pop %v1225
        %v1227 = vmul.f32 %v1224, 1.442695
        %v1228 = vpow.pop %v1227
        %v1229 = vsel %vm975, %v1226, 0.0
        %1230 = vadd.xlane.f32.xlu0 %v1229
        %v1231 = vpop.xlane.xlu0 %1230
        %v1232 = vsel %vm975, %v1228, 0.0
        %1233 = vadd.xlane.f32.xlu0 %v1232
        %v1234 = vpop.xlane.xlu0 %1233
        %v1235 = vrcp.pop %v1231
        %v1236 = vrcp.pop %v1234
        %v1237 = vmul.f32 %v1226, %v1235
        %v1238 = vmul.f32 %v1228, %v1236
        %v1240 = vsel %vm975, %v1237, 0
        %1242 = vmatpush.msra.mxu0 0.0
        %1243 = vmatpush.msra.mxu0 0.0
        %1244 = vmatpush.msra.mxu0 0.0
        %1245 = vmatpush.msra.mxu0 0.0
        %1246 = vmatpush.msra.mxu0 0.0
        %1247 = vmatpush.msra.mxu0 0.0
        %1248 = vmatpush.msra.mxu0 0.0
        %1249 = vmatpush.msra.mxu0 0.0
        %1250 = vmatpush.msra.mxu0 0.0
        %1251 = vmatpush.msra.mxu0 0.0
        %1252 = vmatpush.msra.mxu0 0.0
        %1253 = vmatpush.msra.mxu0 0.0
        %1254 = vmatpush.msra.mxu0 0.0
        %1255 = vmatpush.msra.mxu0 0.0
        %1256 = vmatpush.msra.mxu0 0.0
        %1257 = vmatpush.msra.mxu0 %v1160
        %1258 = vmatmul.f32.gmra.mxu0 %v1240
        %v1259 = vpop.f32.mrf.mxu0
        %v1260 = vadd.f32 0.0, %v1259
        %1261 = vdwg.mxu0
        %v1263 = vsel %vm975, %v1238, 0
        %1265 = vmatpush.msra.mxu0 0.0
        %1266 = vmatpush.msra.mxu0 0.0
        %1267 = vmatpush.msra.mxu0 0.0
        %1268 = vmatpush.msra.mxu0 0.0
        %1269 = vmatpush.msra.mxu0 0.0
        %1270 = vmatpush.msra.mxu0 0.0
        %1271 = vmatpush.msra.mxu0 0.0
        %1272 = vmatpush.msra.mxu0 0.0
        %1273 = vmatpush.msra.mxu0 0.0
        %1274 = vmatpush.msra.mxu0 0.0
        %1275 = vmatpush.msra.mxu0 0.0
        %1276 = vmatpush.msra.mxu0 0.0
        %1277 = vmatpush.msra.mxu0 0.0
        %1278 = vmatpush.msra.mxu0 0.0
        %1279 = vmatpush.msra.mxu0 0.0
        %1280 = vmatpush.msra.mxu0 %v1163
        %1281 = vmatmul.f32.gmra.mxu0 %v1263
        %v1282 = vpop.f32.mrf.mxu0
        %v1283 = vadd.f32 0.0, %v1282
        %1284 = vdwg.mxu0
        %v1286 = vsel %vm975, %v1260, 0
        %v1289 = vsel %vm975, %v1283, 0
        %1291 = vmatpush.msra.mxu0 0.0
        %1292 = vmatpush.msra.mxu0 0.0
        %1293 = vmatpush.msra.mxu0 0.0
        %1294 = vmatpush.msra.mxu0 0.0
        %1295 = vmatpush.msra.mxu0 0.0
        %1296 = vmatpush.msra.mxu0 0.0
        %1297 = vmatpush.msra.mxu0 0.0
        %1298 = vmatpush.msra.mxu0 0.0
        %1299 = vmatpush.msra.mxu0 0.0
        %1300 = vmatpush.msra.mxu0 0.0
        %1301 = vmatpush.msra.mxu0 0.0
        %1302 = vmatpush.msra.mxu0 0.0
        %1303 = vmatpush.msra.mxu0 0.0
        %1304 = vmatpush.msra.mxu0 0.0
        %1305 = vmatpush.msra.mxu0 0.0
        %1306 = vmatpush.msra.mxu0 %v893
        %1307 = vmatmul.f32.gmra.mxu0 %v1286
        %v1308 = vpop.f32.mrf.mxu0
        %v1309 = vadd.f32 0.0, %v1308
        %1310 = vmatmul.f32.gmra.mxu0 %v1289
        %v1311 = vpop.f32.mrf.mxu0
        %v1312 = vadd.f32 0.0, %v1311
        %1313 = vdwg.mxu0
        %v1315 = vsel %vm975, %v1071, 0
        %v1318 = vsel %vm975, %v1094, 0
        %1320 = vmatpush.msra.mxu0 0.0
        %1321 = vmatpush.msra.mxu0 0.0
        %1322 = vmatpush.msra.mxu0 0.0
        %1323 = vmatpush.msra.mxu0 0.0
        %1324 = vmatpush.msra.mxu0 0.0
        %1325 = vmatpush.msra.mxu0 0.0
        %1326 = vmatpush.msra.mxu0 0.0
        %1327 = vmatpush.msra.mxu0 0.0
        %1328 = vmatpush.msra.mxu0 0.0
        %1329 = vmatpush.msra.mxu0 0.0
        %1330 = vmatpush.msra.mxu0 0.0
        %1331 = vmatpush.msra.mxu0 0.0
        %1332 = vmatpush.msra.mxu0 0.0
        %1333 = vmatpush.msra.mxu0 0.0
        %1334 = vmatpush.msra.mxu0 0.0
        %1335 = vmatpush.msra.mxu0 %v892
        %1336 = vmatmul.f32.gmra.mxu0 %v1315
        %v1337 = vpop.f32.mrf.mxu0
        %v1338 = vadd.f32 %v1309, %v1337
        %1339 = vmatmul.f32.gmra.mxu0 %v1318
        %v1340 = vpop.f32.mrf.mxu0
        %v1341 = vadd.f32 %v1312, %v1340
        %1342 = vdwg.mxu0
        %1343 = vmatpush.msra.mxu0 0.0
        %1344 = vmatpush.msra.mxu0 0.0
        %1345 = vmatpush.msra.mxu0 0.0
        %1346 = vmatpush.msra.mxu0 0.0
        %1347 = vmatpush.msra.mxu0 0.0
        %1348 = vmatpush.msra.mxu0 0.0
        %1349 = vmatpush.msra.mxu0 0.0
        %1350 = vmatpush.msra.mxu0 0.0
        %1351 = vmatpush.msra.mxu0 0.0
        %1352 = vmatpush.msra.mxu0 0.0
        %1353 = vmatpush.msra.mxu0 0.0
        %1354 = vmatpush.msra.mxu0 0.0
        %1355 = vmatpush.msra.mxu0 %v855
        %1356 = vmatpush.msra.mxu0 %v854
        %1357 = vmatpush.msra.mxu0 %v853
        %1358 = vmatpush.msra.mxu0 %v852
        %1359 = vmatmul.f32.gmra.mxu0 %v901
        %v1360 = vpop.f32.mrf.mxu0
        %v1361 = vadd.f32 0.0, %v1360
        %1362 = vmatmul.f32.gmra.mxu0 %v904
        %v1363 = vpop.f32.mrf.mxu0
        %v1364 = vadd.f32 0.0, %v1363
        %1365 = vdwg.mxu0
        %1366 = vmatpush.msra.mxu0 0.0
        %1367 = vmatpush.msra.mxu0 0.0
        %1368 = vmatpush.msra.mxu0 0.0
        %1369 = vmatpush.msra.mxu0 0.0
        %1370 = vmatpush.msra.mxu0 0.0
        %1371 = vmatpush.msra.mxu0 0.0
        %1372 = vmatpush.msra.mxu0 0.0
        %1373 = vmatpush.msra.mxu0 0.0
        %1374 = vmatpush.msra.mxu0 0.0
        %1375 = vmatpush.msra.mxu0 0.0
        %1376 = vmatpush.msra.mxu0 0.0
        %1377 = vmatpush.msra.mxu0 0.0
        %1378 = vmatpush.msra.mxu0 %v871
        %1379 = vmatpush.msra.mxu0 %v870
        %1380 = vmatpush.msra.mxu0 %v869
        %1381 = vmatpush.msra.mxu0 %v868
        %1382 = vmatmul.f32.gmra.mxu0 %v901
        %v1383 = vpop.f32.mrf.mxu0
        %v1384 = vadd.f32 0.0, %v1383
        %1385 = vmatmul.f32.gmra.mxu0 %v904
        %v1386 = vpop.f32.mrf.mxu0
        %v1387 = vadd.f32 0.0, %v1386
        %1388 = vdwg.mxu0
        %1389 = vmatpush.msra.mxu0 0.0
        %1390 = vmatpush.msra.mxu0 0.0
        %1391 = vmatpush.msra.mxu0 0.0
        %1392 = vmatpush.msra.mxu0 0.0
        %1393 = vmatpush.msra.mxu0 0.0
        %1394 = vmatpush.msra.mxu0 0.0
        %1395 = vmatpush.msra.mxu0 0.0
        %1396 = vmatpush.msra.mxu0 0.0
        %1397 = vmatpush.msra.mxu0 0.0
        %1398 = vmatpush.msra.mxu0 0.0
        %1399 = vmatpush.msra.mxu0 0.0
        %1400 = vmatpush.msra.mxu0 0.0
        %1401 = vmatpush.msra.mxu0 %v887
        %1402 = vmatpush.msra.mxu0 %v886
        %1403 = vmatpush.msra.mxu0 %v885
        %1404 = vmatpush.msra.mxu0 %v884
        %1405 = vmatmul.f32.gmra.mxu0 %v901
        %v1406 = vpop.f32.mrf.mxu0
        %v1407 = vadd.f32 0.0, %v1406
        %1408 = vmatmul.f32.gmra.mxu0 %v904
        %v1409 = vpop.f32.mrf.mxu0
        %v1410 = vadd.f32 0.0, %v1409
        %1411 = vdwg.mxu0
        %v1413 = vsel %vm975, %v1361, 0
        %v1416 = vsel %vm975, %v1384, 0
        %1418 = vmatpush.xpose.msra.mxu0 0.0
        %1419 = vmatpush.xpose.msra.mxu0 0.0
        %1420 = vmatpush.xpose.msra.mxu0 0.0
        %1421 = vmatpush.xpose.msra.mxu0 0.0
        %1422 = vmatpush.xpose.msra.mxu0 0.0
        %1423 = vmatpush.xpose.msra.mxu0 0.0
        %1424 = vmatpush.xpose.msra.mxu0 0.0
        %1425 = vmatpush.xpose.msra.mxu0 0.0
        %1426 = vmatpush.xpose.msra.mxu0 0.0
        %1427 = vmatpush.xpose.msra.mxu0 0.0
        %1428 = vmatpush.xpose.msra.mxu0 0.0
        %1429 = vmatpush.xpose.msra.mxu0 0.0
        %1430 = vmatpush.xpose.msra.mxu0 0.0
        %1431 = vmatpush.xpose.msra.mxu0 0.0
        %1432 = vmatpush.xpose.msra.mxu0 0.0
        %1433 = vmatpush.xpose.msra.mxu0 %v1416
        %1434 = vmatmul.f32.gmra.mxu0 %v1413
        %v1435 = vpop.f32.mrf.mxu0
        %v1436 = vadd.f32 %v898, %v1435
        %1437 = vdwg.mxu0
        %v1439 = vsel %vm975, %v1364, 0
        %v1442 = vsel %vm975, %v1387, 0
        %1444 = vmatpush.xpose.msra.mxu0 0.0
        %1445 = vmatpush.xpose.msra.mxu0 0.0
        %1446 = vmatpush.xpose.msra.mxu0 0.0
        %1447 = vmatpush.xpose.msra.mxu0 0.0
        %1448 = vmatpush.xpose.msra.mxu0 0.0
        %1449 = vmatpush.xpose.msra.mxu0 0.0
        %1450 = vmatpush.xpose.msra.mxu0 0.0
        %1451 = vmatpush.xpose.msra.mxu0 0.0
        %1452 = vmatpush.xpose.msra.mxu0 0.0
        %1453 = vmatpush.xpose.msra.mxu0 0.0
        %1454 = vmatpush.xpose.msra.mxu0 0.0
        %1455 = vmatpush.xpose.msra.mxu0 0.0
        %1456 = vmatpush.xpose.msra.mxu0 0.0
        %1457 = vmatpush.xpose.msra.mxu0 0.0
        %1458 = vmatpush.xpose.msra.mxu0 0.0
        %1459 = vmatpush.xpose.msra.mxu0 %v1442
        %1460 = vmatmul.f32.gmra.mxu0 %v1439
        %v1461 = vpop.f32.mrf.mxu0
        %v1462 = vadd.f32 %v898, %v1461
        %1463 = vdwg.mxu0
        %v1464 = vsel %vm975, %v1436, -inf
        %1465 = vmax.xlane.f32.xlu0 %v1464
        %v1466 = vpop.xlane.xlu0 %1465
        %v1467 = vsel %vm975, %v1462, -inf
        %1468 = vmax.xlane.f32.xlu0 %v1467
        %v1469 = vpop.xlane.xlu0 %1468
        %v1470 = vsub.f32 %v1436, %v1466
        %v1471 = vsub.f32 %v1462, %v1469
        %v1472 = vmul.f32 %v1470, 1.442695
        %v1473 = vpow.pop %v1472
        %v1474 = vmul.f32 %v1471, 1.442695
        %v1475 = vpow.pop %v1474
        %v1476 = vsel %vm975, %v1473, 0.0
        %1477 = vadd.xlane.f32.xlu0 %v1476
        %v1478 = vpop.xlane.xlu0 %1477
        %v1479 = vsel %vm975, %v1475, 0.0
        %1480 = vadd.xlane.f32.xlu0 %v1479
        %v1481 = vpop.xlane.xlu0 %1480
        %v1482 = vrcp.pop %v1478
        %v1483 = vrcp.pop %v1481
        %v1484 = vmul.f32 %v1473, %v1482
        %v1485 = vmul.f32 %v1475, %v1483
        %v1487 = vsel %vm975, %v1484, 0
        %1489 = vmatpush.msra.mxu0 0.0
        %1490 = vmatpush.msra.mxu0 0.0
        %1491 = vmatpush.msra.mxu0 0.0
        %1492 = vmatpush.msra.mxu0 0.0
        %1493 = vmatpush.msra.mxu0 0.0
        %1494 = vmatpush.msra.mxu0 0.0
        %1495 = vmatpush.msra.mxu0 0.0
        %1496 = vmatpush.msra.mxu0 0.0
        %1497 = vmatpush.msra.mxu0 0.0
        %1498 = vmatpush.msra.mxu0 0.0
        %1499 = vmatpush.msra.mxu0 0.0
        %1500 = vmatpush.msra.mxu0 0.0
        %1501 = vmatpush.msra.mxu0 0.0
        %1502 = vmatpush.msra.mxu0 0.0
        %1503 = vmatpush.msra.mxu0 0.0
        %1504 = vmatpush.msra.mxu0 %v1407
        %1505 = vmatmul.f32.gmra.mxu0 %v1487
        %v1506 = vpop.f32.mrf.mxu0
        %v1507 = vadd.f32 0.0, %v1506
        %1508 = vdwg.mxu0
        %v1510 = vsel %vm975, %v1485, 0
        %1512 = vmatpush.msra.mxu0 0.0
        %1513 = vmatpush.msra.mxu0 0.0
        %1514 = vmatpush.msra.mxu0 0.0
        %1515 = vmatpush.msra.mxu0 0.0
        %1516 = vmatpush.msra.mxu0 0.0
        %1517 = vmatpush.msra.mxu0 0.0
        %1518 = vmatpush.msra.mxu0 0.0
        %1519 = vmatpush.msra.mxu0 0.0
        %1520 = vmatpush.msra.mxu0 0.0
        %1521 = vmatpush.msra.mxu0 0.0
        %1522 = vmatpush.msra.mxu0 0.0
        %1523 = vmatpush.msra.mxu0 0.0
        %1524 = vmatpush.msra.mxu0 0.0
        %1525 = vmatpush.msra.mxu0 0.0
        %1526 = vmatpush.msra.mxu0 0.0
        %1527 = vmatpush.msra.mxu0 %v1410
        %1528 = vmatmul.f32.gmra.mxu0 %v1510
        %v1529 = vpop.f32.mrf.mxu0
        %v1530 = vadd.f32 0.0, %v1529
        %1531 = vdwg.mxu0
        %v1533 = vsel %vm975, %v1507, 0
        %v1536 = vsel %vm975, %v1530, 0
        %1538 = vmatpush.msra.mxu0 0.0
        %1539 = vmatpush.msra.mxu0 0.0
        %1540 = vmatpush.msra.mxu0 0.0
        %1541 = vmatpush.msra.mxu0 0.0
        %1542 = vmatpush.msra.mxu0 0.0
        %1543 = vmatpush.msra.mxu0 0.0
        %1544 = vmatpush.msra.mxu0 0.0
        %1545 = vmatpush.msra.mxu0 0.0
        %1546 = vmatpush.msra.mxu0 0.0
        %1547 = vmatpush.msra.mxu0 0.0
        %1548 = vmatpush.msra.mxu0 0.0
        %1549 = vmatpush.msra.mxu0 0.0
        %1550 = vmatpush.msra.mxu0 0.0
        %1551 = vmatpush.msra.mxu0 0.0
        %1552 = vmatpush.msra.mxu0 0.0
        %1553 = vmatpush.msra.mxu0 %v894
        %1554 = vmatmul.f32.gmra.mxu0 %v1533
        %v1555 = vpop.f32.mrf.mxu0
        %v1556 = vadd.f32 0.0, %v1555
        %1557 = vmatmul.f32.gmra.mxu0 %v1536
        %v1558 = vpop.f32.mrf.mxu0
        %v1559 = vadd.f32 0.0, %v1558
        %1560 = vdwg.mxu0
        %v1561 = vadd.f32 %v1338, %v1556
        %v1562 = vadd.f32 %v1341, %v1559
        %1563 = vmatpush.msra.mxu0 0.0
        %1564 = vmatpush.msra.mxu0 0.0
        %1565 = vmatpush.msra.mxu0 0.0
        %1566 = vmatpush.msra.mxu0 0.0
        %1567 = vmatpush.msra.mxu0 0.0
        %1568 = vmatpush.msra.mxu0 0.0
        %1569 = vmatpush.msra.mxu0 0.0
        %1570 = vmatpush.msra.mxu0 0.0
        %1571 = vmatpush.msra.mxu0 0.0
        %1572 = vmatpush.msra.mxu0 0.0
        %1573 = vmatpush.msra.mxu0 0.0
        %1574 = vmatpush.msra.mxu0 0.0
        %1575 = vmatpush.msra.mxu0 %v859
        %1576 = vmatpush.msra.mxu0 %v858
        %1577 = vmatpush.msra.mxu0 %v857
        %1578 = vmatpush.msra.mxu0 %v856
        %1579 = vmatmul.f32.gmra.mxu0 %v901
        %v1580 = vpop.f32.mrf.mxu0
        %v1581 = vadd.f32 0.0, %v1580
        %1582 = vmatmul.f32.gmra.mxu0 %v904
        %v1583 = vpop.f32.mrf.mxu0
        %v1584 = vadd.f32 0.0, %v1583
        %1585 = vdwg.mxu0
        %1586 = vmatpush.msra.mxu0 0.0
        %1587 = vmatpush.msra.mxu0 0.0
        %1588 = vmatpush.msra.mxu0 0.0
        %1589 = vmatpush.msra.mxu0 0.0
        %1590 = vmatpush.msra.mxu0 0.0
        %1591 = vmatpush.msra.mxu0 0.0
        %1592 = vmatpush.msra.mxu0 0.0
        %1593 = vmatpush.msra.mxu0 0.0
        %1594 = vmatpush.msra.mxu0 0.0
        %1595 = vmatpush.msra.mxu0 0.0
        %1596 = vmatpush.msra.mxu0 0.0
        %1597 = vmatpush.msra.mxu0 0.0
        %1598 = vmatpush.msra.mxu0 %v875
        %1599 = vmatpush.msra.mxu0 %v874
        %1600 = vmatpush.msra.mxu0 %v873
        %1601 = vmatpush.msra.mxu0 %v872
        %1602 = vmatmul.f32.gmra.mxu0 %v901
        %v1603 = vpop.f32.mrf.mxu0
        %v1604 = vadd.f32 0.0, %v1603
        %1605 = vmatmul.f32.gmra.mxu0 %v904
        %v1606 = vpop.f32.mrf.mxu0
        %v1607 = vadd.f32 0.0, %v1606
        %1608 = vdwg.mxu0
        %1609 = vmatpush.msra.mxu0 0.0
        %1610 = vmatpush.msra.mxu0 0.0
        %1611 = vmatpush.msra.mxu0 0.0
        %1612 = vmatpush.msra.mxu0 0.0
        %1613 = vmatpush.msra.mxu0 0.0
        %1614 = vmatpush.msra.mxu0 0.0
        %1615 = vmatpush.msra.mxu0 0.0
        %1616 = vmatpush.msra.mxu0 0.0
        %1617 = vmatpush.msra.mxu0 0.0
        %1618 = vmatpush.msra.mxu0 0.0
        %1619 = vmatpush.msra.mxu0 0.0
        %1620 = vmatpush.msra.mxu0 0.0
        %1621 = vmatpush.msra.mxu0 %v891
        %1622 = vmatpush.msra.mxu0 %v890
        %1623 = vmatpush.msra.mxu0 %v889
        %1624 = vmatpush.msra.mxu0 %v888
        %1625 = vmatmul.f32.gmra.mxu0 %v901
        %v1626 = vpop.f32.mrf.mxu0
        %v1627 = vadd.f32 0.0, %v1626
        %1628 = vmatmul.f32.gmra.mxu0 %v904
        %v1629 = vpop.f32.mrf.mxu0
        %v1630 = vadd.f32 0.0, %v1629
        %1631 = vdwg.mxu0
        %v1633 = vsel %vm975, %v1581, 0
        %v1636 = vsel %vm975, %v1604, 0
        %1638 = vmatpush.xpose.msra.mxu0 0.0
        %1639 = vmatpush.xpose.msra.mxu0 0.0
        %1640 = vmatpush.xpose.msra.mxu0 0.0
        %1641 = vmatpush.xpose.msra.mxu0 0.0
        %1642 = vmatpush.xpose.msra.mxu0 0.0
        %1643 = vmatpush.xpose.msra.mxu0 0.0
        %1644 = vmatpush.xpose.msra.mxu0 0.0
        %1645 = vmatpush.xpose.msra.mxu0 0.0
        %1646 = vmatpush.xpose.msra.mxu0 0.0
        %1647 = vmatpush.xpose.msra.mxu0 0.0
        %1648 = vmatpush.xpose.msra.mxu0 0.0
        %1649 = vmatpush.xpose.msra.mxu0 0.0
        %1650 = vmatpush.xpose.msra.mxu0 0.0
        %1651 = vmatpush.xpose.msra.mxu0 0.0
        %1652 = vmatpush.xpose.msra.mxu0 0.0
        %1653 = vmatpush.xpose.msra.mxu0 %v1636
        %1654 = vmatmul.f32.gmra.mxu0 %v1633
        %v1655 = vpop.f32.mrf.mxu0
        %v1656 = vadd.f32 %v899, %v1655
        %1657 = vdwg.mxu0
        %v1659 = vsel %vm975, %v1584, 0
        %v1662 = vsel %vm975, %v1607, 0
        %1664 = vmatpush.xpose.msra.mxu0 0.0
        %1665 = vmatpush.xpose.msra.mxu0 0.0
        %1666 = vmatpush.xpose.msra.mxu0 0.0
        %1667 = vmatpush.xpose.msra.mxu0 0.0
        %1668 = vmatpush.xpose.msra.mxu0 0.0
        %1669 = vmatpush.xpose.msra.mxu0 0.0
        %1670 = vmatpush.xpose.msra.mxu0 0.0
        %1671 = vmatpush.xpose.msra.mxu0 0.0
        %1672 = vmatpush.xpose.msra.mxu0 0.0
        %1673 = vmatpush.xpose.msra.mxu0 0.0
        %1674 = vmatpush.xpose.msra.mxu0 0.0
        %1675 = vmatpush.xpose.msra.mxu0 0.0
        %1676 = vmatpush.xpose.msra.mxu0 0.0
        %1677 = vmatpush.xpose.msra.mxu0 0.0
        %1678 = vmatpush.xpose.msra.mxu0 0.0
        %1679 = vmatpush.xpose.msra.mxu0 %v1662
        %1680 = vmatmul.f32.gmra.mxu0 %v1659
        %v1681 = vpop.f32.mrf.mxu0
        %v1682 = vadd.f32 %v899, %v1681
        %1683 = vdwg.mxu0
        %v1684 = vsel %vm975, %v1656, -inf
        %1685 = vmax.xlane.f32.xlu0 %v1684
        %v1686 = vpop.xlane.xlu0 %1685
        %v1687 = vsel %vm975, %v1682, -inf
        %1688 = vmax.xlane.f32.xlu0 %v1687
        %v1689 = vpop.xlane.xlu0 %1688
        %v1690 = vsub.f32 %v1656, %v1686
        %v1691 = vsub.f32 %v1682, %v1689
        %v1692 = vmul.f32 %v1690, 1.442695
        %v1693 = vpow.pop %v1692
        %v1694 = vmul.f32 %v1691, 1.442695
        %v1695 = vpow.pop %v1694
        %v1696 = vsel %vm975, %v1693, 0.0
        %1697 = vadd.xlane.f32.xlu0 %v1696
        %v1698 = vpop.xlane.xlu0 %1697
        %v1699 = vsel %vm975, %v1695, 0.0
        %1700 = vadd.xlane.f32.xlu0 %v1699
        %v1701 = vpop.xlane.xlu0 %1700
        %v1702 = vrcp.pop %v1698
        %v1703 = vrcp.pop %v1701
        %v1704 = vmul.f32 %v1693, %v1702
        %v1705 = vmul.f32 %v1695, %v1703
        %v1707 = vsel %vm975, %v1704, 0
        %1709 = vmatpush.msra.mxu0 0.0
        %1710 = vmatpush.msra.mxu0 0.0
        %1711 = vmatpush.msra.mxu0 0.0
        %1712 = vmatpush.msra.mxu0 0.0
        %1713 = vmatpush.msra.mxu0 0.0
        %1714 = vmatpush.msra.mxu0 0.0
        %1715 = vmatpush.msra.mxu0 0.0
        %1716 = vmatpush.msra.mxu0 0.0
        %1717 = vmatpush.msra.mxu0 0.0
        %1718 = vmatpush.msra.mxu0 0.0
        %1719 = vmatpush.msra.mxu0 0.0
        %1720 = vmatpush.msra.mxu0 0.0
        %1721 = vmatpush.msra.mxu0 0.0
        %1722 = vmatpush.msra.mxu0 0.0
        %1723 = vmatpush.msra.mxu0 0.0
        %1724 = vmatpush.msra.mxu0 %v1627
        %1725 = vmatmul.f32.gmra.mxu0 %v1707
        %v1726 = vpop.f32.mrf.mxu0
        %v1727 = vadd.f32 0.0, %v1726
        %1728 = vdwg.mxu0
        %v1730 = vsel %vm975, %v1705, 0
        %1732 = vmatpush.msra.mxu0 0.0
        %1733 = vmatpush.msra.mxu0 0.0
        %1734 = vmatpush.msra.mxu0 0.0
        %1735 = vmatpush.msra.mxu0 0.0
        %1736 = vmatpush.msra.mxu0 0.0
        %1737 = vmatpush.msra.mxu0 0.0
        %1738 = vmatpush.msra.mxu0 0.0
        %1739 = vmatpush.msra.mxu0 0.0
        %1740 = vmatpush.msra.mxu0 0.0
        %1741 = vmatpush.msra.mxu0 0.0
        %1742 = vmatpush.msra.mxu0 0.0
        %1743 = vmatpush.msra.mxu0 0.0
        %1744 = vmatpush.msra.mxu0 0.0
        %1745 = vmatpush.msra.mxu0 0.0
        %1746 = vmatpush.msra.mxu0 0.0
        %1747 = vmatpush.msra.mxu0 %v1630
        %1748 = vmatmul.f32.gmra.mxu0 %v1730
        %v1749 = vpop.f32.mrf.mxu0
        %v1750 = vadd.f32 0.0, %v1749
        %1751 = vdwg.mxu0
        %v1753 = vsel %vm975, %v1727, 0
        %v1756 = vsel %vm975, %v1750, 0
        %1758 = vmatpush.msra.mxu0 0.0
        %1759 = vmatpush.msra.mxu0 0.0
        %1760 = vmatpush.msra.mxu0 0.0
        %1761 = vmatpush.msra.mxu0 0.0
        %1762 = vmatpush.msra.mxu0 0.0
        %1763 = vmatpush.msra.mxu0 0.0
        %1764 = vmatpush.msra.mxu0 0.0
        %1765 = vmatpush.msra.mxu0 0.0
        %1766 = vmatpush.msra.mxu0 0.0
        %1767 = vmatpush.msra.mxu0 0.0
        %1768 = vmatpush.msra.mxu0 0.0
        %1769 = vmatpush.msra.mxu0 0.0
        %1770 = vmatpush.msra.mxu0 0.0
        %1771 = vmatpush.msra.mxu0 0.0
        %1772 = vmatpush.msra.mxu0 0.0
        %1773 = vmatpush.msra.mxu0 %v895
        %1774 = vmatmul.f32.gmra.mxu0 %v1753
        %v1775 = vpop.f32.mrf.mxu0
        %v1776 = vadd.f32 0.0, %v1775
        %1777 = vmatmul.f32.gmra.mxu0 %v1756
        %v1778 = vpop.f32.mrf.mxu0
        %v1779 = vadd.f32 0.0, %v1778
        %1780 = vdwg.mxu0
        %v1781 = vadd.f32 %v1561, %v1776
        %v1782 = vadd.f32 %v1562, %v1779
        %v1783 = vadd.f32 %v794, %v1781
        %v1784 = vadd.f32 %v795, %v1782
        %v1785 = vmul.f32 %v1783, %v1783
        %v1786 = vmul.f32 %v1784, %v1784
        %v1787 = vsel %vm801, %v1785, 0.0
        %1788 = vadd.xlane.f32.xlu0 %v1787
        %v1789 = vpop.xlane.xlu0 %1788
        %v1790 = vsel %vm801, %v1786, 0.0
        %1791 = vadd.xlane.f32.xlu0 %v1790
        %v1792 = vpop.xlane.xlu0 %1791
        %v1793 = vmul.f32 %v1789, %v814
        %v1794 = vmul.f32 %v1792, %v814
        %v1795 = vadd.f32 %v1793, 1e-06
        %v1796 = vadd.f32 %v1794, 1e-06
        %v1797 = vrsqrt.pop %v1795
        %v1798 = vmul.f32 %v1797, %v1795
        %v1799 = vmul.f32 %v1798, %v1797
        %v1800 = vmul.f32 0.5, %v1799
        %v1801 = vsub.f32 1.5, %v1800
        %v1802 = vmul.f32 %v1797, %v1801
        %vm1803 = vweird.f32 %v1795
        %vm1804 = vweird.f32 %v1797
        %vm1805 = vmor %vm1803, %vm1804
        %v1806 = vsel %vm1805, %v1797, %v1802
        %v1807 = vrsqrt.pop %v1796
        %v1808 = vmul.f32 %v1807, %v1796
        %v1809 = vmul.f32 %v1808, %v1807
        %v1810 = vmul.f32 0.5, %v1809
        %v1811 = vsub.f32 1.5, %v1810
        %v1812 = vmul.f32 %v1807, %v1811
        %vm1813 = vweird.f32 %v1796
        %vm1814 = vweird.f32 %v1807
        %vm1815 = vmor %vm1813, %vm1814
        %v1816 = vsel %vm1815, %v1807, %v1812
        %v1817 = vmul.f32 %v1783, %v1806
        %v1818 = vmul.f32 %v1784, %v1816
        %v1819 = vperm.slane %v798, 1
        %v1820 = vmul.f32 %v1817, %v1819
        %v1821 = vmul.f32 %v1818, %v1819
        %v1822 = vld [vmem:[%s759] sm:$0xff]
        %v1823 = vld [vmem:[%s759 + $0x8] sm:$0xff]
        %v1824 = vld [vmem:[%s759 + $0x10] sm:$0xff]
        %v1825 = vld [vmem:[%s759 + $0x18] sm:$0xff]
        %v1826 = vld [vmem:[%s759 + $0x20] sm:$0xff]
        %v1827 = vld [vmem:[%s759 + $0x28] sm:$0xff]
        %v1828 = vld [vmem:[%s759 + $0x30] sm:$0xff]
        %v1829 = vld [vmem:[%s759 + $0x38] sm:$0xff]
        %v1830 = vld [vmem:[%s759 + $0x40] sm:$0xff]
        %v1831 = vld [vmem:[%s759 + $0x48] sm:$0xff]
        %v1832 = vld [vmem:[%s759 + $0x50] sm:$0xff]
        %v1833 = vld [vmem:[%s759 + $0x58] sm:$0xff]
        %v1834 = vld [vmem:[%s759 + $0x60] sm:$0xff]
        %v1835 = vld [vmem:[%s759 + $0x68] sm:$0xff]
        %v1836 = vld [vmem:[%s759 + $0x70] sm:$0xff]
        %v1837 = vld [vmem:[%s759 + $0x78] sm:$0xff]
        %v1838 = vld [vmem:[%s764] sm:$0xff]
        %v1839 = vld [vmem:[%s764 + $0x8] sm:$0xff]
        %v1840 = vld [vmem:[%s764 + $0x10] sm:$0xff]
        %v1841 = vld [vmem:[%s764 + $0x18] sm:$0xff]
        %v1842 = vld [vmem:[%s764 + $0x20] sm:$0xff]
        %v1843 = vld [vmem:[%s764 + $0x28] sm:$0xff]
        %v1844 = vld [vmem:[%s764 + $0x30] sm:$0xff]
        %v1845 = vld [vmem:[%s764 + $0x38] sm:$0xff]
        %v1846 = vld [vmem:[%s764 + $0x40] sm:$0xff]
        %v1847 = vld [vmem:[%s764 + $0x48] sm:$0xff]
        %v1848 = vld [vmem:[%s764 + $0x50] sm:$0xff]
        %v1849 = vld [vmem:[%s764 + $0x58] sm:$0xff]
        %v1850 = vld [vmem:[%s764 + $0x60] sm:$0xff]
        %v1851 = vld [vmem:[%s764 + $0x68] sm:$0xff]
        %v1852 = vld [vmem:[%s764 + $0x70] sm:$0xff]
        %v1853 = vld [vmem:[%s764 + $0x78] sm:$0xff]
        %v1854 = vld [vmem:[%s769] sm:$0xff]
        %v1855 = vld [vmem:[%s769 + $0x8] sm:$0xff]
        %v1856 = vld [vmem:[%s769 + $0x10] sm:$0xff]
        %v1857 = vld [vmem:[%s769 + $0x18] sm:$0xff]
        %v1858 = vld [vmem:[%s769 + $0x20] sm:$0xff]
        %v1859 = vld [vmem:[%s769 + $0x28] sm:$0xff]
        %v1860 = vld [vmem:[%s769 + $0x30] sm:$0xff]
        %v1861 = vld [vmem:[%s769 + $0x38] sm:$0xff]
        %v1862 = vld [vmem:[%s769 + $0x40] sm:$0xff]
        %v1863 = vld [vmem:[%s769 + $0x48] sm:$0xff]
        %v1864 = vld [vmem:[%s769 + $0x50] sm:$0xff]
        %v1865 = vld [vmem:[%s769 + $0x58] sm:$0xff]
        %v1866 = vld [vmem:[%s769 + $0x60] sm:$0xff]
        %v1867 = vld [vmem:[%s769 + $0x68] sm:$0xff]
        %v1868 = vld [vmem:[%s769 + $0x70] sm:$0xff]
        %v1869 = vld [vmem:[%s769 + $0x78] sm:$0xff]
        %v1870 = vld [vmem:[%s774] sm:$0xff]
        %v1871 = vld [vmem:[%s774 + $0x8] sm:$0xff]
        %v1872 = vld [vmem:[%s774 + $0x10] sm:$0xff]
        %v1873 = vld [vmem:[%s774 + $0x18] sm:$0xff]
        %v1874 = vld [vmem:[%s3] sm:$0x1]
        %v1875 = vld [vmem:[%s3 + $0x1] sm:$0x1]
        %v1877 = vsel %vm801, %v1820, 0
        %v1880 = vsel %vm801, %v1821, 0
        %1882 = vmatpush.msra.mxu0 0.0
        %1883 = vmatpush.msra.mxu0 0.0
        %1884 = vmatpush.msra.mxu0 0.0
        %1885 = vmatpush.msra.mxu0 0.0
        %1886 = vmatpush.msra.mxu0 0.0
        %1887 = vmatpush.msra.mxu0 0.0
        %1888 = vmatpush.msra.mxu0 0.0
        %1889 = vmatpush.msra.mxu0 0.0
        %1890 = vmatpush.msra.mxu0 0.0
        %1891 = vmatpush.msra.mxu0 0.0
        %1892 = vmatpush.msra.mxu0 0.0
        %1893 = vmatpush.msra.mxu0 0.0
        %1894 = vmatpush.msra.mxu0 %v1825
        %1895 = vmatpush.msra.mxu0 %v1824
        %1896 = vmatpush.msra.mxu0 %v1823
        %1897 = vmatpush.msra.mxu0 %v1822
        %1898 = vmatmul.f32.gmra.mxu0 %v1877
        %v1899 = vpop.f32.mrf.mxu0
        %v1900 = vadd.f32 0.0, %v1899
        %1901 = vmatmul.f32.gmra.mxu0 %v1880
        %v1902 = vpop.f32.mrf.mxu0
        %v1903 = vadd.f32 0.0, %v1902
        %1904 = vdwg.mxu0
        %v1906 = vsel %vm801, %v796, 0
        %v1909 = vsel %vm801, %v797, 0
        %1911 = vmatpush.msra.mxu0 0.0
        %1912 = vmatpush.msra.mxu0 0.0
        %1913 = vmatpush.msra.mxu0 0.0
        %1914 = vmatpush.msra.mxu0 0.0
        %1915 = vmatpush.msra.mxu0 0.0
        %1916 = vmatpush.msra.mxu0 0.0
        %1917 = vmatpush.msra.mxu0 0.0
        %1918 = vmatpush.msra.mxu0 0.0
        %1919 = vmatpush.msra.mxu0 0.0
        %1920 = vmatpush.msra.mxu0 0.0
        %1921 = vmatpush.msra.mxu0 0.0
        %1922 = vmatpush.msra.mxu0 0.0
        %1923 = vmatpush.msra.mxu0 %v1841
        %1924 = vmatpush.msra.mxu0 %v1840
        %1925 = vmatpush.msra.mxu0 %v1839
        %1926 = vmatpush.msra.mxu0 %v1838
        %1927 = vmatmul.f32.gmra.mxu0 %v1906
        %v1928 = vpop.f32.mrf.mxu0
        %v1929 = vadd.f32 0.0, %v1928
        %1930 = vmatmul.f32.gmra.mxu0 %v1909
        %v1931 = vpop.f32.mrf.mxu0
        %v1932 = vadd.f32 0.0, %v1931
        %1933 = vdwg.mxu0
        %1934 = vmatpush.msra.mxu0 0.0
        %1935 = vmatpush.msra.mxu0 0.0
        %1936 = vmatpush.msra.mxu0 0.0
        %1937 = vmatpush.msra.mxu0 0.0
        %1938 = vmatpush.msra.mxu0 0.0
        %1939 = vmatpush.msra.mxu0 0.0
        %1940 = vmatpush.msra.mxu0 0.0
        %1941 = vmatpush.msra.mxu0 0.0
        %1942 = vmatpush.msra.mxu0 0.0
        %1943 = vmatpush.msra.mxu0 0.0
        %1944 = vmatpush.msra.mxu0 0.0
        %1945 = vmatpush.msra.mxu0 0.0
        %1946 = vmatpush.msra.mxu0 %v1857
        %1947 = vmatpush.msra.mxu0 %v1856
        %1948 = vmatpush.msra.mxu0 %v1855
        %1949 = vmatpush.msra.mxu0 %v1854
        %1950 = vmatmul.f32.gmra.mxu0 %v1906
        %v1951 = vpop.f32.mrf.mxu0
        %v1952 = vadd.f32 0.0, %v1951
        %1953 = vmatmul.f32.gmra.mxu0 %v1909
        %v1954 = vpop.f32.mrf.mxu0
        %v1955 = vadd.f32 0.0, %v1954
        %1956 = vdwg.mxu0
        %v1959 = vperm.slane %v1874, 0
        %v1960 = vperm.slane %v1875, 0
        %v1964 = vsel %vm975, %v1900, 0
        %v1967 = vsel %vm975, %v1929, 0
        %1969 = vmatpush.xpose.msra.mxu0 0.0
        %1970 = vmatpush.xpose.msra.mxu0 0.0
        %1971 = vmatpush.xpose.msra.mxu0 0.0
        %1972 = vmatpush.xpose.msra.mxu0 0.0
        %1973 = vmatpush.xpose.msra.mxu0 0.0
        %1974 = vmatpush.xpose.msra.mxu0 0.0
        %1975 = vmatpush.xpose.msra.mxu0 0.0
        %1976 = vmatpush.xpose.msra.mxu0 0.0
        %1977 = vmatpush.xpose.msra.mxu0 0.0
        %1978 = vmatpush.xpose.msra.mxu0 0.0
        %1979 = vmatpush.xpose.msra.mxu0 0.0
        %1980 = vmatpush.xpose.msra.mxu0 0.0
        %1981 = vmatpush.xpose.msra.mxu0 0.0
        %1982 = vmatpush.xpose.msra.mxu0 0.0
        %1983 = vmatpush.xpose.msra.mxu0 0.0
        %1984 = vmatpush.xpose.msra.mxu0 %v1967
        %1985 = vmatmul.f32.gmra.mxu0 %v1964
        %v1986 = vpop.f32.mrf.mxu0
        %v1987 = vadd.f32 %v1959, %v1986
        %1988 = vdwg.mxu0
        %v1990 = vsel %vm975, %v1903, 0
        %v1993 = vsel %vm975, %v1932, 0
        %1995 = vmatpush.xpose.msra.mxu0 0.0
        %1996 = vmatpush.xpose.msra.mxu0 0.0
        %1997 = vmatpush.xpose.msra.mxu0 0.0
        %1998 = vmatpush.xpose.msra.mxu0 0.0
        %1999 = vmatpush.xpose.msra.mxu0 0.0
        %2000 = vmatpush.xpose.msra.mxu0 0.0
        %2001 = vmatpush.xpose.msra.mxu0 0.0
        %2002 = vmatpush.xpose.msra.mxu0 0.0
        %2003 = vmatpush.xpose.msra.mxu0 0.0
        %2004 = vmatpush.xpose.msra.mxu0 0.0
        %2005 = vmatpush.xpose.msra.mxu0 0.0
        %2006 = vmatpush.xpose.msra.mxu0 0.0
        %2007 = vmatpush.xpose.msra.mxu0 0.0
        %2008 = vmatpush.xpose.msra.mxu0 0.0
        %2009 = vmatpush.xpose.msra.mxu0 0.0
        %2010 = vmatpush.xpose.msra.mxu0 %v1993
        %2011 = vmatmul.f32.gmra.mxu0 %v1990
        %v2012 = vpop.f32.mrf.mxu0
        %v2013 = vadd.f32 %v1960, %v2012
        %2014 = vdwg.mxu0
        %v2015 = vsel %vm975, %v1987, -inf
        %2016 = vmax.xlane.f32.xlu0 %v2015
        %v2017 = vpop.xlane.xlu0 %2016
        %v2018 = vsel %vm975, %v2013, -inf
        %2019 = vmax.xlane.f32.xlu0 %v2018
        %v2020 = vpop.xlane.xlu0 %2019
        %v2021 = vsub.f32 %v1987, %v2017
        %v2022 = vsub.f32 %v2013, %v2020
        %v2023 = vmul.f32 %v2021, 1.442695
        %v2024 = vpow.pop %v2023
        %v2025 = vmul.f32 %v2022, 1.442695
        %v2026 = vpow.pop %v2025
        %v2027 = vsel %vm975, %v2024, 0.0
        %2028 = vadd.xlane.f32.xlu0 %v2027
        %v2029 = vpop.xlane.xlu0 %2028
        %v2030 = vsel %vm975, %v2026, 0.0
        %2031 = vadd.xlane.f32.xlu0 %v2030
        %v2032 = vpop.xlane.xlu0 %2031
        %v2033 = vrcp.pop %v2029
        %v2034 = vrcp.pop %v2032
        %v2035 = vmul.f32 %v2024, %v2033
        %v2036 = vmul.f32 %v2026, %v2034
        %v2038 = vsel %vm975, %v2035, 0
        %2040 = vmatpush.msra.mxu0 0.0
        %2041 = vmatpush.msra.mxu0 0.0
        %2042 = vmatpush.msra.mxu0 0.0
        %2043 = vmatpush.msra.mxu0 0.0
        %2044 = vmatpush.msra.mxu0 0.0
        %2045 = vmatpush.msra.mxu0 0.0
        %2046 = vmatpush.msra.mxu0 0.0
        %2047 = vmatpush.msra.mxu0 0.0
        %2048 = vmatpush.msra.mxu0 0.0
        %2049 = vmatpush.msra.mxu0 0.0
        %2050 = vmatpush.msra.mxu0 0.0
        %2051 = vmatpush.msra.mxu0 0.0
        %2052 = vmatpush.msra.mxu0 0.0
        %2053 = vmatpush.msra.mxu0 0.0
        %2054 = vmatpush.msra.mxu0 0.0
        %2055 = vmatpush.msra.mxu0 %v1952
        %2056 = vmatmul.f32.gmra.mxu0 %v2038
        %v2057 = vpop.f32.mrf.mxu0
        %v2058 = vadd.f32 0.0, %v2057
        %2059 = vdwg.mxu0
        %v2061 = vsel %vm975, %v2036, 0
        %2063 = vmatpush.msra.mxu0 0.0
        %2064 = vmatpush.msra.mxu0 0.0
        %2065 = vmatpush.msra.mxu0 0.0
        %2066 = vmatpush.msra.mxu0 0.0
        %2067 = vmatpush.msra.mxu0 0.0
        %2068 = vmatpush.msra.mxu0 0.0
        %2069 = vmatpush.msra.mxu0 0.0
        %2070 = vmatpush.msra.mxu0 0.0
        %2071 = vmatpush.msra.mxu0 0.0
        %2072 = vmatpush.msra.mxu0 0.0
        %2073 = vmatpush.msra.mxu0 0.0
        %2074 = vmatpush.msra.mxu0 0.0
        %2075 = vmatpush.msra.mxu0 0.0
        %2076 = vmatpush.msra.mxu0 0.0
        %2077 = vmatpush.msra.mxu0 0.0
        %2078 = vmatpush.msra.mxu0 %v1955
        %2079 = vmatmul.f32.gmra.mxu0 %v2061
        %v2080 = vpop.f32.mrf.mxu0
        %v2081 = vadd.f32 0.0, %v2080
        %2082 = vdwg.mxu0
        %2083 = vmatpush.msra.mxu0 0.0
        %2084 = vmatpush.msra.mxu0 0.0
        %2085 = vmatpush.msra.mxu0 0.0
        %2086 = vmatpush.msra.mxu0 0.0
        %2087 = vmatpush.msra.mxu0 0.0
        %2088 = vmatpush.msra.mxu0 0.0
        %2089 = vmatpush.msra.mxu0 0.0
        %2090 = vmatpush.msra.mxu0 0.0
        %2091 = vmatpush.msra.mxu0 0.0
        %2092 = vmatpush.msra.mxu0 0.0
        %2093 = vmatpush.msra.mxu0 0.0
        %2094 = vmatpush.msra.mxu0 0.0
        %2095 = vmatpush.msra.mxu0 %v1829
        %2096 = vmatpush.msra.mxu0 %v1828
        %2097 = vmatpush.msra.mxu0 %v1827
        %2098 = vmatpush.msra.mxu0 %v1826
        %2099 = vmatmul.f32.gmra.mxu0 %v1877
        %v2100 = vpop.f32.mrf.mxu0
        %v2101 = vadd.f32 0.0, %v2100
        %2102 = vmatmul.f32.gmra.mxu0 %v1880
        %v2103 = vpop.f32.mrf.mxu0
        %v2104 = vadd.f32 0.0, %v2103
        %2105 = vdwg.mxu0
        %2106 = vmatpush.msra.mxu0 0.0
        %2107 = vmatpush.msra.mxu0 0.0
        %2108 = vmatpush.msra.mxu0 0.0
        %2109 = vmatpush.msra.mxu0 0.0
        %2110 = vmatpush.msra.mxu0 0.0
        %2111 = vmatpush.msra.mxu0 0.0
        %2112 = vmatpush.msra.mxu0 0.0
        %2113 = vmatpush.msra.mxu0 0.0
        %2114 = vmatpush.msra.mxu0 0.0
        %2115 = vmatpush.msra.mxu0 0.0
        %2116 = vmatpush.msra.mxu0 0.0
        %2117 = vmatpush.msra.mxu0 0.0
        %2118 = vmatpush.msra.mxu0 %v1845
        %2119 = vmatpush.msra.mxu0 %v1844
        %2120 = vmatpush.msra.mxu0 %v1843
        %2121 = vmatpush.msra.mxu0 %v1842
        %2122 = vmatmul.f32.gmra.mxu0 %v1906
        %v2123 = vpop.f32.mrf.mxu0
        %v2124 = vadd.f32 0.0, %v2123
        %2125 = vmatmul.f32.gmra.mxu0 %v1909
        %v2126 = vpop.f32.mrf.mxu0
        %v2127 = vadd.f32 0.0, %v2126
        %2128 = vdwg.mxu0
        %2129 = vmatpush.msra.mxu0 0.0
        %2130 = vmatpush.msra.mxu0 0.0
        %2131 = vmatpush.msra.mxu0 0.0
        %2132 = vmatpush.msra.mxu0 0.0
        %2133 = vmatpush.msra.mxu0 0.0
        %2134 = vmatpush.msra.mxu0 0.0
        %2135 = vmatpush.msra.mxu0 0.0
        %2136 = vmatpush.msra.mxu0 0.0
        %2137 = vmatpush.msra.mxu0 0.0
        %2138 = vmatpush.msra.mxu0 0.0
        %2139 = vmatpush.msra.mxu0 0.0
        %2140 = vmatpush.msra.mxu0 0.0
        %2141 = vmatpush.msra.mxu0 %v1861
        %2142 = vmatpush.msra.mxu0 %v1860
        %2143 = vmatpush.msra.mxu0 %v1859
        %2144 = vmatpush.msra.mxu0 %v1858
        %2145 = vmatmul.f32.gmra.mxu0 %v1906
        %v2146 = vpop.f32.mrf.mxu0
        %v2147 = vadd.f32 0.0, %v2146
        %2148 = vmatmul.f32.gmra.mxu0 %v1909
        %v2149 = vpop.f32.mrf.mxu0
        %v2150 = vadd.f32 0.0, %v2149
        %2151 = vdwg.mxu0
        %v2153 = vsel %vm975, %v2101, 0
        %v2156 = vsel %vm975, %v2124, 0
        %2158 = vmatpush.xpose.msra.mxu0 0.0
        %2159 = vmatpush.xpose.msra.mxu0 0.0
        %2160 = vmatpush.xpose.msra.mxu0 0.0
        %2161 = vmatpush.xpose.msra.mxu0 0.0
        %2162 = vmatpush.xpose.msra.mxu0 0.0
        %2163 = vmatpush.xpose.msra.mxu0 0.0
        %2164 = vmatpush.xpose.msra.mxu0 0.0
        %2165 = vmatpush.xpose.msra.mxu0 0.0
        %2166 = vmatpush.xpose.msra.mxu0 0.0
        %2167 = vmatpush.xpose.msra.mxu0 0.0
        %2168 = vmatpush.xpose.msra.mxu0 0.0
        %2169 = vmatpush.xpose.msra.mxu0 0.0
        %2170 = vmatpush.xpose.msra.mxu0 0.0
        %2171 = vmatpush.xpose.msra.mxu0 0.0
        %2172 = vmatpush.xpose.msra.mxu0 0.0
        %2173 = vmatpush.xpose.msra.mxu0 %v2156
        %2174 = vmatmul.f32.gmra.mxu0 %v2153
        %v2175 = vpop.f32.mrf.mxu0
        %v2176 = vadd.f32 %v1959, %v2175
        %2177 = vdwg.mxu0
        %v2179 = vsel %vm975, %v2104, 0
        %v2182 = vsel %vm975, %v2127, 0
        %2184 = vmatpush.xpose.msra.mxu0 0.0
        %2185 = vmatpush.xpose.msra.mxu0 0.0
        %2186 = vmatpush.xpose.msra.mxu0 0.0
        %2187 = vmatpush.xpose.msra.mxu0 0.0
        %2188 = vmatpush.xpose.msra.mxu0 0.0
        %2189 = vmatpush.xpose.msra.mxu0 0.0
        %2190 = vmatpush.xpose.msra.mxu0 0.0
        %2191 = vmatpush.xpose.msra.mxu0 0.0
        %2192 = vmatpush.xpose.msra.mxu0 0.0
        %2193 = vmatpush.xpose.msra.mxu0 0.0
        %2194 = vmatpush.xpose.msra.mxu0 0.0
        %2195 = vmatpush.xpose.msra.mxu0 0.0
        %2196 = vmatpush.xpose.msra.mxu0 0.0
        %2197 = vmatpush.xpose.msra.mxu0 0.0
        %2198 = vmatpush.xpose.msra.mxu0 0.0
        %2199 = vmatpush.xpose.msra.mxu0 %v2182
        %2200 = vmatmul.f32.gmra.mxu0 %v2179
        %v2201 = vpop.f32.mrf.mxu0
        %v2202 = vadd.f32 %v1960, %v2201
        %2203 = vdwg.mxu0
        %v2204 = vsel %vm975, %v2176, -inf
        %2205 = vmax.xlane.f32.xlu0 %v2204
        %v2206 = vpop.xlane.xlu0 %2205
        %v2207 = vsel %vm975, %v2202, -inf
        %2208 = vmax.xlane.f32.xlu0 %v2207
        %v2209 = vpop.xlane.xlu0 %2208
        %v2210 = vsub.f32 %v2176, %v2206
        %v2211 = vsub.f32 %v2202, %v2209
        %v2212 = vmul.f32 %v2210, 1.442695
        %v2213 = vpow.pop %v2212
        %v2214 = vmul.f32 %v2211, 1.442695
        %v2215 = vpow.pop %v2214
        %v2216 = vsel %vm975, %v2213, 0.0
        %2217 = vadd.xlane.f32.xlu0 %v2216
        %v2218 = vpop.xlane.xlu0 %2217
        %v2219 = vsel %vm975, %v2215, 0.0
        %2220 = vadd.xlane.f32.xlu0 %v2219
        %v2221 = vpop.xlane.xlu0 %2220
        %v2222 = vrcp.pop %v2218
        %v2223 = vrcp.pop %v2221
        %v2224 = vmul.f32 %v2213, %v2222
        %v2225 = vmul.f32 %v2215, %v2223
        %v2227 = vsel %vm975, %v2224, 0
        %2229 = vmatpush.msra.mxu0 0.0
        %2230 = vmatpush.msra.mxu0 0.0
        %2231 = vmatpush.msra.mxu0 0.0
        %2232 = vmatpush.msra.mxu0 0.0
        %2233 = vmatpush.msra.mxu0 0.0
        %2234 = vmatpush.msra.mxu0 0.0
        %2235 = vmatpush.msra.mxu0 0.0
        %2236 = vmatpush.msra.mxu0 0.0
        %2237 = vmatpush.msra.mxu0 0.0
        %2238 = vmatpush.msra.mxu0 0.0
        %2239 = vmatpush.msra.mxu0 0.0
        %2240 = vmatpush.msra.mxu0 0.0
        %2241 = vmatpush.msra.mxu0 0.0
        %2242 = vmatpush.msra.mxu0 0.0
        %2243 = vmatpush.msra.mxu0 0.0
        %2244 = vmatpush.msra.mxu0 %v2147
        %2245 = vmatmul.f32.gmra.mxu0 %v2227
        %v2246 = vpop.f32.mrf.mxu0
        %v2247 = vadd.f32 0.0, %v2246
        %2248 = vdwg.mxu0
        %v2250 = vsel %vm975, %v2225, 0
        %2252 = vmatpush.msra.mxu0 0.0
        %2253 = vmatpush.msra.mxu0 0.0
        %2254 = vmatpush.msra.mxu0 0.0
        %2255 = vmatpush.msra.mxu0 0.0
        %2256 = vmatpush.msra.mxu0 0.0
        %2257 = vmatpush.msra.mxu0 0.0
        %2258 = vmatpush.msra.mxu0 0.0
        %2259 = vmatpush.msra.mxu0 0.0
        %2260 = vmatpush.msra.mxu0 0.0
        %2261 = vmatpush.msra.mxu0 0.0
        %2262 = vmatpush.msra.mxu0 0.0
        %2263 = vmatpush.msra.mxu0 0.0
        %2264 = vmatpush.msra.mxu0 0.0
        %2265 = vmatpush.msra.mxu0 0.0
        %2266 = vmatpush.msra.mxu0 0.0
        %2267 = vmatpush.msra.mxu0 %v2150
        %2268 = vmatmul.f32.gmra.mxu0 %v2250
        %v2269 = vpop.f32.mrf.mxu0
        %v2270 = vadd.f32 0.0, %v2269
        %2271 = vdwg.mxu0
        %v2273 = vsel %vm975, %v2247, 0
        %v2276 = vsel %vm975, %v2270, 0
        %2278 = vmatpush.msra.mxu0 0.0
        %2279 = vmatpush.msra.mxu0 0.0
        %2280 = vmatpush.msra.mxu0 0.0
        %2281 = vmatpush.msra.mxu0 0.0
        %2282 = vmatpush.msra.mxu0 0.0
        %2283 = vmatpush.msra.mxu0 0.0
        %2284 = vmatpush.msra.mxu0 0.0
        %2285 = vmatpush.msra.mxu0 0.0
        %2286 = vmatpush.msra.mxu0 0.0
        %2287 = vmatpush.msra.mxu0 0.0
        %2288 = vmatpush.msra.mxu0 0.0
        %2289 = vmatpush.msra.mxu0 0.0
        %2290 = vmatpush.msra.mxu0 0.0
        %2291 = vmatpush.msra.mxu0 0.0
        %2292 = vmatpush.msra.mxu0 0.0
        %2293 = vmatpush.msra.mxu0 %v1871
        %2294 = vmatmul.f32.gmra.mxu0 %v2273
        %v2295 = vpop.f32.mrf.mxu0
        %v2296 = vadd.f32 0.0, %v2295
        %2297 = vmatmul.f32.gmra.mxu0 %v2276
        %v2298 = vpop.f32.mrf.mxu0
        %v2299 = vadd.f32 0.0, %v2298
        %2300 = vdwg.mxu0
        %v2302 = vsel %vm975, %v2058, 0
        %v2305 = vsel %vm975, %v2081, 0
        %2307 = vmatpush.msra.mxu0 0.0
        %2308 = vmatpush.msra.mxu0 0.0
        %2309 = vmatpush.msra.mxu0 0.0
        %2310 = vmatpush.msra.mxu0 0.0
        %2311 = vmatpush.msra.mxu0 0.0
        %2312 = vmatpush.msra.mxu0 0.0
        %2313 = vmatpush.msra.mxu0 0.0
        %2314 = vmatpush.msra.mxu0 0.0
        %2315 = vmatpush.msra.mxu0 0.0
        %2316 = vmatpush.msra.mxu0 0.0
        %2317 = vmatpush.msra.mxu0 0.0
        %2318 = vmatpush.msra.mxu0 0.0
        %2319 = vmatpush.msra.mxu0 0.0
        %2320 = vmatpush.msra.mxu0 0.0
        %2321 = vmatpush.msra.mxu0 0.0
        %2322 = vmatpush.msra.mxu0 %v1870
        %2323 = vmatmul.f32.gmra.mxu0 %v2302
        %v2324 = vpop.f32.mrf.mxu0
        %v2325 = vadd.f32 %v2296, %v2324
        %2326 = vmatmul.f32.gmra.mxu0 %v2305
        %v2327 = vpop.f32.mrf.mxu0
        %v2328 = vadd.f32 %v2299, %v2327
        %2329 = vdwg.mxu0
        %2330 = vmatpush.msra.mxu0 0.0
        %2331 = vmatpush.msra.mxu0 0.0
        %2332 = vmatpush.msra.mxu0 0.0
        %2333 = vmatpush.msra.mxu0 0.0
        %2334 = vmatpush.msra.mxu0 0.0
        %2335 = vmatpush.msra.mxu0 0.0
        %2336 = vmatpush.msra.mxu0 0.0
        %2337 = vmatpush.msra.mxu0 0.0
        %2338 = vmatpush.msra.mxu0 0.0
        %2339 = vmatpush.msra.mxu0 0.0
        %2340 = vmatpush.msra.mxu0 0.0
        %2341 = vmatpush.msra.mxu0 0.0
        %2342 = vmatpush.msra.mxu0 %v1833
        %2343 = vmatpush.msra.mxu0 %v1832
        %2344 = vmatpush.msra.mxu0 %v1831
        %2345 = vmatpush.msra.mxu0 %v1830
        %2346 = vmatmul.f32.gmra.mxu0 %v1877
        %v2347 = vpop.f32.mrf.mxu0
        %v2348 = vadd.f32 0.0, %v2347
        %2349 = vmatmul.f32.gmra.mxu0 %v1880
        %v2350 = vpop.f32.mrf.mxu0
        %v2351 = vadd.f32 0.0, %v2350
        %2352 = vdwg.mxu0
        %2353 = vmatpush.msra.mxu0 0.0
        %2354 = vmatpush.msra.mxu0 0.0
        %2355 = vmatpush.msra.mxu0 0.0
        %2356 = vmatpush.msra.mxu0 0.0
        %2357 = vmatpush.msra.mxu0 0.0
        %2358 = vmatpush.msra.mxu0 0.0
        %2359 = vmatpush.msra.mxu0 0.0
        %2360 = vmatpush.msra.mxu0 0.0
        %2361 = vmatpush.msra.mxu0 0.0
        %2362 = vmatpush.msra.mxu0 0.0
        %2363 = vmatpush.msra.mxu0 0.0
        %2364 = vmatpush.msra.mxu0 0.0
        %2365 = vmatpush.msra.mxu0 %v1849
        %2366 = vmatpush.msra.mxu0 %v1848
        %2367 = vmatpush.msra.mxu0 %v1847
        %2368 = vmatpush.msra.mxu0 %v1846
        %2369 = vmatmul.f32.gmra.mxu0 %v1906
        %v2370 = vpop.f32.mrf.mxu0
        %v2371 = vadd.f32 0.0, %v2370
        %2372 = vmatmul.f32.gmra.mxu0 %v1909
        %v2373 = vpop.f32.mrf.mxu0
        %v2374 = vadd.f32 0.0, %v2373
        %2375 = vdwg.mxu0
        %2376 = vmatpush.msra.mxu0 0.0
        %2377 = vmatpush.msra.mxu0 0.0
        %2378 = vmatpush.msra.mxu0 0.0
        %2379 = vmatpush.msra.mxu0 0.0
        %2380 = vmatpush.msra.mxu0 0.0
        %2381 = vmatpush.msra.mxu0 0.0
        %2382 = vmatpush.msra.mxu0 0.0
        %2383 = vmatpush.msra.mxu0 0.0
        %2384 = vmatpush.msra.mxu0 0.0
        %2385 = vmatpush.msra.mxu0 0.0
        %2386 = vmatpush.msra.mxu0 0.0
        %2387 = vmatpush.msra.mxu0 0.0
        %2388 = vmatpush.msra.mxu0 %v1865
        %2389 = vmatpush.msra.mxu0 %v1864
        %2390 = vmatpush.msra.mxu0 %v1863
        %2391 = vmatpush.msra.mxu0 %v1862
        %2392 = vmatmul.f32.gmra.mxu0 %v1906
        %v2393 = vpop.f32.mrf.mxu0
        %v2394 = vadd.f32 0.0, %v2393
        %2395 = vmatmul.f32.gmra.mxu0 %v1909
        %v2396 = vpop.f32.mrf.mxu0
        %v2397 = vadd.f32 0.0, %v2396
        %2398 = vdwg.mxu0
        %v2400 = vsel %vm975, %v2348, 0
        %v2403 = vsel %vm975, %v2371, 0
        %2405 = vmatpush.xpose.msra.mxu0 0.0
        %2406 = vmatpush.xpose.msra.mxu0 0.0
        %2407 = vmatpush.xpose.msra.mxu0 0.0
        %2408 = vmatpush.xpose.msra.mxu0 0.0
        %2409 = vmatpush.xpose.msra.mxu0 0.0
        %2410 = vmatpush.xpose.msra.mxu0 0.0
        %2411 = vmatpush.xpose.msra.mxu0 0.0
        %2412 = vmatpush.xpose.msra.mxu0 0.0
        %2413 = vmatpush.xpose.msra.mxu0 0.0
        %2414 = vmatpush.xpose.msra.mxu0 0.0
        %2415 = vmatpush.xpose.msra.mxu0 0.0
        %2416 = vmatpush.xpose.msra.mxu0 0.0
        %2417 = vmatpush.xpose.msra.mxu0 0.0
        %2418 = vmatpush.xpose.msra.mxu0 0.0
        %2419 = vmatpush.xpose.msra.mxu0 0.0
        %2420 = vmatpush.xpose.msra.mxu0 %v2403
        %2421 = vmatmul.f32.gmra.mxu0 %v2400
        %v2422 = vpop.f32.mrf.mxu0
        %v2423 = vadd.f32 %v1959, %v2422
        %2424 = vdwg.mxu0
        %v2426 = vsel %vm975, %v2351, 0
        %v2429 = vsel %vm975, %v2374, 0
        %2431 = vmatpush.xpose.msra.mxu0 0.0
        %2432 = vmatpush.xpose.msra.mxu0 0.0
        %2433 = vmatpush.xpose.msra.mxu0 0.0
        %2434 = vmatpush.xpose.msra.mxu0 0.0
        %2435 = vmatpush.xpose.msra.mxu0 0.0
        %2436 = vmatpush.xpose.msra.mxu0 0.0
        %2437 = vmatpush.xpose.msra.mxu0 0.0
        %2438 = vmatpush.xpose.msra.mxu0 0.0
        %2439 = vmatpush.xpose.msra.mxu0 0.0
        %2440 = vmatpush.xpose.msra.mxu0 0.0
        %2441 = vmatpush.xpose.msra.mxu0 0.0
        %2442 = vmatpush.xpose.msra.mxu0 0.0
        %2443 = vmatpush.xpose.msra.mxu0 0.0
        %2444 = vmatpush.xpose.msra.mxu0 0.0
        %2445 = vmatpush.xpose.msra.mxu0 0.0
        %2446 = vmatpush.xpose.msra.mxu0 %v2429
        %2447 = vmatmul.f32.gmra.mxu0 %v2426
        %v2448 = vpop.f32.mrf.mxu0
        %v2449 = vadd.f32 %v1960, %v2448
        %2450 = vdwg.mxu0
        %v2451 = vsel %vm975, %v2423, -inf
        %2452 = vmax.xlane.f32.xlu0 %v2451
        %v2453 = vpop.xlane.xlu0 %2452
        %v2454 = vsel %vm975, %v2449, -inf
        %2455 = vmax.xlane.f32.xlu0 %v2454
        %v2456 = vpop.xlane.xlu0 %2455
        %v2457 = vsub.f32 %v2423, %v2453
        %v2458 = vsub.f32 %v2449, %v2456
        %v2459 = vmul.f32 %v2457, 1.442695
        %v2460 = vpow.pop %v2459
        %v2461 = vmul.f32 %v2458, 1.442695
        %v2462 = vpow.pop %v2461
        %v2463 = vsel %vm975, %v2460, 0.0
        %2464 = vadd.xlane.f32.xlu0 %v2463
        %v2465 = vpop.xlane.xlu0 %2464
        %v2466 = vsel %vm975, %v2462, 0.0
        %2467 = vadd.xlane.f32.xlu0 %v2466
        %v2468 = vpop.xlane.xlu0 %2467
        %v2469 = vrcp.pop %v2465
        %v2470 = vrcp.pop %v2468
        %v2471 = vmul.f32 %v2460, %v2469
        %v2472 = vmul.f32 %v2462, %v2470
        %v2474 = vsel %vm975, %v2471, 0
        %2476 = vmatpush.msra.mxu0 0.0
        %2477 = vmatpush.msra.mxu0 0.0
        %2478 = vmatpush.msra.mxu0 0.0
        %2479 = vmatpush.msra.mxu0 0.0
        %2480 = vmatpush.msra.mxu0 0.0
        %2481 = vmatpush.msra.mxu0 0.0
        %2482 = vmatpush.msra.mxu0 0.0
        %2483 = vmatpush.msra.mxu0 0.0
        %2484 = vmatpush.msra.mxu0 0.0
        %2485 = vmatpush.msra.mxu0 0.0
        %2486 = vmatpush.msra.mxu0 0.0
        %2487 = vmatpush.msra.mxu0 0.0
        %2488 = vmatpush.msra.mxu0 0.0
        %2489 = vmatpush.msra.mxu0 0.0
        %2490 = vmatpush.msra.mxu0 0.0
        %2491 = vmatpush.msra.mxu0 %v2394
        %2492 = vmatmul.f32.gmra.mxu0 %v2474
        %v2493 = vpop.f32.mrf.mxu0
        %v2494 = vadd.f32 0.0, %v2493
        %2495 = vdwg.mxu0
        %v2497 = vsel %vm975, %v2472, 0
        %2499 = vmatpush.msra.mxu0 0.0
        %2500 = vmatpush.msra.mxu0 0.0
        %2501 = vmatpush.msra.mxu0 0.0
        %2502 = vmatpush.msra.mxu0 0.0
        %2503 = vmatpush.msra.mxu0 0.0
        %2504 = vmatpush.msra.mxu0 0.0
        %2505 = vmatpush.msra.mxu0 0.0
        %2506 = vmatpush.msra.mxu0 0.0
        %2507 = vmatpush.msra.mxu0 0.0
        %2508 = vmatpush.msra.mxu0 0.0
        %2509 = vmatpush.msra.mxu0 0.0
        %2510 = vmatpush.msra.mxu0 0.0
        %2511 = vmatpush.msra.mxu0 0.0
        %2512 = vmatpush.msra.mxu0 0.0
        %2513 = vmatpush.msra.mxu0 0.0
        %2514 = vmatpush.msra.mxu0 %v2397
        %2515 = vmatmul.f32.gmra.mxu0 %v2497
        %v2516 = vpop.f32.mrf.mxu0
        %v2517 = vadd.f32 0.0, %v2516
        %2518 = vdwg.mxu0
        %v2520 = vsel %vm975, %v2494, 0
        %v2523 = vsel %vm975, %v2517, 0
        %2525 = vmatpush.msra.mxu0 0.0
        %2526 = vmatpush.msra.mxu0 0.0
        %2527 = vmatpush.msra.mxu0 0.0
        %2528 = vmatpush.msra.mxu0 0.0
        %2529 = vmatpush.msra.mxu0 0.0
        %2530 = vmatpush.msra.mxu0 0.0
        %2531 = vmatpush.msra.mxu0 0.0
        %2532 = vmatpush.msra.mxu0 0.0
        %2533 = vmatpush.msra.mxu0 0.0
        %2534 = vmatpush.msra.mxu0 0.0
        %2535 = vmatpush.msra.mxu0 0.0
        %2536 = vmatpush.msra.mxu0 0.0
        %2537 = vmatpush.msra.mxu0 0.0
        %2538 = vmatpush.msra.mxu0 0.0
        %2539 = vmatpush.msra.mxu0 0.0
        %2540 = vmatpush.msra.mxu0 %v1872
        %2541 = vmatmul.f32.gmra.mxu0 %v2520
        %v2542 = vpop.f32.mrf.mxu0
        %v2543 = vadd.f32 0.0, %v2542
        %2544 = vmatmul.f32.gmra.mxu0 %v2523
        %v2545 = vpop.f32.mrf.mxu0
        %v2546 = vadd.f32 0.0, %v2545
        %2547 = vdwg.mxu0
        %v2548 = vadd.f32 %v2325, %v2543
        %v2549 = vadd.f32 %v2328, %v2546
        %2550 = vmatpush.msra.mxu0 0.0
        %2551 = vmatpush.msra.mxu0 0.0
        %2552 = vmatpush.msra.mxu0 0.0
        %2553 = vmatpush.msra.mxu0 0.0
        %2554 = vmatpush.msra.mxu0 0.0
        %2555 = vmatpush.msra.mxu0 0.0
        %2556 = vmatpush.msra.mxu0 0.0
        %2557 = vmatpush.msra.mxu0 0.0
        %2558 = vmatpush.msra.mxu0 0.0
        %2559 = vmatpush.msra.mxu0 0.0
        %2560 = vmatpush.msra.mxu0 0.0
        %2561 = vmatpush.msra.mxu0 0.0
        %2562 = vmatpush.msra.mxu0 %v1837
        %2563 = vmatpush.msra.mxu0 %v1836
        %2564 = vmatpush.msra.mxu0 %v1835
        %2565 = vmatpush.msra.mxu0 %v1834
        %2566 = vmatmul.f32.gmra.mxu0 %v1877
        %v2567 = vpop.f32.mrf.mxu0
        %v2568 = vadd.f32 0.0, %v2567
        %2569 = vmatmul.f32.gmra.mxu0 %v1880
        %v2570 = vpop.f32.mrf.mxu0
        %v2571 = vadd.f32 0.0, %v2570
        %2572 = vdwg.mxu0
        %2573 = vmatpush.msra.mxu0 0.0
        %2574 = vmatpush.msra.mxu0 0.0
        %2575 = vmatpush.msra.mxu0 0.0
        %2576 = vmatpush.msra.mxu0 0.0
        %2577 = vmatpush.msra.mxu0 0.0
        %2578 = vmatpush.msra.mxu0 0.0
        %2579 = vmatpush.msra.mxu0 0.0
        %2580 = vmatpush.msra.mxu0 0.0
        %2581 = vmatpush.msra.mxu0 0.0
        %2582 = vmatpush.msra.mxu0 0.0
        %2583 = vmatpush.msra.mxu0 0.0
        %2584 = vmatpush.msra.mxu0 0.0
        %2585 = vmatpush.msra.mxu0 %v1853
        %2586 = vmatpush.msra.mxu0 %v1852
        %2587 = vmatpush.msra.mxu0 %v1851
        %2588 = vmatpush.msra.mxu0 %v1850
        %2589 = vmatmul.f32.gmra.mxu0 %v1906
        %v2590 = vpop.f32.mrf.mxu0
        %v2591 = vadd.f32 0.0, %v2590
        %2592 = vmatmul.f32.gmra.mxu0 %v1909
        %v2593 = vpop.f32.mrf.mxu0
        %v2594 = vadd.f32 0.0, %v2593
        %2595 = vdwg.mxu0
        %2596 = vmatpush.msra.mxu0 0.0
        %2597 = vmatpush.msra.mxu0 0.0
        %2598 = vmatpush.msra.mxu0 0.0
        %2599 = vmatpush.msra.mxu0 0.0
        %2600 = vmatpush.msra.mxu0 0.0
        %2601 = vmatpush.msra.mxu0 0.0
        %2602 = vmatpush.msra.mxu0 0.0
        %2603 = vmatpush.msra.mxu0 0.0
        %2604 = vmatpush.msra.mxu0 0.0
        %2605 = vmatpush.msra.mxu0 0.0
        %2606 = vmatpush.msra.mxu0 0.0
        %2607 = vmatpush.msra.mxu0 0.0
        %2608 = vmatpush.msra.mxu0 %v1869
        %2609 = vmatpush.msra.mxu0 %v1868
        %2610 = vmatpush.msra.mxu0 %v1867
        %2611 = vmatpush.msra.mxu0 %v1866
        %2612 = vmatmul.f32.gmra.mxu0 %v1906
        %v2613 = vpop.f32.mrf.mxu0
        %v2614 = vadd.f32 0.0, %v2613
        %2615 = vmatmul.f32.gmra.mxu0 %v1909
        %v2616 = vpop.f32.mrf.mxu0
        %v2617 = vadd.f32 0.0, %v2616
        %2618 = vdwg.mxu0
        %v2620 = vsel %vm975, %v2568, 0
        %v2623 = vsel %vm975, %v2591, 0
        %2625 = vmatpush.xpose.msra.mxu0 0.0
        %2626 = vmatpush.xpose.msra.mxu0 0.0
        %2627 = vmatpush.xpose.msra.mxu0 0.0
        %2628 = vmatpush.xpose.msra.mxu0 0.0
        %2629 = vmatpush.xpose.msra.mxu0 0.0
        %2630 = vmatpush.xpose.msra.mxu0 0.0
        %2631 = vmatpush.xpose.msra.mxu0 0.0
        %2632 = vmatpush.xpose.msra.mxu0 0.0
        %2633 = vmatpush.xpose.msra.mxu0 0.0
        %2634 = vmatpush.xpose.msra.mxu0 0.0
        %2635 = vmatpush.xpose.msra.mxu0 0.0
        %2636 = vmatpush.xpose.msra.mxu0 0.0
        %2637 = vmatpush.xpose.msra.mxu0 0.0
        %2638 = vmatpush.xpose.msra.mxu0 0.0
        %2639 = vmatpush.xpose.msra.mxu0 0.0
        %2640 = vmatpush.xpose.msra.mxu0 %v2623
        %2641 = vmatmul.f32.gmra.mxu0 %v2620
        %v2642 = vpop.f32.mrf.mxu0
        %v2643 = vadd.f32 %v1959, %v2642
        %2644 = vdwg.mxu0
        %v2646 = vsel %vm975, %v2571, 0
        %v2649 = vsel %vm975, %v2594, 0
        %2651 = vmatpush.xpose.msra.mxu0 0.0
        %2652 = vmatpush.xpose.msra.mxu0 0.0
        %2653 = vmatpush.xpose.msra.mxu0 0.0
        %2654 = vmatpush.xpose.msra.mxu0 0.0
        %2655 = vmatpush.xpose.msra.mxu0 0.0
        %2656 = vmatpush.xpose.msra.mxu0 0.0
        %2657 = vmatpush.xpose.msra.mxu0 0.0
        %2658 = vmatpush.xpose.msra.mxu0 0.0
        %2659 = vmatpush.xpose.msra.mxu0 0.0
        %2660 = vmatpush.xpose.msra.mxu0 0.0
        %2661 = vmatpush.xpose.msra.mxu0 0.0
        %2662 = vmatpush.xpose.msra.mxu0 0.0
        %2663 = vmatpush.xpose.msra.mxu0 0.0
        %2664 = vmatpush.xpose.msra.mxu0 0.0
        %2665 = vmatpush.xpose.msra.mxu0 0.0
        %2666 = vmatpush.xpose.msra.mxu0 %v2649
        %2667 = vmatmul.f32.gmra.mxu0 %v2646
        %v2668 = vpop.f32.mrf.mxu0
        %v2669 = vadd.f32 %v1960, %v2668
        %2670 = vdwg.mxu0
        %v2671 = vsel %vm975, %v2643, -inf
        %2672 = vmax.xlane.f32.xlu0 %v2671
        %v2673 = vpop.xlane.xlu0 %2672
        %v2674 = vsel %vm975, %v2669, -inf
        %2675 = vmax.xlane.f32.xlu0 %v2674
        %v2676 = vpop.xlane.xlu0 %2675
        %v2677 = vsub.f32 %v2643, %v2673
        %v2678 = vsub.f32 %v2669, %v2676
        %v2679 = vmul.f32 %v2677, 1.442695
        %v2680 = vpow.pop %v2679
        %v2681 = vmul.f32 %v2678, 1.442695
        %v2682 = vpow.pop %v2681
        %v2683 = vsel %vm975, %v2680, 0.0
        %2684 = vadd.xlane.f32.xlu0 %v2683
        %v2685 = vpop.xlane.xlu0 %2684
        %v2686 = vsel %vm975, %v2682, 0.0
        %2687 = vadd.xlane.f32.xlu0 %v2686
        %v2688 = vpop.xlane.xlu0 %2687
        %v2689 = vrcp.pop %v2685
        %v2690 = vrcp.pop %v2688
        %v2691 = vmul.f32 %v2680, %v2689
        %v2692 = vmul.f32 %v2682, %v2690
        %v2694 = vsel %vm975, %v2691, 0
        %2696 = vmatpush.msra.mxu0 0.0
        %2697 = vmatpush.msra.mxu0 0.0
        %2698 = vmatpush.msra.mxu0 0.0
        %2699 = vmatpush.msra.mxu0 0.0
        %2700 = vmatpush.msra.mxu0 0.0
        %2701 = vmatpush.msra.mxu0 0.0
        %2702 = vmatpush.msra.mxu0 0.0
        %2703 = vmatpush.msra.mxu0 0.0
        %2704 = vmatpush.msra.mxu0 0.0
        %2705 = vmatpush.msra.mxu0 0.0
        %2706 = vmatpush.msra.mxu0 0.0
        %2707 = vmatpush.msra.mxu0 0.0
        %2708 = vmatpush.msra.mxu0 0.0
        %2709 = vmatpush.msra.mxu0 0.0
        %2710 = vmatpush.msra.mxu0 0.0
        %2711 = vmatpush.msra.mxu0 %v2614
        %2712 = vmatmul.f32.gmra.mxu0 %v2694
        %v2713 = vpop.f32.mrf.mxu0
        %v2714 = vadd.f32 0.0, %v2713
        %2715 = vdwg.mxu0
        %v2717 = vsel %vm975, %v2692, 0
        %2719 = vmatpush.msra.mxu0 0.0
        %2720 = vmatpush.msra.mxu0 0.0
        %2721 = vmatpush.msra.mxu0 0.0
        %2722 = vmatpush.msra.mxu0 0.0
        %2723 = vmatpush.msra.mxu0 0.0
        %2724 = vmatpush.msra.mxu0 0.0
        %2725 = vmatpush.msra.mxu0 0.0
        %2726 = vmatpush.msra.mxu0 0.0
        %2727 = vmatpush.msra.mxu0 0.0
        %2728 = vmatpush.msra.mxu0 0.0
        %2729 = vmatpush.msra.mxu0 0.0
        %2730 = vmatpush.msra.mxu0 0.0
        %2731 = vmatpush.msra.mxu0 0.0
        %2732 = vmatpush.msra.mxu0 0.0
        %2733 = vmatpush.msra.mxu0 0.0
        %2734 = vmatpush.msra.mxu0 %v2617
        %2735 = vmatmul.f32.gmra.mxu0 %v2717
        %v2736 = vpop.f32.mrf.mxu0
        %v2737 = vadd.f32 0.0, %v2736
        %2738 = vdwg.mxu0
        %v2740 = vsel %vm975, %v2714, 0
        %v2743 = vsel %vm975, %v2737, 0
        %2745 = vmatpush.msra.mxu0 0.0
        %2746 = vmatpush.msra.mxu0 0.0
        %2747 = vmatpush.msra.mxu0 0.0
        %2748 = vmatpush.msra.mxu0 0.0
        %2749 = vmatpush.msra.mxu0 0.0
        %2750 = vmatpush.msra.mxu0 0.0
        %2751 = vmatpush.msra.mxu0 0.0
        %2752 = vmatpush.msra.mxu0 0.0
        %2753 = vmatpush.msra.mxu0 0.0
        %2754 = vmatpush.msra.mxu0 0.0
        %2755 = vmatpush.msra.mxu0 0.0
        %2756 = vmatpush.msra.mxu0 0.0
        %2757 = vmatpush.msra.mxu0 0.0
        %2758 = vmatpush.msra.mxu0 0.0
        %2759 = vmatpush.msra.mxu0 0.0
        %2760 = vmatpush.msra.mxu0 %v1873
        %2761 = vmatmul.f32.gmra.mxu0 %v2740
        %v2762 = vpop.f32.mrf.mxu0
        %v2763 = vadd.f32 0.0, %v2762
        %2764 = vmatmul.f32.gmra.mxu0 %v2743
        %v2765 = vpop.f32.mrf.mxu0
        %v2766 = vadd.f32 0.0, %v2765
        %2767 = vdwg.mxu0
        %v2768 = vadd.f32 %v2548, %v2763
        %v2769 = vadd.f32 %v2549, %v2766
        %v2770 = vadd.f32 %v1783, %v2768
        %v2771 = vadd.f32 %v1784, %v2769
        %v2772 = vmul.f32 %v2770, %v2770
        %v2773 = vmul.f32 %v2771, %v2771
        %v2774 = vsel %vm801, %v2772, 0.0
        %2775 = vadd.xlane.f32.xlu0 %v2774
        %v2776 = vpop.xlane.xlu0 %2775
        %v2777 = vsel %vm801, %v2773, 0.0
        %2778 = vadd.xlane.f32.xlu0 %v2777
        %v2779 = vpop.xlane.xlu0 %2778
        %v2780 = vmul.f32 %v2776, %v814
        %v2781 = vmul.f32 %v2779, %v814
        %v2782 = vadd.f32 %v2780, 1e-06
        %v2783 = vadd.f32 %v2781, 1e-06
        %v2784 = vrsqrt.pop %v2782
        %v2785 = vmul.f32 %v2784, %v2782
        %v2786 = vmul.f32 %v2785, %v2784
        %v2787 = vmul.f32 0.5, %v2786
        %v2788 = vsub.f32 1.5, %v2787
        %v2789 = vmul.f32 %v2784, %v2788
        %vm2790 = vweird.f32 %v2782
        %vm2791 = vweird.f32 %v2784
        %vm2792 = vmor %vm2790, %vm2791
        %v2793 = vsel %vm2792, %v2784, %v2789
        %v2794 = vrsqrt.pop %v2783
        %v2795 = vmul.f32 %v2794, %v2783
        %v2796 = vmul.f32 %v2795, %v2794
        %v2797 = vmul.f32 0.5, %v2796
        %v2798 = vsub.f32 1.5, %v2797
        %v2799 = vmul.f32 %v2794, %v2798
        %vm2800 = vweird.f32 %v2783
        %vm2801 = vweird.f32 %v2794
        %vm2802 = vmor %vm2800, %vm2801
        %v2803 = vsel %vm2802, %v2794, %v2799
        %v2804 = vmul.f32 %v2770, %v2793
        %v2805 = vmul.f32 %v2771, %v2803
        %v2806 = vperm.slane %v798, 2
        %v2807 = vmul.f32 %v2804, %v2806
        %v2808 = vmul.f32 %v2805, %v2806
        %v2809 = vld [vmem:[%s779] sm:$0xff]
        %v2810 = vld [vmem:[%s779 + $0x8] sm:$0xff]
        %v2811 = vld [vmem:[%s779 + $0x10] sm:$0xff]
        %v2812 = vld [vmem:[%s779 + $0x18] sm:$0xff]
        %v2814 = vsel %vm801, %v2807, 0
        %v2817 = vsel %vm801, %v2808, 0
        %2819 = vmatpush.msra.mxu0 0.0
        %2820 = vmatpush.msra.mxu0 0.0
        %2821 = vmatpush.msra.mxu0 0.0
        %2822 = vmatpush.msra.mxu0 0.0
        %2823 = vmatpush.msra.mxu0 0.0
        %2824 = vmatpush.msra.mxu0 0.0
        %2825 = vmatpush.msra.mxu0 0.0
        %2826 = vmatpush.msra.mxu0 0.0
        %2827 = vmatpush.msra.mxu0 0.0
        %2828 = vmatpush.msra.mxu0 0.0
        %2829 = vmatpush.msra.mxu0 0.0
        %2830 = vmatpush.msra.mxu0 0.0
        %2831 = vmatpush.msra.mxu0 %v2812
        %2832 = vmatpush.msra.mxu0 %v2811
        %2833 = vmatpush.msra.mxu0 %v2810
        %2834 = vmatpush.msra.mxu0 %v2809
        %2835 = vmatmul.f32.gmra.mxu0 %v2814
        %v2836 = vpop.f32.mrf.mxu0
        %v2837 = vadd.f32 0.0, %v2836
        %2838 = vmatmul.f32.gmra.mxu0 %v2817
        %v2839 = vpop.f32.mrf.mxu0
        %v2840 = vadd.f32 0.0, %v2839
        %2841 = vdwg.mxu0
        %v2842 = vmax.f32 %v2837, 0.0
        %v2843 = vmax.f32 %v2840, 0.0
        %v2844 = vld [vmem:[%s784] sm:$0xff]
        %v2845 = vld [vmem:[%s784 + $0x8] sm:$0xff]
        %v2846 = vld [vmem:[%s784 + $0x10] sm:$0xff]
        %v2847 = vld [vmem:[%s784 + $0x18] sm:$0xff]
        %v2848 = vld [vmem:[%s784 + $0x20] sm:$0xff]
        %v2849 = vld [vmem:[%s784 + $0x28] sm:$0xff]
        %v2850 = vld [vmem:[%s784 + $0x30] sm:$0xff]
        %v2851 = vld [vmem:[%s784 + $0x38] sm:$0xff]
        %vm2852 = vcmask 523264
        %v2854 = vsel %vm2852, %v2842, 0
        %v2857 = vsel %vm2852, %v2843, 0
        %2859 = vmatpush.msra.mxu0 0.0
        %2860 = vmatpush.msra.mxu0 0.0
        %2861 = vmatpush.msra.mxu0 0.0
        %2862 = vmatpush.msra.mxu0 0.0
        %2863 = vmatpush.msra.mxu0 0.0
        %2864 = vmatpush.msra.mxu0 0.0
        %2865 = vmatpush.msra.mxu0 0.0
        %2866 = vmatpush.msra.mxu0 0.0
        %2867 = vmatpush.msra.mxu0 %v2851
        %2868 = vmatpush.msra.mxu0 %v2850
        %2869 = vmatpush.msra.mxu0 %v2849
        %2870 = vmatpush.msra.mxu0 %v2848
        %2871 = vmatpush.msra.mxu0 %v2847
        %2872 = vmatpush.msra.mxu0 %v2846
        %2873 = vmatpush.msra.mxu0 %v2845
        %2874 = vmatpush.msra.mxu0 %v2844
        %2875 = vmatmul.f32.gmra.mxu0 %v2854
        %v2876 = vpop.f32.mrf.mxu0
        %v2877 = vadd.f32 0.0, %v2876
        %2878 = vmatmul.f32.gmra.mxu0 %v2857
        %v2879 = vpop.f32.mrf.mxu0
        %v2880 = vadd.f32 0.0, %v2879
        %2881 = vdwg.mxu0
        %v2882 = vadd.f32 %v2770, %v2877
        %v2883 = vadd.f32 %v2771, %v2880
        %2884 = vst.msk [vmem:[#allocation2] sm:$0xff] %vm801, %v2882
        %2885 = vst.msk [vmem:[#allocation2 + $0x8] sm:$0xff] %vm801, %v2883
        %p2886 = scmp.eq.s32.totalorder %s33, 1
        // Predicated region
        $region97: #{t5_multitask_relation_forward.3} parent=91 // pred_check
          %p2887 = pneg %p2886
        $region98: #{t5_multitask_relation_forward.3} parent=91 // pred_check_branch
          %2889 = sbr.rel (%p2887) target = $region100
        $region99: #{t5_multitask_relation_forward.3} parent=91 // pred_region
          %v2890 = vld [vmem:[%s17] sm:$0x1]
          %v2891 = vmul.f32 %v2882, %v2882
          %v2892 = vmul.f32 %v2883, %v2883
          %v2893 = vsel %vm801, %v2891, 0.0
          %2894 = vadd.xlane.f32.xlu0 %v2893
          %v2895 = vpop.xlane.xlu0 %2894
          %v2896 = vsel %vm801, %v2892, 0.0
          %2897 = vadd.xlane.f32.xlu0 %v2896
          %v2898 = vpop.xlane.xlu0 %2897
          %v2899 = vmul.f32 %v2895, %v814
          %v2900 = vmul.f32 %v2898, %v814
          %v2901 = vadd.f32 %v2899, 1e-06
          %v2902 = vadd.f32 %v2900, 1e-06
          %v2903 = vrsqrt.pop %v2901
          %v2904 = vmul.f32 %v2903, %v2901
          %v2905 = vmul.f32 %v2904, %v2903
          %v2906 = vmul.f32 0.5, %v2905
          %v2907 = vsub.f32 1.5, %v2906
          %v2908 = vmul.f32 %v2903, %v2907
          %vm2909 = vweird.f32 %v2901
          %vm2910 = vweird.f32 %v2903
          %vm2911 = vmor %vm2909, %vm2910
          %v2912 = vsel %vm2911, %v2903, %v2908
          %v2913 = vrsqrt.pop %v2902
          %v2914 = vmul.f32 %v2913, %v2902
          %v2915 = vmul.f32 %v2914, %v2913
          %v2916 = vmul.f32 0.5, %v2915
          %v2917 = vsub.f32 1.5, %v2916
          %v2918 = vmul.f32 %v2913, %v2917
          %vm2919 = vweird.f32 %v2902
          %vm2920 = vweird.f32 %v2913
          %vm2921 = vmor %vm2919, %vm2920
          %v2922 = vsel %vm2921, %v2913, %v2918
          %v2923 = vmul.f32 %v2882, %v2912
          %v2924 = vmul.f32 %v2883, %v2922
          %v2926 = vperm.slane %v2890, 0
          %v2928 = vmul.f32 %v2923, %v2926
          %v2929 = vmul.f32 %v2924, %v2926
          %2930 = vst.msk [vmem:[#allocation2] sm:$0xff] %vm801, %v2928
          %2931 = vst.msk [vmem:[#allocation2 + $0x8] sm:$0xff] %vm801, %v2929
          %v2932 = vmul.f32 %v2928, 0.17677669
          %v2933 = vmul.f32 %v2929, 0.17677669
          %v2934 = vld [vmem:[%s4] sm:$0xff]
          %v2935 = vld [vmem:[%s4 + $0x8] sm:$0xff]
          %v2936 = vld [vmem:[%s4 + $0x10] sm:$0xff]
          %v2937 = vld [vmem:[%s4 + $0x18] sm:$0xff]
          %v2939 = vsel %vm801, %v2932, 0
          %v2942 = vsel %vm801, %v2933, 0
          %2944 = vmatpush.msra.mxu0 0.0
          %2945 = vmatpush.msra.mxu0 0.0
          %2946 = vmatpush.msra.mxu0 0.0
          %2947 = vmatpush.msra.mxu0 0.0
          %2948 = vmatpush.msra.mxu0 0.0
          %2949 = vmatpush.msra.mxu0 0.0
          %2950 = vmatpush.msra.mxu0 0.0
          %2951 = vmatpush.msra.mxu0 0.0
          %2952 = vmatpush.msra.mxu0 0.0
          %2953 = vmatpush.msra.mxu0 0.0
          %2954 = vmatpush.msra.mxu0 0.0
          %2955 = vmatpush.msra.mxu0 0.0
          %2956 = vmatpush.msra.mxu0 %v2937
          %2957 = vmatpush.msra.mxu0 %v2936
          %2958 = vmatpush.msra.mxu0 %v2935
          %2959 = vmatpush.msra.mxu0 %v2934
          %2960 = vmatmul.f32.gmra.mxu0 %v2939
          %v2961 = vpop.f32.mrf.mxu0
          %v2962 = vadd.f32 0.0, %v2961
          %2963 = vmatmul.f32.gmra.mxu0 %v2942
          %v2964 = vpop.f32.mrf.mxu0
          %v2965 = vadd.f32 0.0, %v2964
          %2966 = vdwg.mxu0
          %v2967 = vld [vmem:[%s5] sm:$0xff]
          %v2968 = vld [vmem:[%s5 + $0x8] sm:$0xff]
          %v2969 = vsel %vm2852, %v2962, -inf
          %2970 = vmax.xlane.f32.xlu0 %v2969
          %v2971 = vpop.xlane.xlu0 %2970
          %v2972 = vsel %vm2852, %v2965, -inf
          %2973 = vmax.xlane.f32.xlu0 %v2972
          %v2974 = vpop.xlane.xlu0 %2973
          %v2975 = vsub.f32 %v2962, %v2971
          %v2976 = vsub.f32 %v2965, %v2974
          %v2977 = vmul.f32 %v2975, 1.442695
          %v2978 = vpow.pop %v2977
          %v2979 = vmul.f32 %v2976, 1.442695
          %v2980 = vpow.pop %v2979
          %v2981 = vsel %vm2852, %v2978, 0.0
          %2982 = vadd.xlane.f32.xlu0 %v2981
          %v2983 = vpop.xlane.xlu0 %2982
          %v2984 = vsel %vm2852, %v2980, 0.0
          %2985 = vadd.xlane.f32.xlu0 %v2984
          %v2986 = vpop.xlane.xlu0 %2985
          %v2987 = vlog2.pop %v2983
          %v2988 = vmul.f32 %v2987, 0.6931472
          %v2989 = vlog2.pop %v2986
          %v2990 = vmul.f32 %v2989, 0.6931472
          %v2991 = vadd.f32 %v2988, %v2971
          %v2992 = vadd.f32 %v2990, %v2974
          %v2993 = vlaneseq
          %v2994 = vand.u32 %v2993, 127
          %2995 = vset.pattern.permute.xlu0 0
          %2996 = vperm.xlu0 %2995, %v2967
          %v2997 = vpop.permute.xlu0 %2996
          %2998 = vset.pattern.permute.xlu0 0
          %2999 = vperm.xlu0 %2998, %v2968
          %v3000 = vpop.permute.xlu0 %2999
          %vm3001 = vcmp.eq.s32.totalorder %v2994, %v2997
          %vm3002 = vcmp.eq.s32.totalorder %v2994, %v3000
          %v3003 = vsel %vm3001, %v2962, 0.0
          %v3004 = vsel %vm3002, %v2965, 0.0
          %v3005 = vsel %vm2852, %v3003, 0.0
          %3006 = vadd.xlane.f32.xlu0 %v3005
          %v3007 = vpop.xlane.xlu0 %3006
          %v3008 = vsel %vm2852, %v3004, 0.0
          %3009 = vadd.xlane.f32.xlu0 %v3008
          %v3010 = vpop.xlane.xlu0 %3009
          %vm3011 = vcmp.ge.s32.totalorder %v2967, 0
          %vm3012 = vcmp.ge.s32.totalorder %v2968, 0
          %v3013 = vsel %vm3011, 1, 0
          %v3014 = vsel %vm3012, 1, 0
          %v3015 = vcvt.s32.f32 %v3013
          %v3016 = vcvt.s32.f32 %v3014
          %v3017 = vsub.f32 %v2991, %v3007
          %v3018 = vsub.f32 %v2992, %v3010
          %v3019 = vmul.f32 %v3017, %v3015
          %v3020 = vmul.f32 %v3018, %v3016
          %vm3021 = vcmask 7168
          %v3022 = vsel %vm3021, %v3019, 0.0
          %v3023 = vsel %vm3021, %v3020, 0.0
          %v3024 = vadd.f32 %v3022, %v3023
          %v3025 = vrot.slane %v3024, 4
          %v3026 = vadd.f32 %v3024, %v3025
          %v3027 = vrot.slane %v3026, 2
          %v3028 = vadd.f32 %v3026, %v3027
          %v3029 = vrot.slane %v3028, 1
          %v3030 = vadd.f32 %v3028, %v3029
          %v3031 = vsel %vm3021, %v3015, 0.0
          %v3032 = vsel %vm3021, %v3016, 0.0
          %v3033 = vadd.f32 %v3031, %v3032
          %v3034 = vrot.slane %v3033, 4
          %v3035 = vadd.f32 %v3033, %v3034
          %v3036 = vrot.slane %v3035, 2
          %v3037 = vadd.f32 %v3035, %v3036
          %v3038 = vrot.slane %v3037, 1
          %v3039 = vadd.f32 %v3037, %v3038
          %v3040 = vmax.f32 %v3039, 1.0
          %v3041 = vrcp.pop %v3040
          %v3042 = vmul.f32 %v3040, %v3041
          %v3043 = vsub.f32 1.0, %v3042
          %v3044 = vmul.f32 %v3041, %v3043
          %v3045 = vadd.f32 %v3041, %v3044
          %vm3046 = vweird.f32 %v3040
          %vm3047 = vweird.f32 %v3041
          %vm3048 = vmor %vm3046, %vm3047
          %v3049 = vsel %vm3048, %v3041, %v3045
          %v3050 = vand.u32 2147483647, %v3040
          %vm3051 = vcmp.eq.f32.partialorder %v3050, 8.507059e+37
          %v3052 = vand.u32 %v3040, 2147483648
          %v3053 = vor.u32 1.1754944e-38, %v3052
          %v3054 = vsel %vm3051, %v3053, %v3049
          %v3055 = vmul.f32 %v3030, %v3054
          %vm3056 = vcmask 0
          %3057 = vst.msk [vmem:[#allocation4] sm:$0x1] %vm3056, %v3055
        $region100: #{t5_multitask_relation_forward.3} parent=91 // pred_fallthru
          _
        // Predicated region
        $region101: #{t5_multitask_relation_forward.3} parent=91 // pred_check
          %p3058 = pneg %p479
        $region102: #{t5_multitask_relation_forward.3} parent=91 // pred_check_branch
          %3060 = sbr.rel (%p3058) target = $region104
        $region103: #{t5_multitask_relation_forward.3} parent=91 // pred_region
          %3062 = vsyncadd [#allocation3], 0
          %s3063 = sshll.u32 [#allocation2], 4
          %s3064 = int_to_ptr.vmem [resolvable:$true] %s3063
          %s3065 = sshll.u32 %s18, 4
          %s3066 = int_to_ptr.hbm [resolvable:$true] %s3065
          %3071 = dma.vmem_to_hbm [thread:$0]  %s3064, 256, %s3066, [#allocation3], 128, 128, 8
        $region104: #{t5_multitask_relation_forward.3} parent=91 // pred_fallthru
          _
        // Predicated region
        $region105: #{t5_multitask_relation_forward.3} parent=91 // pred_check
          %p3072 = pneg %p500
        $region106: #{t5_multitask_relation_forward.3} parent=91 // pred_check_branch
          %3074 = sbr.rel (%p3072) target = $region108
        $region107: #{t5_multitask_relation_forward.3} parent=91 // pred_region
          %3076 = vsyncadd [#allocation5], 0
          %s3078 = sshll.u32 [#allocation4], 4
          %s3079 = int_to_ptr.vmem [resolvable:$true] %s3078
          %s3080 = sshll.u32 %s19, 4
          %s3081 = int_to_ptr.hbm [resolvable:$true] %s3080
          %3083 = dma.vmem_to_hbm [thread:$0]  %s3079, 16, %s3081, [#allocation5]
        $region108: #{t5_multitask_relation_forward.3} parent=91 // pred_fallthru
          _
        // Predicated region
        $region109: #{t5_multitask_relation_forward.3} parent=91 // pred_check
          %p3084 = pneg %p479
        $region110: #{t5_multitask_relation_forward.3} parent=91 // pred_check_branch
          %3086 = sbr.rel (%p3084) target = $region112
        $region111: #{t5_multitask_relation_forward.3} parent=91 // pred_region
          %3088 = dma.done [#allocation3], 256
        $region112: #{t5_multitask_relation_forward.3} parent=91 // pred_fallthru
          _
        // Predicated region
        $region113: #{t5_multitask_relation_forward.3} parent=91 // pred_check
          %p3089 = pneg %p500
        $region114: #{t5_multitask_relation_forward.3} parent=91 // pred_check_branch
          %3091 = sbr.rel (%p3089) target = $region116
        $region115: #{t5_multitask_relation_forward.3} parent=91 // pred_region
          %3093 = dma.done [#allocation5], 16
        $region116: #{t5_multitask_relation_forward.3} parent=91 // pred_fallthru
          _
      $region92: #{t5_multitask_relation_forward.3} parent=5 // pred_fallthru
        _
      %p3094 = scmp.le.s32.totalorder 2, %s28
      // Predicated region
      $region117: #{t5_multitask_relation_forward.3} parent=5 // pred_check
        %p3095 = pneg %p3094
      $region118: #{t5_multitask_relation_forward.3} parent=5 // pred_check_branch
        %3097 = sbr.rel (%p3095) target = $region120
      $region119: #{t5_multitask_relation_forward.3} parent=5 // pred_region
        %s3098 = ssub.s32 %s28, 2
      $region120: #{t5_multitask_relation_forward.3} parent=5 // pred_fallthru
        _
    $region6: #{t5_multitask_relation_forward.3} parent=1 // loop_footer
      %s32 = sadd.s32 1, %s28
    $region7: #{t5_multitask_relation_forward.3} parent=1 // loop_footer_branch
      %27 = sbr.rel target = $region3
    $region8: #{t5_multitask_relation_forward.3} parent=1 // loop_exit
      _
    %3099 = vsyncpa [#allocation3], 1
    %s3100 = scalar_lea.sflag [#allocation3], 1
    %3101 = vsyncpa %s3100, 1
    %3102 = vsyncpa [#allocation5], 1

</llo_original>
